<compile_context>
chip_gen: v7x
topology: tpu7x:2x2x1
jax: 0.10.0
libtpu: 0.0.40
codegen_flags: <defaults>
</compile_context>

<pallas_src>
import numpy as np
import jax
import jax.numpy as jnp
from jax.experimental import pallas as pl
from jax.experimental.pallas import tpu as pltpu

# ----------------------------- model sizes ---------------------------------
BATCH = 256
BATCH_TILE = 128
INPUT_DIM = 256
HIDDEN_DIM = 128
LATENT_DIM = 64
N_LAYERS = 5

LN_EPS = 0.1                     # Encoder() default eps=0.1 in the PyTorch spec
GAMMA = 1.0
LOG_2PI = float(np.log(2.0 * np.pi))
MIX_LOG_W = (float(np.log(3.0 / 20.0)),
             float(np.log(3.0 / 4.0)),
             float(np.log(1.0 / 10.0)))
LOGVAR_UNIFORM = 10.0            # logvar_uniform_prior fill value
EXP_NEG_LVU = float(np.exp(-LOGVAR_UNIFORM))


# --------------------------- shared math helpers ---------------------------
# Pure jnp -> identical math inside the Pallas kernel and in the JAX reference.
def _swish(v):
    # sigmoid(v) = 0.5*(tanh(0.5*v) + 1): a single EUP tanh per element instead
    # of exp + reciprocal/divide (kernel is EUP-bound).
    return v * (0.5 * jnp.tanh(0.5 * v) + 0.5)


def _ln_no_affine(u):
    m = jnp.mean(u, axis=-1, keepdims=True)
    c = u - m
    var = jnp.mean(c * c, axis=-1, keepdims=True)
    return c * jax.lax.rsqrt(var + LN_EPS)


def _dot_bf16(a, w, b):
    # bf16 MXU matmul, f32 accumulation; bias add in f32.
    return jnp.dot(a.astype(jnp.bfloat16), w.astype(jnp.bfloat16),
                   preferred_element_type=jnp.float32) + b


def _row_normalize(x):
    sumsq = jnp.sum(x * x, axis=-1, keepdims=True)
    # eps guard: all-zero rows would be NaN in PyTorch; harmless for real data.
    return x * jax.lax.rsqrt(jnp.maximum(sumsq, 1e-24))


def _loss_terms(x, mu, logvar, post_mu, post_logvar, dec_w, dec_b):
    """Per-row MLL / KLD contributions. x:[N,I]; latents:[N,L]."""
    z = mu                                            # eval-mode reparameterize
    x_pred = _dot_bf16(z, dec_w, dec_b)               # decoder, [N, I] f32

    # mll_row = sum_i log_softmax(x_pred)_i * x_i
    m = jnp.max(x_pred, axis=-1, keepdims=True)
    lse = m + jnp.log(jnp.sum(jnp.exp(x_pred - m), axis=-1, keepdims=True))
    mll_row = jnp.sum((x_pred - lse) * x, axis=-1, keepdims=True)     # [N,1]

    # CompositePrior mixture (constant components folded, z*z computed once).
    z2 = z * z
    g0 = -0.5 * (LOG_2PI + z2) + MIX_LOG_W[0]
    d = z - post_mu
    g1 = -0.5 * (post_logvar + LOG_2PI + d * d * jnp.exp(-post_logvar)) + MIX_LOG_W[1]
    g2 = -0.5 * (LOGVAR_UNIFORM + LOG_2PI + z2 * EXP_NEG_LVU) + MIX_LOG_W[2]
    gm = jnp.maximum(jnp.maximum(g0, g1), g2)
    prior = gm + jnp.log(jnp.exp(g0 - gm) + jnp.exp(g1 - gm) + jnp.exp(g2 - gm))

    # z == mu exactly in eval mode -> (z - mu)^2 / exp(logvar) == 0 (dead term
    # dropped: no exp(-logvar), no multiplies).
    log_q = -0.5 * (logvar + LOG_2PI)

    kl_w = GAMMA * jnp.sum(x, axis=-1, keepdims=True)                 # [N,1]
    kld_row = jnp.sum(log_q - prior, axis=-1, keepdims=True) * kl_w   # [N,1]
    return mll_row, kld_row


# ------------------------------- Pallas kernel ------------------------------
def vae_kernel(x_ref, w_ref, b_ref, g_ref, be_ref,
               hw_ref, hb_ref, dw_ref, db_ref, out_ref):
    # L2 row-normalize (dropout = identity in eval mode).
    h = _row_normalize(x_ref[...])                         # [TM, INPUT_DIM] f32

    # 5 fused (new-encoder | old-encoder) residual swish + LayerNorm layers.
    # Activations are [TM, 2*H]: lanes 0:128 = current encoder, 128:256 = old.
    res = None
    for l in range(N_LAYERS):
        pre = _dot_bf16(h, w_ref[l], b_ref[l])             # one 256-wide matmul
        if l > 0:
            pre = pre + res                                # running residual sum
        a = _swish(pre)
        hl = jnp.concatenate(
            [_ln_no_affine(a[:, :HIDDEN_DIM]),
             _ln_no_affine(a[:, HIDDEN_DIM:])], axis=-1) * g_ref[l] + be_ref[l]
        if l == 0:
            res = hl
        elif l < N_LAYERS - 1:
            res = res + hl
        h = hl

    # Fused (mu_enc | logvar_enc | mu_old | logvar_old) head: one matmul.
    head = _dot_bf16(h, hw_ref[...], hb_ref[...])          # [TM, 4*L] f32
    L = LATENT_DIM
    mu, logvar = head[:, 0:L], head[:, L:2 * L]
    post_mu, post_logvar = head[:, 2 * L:3 * L], head[:, 3 * L:4 * L]

    mll_row, kld_row = _loss_terms(x_ref[...], mu, logvar, post_mu, post_logvar,
                                   dw_ref[...], db_ref[...])

    # Per-tile, per-row partial losses; final mean / (kld - mll) done in wrapper
    # so the batch axis can be "parallel" (2 TensorCores on v7x).
    out_ref[...] = jnp.concatenate([mll_row, kld_row], axis=-1)   # [TM, 2]


def _resident(shape):
    """Constant-index BlockSpec: whole array stays VMEM-resident across steps."""
    n = len(shape)
    return pl.BlockSpec(shape, lambda i, n=n: (0,) * n)


def vae_forward(x, w_stack, b_stack, g_stack, be_stack,
                head_w, head_b, dec_w, dec_b):
    assert BATCH % BATCH_TILE == 0
    grid = (BATCH // BATCH_TILE,)

    per_row = pl.pallas_call(
        vae_kernel,
        out_shape=jax.ShapeDtypeStruct((BATCH, 2), jnp.float32),
        grid=grid,
        in_specs=[pl.BlockSpec((BATCH_TILE, INPUT_DIM), lambda i: (i, 0)),
                  _resident(w_stack.shape), _resident(b_stack.shape),
                  _resident(g_stack.shape), _resident(be_stack.shape),
                  _resident(head_w.shape), _resident(head_b.shape),
                  _resident(dec_w.shape), _resident(dec_b.shape)],
        out_specs=pl.BlockSpec((BATCH_TILE, 2), lambda i: (i, 0)),
        compiler_params=pltpu.CompilerParams(
            # each tile writes its own output block -> truly parallel axis
            dimension_semantics=("parallel",)),
    )(x, w_stack, b_stack, g_stack, be_stack, head_w, head_b, dec_w, dec_b)

    mll = jnp.mean(per_row[:, 0])
    kld = jnp.mean(per_row[:, 1])
    return jnp.stack([mll, kld, kld - mll])               # (mll, kld, neg-ELBO)


# --------------------------- parameter construction -------------------------
def _init_linear(key, fan_in, fan_out):
    kw, kb = jax.random.split(key)
    w = jax.random.normal(kw, (fan_in, fan_out), jnp.float32) * 0.05
    b = jax.random.normal(kb, (1, fan_out), jnp.float32) * 0.05
    return w, b


def init_encoder_params(key, input_dim, hidden_dim, latent_dim):
    keys = jax.random.split(key, 7)
    params = []
    dims = [(input_dim, hidden_dim)] + [(hidden_dim, hidden_dim)] * 4
    for i, (fi, fo) in enumerate(dims):
        w, b = _init_linear(keys[i], fi, fo)
        gamma = jnp.ones((1, fo), jnp.float32)      # nn.LayerNorm default weight
        beta = jnp.zeros((1, fo), jnp.float32)      # nn.LayerNorm default bias
        params += [w, b, gamma, beta]
    wmu, bmu = _init_linear(keys[5], hidden_dim, latent_dim)
    wlv, blv = _init_linear(keys[6], hidden_dim, latent_dim)
    params += [wmu, bmu, wlv, blv]
    return params


def build_fused_params(enc_p, old_p):
    """Fuse (current, old) encoders into stacked concatenated / block-diag
    weights so each layer is one 256-wide matmul.  Weights cast to bf16."""
    H, L = HIDDEN_DIM, LATENT_DIM
    assert INPUT_DIM == 2 * H, "layer-0 concat fusion assumes input_dim == 2*hidden_dim"
    ws, bs, gs, bes = [], [], [], []
    for l in range(N_LAYERS):
        we, be_, ge, bee = enc_p[4 * l: 4 * l + 4]
        wo, bo, go, beo = old_p[4 * l: 4 * l + 4]
        if l == 0:
            w = jnp.concatenate([we, wo], axis=1)                       # [I, 2H]
        else:
            zero = jnp.zeros((H, H), jnp.float32)
            w = jnp.concatenate(
                [jnp.concatenate([we, zero], axis=1),
                 jnp.concatenate([zero, wo], axis=1)], axis=0)          # [2H, 2H]
        ws.append(w)
        bs.append(jnp.concatenate([be_, bo], axis=1))
        gs.append(jnp.concatenate([ge, go], axis=1))
        bes.append(jnp.concatenate([bee, beo], axis=1))
    w_stack = jnp.stack(ws).astype(jnp.bfloat16)        # [5, 2H, 2H]
    b_stack = jnp.stack(bs)                             # [5, 1, 2H]
    g_stack = jnp.stack(gs)                             # [5, 1, 2H]
    be_stack = jnp.stack(bes)                           # [5, 1, 2H]

    # Head: block-diag [2H, 4L] producing (mu_e | lv_e | mu_o | lv_o).
    wmu_e, bmu_e, wlv_e, blv_e = enc_p[4 * N_LAYERS: 4 * N_LAYERS + 4]
    wmu_o, bmu_o, wlv_o, blv_o = old_p[4 * N_LAYERS: 4 * N_LAYERS + 4]
    he = jnp.concatenate([wmu_e, wlv_e], axis=1)                        # [H, 2L]
    ho = jnp.concatenate([wmu_o, wlv_o], axis=1)                        # [H, 2L]
    zero = jnp.zeros((H, 2 * L), jnp.float32)
    head_w = jnp.concatenate(
        [jnp.concatenate([he, zero], axis=1),
         jnp.concatenate([zero, ho], axis=1)], axis=0).astype(jnp.bfloat16)
    head_b = jnp.concatenate([bmu_e, blv_e, bmu_o, blv_o], axis=1)      # [1, 4L]
    return w_stack, b_stack, g_stack, be_stack, head_w, head_b


# --------------------------- pure-JAX reference ------------------------------
def _encoder_ref(xn, p):
    res = None
    h = xn
    for l in range(N_LAYERS):
        w, b, g, be = p[4 * l: 4 * l + 4]
        pre = _dot_bf16(h, w, b)
        if l > 0:
            pre = pre + res
        hl = _ln_no_affine(_swish(pre)) * g + be
        if l == 0:
            res = hl
        elif l < N_LAYERS - 1:
            res = res + hl
        h = hl
    wmu, bmu, wlv, blv = p[4 * N_LAYERS: 4 * N_LAYERS + 4]
    return _dot_bf16(h, wmu, bmu), _dot_bf16(h, wlv, blv)


def _losses_ref(x, enc_p, old_p, dec_w, dec_b):
    xn = _row_normalize(x)
    mu, logvar = _encoder_ref(xn, enc_p)
    post_mu, post_logvar = _encoder_ref(xn, old_p)
    mll_row, kld_row = _loss_terms(x, mu, logvar, post_mu, post_logvar, dec_w, dec_b)
    mll = jnp.mean(mll_row)
    kld = jnp.mean(kld_row)
    return jnp.stack([mll, kld, kld - mll])


# --------------------------------- main -------------------------------------
if __name__ == "__main__":
    root = jax.random.PRNGKey(0)
    k_x, k_enc, k_old, k_dec = jax.random.split(root, 4)

    # user_ratings: strictly positive so the L2 row-norm is never zero.
    x = jax.random.uniform(k_x, (BATCH, INPUT_DIM), jnp.float32,
                           minval=0.05, maxval=1.0)

    enc_p = init_encoder_params(k_enc, INPUT_DIM, HIDDEN_DIM, LATENT_DIM)
    old_p = init_encoder_params(k_old, INPUT_DIM, HIDDEN_DIM, LATENT_DIM)  # prior.encoder_old
    dec_w, dec_b = _init_linear(k_dec, LATENT_DIM, INPUT_DIM)              # decoder
    dec_w = dec_w.astype(jnp.bfloat16)

    fused = build_fused_params(enc_p, old_p)

    out = vae_forward(x, *fused, dec_w, dec_b)
    out = jax.block_until_ready(out)

    # pure-JAX reference (un-fused parameters, same bf16-matmul math)
    ref = jax.block_until_ready(_losses_ref(x, enc_p, old_p, dec_w, dec_b))

    assert np.all(np.isfinite(np.asarray(out))), "non-finite kernel output"
    np.testing.assert_allclose(np.asarray(out), np.asarray(ref),
                               rtol=2e-2, atol=1e-2)
    print("KERNEL_OK")
</pallas_src>

<mosaic_0001>
module attributes {stable_mosaic.version = 11 : i64} {
  func.func @vae_kernel(%arg0: i32, %arg1: memref<128x256xf32, #tpu.memory_space<vmem>>, %arg2: memref<5x256x256xbf16, #tpu.memory_space<vmem>>, %arg3: memref<5x1x256xf32, #tpu.memory_space<vmem>>, %arg4: memref<5x1x256xf32, #tpu.memory_space<vmem>>, %arg5: memref<5x1x256xf32, #tpu.memory_space<vmem>>, %arg6: memref<256x256xbf16, #tpu.memory_space<vmem>>, %arg7: memref<1x256xf32, #tpu.memory_space<vmem>>, %arg8: memref<64x256xbf16, #tpu.memory_space<vmem>>, %arg9: memref<1x256xf32, #tpu.memory_space<vmem>>, %arg10: memref<128x2xf32, #tpu.memory_space<vmem>>) attributes {dimension_semantics = [#tpu.dimension_semantics<parallel>], iteration_bounds = array<i64: 2>, scalar_prefetch = 0 : i64, scratch_operands = 0 : i64, tpu.core_type = #tpu.core_type<tc>, window_params = [{transform_indices = @transform_0, window_bounds = array<i64: 128, 256>}, {pipeline_mode = #tpu.pipeline_mode<synchronous>, transform_indices = @transform_1, window_bounds = array<i64: 5, 256, 256>}, {pipeline_mode = #tpu.pipeline_mode<synchronous>, transform_indices = @transform_2, window_bounds = array<i64: 5, 1, 256>}, {pipeline_mode = #tpu.pipeline_mode<synchronous>, transform_indices = @transform_3, window_bounds = array<i64: 5, 1, 256>}, {pipeline_mode = #tpu.pipeline_mode<synchronous>, transform_indices = @transform_4, window_bounds = array<i64: 5, 1, 256>}, {pipeline_mode = #tpu.pipeline_mode<synchronous>, transform_indices = @transform_5, window_bounds = array<i64: 256, 256>}, {pipeline_mode = #tpu.pipeline_mode<synchronous>, transform_indices = @transform_6, window_bounds = array<i64: 1, 256>}, {pipeline_mode = #tpu.pipeline_mode<synchronous>, transform_indices = @transform_7, window_bounds = array<i64: 64, 256>}, {pipeline_mode = #tpu.pipeline_mode<synchronous>, transform_indices = @transform_8, window_bounds = array<i64: 1, 256>}, {transform_indices = @transform_9, window_bounds = array<i64: 128, 2>}]} {
    %c0 = arith.constant 0 : index
    %c0_0 = arith.constant 0 : index
    %0 = vector.load %arg1[%c0, %c0_0] : memref<128x256xf32, #tpu.memory_space<vmem>>, vector<128x256xf32>
    %1 = arith.mulf %0, %0 : vector<128x256xf32>
    %cst = arith.constant dense<0.000000e+00> : vector<128xf32>
    %2 = vector.multi_reduction <add>, %1, %cst [1] : vector<128x256xf32> to vector<128xf32>
    %3 = vector.shape_cast %2 : vector<128xf32> to vector<128x1xf32>
    %cst_1 = arith.constant 1.000000e-24 : f32
    %4 = vector.broadcast %cst_1 : f32 to vector<128x1xf32>
    %5 = arith.maximumf %3, %4 : vector<128x1xf32>
    %6 = math.rsqrt %5 : vector<128x1xf32>
    %7 = vector.broadcast %6 : vector<128x1xf32> to vector<128x256xf32>
    %8 = arith.mulf %0, %7 : vector<128x256xf32>
    %c0_2 = arith.constant 0 : index
    %c0_3 = arith.constant 0 : index
    %c0_4 = arith.constant 0 : index
    %9 = vector.load %arg2[%c0_2, %c0_3, %c0_4] : memref<5x256x256xbf16, #tpu.memory_space<vmem>>, vector<1x256x256xbf16>
    %10 = vector.shape_cast %9 : vector<1x256x256xbf16> to vector<256x256xbf16>
    %c0_5 = arith.constant 0 : index
    %c0_6 = arith.constant 0 : index
    %c0_7 = arith.constant 0 : index
    %11 = vector.load %arg3[%c0_5, %c0_6, %c0_7] : memref<5x1x256xf32, #tpu.memory_space<vmem>>, vector<1x1x256xf32>
    %12 = vector.shape_cast %11 : vector<1x1x256xf32> to vector<1x256xf32>
    %13 = arith.truncf %8 : vector<128x256xf32> to vector<128x256xbf16>
    %cst_8 = arith.constant dense<0.000000e+00> : vector<128x256xf32>
    %14 = tpu.matmul %13, %10, %cst_8 {dimension_numbers = #tpu.dot_dimension_numbers<[1], [0], [0], [1], [0, 0, 1, 1], [], []>} : vector<128x256xbf16>, vector<256x256xbf16>, vector<128x256xf32> -> vector<128x256xf32>
    %15 = vector.broadcast %12 : vector<1x256xf32> to vector<128x256xf32>
    %16 = arith.addf %14, %15 : vector<128x256xf32>
    %cst_9 = arith.constant 5.000000e-01 : f32
    %17 = vector.broadcast %cst_9 : f32 to vector<128x256xf32>
    %18 = arith.mulf %17, %16 : vector<128x256xf32>
    %19 = math.tanh %18 : vector<128x256xf32>
    %cst_10 = arith.constant 5.000000e-01 : f32
    %20 = vector.broadcast %cst_10 : f32 to vector<128x256xf32>
    %21 = arith.mulf %20, %19 : vector<128x256xf32>
    %cst_11 = arith.constant 5.000000e-01 : f32
    %22 = vector.broadcast %cst_11 : f32 to vector<128x256xf32>
    %23 = arith.addf %21, %22 : vector<128x256xf32>
    %24 = arith.mulf %16, %23 : vector<128x256xf32>
    %25 = vector.extract_strided_slice %24 {offsets = [0, 0], sizes = [128, 128], strides = [1, 1]} : vector<128x256xf32> to vector<128x128xf32>
    %cst_12 = arith.constant dense<0.000000e+00> : vector<128xf32>
    %26 = vector.multi_reduction <add>, %25, %cst_12 [1] : vector<128x128xf32> to vector<128xf32>
    %27 = vector.shape_cast %26 : vector<128xf32> to vector<128x1xf32>
    %cst_13 = arith.constant 1.280000e+02 : f32
    %28 = vector.broadcast %cst_13 : f32 to vector<128x1xf32>
    %29 = arith.divf %27, %28 : vector<128x1xf32>
    %30 = vector.broadcast %29 : vector<128x1xf32> to vector<128x128xf32>
    %31 = arith.subf %25, %30 : vector<128x128xf32>
    %32 = arith.mulf %31, %31 : vector<128x128xf32>
    %cst_14 = arith.constant dense<0.000000e+00> : vector<128xf32>
    %33 = vector.multi_reduction <add>, %32, %cst_14 [1] : vector<128x128xf32> to vector<128xf32>
    %34 = vector.shape_cast %33 : vector<128xf32> to vector<128x1xf32>
    %cst_15 = arith.constant 1.280000e+02 : f32
    %35 = vector.broadcast %cst_15 : f32 to vector<128x1xf32>
    %36 = arith.divf %34, %35 : vector<128x1xf32>
    %cst_16 = arith.constant 1.000000e-01 : f32
    %37 = vector.broadcast %cst_16 : f32 to vector<128x1xf32>
    %38 = arith.addf %36, %37 : vector<128x1xf32>
    %39 = math.rsqrt %38 : vector<128x1xf32>
    %40 = vector.broadcast %39 : vector<128x1xf32> to vector<128x128xf32>
    %41 = arith.mulf %31, %40 : vector<128x128xf32>
    %42 = vector.extract_strided_slice %24 {offsets = [0, 128], sizes = [128, 128], strides = [1, 1]} : vector<128x256xf32> to vector<128x128xf32>
    %cst_17 = arith.constant dense<0.000000e+00> : vector<128xf32>
    %43 = vector.multi_reduction <add>, %42, %cst_17 [1] : vector<128x128xf32> to vector<128xf32>
    %44 = vector.shape_cast %43 : vector<128xf32> to vector<128x1xf32>
    %cst_18 = arith.constant 1.280000e+02 : f32
    %45 = vector.broadcast %cst_18 : f32 to vector<128x1xf32>
    %46 = arith.divf %44, %45 : vector<128x1xf32>
    %47 = vector.broadcast %46 : vector<128x1xf32> to vector<128x128xf32>
    %48 = arith.subf %42, %47 : vector<128x128xf32>
    %49 = arith.mulf %48, %48 : vector<128x128xf32>
    %cst_19 = arith.constant dense<0.000000e+00> : vector<128xf32>
    %50 = vector.multi_reduction <add>, %49, %cst_19 [1] : vector<128x128xf32> to vector<128xf32>
    %51 = vector.shape_cast %50 : vector<128xf32> to vector<128x1xf32>
    %cst_20 = arith.constant 1.280000e+02 : f32
    %52 = vector.broadcast %cst_20 : f32 to vector<128x1xf32>
    %53 = arith.divf %51, %52 : vector<128x1xf32>
    %cst_21 = arith.constant 1.000000e-01 : f32
    %54 = vector.broadcast %cst_21 : f32 to vector<128x1xf32>
    %55 = arith.addf %53, %54 : vector<128x1xf32>
    %56 = math.rsqrt %55 : vector<128x1xf32>
    %57 = vector.broadcast %56 : vector<128x1xf32> to vector<128x128xf32>
    %58 = arith.mulf %48, %57 : vector<128x128xf32>
    %59 = tpu.concatenate %41, %58 in 1 : vector<128x128xf32>, vector<128x128xf32> -> vector<128x256xf32>
    %c0_22 = arith.constant 0 : index
    %c0_23 = arith.constant 0 : index
    %c0_24 = arith.constant 0 : index
    %60 = vector.load %arg4[%c0_22, %c0_23, %c0_24] : memref<5x1x256xf32, #tpu.memory_space<vmem>>, vector<1x1x256xf32>
    %61 = vector.shape_cast %60 : vector<1x1x256xf32> to vector<1x256xf32>
    %62 = vector.broadcast %61 : vector<1x256xf32> to vector<128x256xf32>
    %63 = arith.mulf %59, %62 : vector<128x256xf32>
    %c0_25 = arith.constant 0 : index
    %c0_26 = arith.constant 0 : index
    %c0_27 = arith.constant 0 : index
    %64 = vector.load %arg5[%c0_25, %c0_26, %c0_27] : memref<5x1x256xf32, #tpu.memory_space<vmem>>, vector<1x1x256xf32>
    %65 = vector.shape_cast %64 : vector<1x1x256xf32> to vector<1x256xf32>
    %66 = vector.broadcast %65 : vector<1x256xf32> to vector<128x256xf32>
    %67 = arith.addf %63, %66 : vector<128x256xf32>
    %c1 = arith.constant 1 : index
    %c0_28 = arith.constant 0 : index
    %c0_29 = arith.constant 0 : index
    %68 = vector.load %arg2[%c1, %c0_28, %c0_29] : memref<5x256x256xbf16, #tpu.memory_space<vmem>>, vector<1x256x256xbf16>
    %69 = vector.shape_cast %68 : vector<1x256x256xbf16> to vector<256x256xbf16>
    %c1_30 = arith.constant 1 : index
    %c0_31 = arith.constant 0 : index
    %c0_32 = arith.constant 0 : index
    %70 = vector.load %arg3[%c1_30, %c0_31, %c0_32] : memref<5x1x256xf32, #tpu.memory_space<vmem>>, vector<1x1x256xf32>
    %71 = vector.shape_cast %70 : vector<1x1x256xf32> to vector<1x256xf32>
    %72 = arith.truncf %67 : vector<128x256xf32> to vector<128x256xbf16>
    %cst_33 = arith.constant dense<0.000000e+00> : vector<128x256xf32>
    %73 = tpu.matmul %72, %69, %cst_33 {dimension_numbers = #tpu.dot_dimension_numbers<[1], [0], [0], [1], [0, 0, 1, 1], [], []>} : vector<128x256xbf16>, vector<256x256xbf16>, vector<128x256xf32> -> vector<128x256xf32>
    %74 = vector.broadcast %71 : vector<1x256xf32> to vector<128x256xf32>
    %75 = arith.addf %73, %74 : vector<128x256xf32>
    %76 = arith.addf %75, %67 : vector<128x256xf32>
    %cst_34 = arith.constant 5.000000e-01 : f32
    %77 = vector.broadcast %cst_34 : f32 to vector<128x256xf32>
    %78 = arith.mulf %77, %76 : vector<128x256xf32>
    %79 = math.tanh %78 : vector<128x256xf32>
    %cst_35 = arith.constant 5.000000e-01 : f32
    %80 = vector.broadcast %cst_35 : f32 to vector<128x256xf32>
    %81 = arith.mulf %80, %79 : vector<128x256xf32>
    %cst_36 = arith.constant 5.000000e-01 : f32
    %82 = vector.broadcast %cst_36 : f32 to vector<128x256xf32>
    %83 = arith.addf %81, %82 : vector<128x256xf32>
    %84 = arith.mulf %76, %83 : vector<128x256xf32>
    %85 = vector.extract_strided_slice %84 {offsets = [0, 0], sizes = [128, 128], strides = [1, 1]} : vector<128x256xf32> to vector<128x128xf32>
    %cst_37 = arith.constant dense<0.000000e+00> : vector<128xf32>
    %86 = vector.multi_reduction <add>, %85, %cst_37 [1] : vector<128x128xf32> to vector<128xf32>
    %87 = vector.shape_cast %86 : vector<128xf32> to vector<128x1xf32>
    %cst_38 = arith.constant 1.280000e+02 : f32
    %88 = vector.broadcast %cst_38 : f32 to vector<128x1xf32>
    %89 = arith.divf %87, %88 : vector<128x1xf32>
    %90 = vector.broadcast %89 : vector<128x1xf32> to vector<128x128xf32>
    %91 = arith.subf %85, %90 : vector<128x128xf32>
    %92 = arith.mulf %91, %91 : vector<128x128xf32>
    %cst_39 = arith.constant dense<0.000000e+00> : vector<128xf32>
    %93 = vector.multi_reduction <add>, %92, %cst_39 [1] : vector<128x128xf32> to vector<128xf32>
    %94 = vector.shape_cast %93 : vector<128xf32> to vector<128x1xf32>
    %cst_40 = arith.constant 1.280000e+02 : f32
    %95 = vector.broadcast %cst_40 : f32 to vector<128x1xf32>
    %96 = arith.divf %94, %95 : vector<128x1xf32>
    %cst_41 = arith.constant 1.000000e-01 : f32
    %97 = vector.broadcast %cst_41 : f32 to vector<128x1xf32>
    %98 = arith.addf %96, %97 : vector<128x1xf32>
    %99 = math.rsqrt %98 : vector<128x1xf32>
    %100 = vector.broadcast %99 : vector<128x1xf32> to vector<128x128xf32>
    %101 = arith.mulf %91, %100 : vector<128x128xf32>
    %102 = vector.extract_strided_slice %84 {offsets = [0, 128], sizes = [128, 128], strides = [1, 1]} : vector<128x256xf32> to vector<128x128xf32>
    %cst_42 = arith.constant dense<0.000000e+00> : vector<128xf32>
    %103 = vector.multi_reduction <add>, %102, %cst_42 [1] : vector<128x128xf32> to vector<128xf32>
    %104 = vector.shape_cast %103 : vector<128xf32> to vector<128x1xf32>
    %cst_43 = arith.constant 1.280000e+02 : f32
    %105 = vector.broadcast %cst_43 : f32 to vector<128x1xf32>
    %106 = arith.divf %104, %105 : vector<128x1xf32>
    %107 = vector.broadcast %106 : vector<128x1xf32> to vector<128x128xf32>
    %108 = arith.subf %102, %107 : vector<128x128xf32>
    %109 = arith.mulf %108, %108 : vector<128x128xf32>
    %cst_44 = arith.constant dense<0.000000e+00> : vector<128xf32>
    %110 = vector.multi_reduction <add>, %109, %cst_44 [1] : vector<128x128xf32> to vector<128xf32>
    %111 = vector.shape_cast %110 : vector<128xf32> to vector<128x1xf32>
    %cst_45 = arith.constant 1.280000e+02 : f32
    %112 = vector.broadcast %cst_45 : f32 to vector<128x1xf32>
    %113 = arith.divf %111, %112 : vector<128x1xf32>
    %cst_46 = arith.constant 1.000000e-01 : f32
    %114 = vector.broadcast %cst_46 : f32 to vector<128x1xf32>
    %115 = arith.addf %113, %114 : vector<128x1xf32>
    %116 = math.rsqrt %115 : vector<128x1xf32>
    %117 = vector.broadcast %116 : vector<128x1xf32> to vector<128x128xf32>
    %118 = arith.mulf %108, %117 : vector<128x128xf32>
    %119 = tpu.concatenate %101, %118 in 1 : vector<128x128xf32>, vector<128x128xf32> -> vector<128x256xf32>
    %c1_47 = arith.constant 1 : index
    %c0_48 = arith.constant 0 : index
    %c0_49 = arith.constant 0 : index
    %120 = vector.load %arg4[%c1_47, %c0_48, %c0_49] : memref<5x1x256xf32, #tpu.memory_space<vmem>>, vector<1x1x256xf32>
    %121 = vector.shape_cast %120 : vector<1x1x256xf32> to vector<1x256xf32>
    %122 = vector.broadcast %121 : vector<1x256xf32> to vector<128x256xf32>
    %123 = arith.mulf %119, %122 : vector<128x256xf32>
    %c1_50 = arith.constant 1 : index
    %c0_51 = arith.constant 0 : index
    %c0_52 = arith.constant 0 : index
    %124 = vector.load %arg5[%c1_50, %c0_51, %c0_52] : memref<5x1x256xf32, #tpu.memory_space<vmem>>, vector<1x1x256xf32>
    %125 = vector.shape_cast %124 : vector<1x1x256xf32> to vector<1x256xf32>
    %126 = vector.broadcast %125 : vector<1x256xf32> to vector<128x256xf32>
    %127 = arith.addf %123, %126 : vector<128x256xf32>
    %128 = arith.addf %67, %127 : vector<128x256xf32>
    %c2 = arith.constant 2 : index
    %c0_53 = arith.constant 0 : index
    %c0_54 = arith.constant 0 : index
    %129 = vector.load %arg2[%c2, %c0_53, %c0_54] : memref<5x256x256xbf16, #tpu.memory_space<vmem>>, vector<1x256x256xbf16>
    %130 = vector.shape_cast %129 : vector<1x256x256xbf16> to vector<256x256xbf16>
    %c2_55 = arith.constant 2 : index
    %c0_56 = arith.constant 0 : index
    %c0_57 = arith.constant 0 : index
    %131 = vector.load %arg3[%c2_55, %c0_56, %c0_57] : memref<5x1x256xf32, #tpu.memory_space<vmem>>, vector<1x1x256xf32>
    %132 = vector.shape_cast %131 : vector<1x1x256xf32> to vector<1x256xf32>
    %133 = arith.truncf %127 : vector<128x256xf32> to vector<128x256xbf16>
    %cst_58 = arith.constant dense<0.000000e+00> : vector<128x256xf32>
    %134 = tpu.matmul %133, %130, %cst_58 {dimension_numbers = #tpu.dot_dimension_numbers<[1], [0], [0], [1], [0, 0, 1, 1], [], []>} : vector<128x256xbf16>, vector<256x256xbf16>, vector<128x256xf32> -> vector<128x256xf32>
    %135 = vector.broadcast %132 : vector<1x256xf32> to vector<128x256xf32>
    %136 = arith.addf %134, %135 : vector<128x256xf32>
    %137 = arith.addf %136, %128 : vector<128x256xf32>
    %cst_59 = arith.constant 5.000000e-01 : f32
    %138 = vector.broadcast %cst_59 : f32 to vector<128x256xf32>
    %139 = arith.mulf %138, %137 : vector<128x256xf32>
    %140 = math.tanh %139 : vector<128x256xf32>
    %cst_60 = arith.constant 5.000000e-01 : f32
    %141 = vector.broadcast %cst_60 : f32 to vector<128x256xf32>
    %142 = arith.mulf %141, %140 : vector<128x256xf32>
    %cst_61 = arith.constant 5.000000e-01 : f32
    %143 = vector.broadcast %cst_61 : f32 to vector<128x256xf32>
    %144 = arith.addf %142, %143 : vector<128x256xf32>
    %145 = arith.mulf %137, %144 : vector<128x256xf32>
    %146 = vector.extract_strided_slice %145 {offsets = [0, 0], sizes = [128, 128], strides = [1, 1]} : vector<128x256xf32> to vector<128x128xf32>
    %cst_62 = arith.constant dense<0.000000e+00> : vector<128xf32>
    %147 = vector.multi_reduction <add>, %146, %cst_62 [1] : vector<128x128xf32> to vector<128xf32>
    %148 = vector.shape_cast %147 : vector<128xf32> to vector<128x1xf32>
    %cst_63 = arith.constant 1.280000e+02 : f32
    %149 = vector.broadcast %cst_63 : f32 to vector<128x1xf32>
    %150 = arith.divf %148, %149 : vector<128x1xf32>
    %151 = vector.broadcast %150 : vector<128x1xf32> to vector<128x128xf32>
    %152 = arith.subf %146, %151 : vector<128x128xf32>
    %153 = arith.mulf %152, %152 : vector<128x128xf32>
    %cst_64 = arith.constant dense<0.000000e+00> : vector<128xf32>
    %154 = vector.multi_reduction <add>, %153, %cst_64 [1] : vector<128x128xf32> to vector<128xf32>
    %155 = vector.shape_cast %154 : vector<128xf32> to vector<128x1xf32>
    %cst_65 = arith.constant 1.280000e+02 : f32
    %156 = vector.broadcast %cst_65 : f32 to vector<128x1xf32>
    %157 = arith.divf %155, %156 : vector<128x1xf32>
    %cst_66 = arith.constant 1.000000e-01 : f32
    %158 = vector.broadcast %cst_66 : f32 to vector<128x1xf32>
    %159 = arith.addf %157, %158 : vector<128x1xf32>
    %160 = math.rsqrt %159 : vector<128x1xf32>
    %161 = vector.broadcast %160 : vector<128x1xf32> to vector<128x128xf32>
    %162 = arith.mulf %152, %161 : vector<128x128xf32>
    %163 = vector.extract_strided_slice %145 {offsets = [0, 128], sizes = [128, 128], strides = [1, 1]} : vector<128x256xf32> to vector<128x128xf32>
    %cst_67 = arith.constant dense<0.000000e+00> : vector<128xf32>
    %164 = vector.multi_reduction <add>, %163, %cst_67 [1] : vector<128x128xf32> to vector<128xf32>
    %165 = vector.shape_cast %164 : vector<128xf32> to vector<128x1xf32>
    %cst_68 = arith.constant 1.280000e+02 : f32
    %166 = vector.broadcast %cst_68 : f32 to vector<128x1xf32>
    %167 = arith.divf %165, %166 : vector<128x1xf32>
    %168 = vector.broadcast %167 : vector<128x1xf32> to vector<128x128xf32>
    %169 = arith.subf %163, %168 : vector<128x128xf32>
    %170 = arith.mulf %169, %169 : vector<128x128xf32>
    %cst_69 = arith.constant dense<0.000000e+00> : vector<128xf32>
    %171 = vector.multi_reduction <add>, %170, %cst_69 [1] : vector<128x128xf32> to vector<128xf32>
    %172 = vector.shape_cast %171 : vector<128xf32> to vector<128x1xf32>
    %cst_70 = arith.constant 1.280000e+02 : f32
    %173 = vector.broadcast %cst_70 : f32 to vector<128x1xf32>
    %174 = arith.divf %172, %173 : vector<128x1xf32>
    %cst_71 = arith.constant 1.000000e-01 : f32
    %175 = vector.broadcast %cst_71 : f32 to vector<128x1xf32>
    %176 = arith.addf %174, %175 : vector<128x1xf32>
    %177 = math.rsqrt %176 : vector<128x1xf32>
    %178 = vector.broadcast %177 : vector<128x1xf32> to vector<128x128xf32>
    %179 = arith.mulf %169, %178 : vector<128x128xf32>
    %180 = tpu.concatenate %162, %179 in 1 : vector<128x128xf32>, vector<128x128xf32> -> vector<128x256xf32>
    %c2_72 = arith.constant 2 : index
    %c0_73 = arith.constant 0 : index
    %c0_74 = arith.constant 0 : index
    %181 = vector.load %arg4[%c2_72, %c0_73, %c0_74] : memref<5x1x256xf32, #tpu.memory_space<vmem>>, vector<1x1x256xf32>
    %182 = vector.shape_cast %181 : vector<1x1x256xf32> to vector<1x256xf32>
    %183 = vector.broadcast %182 : vector<1x256xf32> to vector<128x256xf32>
    %184 = arith.mulf %180, %183 : vector<128x256xf32>
    %c2_75 = arith.constant 2 : index
    %c0_76 = arith.constant 0 : index
    %c0_77 = arith.constant 0 : index
    %185 = vector.load %arg5[%c2_75, %c0_76, %c0_77] : memref<5x1x256xf32, #tpu.memory_space<vmem>>, vector<1x1x256xf32>
    %186 = vector.shape_cast %185 : vector<1x1x256xf32> to vector<1x256xf32>
    %187 = vector.broadcast %186 : vector<1x256xf32> to vector<128x256xf32>
    %188 = arith.addf %184, %187 : vector<128x256xf32>
    %189 = arith.addf %128, %188 : vector<128x256xf32>
    %c3 = arith.constant 3 : index
    %c0_78 = arith.constant 0 : index
    %c0_79 = arith.constant 0 : index
    %190 = vector.load %arg2[%c3, %c0_78, %c0_79] : memref<5x256x256xbf16, #tpu.memory_space<vmem>>, vector<1x256x256xbf16>
    %191 = vector.shape_cast %190 : vector<1x256x256xbf16> to vector<256x256xbf16>
    %c3_80 = arith.constant 3 : index
    %c0_81 = arith.constant 0 : index
    %c0_82 = arith.constant 0 : index
    %192 = vector.load %arg3[%c3_80, %c0_81, %c0_82] : memref<5x1x256xf32, #tpu.memory_space<vmem>>, vector<1x1x256xf32>
    %193 = vector.shape_cast %192 : vector<1x1x256xf32> to vector<1x256xf32>
    %194 = arith.truncf %188 : vector<128x256xf32> to vector<128x256xbf16>
    %cst_83 = arith.constant dense<0.000000e+00> : vector<128x256xf32>
    %195 = tpu.matmul %194, %191, %cst_83 {dimension_numbers = #tpu.dot_dimension_numbers<[1], [0], [0], [1], [0, 0, 1, 1], [], []>} : vector<128x256xbf16>, vector<256x256xbf16>, vector<128x256xf32> -> vector<128x256xf32>
    %196 = vector.broadcast %193 : vector<1x256xf32> to vector<128x256xf32>
    %197 = arith.addf %195, %196 : vector<128x256xf32>
    %198 = arith.addf %197, %189 : vector<128x256xf32>
    %cst_84 = arith.constant 5.000000e-01 : f32
    %199 = vector.broadcast %cst_84 : f32 to vector<128x256xf32>
    %200 = arith.mulf %199, %198 : vector<128x256xf32>
    %201 = math.tanh %200 : vector<128x256xf32>
    %cst_85 = arith.constant 5.000000e-01 : f32
    %202 = vector.broadcast %cst_85 : f32 to vector<128x256xf32>
    %203 = arith.mulf %202, %201 : vector<128x256xf32>
    %cst_86 = arith.constant 5.000000e-01 : f32
    %204 = vector.broadcast %cst_86 : f32 to vector<128x256xf32>
    %205 = arith.addf %203, %204 : vector<128x256xf32>
    %206 = arith.mulf %198, %205 : vector<128x256xf32>
    %207 = vector.extract_strided_slice %206 {offsets = [0, 0], sizes = [128, 128], strides = [1, 1]} : vector<128x256xf32> to vector<128x128xf32>
    %cst_87 = arith.constant dense<0.000000e+00> : vector<128xf32>
    %208 = vector.multi_reduction <add>, %207, %cst_87 [1] : vector<128x128xf32> to vector<128xf32>
    %209 = vector.shape_cast %208 : vector<128xf32> to vector<128x1xf32>
    %cst_88 = arith.constant 1.280000e+02 : f32
    %210 = vector.broadcast %cst_88 : f32 to vector<128x1xf32>
    %211 = arith.divf %209, %210 : vector<128x1xf32>
    %212 = vector.broadcast %211 : vector<128x1xf32> to vector<128x128xf32>
    %213 = arith.subf %207, %212 : vector<128x128xf32>
    %214 = arith.mulf %213, %213 : vector<128x128xf32>
    %cst_89 = arith.constant dense<0.000000e+00> : vector<128xf32>
    %215 = vector.multi_reduction <add>, %214, %cst_89 [1] : vector<128x128xf32> to vector<128xf32>
    %216 = vector.shape_cast %215 : vector<128xf32> to vector<128x1xf32>
    %cst_90 = arith.constant 1.280000e+02 : f32
    %217 = vector.broadcast %cst_90 : f32 to vector<128x1xf32>
    %218 = arith.divf %216, %217 : vector<128x1xf32>
    %cst_91 = arith.constant 1.000000e-01 : f32
    %219 = vector.broadcast %cst_91 : f32 to vector<128x1xf32>
    %220 = arith.addf %218, %219 : vector<128x1xf32>
    %221 = math.rsqrt %220 : vector<128x1xf32>
    %222 = vector.broadcast %221 : vector<128x1xf32> to vector<128x128xf32>
    %223 = arith.mulf %213, %222 : vector<128x128xf32>
    %224 = vector.extract_strided_slice %206 {offsets = [0, 128], sizes = [128, 128], strides = [1, 1]} : vector<128x256xf32> to vector<128x128xf32>
    %cst_92 = arith.constant dense<0.000000e+00> : vector<128xf32>
    %225 = vector.multi_reduction <add>, %224, %cst_92 [1] : vector<128x128xf32> to vector<128xf32>
    %226 = vector.shape_cast %225 : vector<128xf32> to vector<128x1xf32>
    %cst_93 = arith.constant 1.280000e+02 : f32
    %227 = vector.broadcast %cst_93 : f32 to vector<128x1xf32>
    %228 = arith.divf %226, %227 : vector<128x1xf32>
    %229 = vector.broadcast %228 : vector<128x1xf32> to vector<128x128xf32>
    %230 = arith.subf %224, %229 : vector<128x128xf32>
    %231 = arith.mulf %230, %230 : vector<128x128xf32>
    %cst_94 = arith.constant dense<0.000000e+00> : vector<128xf32>
    %232 = vector.multi_reduction <add>, %231, %cst_94 [1] : vector<128x128xf32> to vector<128xf32>
    %233 = vector.shape_cast %232 : vector<128xf32> to vector<128x1xf32>
    %cst_95 = arith.constant 1.280000e+02 : f32
    %234 = vector.broadcast %cst_95 : f32 to vector<128x1xf32>
    %235 = arith.divf %233, %234 : vector<128x1xf32>
    %cst_96 = arith.constant 1.000000e-01 : f32
    %236 = vector.broadcast %cst_96 : f32 to vector<128x1xf32>
    %237 = arith.addf %235, %236 : vector<128x1xf32>
    %238 = math.rsqrt %237 : vector<128x1xf32>
    %239 = vector.broadcast %238 : vector<128x1xf32> to vector<128x128xf32>
    %240 = arith.mulf %230, %239 : vector<128x128xf32>
    %241 = tpu.concatenate %223, %240 in 1 : vector<128x128xf32>, vector<128x128xf32> -> vector<128x256xf32>
    %c3_97 = arith.constant 3 : index
    %c0_98 = arith.constant 0 : index
    %c0_99 = arith.constant 0 : index
    %242 = vector.load %arg4[%c3_97, %c0_98, %c0_99] : memref<5x1x256xf32, #tpu.memory_space<vmem>>, vector<1x1x256xf32>
    %243 = vector.shape_cast %242 : vector<1x1x256xf32> to vector<1x256xf32>
    %244 = vector.broadcast %243 : vector<1x256xf32> to vector<128x256xf32>
    %245 = arith.mulf %241, %244 : vector<128x256xf32>
    %c3_100 = arith.constant 3 : index
    %c0_101 = arith.constant 0 : index
    %c0_102 = arith.constant 0 : index
    %246 = vector.load %arg5[%c3_100, %c0_101, %c0_102] : memref<5x1x256xf32, #tpu.memory_space<vmem>>, vector<1x1x256xf32>
    %247 = vector.shape_cast %246 : vector<1x1x256xf32> to vector<1x256xf32>
    %248 = vector.broadcast %247 : vector<1x256xf32> to vector<128x256xf32>
    %249 = arith.addf %245, %248 : vector<128x256xf32>
    %250 = arith.addf %189, %249 : vector<128x256xf32>
    %c4 = arith.constant 4 : index
    %c0_103 = arith.constant 0 : index
    %c0_104 = arith.constant 0 : index
    %251 = vector.load %arg2[%c4, %c0_103, %c0_104] : memref<5x256x256xbf16, #tpu.memory_space<vmem>>, vector<1x256x256xbf16>
    %252 = vector.shape_cast %251 : vector<1x256x256xbf16> to vector<256x256xbf16>
    %c4_105 = arith.constant 4 : index
    %c0_106 = arith.constant 0 : index
    %c0_107 = arith.constant 0 : index
    %253 = vector.load %arg3[%c4_105, %c0_106, %c0_107] : memref<5x1x256xf32, #tpu.memory_space<vmem>>, vector<1x1x256xf32>
    %254 = vector.shape_cast %253 : vector<1x1x256xf32> to vector<1x256xf32>
    %255 = arith.truncf %249 : vector<128x256xf32> to vector<128x256xbf16>
    %cst_108 = arith.constant dense<0.000000e+00> : vector<128x256xf32>
    %256 = tpu.matmul %255, %252, %cst_108 {dimension_numbers = #tpu.dot_dimension_numbers<[1], [0], [0], [1], [0, 0, 1, 1], [], []>} : vector<128x256xbf16>, vector<256x256xbf16>, vector<128x256xf32> -> vector<128x256xf32>
    %257 = vector.broadcast %254 : vector<1x256xf32> to vector<128x256xf32>
    %258 = arith.addf %256, %257 : vector<128x256xf32>
    %259 = arith.addf %258, %250 : vector<128x256xf32>
    %cst_109 = arith.constant 5.000000e-01 : f32
    %260 = vector.broadcast %cst_109 : f32 to vector<128x256xf32>
    %261 = arith.mulf %260, %259 : vector<128x256xf32>
    %262 = math.tanh %261 : vector<128x256xf32>
    %cst_110 = arith.constant 5.000000e-01 : f32
    %263 = vector.broadcast %cst_110 : f32 to vector<128x256xf32>
    %264 = arith.mulf %263, %262 : vector<128x256xf32>
    %cst_111 = arith.constant 5.000000e-01 : f32
    %265 = vector.broadcast %cst_111 : f32 to vector<128x256xf32>
    %266 = arith.addf %264, %265 : vector<128x256xf32>
    %267 = arith.mulf %259, %266 : vector<128x256xf32>
    %268 = vector.extract_strided_slice %267 {offsets = [0, 0], sizes = [128, 128], strides = [1, 1]} : vector<128x256xf32> to vector<128x128xf32>
    %cst_112 = arith.constant dense<0.000000e+00> : vector<128xf32>
    %269 = vector.multi_reduction <add>, %268, %cst_112 [1] : vector<128x128xf32> to vector<128xf32>
    %270 = vector.shape_cast %269 : vector<128xf32> to vector<128x1xf32>
    %cst_113 = arith.constant 1.280000e+02 : f32
    %271 = vector.broadcast %cst_113 : f32 to vector<128x1xf32>
    %272 = arith.divf %270, %271 : vector<128x1xf32>
    %273 = vector.broadcast %272 : vector<128x1xf32> to vector<128x128xf32>
    %274 = arith.subf %268, %273 : vector<128x128xf32>
    %275 = arith.mulf %274, %274 : vector<128x128xf32>
    %cst_114 = arith.constant dense<0.000000e+00> : vector<128xf32>
    %276 = vector.multi_reduction <add>, %275, %cst_114 [1] : vector<128x128xf32> to vector<128xf32>
    %277 = vector.shape_cast %276 : vector<128xf32> to vector<128x1xf32>
    %cst_115 = arith.constant 1.280000e+02 : f32
    %278 = vector.broadcast %cst_115 : f32 to vector<128x1xf32>
    %279 = arith.divf %277, %278 : vector<128x1xf32>
    %cst_116 = arith.constant 1.000000e-01 : f32
    %280 = vector.broadcast %cst_116 : f32 to vector<128x1xf32>
    %281 = arith.addf %279, %280 : vector<128x1xf32>
    %282 = math.rsqrt %281 : vector<128x1xf32>
    %283 = vector.broadcast %282 : vector<128x1xf32> to vector<128x128xf32>
    %284 = arith.mulf %274, %283 : vector<128x128xf32>
    %285 = vector.extract_strided_slice %267 {offsets = [0, 128], sizes = [128, 128], strides = [1, 1]} : vector<128x256xf32> to vector<128x128xf32>
    %cst_117 = arith.constant dense<0.000000e+00> : vector<128xf32>
    %286 = vector.multi_reduction <add>, %285, %cst_117 [1] : vector<128x128xf32> to vector<128xf32>
    %287 = vector.shape_cast %286 : vector<128xf32> to vector<128x1xf32>
    %cst_118 = arith.constant 1.280000e+02 : f32
    %288 = vector.broadcast %cst_118 : f32 to vector<128x1xf32>
    %289 = arith.divf %287, %288 : vector<128x1xf32>
    %290 = vector.broadcast %289 : vector<128x1xf32> to vector<128x128xf32>
    %291 = arith.subf %285, %290 : vector<128x128xf32>
    %292 = arith.mulf %291, %291 : vector<128x128xf32>
    %cst_119 = arith.constant dense<0.000000e+00> : vector<128xf32>
    %293 = vector.multi_reduction <add>, %292, %cst_119 [1] : vector<128x128xf32> to vector<128xf32>
    %294 = vector.shape_cast %293 : vector<128xf32> to vector<128x1xf32>
    %cst_120 = arith.constant 1.280000e+02 : f32
    %295 = vector.broadcast %cst_120 : f32 to vector<128x1xf32>
    %296 = arith.divf %294, %295 : vector<128x1xf32>
    %cst_121 = arith.constant 1.000000e-01 : f32
    %297 = vector.broadcast %cst_121 : f32 to vector<128x1xf32>
    %298 = arith.addf %296, %297 : vector<128x1xf32>
    %299 = math.rsqrt %298 : vector<128x1xf32>
    %300 = vector.broadcast %299 : vector<128x1xf32> to vector<128x128xf32>
    %301 = arith.mulf %291, %300 : vector<128x128xf32>
    %302 = tpu.concatenate %284, %301 in 1 : vector<128x128xf32>, vector<128x128xf32> -> vector<128x256xf32>
    %c4_122 = arith.constant 4 : index
    %c0_123 = arith.constant 0 : index
    %c0_124 = arith.constant 0 : index
    %303 = vector.load %arg4[%c4_122, %c0_123, %c0_124] : memref<5x1x256xf32, #tpu.memory_space<vmem>>, vector<1x1x256xf32>
    %304 = vector.shape_cast %303 : vector<1x1x256xf32> to vector<1x256xf32>
    %305 = vector.broadcast %304 : vector<1x256xf32> to vector<128x256xf32>
    %306 = arith.mulf %302, %305 : vector<128x256xf32>
    %c4_125 = arith.constant 4 : index
    %c0_126 = arith.constant 0 : index
    %c0_127 = arith.constant 0 : index
    %307 = vector.load %arg5[%c4_125, %c0_126, %c0_127] : memref<5x1x256xf32, #tpu.memory_space<vmem>>, vector<1x1x256xf32>
    %308 = vector.shape_cast %307 : vector<1x1x256xf32> to vector<1x256xf32>
    %309 = vector.broadcast %308 : vector<1x256xf32> to vector<128x256xf32>
    %310 = arith.addf %306, %309 : vector<128x256xf32>
    %c0_128 = arith.constant 0 : index
    %c0_129 = arith.constant 0 : index
    %311 = vector.load %arg6[%c0_128, %c0_129] : memref<256x256xbf16, #tpu.memory_space<vmem>>, vector<256x256xbf16>
    %c0_130 = arith.constant 0 : index
    %c0_131 = arith.constant 0 : index
    %312 = vector.load %arg7[%c0_130, %c0_131] : memref<1x256xf32, #tpu.memory_space<vmem>>, vector<1x256xf32>
    %313 = arith.truncf %310 : vector<128x256xf32> to vector<128x256xbf16>
    %cst_132 = arith.constant dense<0.000000e+00> : vector<128x256xf32>
    %314 = tpu.matmul %313, %311, %cst_132 {dimension_numbers = #tpu.dot_dimension_numbers<[1], [0], [0], [1], [0, 0, 1, 1], [], []>} : vector<128x256xbf16>, vector<256x256xbf16>, vector<128x256xf32> -> vector<128x256xf32>
    %315 = vector.broadcast %312 : vector<1x256xf32> to vector<128x256xf32>
    %316 = arith.addf %314, %315 : vector<128x256xf32>
    %317 = vector.extract_strided_slice %316 {offsets = [0, 0], sizes = [128, 64], strides = [1, 1]} : vector<128x256xf32> to vector<128x64xf32>
    %318 = vector.extract_strided_slice %316 {offsets = [0, 64], sizes = [128, 64], strides = [1, 1]} : vector<128x256xf32> to vector<128x64xf32>
    %319 = vector.extract_strided_slice %316 {offsets = [0, 128], sizes = [128, 64], strides = [1, 1]} : vector<128x256xf32> to vector<128x64xf32>
    %320 = vector.extract_strided_slice %316 {offsets = [0, 192], sizes = [128, 64], strides = [1, 1]} : vector<128x256xf32> to vector<128x64xf32>
    %c0_133 = arith.constant 0 : index
    %c0_134 = arith.constant 0 : index
    %321 = vector.load %arg1[%c0_133, %c0_134] : memref<128x256xf32, #tpu.memory_space<vmem>>, vector<128x256xf32>
    %c0_135 = arith.constant 0 : index
    %c0_136 = arith.constant 0 : index
    %322 = vector.load %arg8[%c0_135, %c0_136] : memref<64x256xbf16, #tpu.memory_space<vmem>>, vector<64x256xbf16>
    %c0_137 = arith.constant 0 : index
    %c0_138 = arith.constant 0 : index
    %323 = vector.load %arg9[%c0_137, %c0_138] : memref<1x256xf32, #tpu.memory_space<vmem>>, vector<1x256xf32>
    %324 = arith.truncf %317 : vector<128x64xf32> to vector<128x64xbf16>
    %cst_139 = arith.constant dense<0.000000e+00> : vector<128x256xf32>
    %325 = tpu.matmul %324, %322, %cst_139 {dimension_numbers = #tpu.dot_dimension_numbers<[1], [0], [0], [1], [0, 0, 1, 1], [], []>} : vector<128x64xbf16>, vector<64x256xbf16>, vector<128x256xf32> -> vector<128x256xf32>
    %326 = vector.broadcast %323 : vector<1x256xf32> to vector<128x256xf32>
    %327 = arith.addf %325, %326 : vector<128x256xf32>
    %cst_140 = arith.constant dense<0xFF800000> : vector<128xf32>
    %328 = vector.multi_reduction <maximumf>, %327, %cst_140 [1] : vector<128x256xf32> to vector<128xf32>
    %329 = vector.shape_cast %328 : vector<128xf32> to vector<128x1xf32>
    %330 = vector.broadcast %329 : vector<128x1xf32> to vector<128x256xf32>
    %331 = arith.subf %327, %330 : vector<128x256xf32>
    %332 = math.exp %331 : vector<128x256xf32>
    %cst_141 = arith.constant dense<0.000000e+00> : vector<128xf32>
    %333 = vector.multi_reduction <add>, %332, %cst_141 [1] : vector<128x256xf32> to vector<128xf32>
    %334 = vector.shape_cast %333 : vector<128xf32> to vector<128x1xf32>
    %335 = math.log %334 : vector<128x1xf32>
    %336 = arith.addf %329, %335 : vector<128x1xf32>
    %337 = vector.broadcast %336 : vector<128x1xf32> to vector<128x256xf32>
    %338 = arith.subf %327, %337 : vector<128x256xf32>
    %339 = arith.mulf %338, %321 : vector<128x256xf32>
    %cst_142 = arith.constant dense<0.000000e+00> : vector<128xf32>
    %340 = vector.multi_reduction <add>, %339, %cst_142 [1] : vector<128x256xf32> to vector<128xf32>
    %341 = vector.shape_cast %340 : vector<128xf32> to vector<128x1xf32>
    %342 = arith.mulf %317, %317 : vector<128x64xf32>
    %cst_143 = arith.constant 1.83787704 : f32
    %343 = vector.broadcast %cst_143 : f32 to vector<128x64xf32>
    %344 = arith.addf %343, %342 : vector<128x64xf32>
    %cst_144 = arith.constant -5.000000e-01 : f32
    %345 = vector.broadcast %cst_144 : f32 to vector<128x64xf32>
    %346 = arith.mulf %345, %344 : vector<128x64xf32>
    %cst_145 = arith.constant -1.897120e+00 : f32
    %347 = vector.broadcast %cst_145 : f32 to vector<128x64xf32>
    %348 = arith.addf %346, %347 : vector<128x64xf32>
    %349 = arith.subf %317, %319 : vector<128x64xf32>
    %cst_146 = arith.constant 1.83787704 : f32
    %350 = vector.broadcast %cst_146 : f32 to vector<128x64xf32>
    %351 = arith.addf %320, %350 : vector<128x64xf32>
    %352 = arith.mulf %349, %349 : vector<128x64xf32>
    %cst_147 = arith.constant 0.000000e+00 : f32
    %353 = vector.broadcast %cst_147 : f32 to vector<128x64xf32>
    %354 = arith.subf %353, %320 : vector<128x64xf32>
    %355 = math.exp %354 : vector<128x64xf32>
    %356 = arith.mulf %352, %355 : vector<128x64xf32>
    %357 = arith.addf %351, %356 : vector<128x64xf32>
    %cst_148 = arith.constant -5.000000e-01 : f32
    %358 = vector.broadcast %cst_148 : f32 to vector<128x64xf32>
    %359 = arith.mulf %358, %357 : vector<128x64xf32>
    %cst_149 = arith.constant -0.287682086 : f32
    %360 = vector.broadcast %cst_149 : f32 to vector<128x64xf32>
    %361 = arith.addf %359, %360 : vector<128x64xf32>
    %cst_150 = arith.constant 4.5399931E-5 : f32
    %362 = vector.broadcast %cst_150 : f32 to vector<128x64xf32>
    %363 = arith.mulf %342, %362 : vector<128x64xf32>
    %cst_151 = arith.constant 11.8378773 : f32
    %364 = vector.broadcast %cst_151 : f32 to vector<128x64xf32>
    %365 = arith.addf %364, %363 : vector<128x64xf32>
    %cst_152 = arith.constant -5.000000e-01 : f32
    %366 = vector.broadcast %cst_152 : f32 to vector<128x64xf32>
    %367 = arith.mulf %366, %365 : vector<128x64xf32>
    %cst_153 = arith.constant -2.30258512 : f32
    %368 = vector.broadcast %cst_153 : f32 to vector<128x64xf32>
    %369 = arith.addf %367, %368 : vector<128x64xf32>
    %370 = arith.maximumf %348, %361 : vector<128x64xf32>
    %371 = arith.maximumf %370, %369 : vector<128x64xf32>
    %372 = arith.subf %348, %371 : vector<128x64xf32>
    %373 = math.exp %372 : vector<128x64xf32>
    %374 = arith.subf %361, %371 : vector<128x64xf32>
    %375 = math.exp %374 : vector<128x64xf32>
    %376 = arith.addf %373, %375 : vector<128x64xf32>
    %377 = arith.subf %369, %371 : vector<128x64xf32>
    %378 = math.exp %377 : vector<128x64xf32>
    %379 = arith.addf %376, %378 : vector<128x64xf32>
    %380 = math.log %379 : vector<128x64xf32>
    %381 = arith.addf %371, %380 : vector<128x64xf32>
    %cst_154 = arith.constant 1.83787704 : f32
    %382 = vector.broadcast %cst_154 : f32 to vector<128x64xf32>
    %383 = arith.addf %318, %382 : vector<128x64xf32>
    %cst_155 = arith.constant -5.000000e-01 : f32
    %384 = vector.broadcast %cst_155 : f32 to vector<128x64xf32>
    %385 = arith.mulf %384, %383 : vector<128x64xf32>
    %cst_156 = arith.constant dense<0.000000e+00> : vector<128xf32>
    %386 = vector.multi_reduction <add>, %321, %cst_156 [1] : vector<128x256xf32> to vector<128xf32>
    %387 = vector.shape_cast %386 : vector<128xf32> to vector<128x1xf32>
    %cst_157 = arith.constant 1.000000e+00 : f32
    %388 = vector.broadcast %cst_157 : f32 to vector<128x1xf32>
    %389 = arith.mulf %388, %387 : vector<128x1xf32>
    %390 = arith.subf %385, %381 : vector<128x64xf32>
    %cst_158 = arith.constant dense<0.000000e+00> : vector<128xf32>
    %391 = vector.multi_reduction <add>, %390, %cst_158 [1] : vector<128x64xf32> to vector<128xf32>
    %392 = vector.shape_cast %391 : vector<128xf32> to vector<128x1xf32>
    %393 = arith.mulf %392, %389 : vector<128x1xf32>
    %394 = tpu.concatenate %341, %393 in 1 : vector<128x1xf32>, vector<128x1xf32> -> vector<128x2xf32>
    %c0_159 = arith.constant 0 : index
    %c0_160 = arith.constant 0 : index
    %395 = vector.load %arg10[%c0_159, %c0_160] : memref<128x2xf32, #tpu.memory_space<vmem>>, vector<128x2xf32>
    tpu.vector_store %arg10[%c0_159, %c0_160], %394 {strides = array<i32>} : memref<128x2xf32, #tpu.memory_space<vmem>>, vector<128x2xf32>,
    return
  }
  func.func @transform_0(%arg0: i32) -> (i32, i32) {
    %c0_i32 = arith.constant 0 : i32
    %c0_i32_0 = arith.constant 0 : i32
    return %arg0, %c0_i32 : i32, i32
  }
  func.func @transform_1(%arg0: i32) -> (i32, i32, i32) {
    %c0_i32 = arith.constant 0 : i32
    %c0_i32_0 = arith.constant 0 : i32
    %c0_i32_1 = arith.constant 0 : i32
    %c0_i32_2 = arith.constant 0 : i32
    return %c0_i32, %c0_i32_0, %c0_i32_1 : i32, i32, i32
  }
  func.func @transform_2(%arg0: i32) -> (i32, i32, i32) {
    %c0_i32 = arith.constant 0 : i32
    %c0_i32_0 = arith.constant 0 : i32
    %c0_i32_1 = arith.constant 0 : i32
    %c0_i32_2 = arith.constant 0 : i32
    return %c0_i32, %c0_i32_0, %c0_i32_1 : i32, i32, i32
  }
  func.func @transform_3(%arg0: i32) -> (i32, i32, i32) {
    %c0_i32 = arith.constant 0 : i32
    %c0_i32_0 = arith.constant 0 : i32
    %c0_i32_1 = arith.constant 0 : i32
    %c0_i32_2 = arith.constant 0 : i32
    return %c0_i32, %c0_i32_0, %c0_i32_1 : i32, i32, i32
  }
  func.func @transform_4(%arg0: i32) -> (i32, i32, i32) {
    %c0_i32 = arith.constant 0 : i32
    %c0_i32_0 = arith.constant 0 : i32
    %c0_i32_1 = arith.constant 0 : i32
    %c0_i32_2 = arith.constant 0 : i32
    return %c0_i32, %c0_i32_0, %c0_i32_1 : i32, i32, i32
  }
  func.func @transform_5(%arg0: i32) -> (i32, i32) {
    %c0_i32 = arith.constant 0 : i32
    %c0_i32_0 = arith.constant 0 : i32
    %c0_i32_1 = arith.constant 0 : i32
    return %c0_i32, %c0_i32_0 : i32, i32
  }
  func.func @transform_6(%arg0: i32) -> (i32, i32) {
    %c0_i32 = arith.constant 0 : i32
    %c0_i32_0 = arith.constant 0 : i32
    %c0_i32_1 = arith.constant 0 : i32
    return %c0_i32, %c0_i32_0 : i32, i32
  }
  func.func @transform_7(%arg0: i32) -> (i32, i32) {
    %c0_i32 = arith.constant 0 : i32
    %c0_i32_0 = arith.constant 0 : i32
    %c0_i32_1 = arith.constant 0 : i32
    return %c0_i32, %c0_i32_0 : i32, i32
  }
  func.func @transform_8(%arg0: i32) -> (i32, i32) {
    %c0_i32 = arith.constant 0 : i32
    %c0_i32_0 = arith.constant 0 : i32
    %c0_i32_1 = arith.constant 0 : i32
    return %c0_i32, %c0_i32_0 : i32, i32
  }
  func.func @transform_9(%arg0: i32) -> (i32, i32) {
    %c0_i32 = arith.constant 0 : i32
    %c0_i32_0 = arith.constant 0 : i32
    return %arg0, %c0_i32 : i32, i32
  }
}

</mosaic_0001>

<llo_original>
// kernel: tpu_custom_call.1
$region0: #{tpu_custom_call.1}
  #allocation0 [shape = 'u32[]', space=smem, size = 0x4, offset = 0x4, fixed_abs, tag = 'smem constant byte address 0x4 - core index']
  #allocation1 [shape = 'u32[144,128]{1,0:T(1,128)}', space=vmem, size = 0x12000, scoped, tag = 'internal scratch']
  %s0 = inlined_call_operand.hbm [shape: f32[256,256], index: 0, kind: input, shape index: {}]
  %s1 = inlined_call_operand.hbm [shape: bf16[5,256,256], index: 1, kind: input, shape index: {}]
  %s2 = inlined_call_operand.hbm [shape: f32[5,1,256], index: 2, kind: input, shape index: {}]
  %s3 = inlined_call_operand.vmem [shape: f32[5,1,256], index: 3, kind: input, shape index: {}]
  %s4 = inlined_call_operand.hbm [shape: f32[5,1,256], index: 4, kind: input, shape index: {}]
  %s5 = inlined_call_operand.hbm [shape: bf16[256,256], index: 5, kind: input, shape index: {}]
  %s6 = inlined_call_operand.vmem [shape: f32[1,256], index: 6, kind: input, shape index: {}]
  %s7 = inlined_call_operand.hbm [shape: bf16[64,256], index: 7, kind: input, shape index: {}]
  %s8 = inlined_call_operand.vmem [shape: f32[1,256], index: 8, kind: input, shape index: {}]
  %s9 = inlined_call_operand.vmem [shape: f32[256,2], index: 9, kind: output, shape index: {}]
  %s10 = sld [smem:[#allocation0]]
  $region93: #{tpu_custom_call.1} parent=0
    _
  %s12 = ssub.s32 1, %s10
  %s13 = scalar_select 0, %s12, %s10
  $region1: #{tpu_custom_call.1} parent=0
    #allocation2 [shape = 'u8[262144]{0}', space=vmem, size = 0x40000, scoped, tag = 'input window, operand 0']
    #allocation3 [shape = 's32[2]{0}', space=sflag, size = 0x8, scoped, tag = 'scoped memory for tpu_custom_call.1']
    #allocation4 [shape = 'u8[655360]{0}', space=vmem, size = 0xa0000, scoped, tag = 'input window, operand 1, single buffered']
    #allocation5 [shape = 's32[1]{0}', space=sflag, size = 0x4, scoped, tag = 'scoped memory for tpu_custom_call.1']
    #allocation6 [shape = 'u8[5120]{0}', space=vmem, size = 0x1400, scoped, tag = 'input window, operand 2, single buffered']
    #allocation7 [shape = 'u8[5120]{0}', space=vmem, size = 0x1400, scoped, tag = 'input window, operand 4, single buffered']
    #allocation8 [shape = 's32[1]{0}', space=sflag, size = 0x4, scoped, tag = 'scoped memory for tpu_custom_call.1']
    #allocation9 [shape = 'u8[131072]{0}', space=vmem, size = 0x20000, scoped, tag = 'input window, operand 5, single buffered']
    #allocation10 [shape = 'u8[32768]{0}', space=vmem, size = 0x8000, scoped, tag = 'input window, operand 7, single buffered']
    #allocation11 [shape = 's32[1]{0}', space=sflag, size = 0x4, scoped, tag = 'scoped memory for tpu_custom_call.1']
    %14 = vsyncpa [#allocation3], 0
    %s15 = scalar_lea.sflag [#allocation3], 1
    %16 = vsyncpa %s15, 0
    %17 = vsyncpa [#allocation5], 0
    %18 = vsyncpa [#allocation8], 0
    %19 = vsyncpa [#allocation11], 0
    loop: start=0, step=1, limit=4
    $region2: #{tpu_custom_call.1} parent=1 // loop_pre_header
      _
    $region3: #{tpu_custom_call.1} parent=1 // loop_header
      %s21 = sphi 0, %s25
      %p22 = scmp.ge.s32.totalorder %s21, 4
      %s31 = sphi 0, %s33
      %s34 = sphi 0, %s31
      %s35 = sphi 0, %s34
      %s51 = sphi 0, %s35
      %s55 = sphi 0, %s55
      %s57 = sphi 0, %s55
      %s58 = sphi 0, %s57
      %s72 = sphi 0, %s58
      %s76 = sphi 0, %s76
      %s78 = sphi 0, %s76
      %s79 = sphi 0, %s78
      %s93 = sphi 0, %s79
      %s97 = sphi 0, %s97
      %s99 = sphi 0, %s97
      %s100 = sphi 0, %s99
      %s114 = sphi 0, %s100
      %s118 = sphi 0, %s118
      %s120 = sphi 0, %s118
      %s121 = sphi 0, %s120
      %s135 = sphi 0, %s121
      %s139 = sphi 0, %s139
      %s141 = sphi 0, %s139
      %s142 = sphi 0, %s141
      %s156 = sphi 0, %s142
      %s160 = sphi 0, %s160
      %s162 = sphi 0, %s160
      %s163 = sphi 0, %s162
      %s177 = sphi 0, %s163
      %s181 = sphi 0, %s181
      %s183 = sphi 0, %s181
      %s184 = sphi 0, %s183
      %s198 = sphi 0, %s184
      %s202 = sphi 0, %s202
      %s204 = sphi 0, %s202
      %s205 = sphi 0, %s204
      %s219 = sphi 0, %s205
      %s225 = sphi 0, %s227
      %s228 = sphi 0, %s225
      %s229 = sphi 0, %s228
      %s245 = sphi 0, %s229
    $region4: #{tpu_custom_call.1} parent=1 // loop_header_branch
      %24 = sbr.rel (%p22) target = $region8
    $region5: #{tpu_custom_call.1} parent=1 // loop_body
      %s26 = ssub.s32 %s21, 1
      %s27 = ssub.s32 %s21, 2
      %s28 = sadd.s32 %s21, 1
      %s29 = ssub.s32 %s21, %s28
      %p30 = scmp.eq.s32.totalorder %s29, 0
      %s32 = sadd.s32 %s31, 1
      %s33 = scalar_select %p30, %s31, %s32
      %p36 = pneg %p30
      %p37 = scmp.eq.s32.totalorder %s21, 1
      %p38 = por %p36, %p37
      %p39 = scmp.ne.s32.totalorder %s31, %s34
      %p40 = scmp.eq.s32.totalorder %s21, 0
      %p41 = por %p39, %p40
      %p42 = scmp.ne.s32.totalorder %s31, %s34
      %p43 = scmp.eq.s32.totalorder %s26, 1
      %p44 = por %p42, %p43
      %p45 = scmp.ne.s32.totalorder %s34, %s35
      %p46 = scmp.eq.s32.totalorder %s26, 0
      %p47 = por %p45, %p46
      %p48 = scmp.ne.s32.totalorder %s34, %s35
      %p49 = scmp.eq.s32.totalorder %s27, 1
      %p50 = por %p48, %p49
      %p52 = scmp.ne.s32.totalorder %s35, %s51
      %p53 = scmp.eq.s32.totalorder %s27, 0
      %p54 = por %p52, %p53
      %s56 = sadd.s32 %s55, 1
      %p59 = scmp.eq.s32.totalorder %s21, 1
      %p60 = scmp.ne.s32.totalorder %s55, %s57
      %p61 = scmp.eq.s32.totalorder %s21, 0
      %p62 = por %p60, %p61
      %p63 = scmp.ne.s32.totalorder %s55, %s57
      %p64 = scmp.eq.s32.totalorder %s26, 1
      %p65 = por %p63, %p64
      %p66 = scmp.ne.s32.totalorder %s57, %s58
      %p67 = scmp.eq.s32.totalorder %s26, 0
      %p68 = por %p66, %p67
      %p69 = scmp.ne.s32.totalorder %s57, %s58
      %p70 = scmp.eq.s32.totalorder %s27, 1
      %p71 = por %p69, %p70
      %p73 = scmp.ne.s32.totalorder %s58, %s72
      %p74 = scmp.eq.s32.totalorder %s27, 0
      %p75 = por %p73, %p74
      %s77 = sadd.s32 %s76, 1
      %p80 = scmp.eq.s32.totalorder %s21, 1
      %p81 = scmp.ne.s32.totalorder %s76, %s78
      %p82 = scmp.eq.s32.totalorder %s21, 0
      %p83 = por %p81, %p82
      %p84 = scmp.ne.s32.totalorder %s76, %s78
      %p85 = scmp.eq.s32.totalorder %s26, 1
      %p86 = por %p84, %p85
      %p87 = scmp.ne.s32.totalorder %s78, %s79
      %p88 = scmp.eq.s32.totalorder %s26, 0
      %p89 = por %p87, %p88
      %p90 = scmp.ne.s32.totalorder %s78, %s79
      %p91 = scmp.eq.s32.totalorder %s27, 1
      %p92 = por %p90, %p91
      %p94 = scmp.ne.s32.totalorder %s79, %s93
      %p95 = scmp.eq.s32.totalorder %s27, 0
      %p96 = por %p94, %p95
      %s98 = sadd.s32 %s97, 1
      %p101 = scmp.eq.s32.totalorder %s21, 1
      %p102 = scmp.ne.s32.totalorder %s97, %s99
      %p103 = scmp.eq.s32.totalorder %s21, 0
      %p104 = por %p102, %p103
      %p105 = scmp.ne.s32.totalorder %s97, %s99
      %p106 = scmp.eq.s32.totalorder %s26, 1
      %p107 = por %p105, %p106
      %p108 = scmp.ne.s32.totalorder %s99, %s100
      %p109 = scmp.eq.s32.totalorder %s26, 0
      %p110 = por %p108, %p109
      %p111 = scmp.ne.s32.totalorder %s99, %s100
      %p112 = scmp.eq.s32.totalorder %s27, 1
      %p113 = por %p111, %p112
      %p115 = scmp.ne.s32.totalorder %s100, %s114
      %p116 = scmp.eq.s32.totalorder %s27, 0
      %p117 = por %p115, %p116
      %s119 = sadd.s32 %s118, 1
      %p122 = scmp.eq.s32.totalorder %s21, 1
      %p123 = scmp.ne.s32.totalorder %s118, %s120
      %p124 = scmp.eq.s32.totalorder %s21, 0
      %p125 = por %p123, %p124
      %p126 = scmp.ne.s32.totalorder %s118, %s120
      %p127 = scmp.eq.s32.totalorder %s26, 1
      %p128 = por %p126, %p127
      %p129 = scmp.ne.s32.totalorder %s120, %s121
      %p130 = scmp.eq.s32.totalorder %s26, 0
      %p131 = por %p129, %p130
      %p132 = scmp.ne.s32.totalorder %s120, %s121
      %p133 = scmp.eq.s32.totalorder %s27, 1
      %p134 = por %p132, %p133
      %p136 = scmp.ne.s32.totalorder %s121, %s135
      %p137 = scmp.eq.s32.totalorder %s27, 0
      %p138 = por %p136, %p137
      %s140 = sadd.s32 %s139, 1
      %p143 = scmp.eq.s32.totalorder %s21, 1
      %p144 = scmp.ne.s32.totalorder %s139, %s141
      %p145 = scmp.eq.s32.totalorder %s21, 0
      %p146 = por %p144, %p145
      %p147 = scmp.ne.s32.totalorder %s139, %s141
      %p148 = scmp.eq.s32.totalorder %s26, 1
      %p149 = por %p147, %p148
      %p150 = scmp.ne.s32.totalorder %s141, %s142
      %p151 = scmp.eq.s32.totalorder %s26, 0
      %p152 = por %p150, %p151
      %p153 = scmp.ne.s32.totalorder %s141, %s142
      %p154 = scmp.eq.s32.totalorder %s27, 1
      %p155 = por %p153, %p154
      %p157 = scmp.ne.s32.totalorder %s142, %s156
      %p158 = scmp.eq.s32.totalorder %s27, 0
      %p159 = por %p157, %p158
      %s161 = sadd.s32 %s160, 1
      %p164 = scmp.eq.s32.totalorder %s21, 1
      %p165 = scmp.ne.s32.totalorder %s160, %s162
      %p166 = scmp.eq.s32.totalorder %s21, 0
      %p167 = por %p165, %p166
      %p168 = scmp.ne.s32.totalorder %s160, %s162
      %p169 = scmp.eq.s32.totalorder %s26, 1
      %p170 = por %p168, %p169
      %p171 = scmp.ne.s32.totalorder %s162, %s163
      %p172 = scmp.eq.s32.totalorder %s26, 0
      %p173 = por %p171, %p172
      %p174 = scmp.ne.s32.totalorder %s162, %s163
      %p175 = scmp.eq.s32.totalorder %s27, 1
      %p176 = por %p174, %p175
      %p178 = scmp.ne.s32.totalorder %s163, %s177
      %p179 = scmp.eq.s32.totalorder %s27, 0
      %p180 = por %p178, %p179
      %s182 = sadd.s32 %s181, 1
      %p185 = scmp.eq.s32.totalorder %s21, 1
      %p186 = scmp.ne.s32.totalorder %s181, %s183
      %p187 = scmp.eq.s32.totalorder %s21, 0
      %p188 = por %p186, %p187
      %p189 = scmp.ne.s32.totalorder %s181, %s183
      %p190 = scmp.eq.s32.totalorder %s26, 1
      %p191 = por %p189, %p190
      %p192 = scmp.ne.s32.totalorder %s183, %s184
      %p193 = scmp.eq.s32.totalorder %s26, 0
      %p194 = por %p192, %p193
      %p195 = scmp.ne.s32.totalorder %s183, %s184
      %p196 = scmp.eq.s32.totalorder %s27, 1
      %p197 = por %p195, %p196
      %p199 = scmp.ne.s32.totalorder %s184, %s198
      %p200 = scmp.eq.s32.totalorder %s27, 0
      %p201 = por %p199, %p200
      %s203 = sadd.s32 %s202, 1
      %p206 = scmp.eq.s32.totalorder %s21, 1
      %p207 = scmp.ne.s32.totalorder %s202, %s204
      %p208 = scmp.eq.s32.totalorder %s21, 0
      %p209 = por %p207, %p208
      %p210 = scmp.ne.s32.totalorder %s202, %s204
      %p211 = scmp.eq.s32.totalorder %s26, 1
      %p212 = por %p210, %p211
      %p213 = scmp.ne.s32.totalorder %s204, %s205
      %p214 = scmp.eq.s32.totalorder %s26, 0
      %p215 = por %p213, %p214
      %p216 = scmp.ne.s32.totalorder %s204, %s205
      %p217 = scmp.eq.s32.totalorder %s27, 1
      %p218 = por %p216, %p217
      %p220 = scmp.ne.s32.totalorder %s205, %s219
      %p221 = scmp.eq.s32.totalorder %s27, 0
      %p222 = por %p220, %p221
      %s223 = ssub.s32 %s21, %s28
      %p224 = scmp.eq.s32.totalorder %s223, 0
      %s226 = sadd.s32 %s225, 1
      %s227 = scalar_select %p224, %s225, %s226
      %p230 = pneg %p224
      %p231 = scmp.eq.s32.totalorder %s21, 1
      %p232 = por %p230, %p231
      %p233 = scmp.ne.s32.totalorder %s225, %s228
      %p234 = scmp.eq.s32.totalorder %s21, 0
      %p235 = por %p233, %p234
      %p236 = scmp.ne.s32.totalorder %s225, %s228
      %p237 = scmp.eq.s32.totalorder %s26, 1
      %p238 = por %p236, %p237
      %p239 = scmp.ne.s32.totalorder %s228, %s229
      %p240 = scmp.eq.s32.totalorder %s26, 0
      %p241 = por %p239, %p240
      %p242 = scmp.ne.s32.totalorder %s228, %s229
      %p243 = scmp.eq.s32.totalorder %s27, 1
      %p244 = por %p242, %p243
      %p246 = scmp.ne.s32.totalorder %s229, %s245
      %p247 = scmp.eq.s32.totalorder %s27, 0
      %p248 = por %p246, %p247
      %p249 = scmp.le.s32.totalorder 1, %s21
      %p250 = scmp.lt.s32.totalorder %s21, 3
      %p251 = pnand %p249, %p250
      %p252 = pneg %p251
      // Predicated region
      $region9: #{tpu_custom_call.1} parent=5 // pred_check
        _
      $region10: #{tpu_custom_call.1} parent=5 // pred_check_branch
        %254 = sbr.rel (%p251) target = $region12
      $region11: #{tpu_custom_call.1} parent=5 // pred_region
        %s255 = ssub.s32 %s21, 1
        // Predicated region
        $region13: #{tpu_custom_call.1} parent=11 // pred_check
          %p256 = pneg %p68
        $region14: #{tpu_custom_call.1} parent=11 // pred_check_branch
          %258 = sbr.rel (%p256) target = $region16
        $region15: #{tpu_custom_call.1} parent=11 // pred_region
          %s260 = ssub.s32 20480, 20480
          %261 = vsyncadd [#allocation5], %s260
          %s262 = sshll.u32 [#allocation4], 4
          %s263 = int_to_ptr.vmem [resolvable:$true] %s262
          %268 = dma.hbm_to_vmem [thread:$0]  %s1, 20480, %s263, [#allocation5], 128, 128, 8
        $region16: #{tpu_custom_call.1} parent=11 // pred_fallthru
          _
        // Predicated region
        $region17: #{tpu_custom_call.1} parent=11 // pred_check
          %p269 = pneg %p89
        $region18: #{tpu_custom_call.1} parent=11 // pred_check_branch
          %271 = sbr.rel (%p269) target = $region20
        $region19: #{tpu_custom_call.1} parent=11 // pred_region
          %s273 = ssub.s32 160, 160
          %274 = vsyncadd [#allocation5], %s273
          %s275 = sshll.u32 [#allocation6], 4
          %s276 = int_to_ptr.vmem [resolvable:$true] %s275
          %281 = dma.hbm_to_vmem [thread:$0]  %s2, 160, %s276, [#allocation5], 32, 32, 2
        $region20: #{tpu_custom_call.1} parent=11 // pred_fallthru
          _
        // Predicated region
        $region21: #{tpu_custom_call.1} parent=11 // pred_check
          %p282 = pneg %p110
        $region22: #{tpu_custom_call.1} parent=11 // pred_check_branch
          %284 = sbr.rel (%p282) target = $region24
        $region23: #{tpu_custom_call.1} parent=11 // pred_region
          _
        $region24: #{tpu_custom_call.1} parent=11 // pred_fallthru
          _
        // Predicated region
        $region25: #{tpu_custom_call.1} parent=11 // pred_check
          %p285 = pneg %p131
        $region26: #{tpu_custom_call.1} parent=11 // pred_check_branch
          %287 = sbr.rel (%p285) target = $region28
        $region27: #{tpu_custom_call.1} parent=11 // pred_region
          %s289 = ssub.s32 160, 160
          %290 = vsyncadd [#allocation8], %s289
          %s291 = sshll.u32 [#allocation7], 4
          %s292 = int_to_ptr.vmem [resolvable:$true] %s291
          %297 = dma.hbm_to_vmem [thread:$0]  %s4, 160, %s292, [#allocation8], 32, 32, 2
        $region28: #{tpu_custom_call.1} parent=11 // pred_fallthru
          _
        // Predicated region
        $region29: #{tpu_custom_call.1} parent=11 // pred_check
          %p298 = pneg %p152
        $region30: #{tpu_custom_call.1} parent=11 // pred_check_branch
          %300 = sbr.rel (%p298) target = $region32
        $region31: #{tpu_custom_call.1} parent=11 // pred_region
          %s302 = ssub.s32 4096, 4096
          %303 = vsyncadd [#allocation8], %s302
          %s304 = sshll.u32 [#allocation9], 4
          %s305 = int_to_ptr.vmem [resolvable:$true] %s304
          %310 = dma.hbm_to_vmem [thread:$0]  %s5, 4096, %s305, [#allocation8], 128, 128, 8
        $region32: #{tpu_custom_call.1} parent=11 // pred_fallthru
          _
        // Predicated region
        $region33: #{tpu_custom_call.1} parent=11 // pred_check
          %p311 = pneg %p173
        $region34: #{tpu_custom_call.1} parent=11 // pred_check_branch
          %313 = sbr.rel (%p311) target = $region36
        $region35: #{tpu_custom_call.1} parent=11 // pred_region
          _
        $region36: #{tpu_custom_call.1} parent=11 // pred_fallthru
          _
        // Predicated region
        $region37: #{tpu_custom_call.1} parent=11 // pred_check
          %p314 = pneg %p194
        $region38: #{tpu_custom_call.1} parent=11 // pred_check_branch
          %316 = sbr.rel (%p314) target = $region40
        $region39: #{tpu_custom_call.1} parent=11 // pred_region
          %s318 = ssub.s32 1024, 1024
          %319 = vsyncadd [#allocation11], %s318
          %s320 = sshll.u32 [#allocation10], 4
          %s321 = int_to_ptr.vmem [resolvable:$true] %s320
          %326 = dma.hbm_to_vmem [thread:$0]  %s7, 1024, %s321, [#allocation11], 128, 128, 8
        $region40: #{tpu_custom_call.1} parent=11 // pred_fallthru
          _
        // Predicated region
        $region41: #{tpu_custom_call.1} parent=11 // pred_check
          %p327 = pneg %p215
        $region42: #{tpu_custom_call.1} parent=11 // pred_check_branch
          %329 = sbr.rel (%p327) target = $region44
        $region43: #{tpu_custom_call.1} parent=11 // pred_region
          _
        $region44: #{tpu_custom_call.1} parent=11 // pred_fallthru
          _
      $region12: #{tpu_custom_call.1} parent=5 // pred_fallthru
        _
      %p330 = scmp.lt.s32.totalorder %s21, 2
      // Predicated region
      $region45: #{tpu_custom_call.1} parent=5 // pred_check
        %p331 = pneg %p330
      $region46: #{tpu_custom_call.1} parent=5 // pred_check_branch
        %333 = sbr.rel (%p331) target = $region48
      $region47: #{tpu_custom_call.1} parent=5 // pred_region
        // Predicated region
        $region49: #{tpu_custom_call.1} parent=47 // pred_check
          %p334 = pneg %p41
        $region50: #{tpu_custom_call.1} parent=47 // pred_check_branch
          %336 = sbr.rel (%p334) target = $region52
        $region51: #{tpu_custom_call.1} parent=47 // pred_region
          %s337 = sand.u32 %s31, 1
          %s338 = scalar_lea.sflag [#allocation3], %s337
          %s339 = sand.u32 %s31, 1
          %s340 = smul.addr %s339, 256
          %s341 = scalar_lea.vmem [#allocation2], %s340
          %s342 = smul.u32 16, %s21
          %s344 = ssub.s32 4096, 4096
          %345 = vsyncadd %s338, %s344
          %s346 = smul.addr %s342, 2
          %s347 = smul.addr %s346, 128
          %s348 = scalar_lea.hbm %s0, %s347
          %s349 = sshll.u32 %s341, 4
          %s350 = int_to_ptr.vmem [resolvable:$true] %s349
          %355 = dma.hbm_to_vmem [thread:$0]  %s348, 4096, %s350, %s338, 256, 256, 16
        $region52: #{tpu_custom_call.1} parent=47 // pred_fallthru
          _
      $region48: #{tpu_custom_call.1} parent=5 // pred_fallthru
        _
      %p356 = scmp.le.s32.totalorder 1, %s21
      %p357 = scmp.lt.s32.totalorder %s21, 3
      %p358 = pnand %p356, %p357
      %p359 = pneg %p358
      // Predicated region
      $region53: #{tpu_custom_call.1} parent=5 // pred_check
        _
      $region54: #{tpu_custom_call.1} parent=5 // pred_check_branch
        %361 = sbr.rel (%p358) target = $region56
      $region55: #{tpu_custom_call.1} parent=5 // pred_region
        %s362 = ssub.s32 %s21, 1
        %s363 = sand.u32 %s34, 1
        %s364 = scalar_lea.sflag [#allocation3], %s363
        %s365 = sand.u32 %s34, 1
        %s366 = smul.addr %s365, 256
        %s367 = scalar_lea.vmem [#allocation2], %s366
        // Predicated region
        $region57: #{tpu_custom_call.1} parent=55 // pred_check
          %p368 = pneg %p47
        $region58: #{tpu_custom_call.1} parent=55 // pred_check_branch
          %370 = sbr.rel (%p368) target = $region60
        $region59: #{tpu_custom_call.1} parent=55 // pred_region
          %371 = dma.done %s364, 4096
        $region60: #{tpu_custom_call.1} parent=55 // pred_fallthru
          _
        // Predicated region
        $region61: #{tpu_custom_call.1} parent=55 // pred_check
          %p372 = pneg %p68
        $region62: #{tpu_custom_call.1} parent=55 // pred_check_branch
          %374 = sbr.rel (%p372) target = $region64
        $region63: #{tpu_custom_call.1} parent=55 // pred_region
          %375 = dma.done [#allocation5], 20480
        $region64: #{tpu_custom_call.1} parent=55 // pred_fallthru
          _
        // Predicated region
        $region65: #{tpu_custom_call.1} parent=55 // pred_check
          %p376 = pneg %p89
        $region66: #{tpu_custom_call.1} parent=55 // pred_check_branch
          %378 = sbr.rel (%p376) target = $region68
        $region67: #{tpu_custom_call.1} parent=55 // pred_region
          %379 = dma.done [#allocation5], 160
        $region68: #{tpu_custom_call.1} parent=55 // pred_fallthru
          _
        // Predicated region
        $region69: #{tpu_custom_call.1} parent=55 // pred_check
          %p380 = pneg %p131
        $region70: #{tpu_custom_call.1} parent=55 // pred_check_branch
          %382 = sbr.rel (%p380) target = $region72
        $region71: #{tpu_custom_call.1} parent=55 // pred_region
          %383 = dma.done [#allocation8], 160
        $region72: #{tpu_custom_call.1} parent=55 // pred_fallthru
          _
        // Predicated region
        $region73: #{tpu_custom_call.1} parent=55 // pred_check
          %p384 = pneg %p152
        $region74: #{tpu_custom_call.1} parent=55 // pred_check_branch
          %386 = sbr.rel (%p384) target = $region76
        $region75: #{tpu_custom_call.1} parent=55 // pred_region
          %387 = dma.done [#allocation8], 4096
        $region76: #{tpu_custom_call.1} parent=55 // pred_fallthru
          _
        // Predicated region
        $region77: #{tpu_custom_call.1} parent=55 // pred_check
          %p388 = pneg %p194
        $region78: #{tpu_custom_call.1} parent=55 // pred_check_branch
          %390 = sbr.rel (%p388) target = $region80
        $region79: #{tpu_custom_call.1} parent=55 // pred_region
          %391 = dma.done [#allocation11], 1024
        $region80: #{tpu_custom_call.1} parent=55 // pred_fallthru
          _
        %s392 = sand.u32 %s34, 1
        %s393 = scalar_lea.sflag [#allocation3], %s392
        %s394 = sand.u32 %s34, 1
        %s395 = smul.addr %s394, 256
        %s396 = scalar_lea.vmem [#allocation2], %s395
        %p397 = pneg %p47
        %p398 = pneg %p44
        %p399 = pneg %p68
        %p400 = pneg %p65
        %p401 = pneg %p89
        %p402 = pneg %p86
        %p403 = pneg %p110
        %p404 = pneg %p107
        %p405 = pneg %p131
        %p406 = pneg %p128
        %p407 = pneg %p152
        %p408 = pneg %p149
        %p409 = pneg %p173
        %p410 = pneg %p170
        %p411 = pneg %p194
        %p412 = pneg %p191
        %p413 = pneg %p215
        %p414 = pneg %p212
        %p415 = pneg %p241
        %p416 = pneg %p238
        %s417 = smul.u32 16, %s26
        %p418 = scmp.lt.s32.totalorder %s417, 31
        %s419 = scalar_select %p418, %s417, 31
        %s420 = smul.addr %s419, 8
        %s421 = scalar_lea.vmem %s9, %s420
        %s422 = smul.u32 16, %s26
        %s423 = smul.u32 16, %s26
        %p424 = scmp.lt.s32.totalorder %s423, 31
        %s425 = scalar_select %p424, %s423, 31
        %s426 = smul.addr %s425, 8
        %s427 = scalar_lea.vmem %s9, %s426
        %s428 = smul.u32 16, %s26
        %v430 = vld [vmem:[%s367] sm:$0xff]
        %v431 = vld [vmem:[%s367 + $0x8] sm:$0xff]
        %v432 = vld [vmem:[%s367 + $0x10] sm:$0xff]
        %v433 = vld [vmem:[%s367 + $0x18] sm:$0xff]
        %v434 = vld [vmem:[%s367 + $0x20] sm:$0xff]
        %v435 = vld [vmem:[%s367 + $0x28] sm:$0xff]
        %v436 = vld [vmem:[%s367 + $0x30] sm:$0xff]
        %v437 = vld [vmem:[%s367 + $0x38] sm:$0xff]
        %v438 = vld [vmem:[%s367 + $0x40] sm:$0xff]
        %v439 = vld [vmem:[%s367 + $0x48] sm:$0xff]
        %v440 = vld [vmem:[%s367 + $0x50] sm:$0xff]
        %v441 = vld [vmem:[%s367 + $0x58] sm:$0xff]
        %v442 = vld [vmem:[%s367 + $0x60] sm:$0xff]
        %v443 = vld [vmem:[%s367 + $0x68] sm:$0xff]
        %v444 = vld [vmem:[%s367 + $0x70] sm:$0xff]
        %v445 = vld [vmem:[%s367 + $0x78] sm:$0xff]
        %v446 = vld [vmem:[%s367 + $0x80] sm:$0xff]
        %v447 = vld [vmem:[%s367 + $0x88] sm:$0xff]
        %v448 = vld [vmem:[%s367 + $0x90] sm:$0xff]
        %v449 = vld [vmem:[%s367 + $0x98] sm:$0xff]
        %v450 = vld [vmem:[%s367 + $0xa0] sm:$0xff]
        %v451 = vld [vmem:[%s367 + $0xa8] sm:$0xff]
        %v452 = vld [vmem:[%s367 + $0xb0] sm:$0xff]
        %v453 = vld [vmem:[%s367 + $0xb8] sm:$0xff]
        %v454 = vld [vmem:[%s367 + $0xc0] sm:$0xff]
        %v455 = vld [vmem:[%s367 + $0xc8] sm:$0xff]
        %v456 = vld [vmem:[%s367 + $0xd0] sm:$0xff]
        %v457 = vld [vmem:[%s367 + $0xd8] sm:$0xff]
        %v458 = vld [vmem:[%s367 + $0xe0] sm:$0xff]
        %v459 = vld [vmem:[%s367 + $0xe8] sm:$0xff]
        %v460 = vld [vmem:[%s367 + $0xf0] sm:$0xff]
        %v461 = vld [vmem:[%s367 + $0xf8] sm:$0xff]
        %v462 = vmul.f32 %v430, %v430
        %v463 = vmul.f32 %v431, %v431
        %v464 = vmul.f32 %v432, %v432
        %v465 = vmul.f32 %v433, %v433
        %v466 = vmul.f32 %v434, %v434
        %v467 = vmul.f32 %v435, %v435
        %v468 = vmul.f32 %v436, %v436
        %v469 = vmul.f32 %v437, %v437
        %v470 = vmul.f32 %v438, %v438
        %v471 = vmul.f32 %v439, %v439
        %v472 = vmul.f32 %v440, %v440
        %v473 = vmul.f32 %v441, %v441
        %v474 = vmul.f32 %v442, %v442
        %v475 = vmul.f32 %v443, %v443
        %v476 = vmul.f32 %v444, %v444
        %v477 = vmul.f32 %v445, %v445
        %v478 = vmul.f32 %v446, %v446
        %v479 = vmul.f32 %v447, %v447
        %v480 = vmul.f32 %v448, %v448
        %v481 = vmul.f32 %v449, %v449
        %v482 = vmul.f32 %v450, %v450
        %v483 = vmul.f32 %v451, %v451
        %v484 = vmul.f32 %v452, %v452
        %v485 = vmul.f32 %v453, %v453
        %v486 = vmul.f32 %v454, %v454
        %v487 = vmul.f32 %v455, %v455
        %v488 = vmul.f32 %v456, %v456
        %v489 = vmul.f32 %v457, %v457
        %v490 = vmul.f32 %v458, %v458
        %v491 = vmul.f32 %v459, %v459
        %v492 = vmul.f32 %v460, %v460
        %v493 = vmul.f32 %v461, %v461
        %v494 = vadd.f32 %v462, %v463
        %495 = vadd.xlane.f32.xlu0 %v494
        %v496 = vpop.xlane.xlu0 %495
        %v497 = vadd.f32 %v464, %v465
        %498 = vadd.xlane.f32.xlu0 %v497
        %v499 = vpop.xlane.xlu0 %498
        %v500 = vadd.f32 %v466, %v467
        %501 = vadd.xlane.f32.xlu0 %v500
        %v502 = vpop.xlane.xlu0 %501
        %v503 = vadd.f32 %v468, %v469
        %504 = vadd.xlane.f32.xlu0 %v503
        %v505 = vpop.xlane.xlu0 %504
        %v506 = vadd.f32 %v470, %v471
        %507 = vadd.xlane.f32.xlu0 %v506
        %v508 = vpop.xlane.xlu0 %507
        %v509 = vadd.f32 %v472, %v473
        %510 = vadd.xlane.f32.xlu0 %v509
        %v511 = vpop.xlane.xlu0 %510
        %v512 = vadd.f32 %v474, %v475
        %513 = vadd.xlane.f32.xlu0 %v512
        %v514 = vpop.xlane.xlu0 %513
        %v515 = vadd.f32 %v476, %v477
        %516 = vadd.xlane.f32.xlu0 %v515
        %v517 = vpop.xlane.xlu0 %516
        %v518 = vadd.f32 %v478, %v479
        %519 = vadd.xlane.f32.xlu0 %v518
        %v520 = vpop.xlane.xlu0 %519
        %v521 = vadd.f32 %v480, %v481
        %522 = vadd.xlane.f32.xlu0 %v521
        %v523 = vpop.xlane.xlu0 %522
        %v524 = vadd.f32 %v482, %v483
        %525 = vadd.xlane.f32.xlu0 %v524
        %v526 = vpop.xlane.xlu0 %525
        %v527 = vadd.f32 %v484, %v485
        %528 = vadd.xlane.f32.xlu0 %v527
        %v529 = vpop.xlane.xlu0 %528
        %v530 = vadd.f32 %v486, %v487
        %531 = vadd.xlane.f32.xlu0 %v530
        %v532 = vpop.xlane.xlu0 %531
        %v533 = vadd.f32 %v488, %v489
        %534 = vadd.xlane.f32.xlu0 %v533
        %v535 = vpop.xlane.xlu0 %534
        %v536 = vadd.f32 %v490, %v491
        %537 = vadd.xlane.f32.xlu0 %v536
        %v538 = vpop.xlane.xlu0 %537
        %v539 = vadd.f32 %v492, %v493
        %540 = vadd.xlane.f32.xlu0 %v539
        %v541 = vpop.xlane.xlu0 %540
        %v542 = vmax.f32 %v496, 1e-24
        %v543 = vmax.f32 %v499, 1e-24
        %v544 = vmax.f32 %v502, 1e-24
        %v545 = vmax.f32 %v505, 1e-24
        %v546 = vmax.f32 %v508, 1e-24
        %v547 = vmax.f32 %v511, 1e-24
        %v548 = vmax.f32 %v514, 1e-24
        %v549 = vmax.f32 %v517, 1e-24
        %v550 = vmax.f32 %v520, 1e-24
        %v551 = vmax.f32 %v523, 1e-24
        %v552 = vmax.f32 %v526, 1e-24
        %v553 = vmax.f32 %v529, 1e-24
        %v554 = vmax.f32 %v532, 1e-24
        %v555 = vmax.f32 %v535, 1e-24
        %v556 = vmax.f32 %v538, 1e-24
        %v557 = vmax.f32 %v541, 1e-24
        %v558 = vrsqrt.pop %v542
        %v559 = vrsqrt.pop %v543
        %v560 = vrsqrt.pop %v544
        %v561 = vrsqrt.pop %v545
        %v562 = vrsqrt.pop %v546
        %v563 = vrsqrt.pop %v547
        %v564 = vrsqrt.pop %v548
        %v565 = vrsqrt.pop %v549
        %v566 = vrsqrt.pop %v550
        %v567 = vrsqrt.pop %v551
        %v568 = vrsqrt.pop %v552
        %v569 = vrsqrt.pop %v553
        %v570 = vrsqrt.pop %v554
        %v571 = vrsqrt.pop %v555
        %v572 = vrsqrt.pop %v556
        %v573 = vrsqrt.pop %v557
        %v574 = vmul.f32 %v430, %v558
        %v575 = vmul.f32 %v431, %v558
        %v576 = vmul.f32 %v432, %v559
        %v577 = vmul.f32 %v433, %v559
        %v578 = vmul.f32 %v434, %v560
        %v579 = vmul.f32 %v435, %v560
        %v580 = vmul.f32 %v436, %v561
        %v581 = vmul.f32 %v437, %v561
        %v582 = vmul.f32 %v438, %v562
        %v583 = vmul.f32 %v439, %v562
        %v584 = vmul.f32 %v440, %v563
        %v585 = vmul.f32 %v441, %v563
        %v586 = vmul.f32 %v442, %v564
        %v587 = vmul.f32 %v443, %v564
        %v588 = vmul.f32 %v444, %v565
        %v589 = vmul.f32 %v445, %v565
        %v590 = vmul.f32 %v446, %v566
        %v591 = vmul.f32 %v447, %v566
        %v592 = vmul.f32 %v448, %v567
        %v593 = vmul.f32 %v449, %v567
        %v594 = vmul.f32 %v450, %v568
        %v595 = vmul.f32 %v451, %v568
        %v596 = vmul.f32 %v452, %v569
        %v597 = vmul.f32 %v453, %v569
        %v598 = vmul.f32 %v454, %v570
        %v599 = vmul.f32 %v455, %v570
        %v600 = vmul.f32 %v456, %v571
        %v601 = vmul.f32 %v457, %v571
        %v602 = vmul.f32 %v458, %v572
        %v603 = vmul.f32 %v459, %v572
        %v604 = vmul.f32 %v460, %v573
        %v605 = vmul.f32 %v461, %v573
        %v606 = vld [vmem:[#allocation4] sm:$0xff]
        %v607 = vld [vmem:[#allocation4 + $0x8] sm:$0xff]
        %v608 = vld [vmem:[#allocation4 + $0x10] sm:$0xff]
        %v609 = vld [vmem:[#allocation4 + $0x18] sm:$0xff]
        %v610 = vld [vmem:[#allocation4 + $0x20] sm:$0xff]
        %v611 = vld [vmem:[#allocation4 + $0x28] sm:$0xff]
        %v612 = vld [vmem:[#allocation4 + $0x30] sm:$0xff]
        %v613 = vld [vmem:[#allocation4 + $0x38] sm:$0xff]
        %v614 = vld [vmem:[#allocation4 + $0x40] sm:$0xff]
        %v615 = vld [vmem:[#allocation4 + $0x48] sm:$0xff]
        %v616 = vld [vmem:[#allocation4 + $0x50] sm:$0xff]
        %v617 = vld [vmem:[#allocation4 + $0x58] sm:$0xff]
        %v618 = vld [vmem:[#allocation4 + $0x60] sm:$0xff]
        %v619 = vld [vmem:[#allocation4 + $0x68] sm:$0xff]
        %v620 = vld [vmem:[#allocation4 + $0x70] sm:$0xff]
        %v621 = vld [vmem:[#allocation4 + $0x78] sm:$0xff]
        %v622 = vld [vmem:[#allocation4 + $0x80] sm:$0xff]
        %v623 = vld [vmem:[#allocation4 + $0x88] sm:$0xff]
        %v624 = vld [vmem:[#allocation4 + $0x90] sm:$0xff]
        %v625 = vld [vmem:[#allocation4 + $0x98] sm:$0xff]
        %v626 = vld [vmem:[#allocation4 + $0xa0] sm:$0xff]
        %v627 = vld [vmem:[#allocation4 + $0xa8] sm:$0xff]
        %v628 = vld [vmem:[#allocation4 + $0xb0] sm:$0xff]
        %v629 = vld [vmem:[#allocation4 + $0xb8] sm:$0xff]
        %v630 = vld [vmem:[#allocation4 + $0xc0] sm:$0xff]
        %v631 = vld [vmem:[#allocation4 + $0xc8] sm:$0xff]
        %v632 = vld [vmem:[#allocation4 + $0xd0] sm:$0xff]
        %v633 = vld [vmem:[#allocation4 + $0xd8] sm:$0xff]
        %v634 = vld [vmem:[#allocation4 + $0xe0] sm:$0xff]
        %v635 = vld [vmem:[#allocation4 + $0xe8] sm:$0xff]
        %v636 = vld [vmem:[#allocation4 + $0xf0] sm:$0xff]
        %v637 = vld [vmem:[#allocation4 + $0xf8] sm:$0xff]
        %v638 = vld [vmem:[#allocation6] sm:$0x3]
        %v639 = vpack.c.bf16 %v576, %v574
        %v640 = vpack.c.bf16 %v577, %v575
        %v641 = vpack.c.bf16 %v580, %v578
        %v642 = vpack.c.bf16 %v581, %v579
        %v643 = vpack.c.bf16 %v584, %v582
        %v644 = vpack.c.bf16 %v585, %v583
        %v645 = vpack.c.bf16 %v588, %v586
        %v646 = vpack.c.bf16 %v589, %v587
        %v647 = vpack.c.bf16 %v592, %v590
        %v648 = vpack.c.bf16 %v593, %v591
        %v649 = vpack.c.bf16 %v596, %v594
        %v650 = vpack.c.bf16 %v597, %v595
        %v651 = vpack.c.bf16 %v600, %v598
        %v652 = vpack.c.bf16 %v601, %v599
        %v653 = vpack.c.bf16 %v604, %v602
        %v654 = vpack.c.bf16 %v605, %v603
        %v656 = vlaneseq
        %v657 = vshrl.u32 %v656, 7
        %v658 = vsub.s32 0, %v657
        %v659 = vrot.slane %v638, %v658
        %v660 = vlaneseq
        %v661 = vshrl.u32 %v660, 7
        %v662 = vsub.s32 1, %v661
        %v663 = vrot.slane %v638, %v662
        %v698 = vunpack.c.l.b16 %v606
        %v699 = vunpack.c.h.b16 %v606
        %v700 = vunpack.c.l.b16 %v607
        %v701 = vunpack.c.h.b16 %v607
        %v702 = vunpack.c.l.b16 %v608
        %v703 = vunpack.c.h.b16 %v608
        %v704 = vunpack.c.l.b16 %v609
        %v705 = vunpack.c.h.b16 %v609
        %v706 = vunpack.c.l.b16 %v610
        %v707 = vunpack.c.h.b16 %v610
        %v708 = vunpack.c.l.b16 %v611
        %v709 = vunpack.c.h.b16 %v611
        %v710 = vunpack.c.l.b16 %v612
        %v711 = vunpack.c.h.b16 %v612
        %v712 = vunpack.c.l.b16 %v613
        %v713 = vunpack.c.h.b16 %v613
        %v714 = vunpack.c.l.b16 %v614
        %v715 = vunpack.c.h.b16 %v614
        %v716 = vunpack.c.l.b16 %v615
        %v717 = vunpack.c.h.b16 %v615
        %v718 = vunpack.c.l.b16 %v616
        %v719 = vunpack.c.h.b16 %v616
        %v720 = vunpack.c.l.b16 %v617
        %v721 = vunpack.c.h.b16 %v617
        %v722 = vunpack.c.l.b16 %v618
        %v723 = vunpack.c.h.b16 %v618
        %v724 = vunpack.c.l.b16 %v619
        %v725 = vunpack.c.h.b16 %v619
        %v726 = vunpack.c.l.b16 %v620
        %v727 = vunpack.c.h.b16 %v620
        %v728 = vunpack.c.l.b16 %v621
        %v729 = vunpack.c.h.b16 %v621
        %v730 = vunpack.c.l.b16 %v622
        %v731 = vunpack.c.h.b16 %v622
        %v732 = vunpack.c.l.b16 %v623
        %v733 = vunpack.c.h.b16 %v623
        %v734 = vunpack.c.l.b16 %v624
        %v735 = vunpack.c.h.b16 %v624
        %v736 = vunpack.c.l.b16 %v625
        %v737 = vunpack.c.h.b16 %v625
        %v738 = vunpack.c.l.b16 %v626
        %v739 = vunpack.c.h.b16 %v626
        %v740 = vunpack.c.l.b16 %v627
        %v741 = vunpack.c.h.b16 %v627
        %v742 = vunpack.c.l.b16 %v628
        %v743 = vunpack.c.h.b16 %v628
        %v744 = vunpack.c.l.b16 %v629
        %v745 = vunpack.c.h.b16 %v629
        %v746 = vunpack.c.l.b16 %v630
        %v747 = vunpack.c.h.b16 %v630
        %v748 = vunpack.c.l.b16 %v631
        %v749 = vunpack.c.h.b16 %v631
        %v750 = vunpack.c.l.b16 %v632
        %v751 = vunpack.c.h.b16 %v632
        %v752 = vunpack.c.l.b16 %v633
        %v753 = vunpack.c.h.b16 %v633
        %v754 = vunpack.c.l.b16 %v634
        %v755 = vunpack.c.h.b16 %v634
        %v756 = vunpack.c.l.b16 %v635
        %v757 = vunpack.c.h.b16 %v635
        %v758 = vunpack.c.l.b16 %v636
        %v759 = vunpack.c.h.b16 %v636
        %v760 = vunpack.c.l.b16 %v637
        %v761 = vunpack.c.h.b16 %v637
        %v762 = vpack.c.b16 %v700, %v698
        %v763 = vpack.c.b16 %v701, %v699
        %v764 = vpack.c.b16 %v704, %v702
        %v765 = vpack.c.b16 %v705, %v703
        %v766 = vpack.c.b16 %v708, %v706
        %v767 = vpack.c.b16 %v709, %v707
        %v768 = vpack.c.b16 %v712, %v710
        %v769 = vpack.c.b16 %v713, %v711
        %v770 = vpack.c.b16 %v716, %v714
        %v771 = vpack.c.b16 %v717, %v715
        %v772 = vpack.c.b16 %v720, %v718
        %v773 = vpack.c.b16 %v721, %v719
        %v774 = vpack.c.b16 %v724, %v722
        %v775 = vpack.c.b16 %v725, %v723
        %v776 = vpack.c.b16 %v728, %v726
        %v777 = vpack.c.b16 %v729, %v727
        %v778 = vpack.c.b16 %v732, %v730
        %v779 = vpack.c.b16 %v733, %v731
        %v780 = vpack.c.b16 %v736, %v734
        %v781 = vpack.c.b16 %v737, %v735
        %v782 = vpack.c.b16 %v740, %v738
        %v783 = vpack.c.b16 %v741, %v739
        %v784 = vpack.c.b16 %v744, %v742
        %v785 = vpack.c.b16 %v745, %v743
        %v786 = vpack.c.b16 %v748, %v746
        %v787 = vpack.c.b16 %v749, %v747
        %v788 = vpack.c.b16 %v752, %v750
        %v789 = vpack.c.b16 %v753, %v751
        %v790 = vpack.c.b16 %v756, %v754
        %v791 = vpack.c.b16 %v757, %v755
        %v792 = vpack.c.b16 %v760, %v758
        %v793 = vpack.c.b16 %v761, %v759
        %826 = vmatprep.subr.bf16.mxu0 %v763
        %827 = vmatpush1.bf16.msra.mxu0 %v762
        %828 = vmatprep.subr.bf16.mxu0 %v765
        %829 = vmatpush1.bf16.msra.mxu0 %v764
        %830 = vmatprep.subr.bf16.mxu0 %v767
        %831 = vmatpush1.bf16.msra.mxu0 %v766
        %832 = vmatprep.subr.bf16.mxu0 %v769
        %833 = vmatpush1.bf16.msra.mxu0 %v768
        %834 = vmatprep.subr.bf16.mxu0 %v771
        %835 = vmatpush1.bf16.msra.mxu0 %v770
        %836 = vmatprep.subr.bf16.mxu0 %v773
        %837 = vmatpush1.bf16.msra.mxu0 %v772
        %838 = vmatprep.subr.bf16.mxu0 %v775
        %839 = vmatpush1.bf16.msra.mxu0 %v774
        %840 = vmatprep.subr.bf16.mxu0 %v777
        %841 = vmatpush1.bf16.msra.mxu0 %v776
        %842 = vmatprep.subr.bf16.mxu0 %v779
        %843 = vmatpush1.bf16.msra.mxu0 %v778
        %844 = vmatprep.subr.bf16.mxu0 %v781
        %845 = vmatpush1.bf16.msra.mxu0 %v780
        %846 = vmatprep.subr.bf16.mxu0 %v783
        %847 = vmatpush1.bf16.msra.mxu0 %v782
        %848 = vmatprep.subr.bf16.mxu0 %v785
        %849 = vmatpush1.bf16.msra.mxu0 %v784
        %850 = vmatprep.subr.bf16.mxu0 %v787
        %851 = vmatpush1.bf16.msra.mxu0 %v786
        %852 = vmatprep.subr.bf16.mxu0 %v789
        %853 = vmatpush1.bf16.msra.mxu0 %v788
        %854 = vmatprep.subr.bf16.mxu0 %v791
        %855 = vmatpush1.bf16.msra.mxu0 %v790
        %856 = vmatprep.subr.bf16.mxu0 %v793
        %857 = vmatpush1.bf16.msra.mxu0 %v792
        %858 = vmatprep.mubr.bf16.mxu0 %v640
        %859 = vmatmul.mubr.bf16.gmra.mrb[0].mxu0 %v639
        %v860 = vpop.f32.mrb[0].mxu0
        %v861 = vadd.f32 %v659, %v860
        %v862 = vpop.f32.mrb[0].mxu0
        %v863 = vadd.f32 %v663, %v862
        %v864 = vpop.f32.mrb[0].mxu0
        %v865 = vadd.f32 %v659, %v864
        %v866 = vpop.f32.mrb[0].mxu0
        %v867 = vadd.f32 %v663, %v866
        %868 = vmatprep.mubr.bf16.mxu0 %v642
        %869 = vmatmul.mubr.bf16.gmra.mrb[0].mxu0 %v641
        %v870 = vpop.f32.mrb[0].mxu0
        %v871 = vadd.f32 %v659, %v870
        %v872 = vpop.f32.mrb[0].mxu0
        %v873 = vadd.f32 %v663, %v872
        %v874 = vpop.f32.mrb[0].mxu0
        %v875 = vadd.f32 %v659, %v874
        %v876 = vpop.f32.mrb[0].mxu0
        %v877 = vadd.f32 %v663, %v876
        %878 = vmatprep.mubr.bf16.mxu0 %v644
        %879 = vmatmul.mubr.bf16.gmra.mrb[0].mxu0 %v643
        %v880 = vpop.f32.mrb[0].mxu0
        %v881 = vadd.f32 %v659, %v880
        %v882 = vpop.f32.mrb[0].mxu0
        %v883 = vadd.f32 %v663, %v882
        %v884 = vpop.f32.mrb[0].mxu0
        %v885 = vadd.f32 %v659, %v884
        %v886 = vpop.f32.mrb[0].mxu0
        %v887 = vadd.f32 %v663, %v886
        %888 = vmatprep.mubr.bf16.mxu0 %v646
        %889 = vmatmul.mubr.bf16.gmra.mrb[0].mxu0 %v645
        %v890 = vpop.f32.mrb[0].mxu0
        %v891 = vadd.f32 %v659, %v890
        %v892 = vpop.f32.mrb[0].mxu0
        %v893 = vadd.f32 %v663, %v892
        %v894 = vpop.f32.mrb[0].mxu0
        %v895 = vadd.f32 %v659, %v894
        %v896 = vpop.f32.mrb[0].mxu0
        %v897 = vadd.f32 %v663, %v896
        %898 = vmatprep.mubr.bf16.mxu0 %v648
        %899 = vmatmul.mubr.bf16.gmra.mrb[0].mxu0 %v647
        %v900 = vpop.f32.mrb[0].mxu0
        %v901 = vadd.f32 %v659, %v900
        %v902 = vpop.f32.mrb[0].mxu0
        %v903 = vadd.f32 %v663, %v902
        %v904 = vpop.f32.mrb[0].mxu0
        %v905 = vadd.f32 %v659, %v904
        %v906 = vpop.f32.mrb[0].mxu0
        %v907 = vadd.f32 %v663, %v906
        %908 = vmatprep.mubr.bf16.mxu0 %v650
        %909 = vmatmul.mubr.bf16.gmra.mrb[0].mxu0 %v649
        %v910 = vpop.f32.mrb[0].mxu0
        %v911 = vadd.f32 %v659, %v910
        %v912 = vpop.f32.mrb[0].mxu0
        %v913 = vadd.f32 %v663, %v912
        %v914 = vpop.f32.mrb[0].mxu0
        %v915 = vadd.f32 %v659, %v914
        %v916 = vpop.f32.mrb[0].mxu0
        %v917 = vadd.f32 %v663, %v916
        %918 = vmatprep.mubr.bf16.mxu0 %v652
        %919 = vmatmul.mubr.bf16.gmra.mrb[0].mxu0 %v651
        %v920 = vpop.f32.mrb[0].mxu0
        %v921 = vadd.f32 %v659, %v920
        %v922 = vpop.f32.mrb[0].mxu0
        %v923 = vadd.f32 %v663, %v922
        %v924 = vpop.f32.mrb[0].mxu0
        %v925 = vadd.f32 %v659, %v924
        %v926 = vpop.f32.mrb[0].mxu0
        %v927 = vadd.f32 %v663, %v926
        %928 = vmatprep.mubr.bf16.mxu0 %v654
        %929 = vmatmul.mubr.bf16.gmra.mrb[0].mxu0 %v653
        %v930 = vpop.f32.mrb[0].mxu0
        %v931 = vadd.f32 %v659, %v930
        %v932 = vpop.f32.mrb[0].mxu0
        %v933 = vadd.f32 %v663, %v932
        %v934 = vpop.f32.mrb[0].mxu0
        %v935 = vadd.f32 %v659, %v934
        %v936 = vpop.f32.mrb[0].mxu0
        %v937 = vadd.f32 %v663, %v936
        %938 = vdwg.mxu0
        %v939 = vmul.f32 %v861, 0.5
        %v940 = vmul.f32 %v863, 0.5
        %v941 = vmul.f32 %v865, 0.5
        %v942 = vmul.f32 %v867, 0.5
        %v943 = vmul.f32 %v871, 0.5
        %v944 = vmul.f32 %v873, 0.5
        %v945 = vmul.f32 %v875, 0.5
        %v946 = vmul.f32 %v877, 0.5
        %v947 = vmul.f32 %v881, 0.5
        %v948 = vmul.f32 %v883, 0.5
        %v949 = vmul.f32 %v885, 0.5
        %v950 = vmul.f32 %v887, 0.5
        %v951 = vmul.f32 %v891, 0.5
        %v952 = vmul.f32 %v893, 0.5
        %v953 = vmul.f32 %v895, 0.5
        %v954 = vmul.f32 %v897, 0.5
        %v955 = vmul.f32 %v901, 0.5
        %v956 = vmul.f32 %v903, 0.5
        %v957 = vmul.f32 %v905, 0.5
        %v958 = vmul.f32 %v907, 0.5
        %v959 = vmul.f32 %v911, 0.5
        %v960 = vmul.f32 %v913, 0.5
        %v961 = vmul.f32 %v915, 0.5
        %v962 = vmul.f32 %v917, 0.5
        %v963 = vmul.f32 %v921, 0.5
        %v964 = vmul.f32 %v923, 0.5
        %v965 = vmul.f32 %v925, 0.5
        %v966 = vmul.f32 %v927, 0.5
        %v967 = vmul.f32 %v931, 0.5
        %v968 = vmul.f32 %v933, 0.5
        %v969 = vmul.f32 %v935, 0.5
        %v970 = vmul.f32 %v937, 0.5
        %v971 = vtanh.pop %v939
        %v972 = vtanh.pop %v940
        %v973 = vtanh.pop %v941
        %v974 = vtanh.pop %v942
        %v975 = vtanh.pop %v943
        %v976 = vtanh.pop %v944
        %v977 = vtanh.pop %v945
        %v978 = vtanh.pop %v946
        %v979 = vtanh.pop %v947
        %v980 = vtanh.pop %v948
        %v981 = vtanh.pop %v949
        %v982 = vtanh.pop %v950
        %v983 = vtanh.pop %v951
        %v984 = vtanh.pop %v952
        %v985 = vtanh.pop %v953
        %v986 = vtanh.pop %v954
        %v987 = vtanh.pop %v955
        %v988 = vtanh.pop %v956
        %v989 = vtanh.pop %v957
        %v990 = vtanh.pop %v958
        %v991 = vtanh.pop %v959
        %v992 = vtanh.pop %v960
        %v993 = vtanh.pop %v961
        %v994 = vtanh.pop %v962
        %v995 = vtanh.pop %v963
        %v996 = vtanh.pop %v964
        %v997 = vtanh.pop %v965
        %v998 = vtanh.pop %v966
        %v999 = vtanh.pop %v967
        %v1000 = vtanh.pop %v968
        %v1001 = vtanh.pop %v969
        %v1002 = vtanh.pop %v970
        %v1003 = vmul.f32 %v971, 0.5
        %v1004 = vmul.f32 %v972, 0.5
        %v1005 = vmul.f32 %v973, 0.5
        %v1006 = vmul.f32 %v974, 0.5
        %v1007 = vmul.f32 %v975, 0.5
        %v1008 = vmul.f32 %v976, 0.5
        %v1009 = vmul.f32 %v977, 0.5
        %v1010 = vmul.f32 %v978, 0.5
        %v1011 = vmul.f32 %v979, 0.5
        %v1012 = vmul.f32 %v980, 0.5
        %v1013 = vmul.f32 %v981, 0.5
        %v1014 = vmul.f32 %v982, 0.5
        %v1015 = vmul.f32 %v983, 0.5
        %v1016 = vmul.f32 %v984, 0.5
        %v1017 = vmul.f32 %v985, 0.5
        %v1018 = vmul.f32 %v986, 0.5
        %v1019 = vmul.f32 %v987, 0.5
        %v1020 = vmul.f32 %v988, 0.5
        %v1021 = vmul.f32 %v989, 0.5
        %v1022 = vmul.f32 %v990, 0.5
        %v1023 = vmul.f32 %v991, 0.5
        %v1024 = vmul.f32 %v992, 0.5
        %v1025 = vmul.f32 %v993, 0.5
        %v1026 = vmul.f32 %v994, 0.5
        %v1027 = vmul.f32 %v995, 0.5
        %v1028 = vmul.f32 %v996, 0.5
        %v1029 = vmul.f32 %v997, 0.5
        %v1030 = vmul.f32 %v998, 0.5
        %v1031 = vmul.f32 %v999, 0.5
        %v1032 = vmul.f32 %v1000, 0.5
        %v1033 = vmul.f32 %v1001, 0.5
        %v1034 = vmul.f32 %v1002, 0.5
        %v1035 = vadd.f32 %v1003, 0.5
        %v1036 = vadd.f32 %v1004, 0.5
        %v1037 = vadd.f32 %v1005, 0.5
        %v1038 = vadd.f32 %v1006, 0.5
        %v1039 = vadd.f32 %v1007, 0.5
        %v1040 = vadd.f32 %v1008, 0.5
        %v1041 = vadd.f32 %v1009, 0.5
        %v1042 = vadd.f32 %v1010, 0.5
        %v1043 = vadd.f32 %v1011, 0.5
        %v1044 = vadd.f32 %v1012, 0.5
        %v1045 = vadd.f32 %v1013, 0.5
        %v1046 = vadd.f32 %v1014, 0.5
        %v1047 = vadd.f32 %v1015, 0.5
        %v1048 = vadd.f32 %v1016, 0.5
        %v1049 = vadd.f32 %v1017, 0.5
        %v1050 = vadd.f32 %v1018, 0.5
        %v1051 = vadd.f32 %v1019, 0.5
        %v1052 = vadd.f32 %v1020, 0.5
        %v1053 = vadd.f32 %v1021, 0.5
        %v1054 = vadd.f32 %v1022, 0.5
        %v1055 = vadd.f32 %v1023, 0.5
        %v1056 = vadd.f32 %v1024, 0.5
        %v1057 = vadd.f32 %v1025, 0.5
        %v1058 = vadd.f32 %v1026, 0.5
        %v1059 = vadd.f32 %v1027, 0.5
        %v1060 = vadd.f32 %v1028, 0.5
        %v1061 = vadd.f32 %v1029, 0.5
        %v1062 = vadd.f32 %v1030, 0.5
        %v1063 = vadd.f32 %v1031, 0.5
        %v1064 = vadd.f32 %v1032, 0.5
        %v1065 = vadd.f32 %v1033, 0.5
        %v1066 = vadd.f32 %v1034, 0.5
        %v1067 = vmul.f32 %v861, %v1035
        %v1068 = vmul.f32 %v863, %v1036
        %v1069 = vmul.f32 %v865, %v1037
        %v1070 = vmul.f32 %v867, %v1038
        %v1071 = vmul.f32 %v871, %v1039
        %v1072 = vmul.f32 %v873, %v1040
        %v1073 = vmul.f32 %v875, %v1041
        %v1074 = vmul.f32 %v877, %v1042
        %v1075 = vmul.f32 %v881, %v1043
        %v1076 = vmul.f32 %v883, %v1044
        %v1077 = vmul.f32 %v885, %v1045
        %v1078 = vmul.f32 %v887, %v1046
        %v1079 = vmul.f32 %v891, %v1047
        %v1080 = vmul.f32 %v893, %v1048
        %v1081 = vmul.f32 %v895, %v1049
        %v1082 = vmul.f32 %v897, %v1050
        %v1083 = vmul.f32 %v901, %v1051
        %v1084 = vmul.f32 %v903, %v1052
        %v1085 = vmul.f32 %v905, %v1053
        %v1086 = vmul.f32 %v907, %v1054
        %v1087 = vmul.f32 %v911, %v1055
        %v1088 = vmul.f32 %v913, %v1056
        %v1089 = vmul.f32 %v915, %v1057
        %v1090 = vmul.f32 %v917, %v1058
        %v1091 = vmul.f32 %v921, %v1059
        %v1092 = vmul.f32 %v923, %v1060
        %v1093 = vmul.f32 %v925, %v1061
        %v1094 = vmul.f32 %v927, %v1062
        %v1095 = vmul.f32 %v931, %v1063
        %v1096 = vmul.f32 %v933, %v1064
        %v1097 = vmul.f32 %v935, %v1065
        %v1098 = vmul.f32 %v937, %v1066
        %1099 = vadd.xlane.f32.xlu0 %v1067
        %v1100 = vpop.xlane.xlu0 %1099
        %1101 = vadd.xlane.f32.xlu0 %v1069
        %v1102 = vpop.xlane.xlu0 %1101
        %1103 = vadd.xlane.f32.xlu0 %v1071
        %v1104 = vpop.xlane.xlu0 %1103
        %1105 = vadd.xlane.f32.xlu0 %v1073
        %v1106 = vpop.xlane.xlu0 %1105
        %1107 = vadd.xlane.f32.xlu0 %v1075
        %v1108 = vpop.xlane.xlu0 %1107
        %1109 = vadd.xlane.f32.xlu0 %v1077
        %v1110 = vpop.xlane.xlu0 %1109
        %1111 = vadd.xlane.f32.xlu0 %v1079
        %v1112 = vpop.xlane.xlu0 %1111
        %1113 = vadd.xlane.f32.xlu0 %v1081
        %v1114 = vpop.xlane.xlu0 %1113
        %1115 = vadd.xlane.f32.xlu0 %v1083
        %v1116 = vpop.xlane.xlu0 %1115
        %1117 = vadd.xlane.f32.xlu0 %v1085
        %v1118 = vpop.xlane.xlu0 %1117
        %1119 = vadd.xlane.f32.xlu0 %v1087
        %v1120 = vpop.xlane.xlu0 %1119
        %1121 = vadd.xlane.f32.xlu0 %v1089
        %v1122 = vpop.xlane.xlu0 %1121
        %1123 = vadd.xlane.f32.xlu0 %v1091
        %v1124 = vpop.xlane.xlu0 %1123
        %1125 = vadd.xlane.f32.xlu0 %v1093
        %v1126 = vpop.xlane.xlu0 %1125
        %1127 = vadd.xlane.f32.xlu0 %v1095
        %v1128 = vpop.xlane.xlu0 %1127
        %1129 = vadd.xlane.f32.xlu0 %v1097
        %v1130 = vpop.xlane.xlu0 %1129
        %v1131 = vrcp.pop 128.0
        %v1132 = vmul.f32 %v1100, %v1131
        %v1133 = vmul.f32 %v1102, %v1131
        %v1134 = vmul.f32 %v1104, %v1131
        %v1135 = vmul.f32 %v1106, %v1131
        %v1136 = vmul.f32 %v1108, %v1131
        %v1137 = vmul.f32 %v1110, %v1131
        %v1138 = vmul.f32 %v1112, %v1131
        %v1139 = vmul.f32 %v1114, %v1131
        %v1140 = vmul.f32 %v1116, %v1131
        %v1141 = vmul.f32 %v1118, %v1131
        %v1142 = vmul.f32 %v1120, %v1131
        %v1143 = vmul.f32 %v1122, %v1131
        %v1144 = vmul.f32 %v1124, %v1131
        %v1145 = vmul.f32 %v1126, %v1131
        %v1146 = vmul.f32 %v1128, %v1131
        %v1147 = vmul.f32 %v1130, %v1131
        %v1148 = vsub.f32 %v1067, %v1132
        %v1149 = vsub.f32 %v1069, %v1133
        %v1150 = vsub.f32 %v1071, %v1134
        %v1151 = vsub.f32 %v1073, %v1135
        %v1152 = vsub.f32 %v1075, %v1136
        %v1153 = vsub.f32 %v1077, %v1137
        %v1154 = vsub.f32 %v1079, %v1138
        %v1155 = vsub.f32 %v1081, %v1139
        %v1156 = vsub.f32 %v1083, %v1140
        %v1157 = vsub.f32 %v1085, %v1141
        %v1158 = vsub.f32 %v1087, %v1142
        %v1159 = vsub.f32 %v1089, %v1143
        %v1160 = vsub.f32 %v1091, %v1144
        %v1161 = vsub.f32 %v1093, %v1145
        %v1162 = vsub.f32 %v1095, %v1146
        %v1163 = vsub.f32 %v1097, %v1147
        %v1164 = vmul.f32 %v1148, %v1148
        %v1165 = vmul.f32 %v1149, %v1149
        %v1166 = vmul.f32 %v1150, %v1150
        %v1167 = vmul.f32 %v1151, %v1151
        %v1168 = vmul.f32 %v1152, %v1152
        %v1169 = vmul.f32 %v1153, %v1153
        %v1170 = vmul.f32 %v1154, %v1154
        %v1171 = vmul.f32 %v1155, %v1155
        %v1172 = vmul.f32 %v1156, %v1156
        %v1173 = vmul.f32 %v1157, %v1157
        %v1174 = vmul.f32 %v1158, %v1158
        %v1175 = vmul.f32 %v1159, %v1159
        %v1176 = vmul.f32 %v1160, %v1160
        %v1177 = vmul.f32 %v1161, %v1161
        %v1178 = vmul.f32 %v1162, %v1162
        %v1179 = vmul.f32 %v1163, %v1163
        %1180 = vadd.xlane.f32.xlu0 %v1164
        %v1181 = vpop.xlane.xlu0 %1180
        %1182 = vadd.xlane.f32.xlu0 %v1165
        %v1183 = vpop.xlane.xlu0 %1182
        %1184 = vadd.xlane.f32.xlu0 %v1166
        %v1185 = vpop.xlane.xlu0 %1184
        %1186 = vadd.xlane.f32.xlu0 %v1167
        %v1187 = vpop.xlane.xlu0 %1186
        %1188 = vadd.xlane.f32.xlu0 %v1168
        %v1189 = vpop.xlane.xlu0 %1188
        %1190 = vadd.xlane.f32.xlu0 %v1169
        %v1191 = vpop.xlane.xlu0 %1190
        %1192 = vadd.xlane.f32.xlu0 %v1170
        %v1193 = vpop.xlane.xlu0 %1192
        %1194 = vadd.xlane.f32.xlu0 %v1171
        %v1195 = vpop.xlane.xlu0 %1194
        %1196 = vadd.xlane.f32.xlu0 %v1172
        %v1197 = vpop.xlane.xlu0 %1196
        %1198 = vadd.xlane.f32.xlu0 %v1173
        %v1199 = vpop.xlane.xlu0 %1198
        %1200 = vadd.xlane.f32.xlu0 %v1174
        %v1201 = vpop.xlane.xlu0 %1200
        %1202 = vadd.xlane.f32.xlu0 %v1175
        %v1203 = vpop.xlane.xlu0 %1202
        %1204 = vadd.xlane.f32.xlu0 %v1176
        %v1205 = vpop.xlane.xlu0 %1204
        %1206 = vadd.xlane.f32.xlu0 %v1177
        %v1207 = vpop.xlane.xlu0 %1206
        %1208 = vadd.xlane.f32.xlu0 %v1178
        %v1209 = vpop.xlane.xlu0 %1208
        %1210 = vadd.xlane.f32.xlu0 %v1179
        %v1211 = vpop.xlane.xlu0 %1210
        %v1212 = vmul.f32 %v1181, %v1131
        %v1213 = vmul.f32 %v1183, %v1131
        %v1214 = vmul.f32 %v1185, %v1131
        %v1215 = vmul.f32 %v1187, %v1131
        %v1216 = vmul.f32 %v1189, %v1131
        %v1217 = vmul.f32 %v1191, %v1131
        %v1218 = vmul.f32 %v1193, %v1131
        %v1219 = vmul.f32 %v1195, %v1131
        %v1220 = vmul.f32 %v1197, %v1131
        %v1221 = vmul.f32 %v1199, %v1131
        %v1222 = vmul.f32 %v1201, %v1131
        %v1223 = vmul.f32 %v1203, %v1131
        %v1224 = vmul.f32 %v1205, %v1131
        %v1225 = vmul.f32 %v1207, %v1131
        %v1226 = vmul.f32 %v1209, %v1131
        %v1227 = vmul.f32 %v1211, %v1131
        %v1228 = vadd.f32 %v1212, 0.1
        %v1229 = vadd.f32 %v1213, 0.1
        %v1230 = vadd.f32 %v1214, 0.1
        %v1231 = vadd.f32 %v1215, 0.1
        %v1232 = vadd.f32 %v1216, 0.1
        %v1233 = vadd.f32 %v1217, 0.1
        %v1234 = vadd.f32 %v1218, 0.1
        %v1235 = vadd.f32 %v1219, 0.1
        %v1236 = vadd.f32 %v1220, 0.1
        %v1237 = vadd.f32 %v1221, 0.1
        %v1238 = vadd.f32 %v1222, 0.1
        %v1239 = vadd.f32 %v1223, 0.1
        %v1240 = vadd.f32 %v1224, 0.1
        %v1241 = vadd.f32 %v1225, 0.1
        %v1242 = vadd.f32 %v1226, 0.1
        %v1243 = vadd.f32 %v1227, 0.1
        %v1244 = vrsqrt.pop %v1228
        %v1245 = vrsqrt.pop %v1229
        %v1246 = vrsqrt.pop %v1230
        %v1247 = vrsqrt.pop %v1231
        %v1248 = vrsqrt.pop %v1232
        %v1249 = vrsqrt.pop %v1233
        %v1250 = vrsqrt.pop %v1234
        %v1251 = vrsqrt.pop %v1235
        %v1252 = vrsqrt.pop %v1236
        %v1253 = vrsqrt.pop %v1237
        %v1254 = vrsqrt.pop %v1238
        %v1255 = vrsqrt.pop %v1239
        %v1256 = vrsqrt.pop %v1240
        %v1257 = vrsqrt.pop %v1241
        %v1258 = vrsqrt.pop %v1242
        %v1259 = vrsqrt.pop %v1243
        %v1260 = vmul.f32 %v1148, %v1244
        %v1261 = vmul.f32 %v1149, %v1245
        %v1262 = vmul.f32 %v1150, %v1246
        %v1263 = vmul.f32 %v1151, %v1247
        %v1264 = vmul.f32 %v1152, %v1248
        %v1265 = vmul.f32 %v1153, %v1249
        %v1266 = vmul.f32 %v1154, %v1250
        %v1267 = vmul.f32 %v1155, %v1251
        %v1268 = vmul.f32 %v1156, %v1252
        %v1269 = vmul.f32 %v1157, %v1253
        %v1270 = vmul.f32 %v1158, %v1254
        %v1271 = vmul.f32 %v1159, %v1255
        %v1272 = vmul.f32 %v1160, %v1256
        %v1273 = vmul.f32 %v1161, %v1257
        %v1274 = vmul.f32 %v1162, %v1258
        %v1275 = vmul.f32 %v1163, %v1259
        %1276 = vadd.xlane.f32.xlu0 %v1068
        %v1277 = vpop.xlane.xlu0 %1276
        %1278 = vadd.xlane.f32.xlu0 %v1070
        %v1279 = vpop.xlane.xlu0 %1278
        %1280 = vadd.xlane.f32.xlu0 %v1072
        %v1281 = vpop.xlane.xlu0 %1280
        %1282 = vadd.xlane.f32.xlu0 %v1074
        %v1283 = vpop.xlane.xlu0 %1282
        %1284 = vadd.xlane.f32.xlu0 %v1076
        %v1285 = vpop.xlane.xlu0 %1284
        %1286 = vadd.xlane.f32.xlu0 %v1078
        %v1287 = vpop.xlane.xlu0 %1286
        %1288 = vadd.xlane.f32.xlu0 %v1080
        %v1289 = vpop.xlane.xlu0 %1288
        %1290 = vadd.xlane.f32.xlu0 %v1082
        %v1291 = vpop.xlane.xlu0 %1290
        %1292 = vadd.xlane.f32.xlu0 %v1084
        %v1293 = vpop.xlane.xlu0 %1292
        %1294 = vadd.xlane.f32.xlu0 %v1086
        %v1295 = vpop.xlane.xlu0 %1294
        %1296 = vadd.xlane.f32.xlu0 %v1088
        %v1297 = vpop.xlane.xlu0 %1296
        %1298 = vadd.xlane.f32.xlu0 %v1090
        %v1299 = vpop.xlane.xlu0 %1298
        %1300 = vadd.xlane.f32.xlu0 %v1092
        %v1301 = vpop.xlane.xlu0 %1300
        %1302 = vadd.xlane.f32.xlu0 %v1094
        %v1303 = vpop.xlane.xlu0 %1302
        %1304 = vadd.xlane.f32.xlu0 %v1096
        %v1305 = vpop.xlane.xlu0 %1304
        %1306 = vadd.xlane.f32.xlu0 %v1098
        %v1307 = vpop.xlane.xlu0 %1306
        %v1308 = vmul.f32 %v1277, %v1131
        %v1309 = vmul.f32 %v1279, %v1131
        %v1310 = vmul.f32 %v1281, %v1131
        %v1311 = vmul.f32 %v1283, %v1131
        %v1312 = vmul.f32 %v1285, %v1131
        %v1313 = vmul.f32 %v1287, %v1131
        %v1314 = vmul.f32 %v1289, %v1131
        %v1315 = vmul.f32 %v1291, %v1131
        %v1316 = vmul.f32 %v1293, %v1131
        %v1317 = vmul.f32 %v1295, %v1131
        %v1318 = vmul.f32 %v1297, %v1131
        %v1319 = vmul.f32 %v1299, %v1131
        %v1320 = vmul.f32 %v1301, %v1131
        %v1321 = vmul.f32 %v1303, %v1131
        %v1322 = vmul.f32 %v1305, %v1131
        %v1323 = vmul.f32 %v1307, %v1131
        %v1324 = vsub.f32 %v1068, %v1308
        %v1325 = vsub.f32 %v1070, %v1309
        %v1326 = vsub.f32 %v1072, %v1310
        %v1327 = vsub.f32 %v1074, %v1311
        %v1328 = vsub.f32 %v1076, %v1312
        %v1329 = vsub.f32 %v1078, %v1313
        %v1330 = vsub.f32 %v1080, %v1314
        %v1331 = vsub.f32 %v1082, %v1315
        %v1332 = vsub.f32 %v1084, %v1316
        %v1333 = vsub.f32 %v1086, %v1317
        %v1334 = vsub.f32 %v1088, %v1318
        %v1335 = vsub.f32 %v1090, %v1319
        %v1336 = vsub.f32 %v1092, %v1320
        %v1337 = vsub.f32 %v1094, %v1321
        %v1338 = vsub.f32 %v1096, %v1322
        %v1339 = vsub.f32 %v1098, %v1323
        %v1340 = vmul.f32 %v1324, %v1324
        %v1341 = vmul.f32 %v1325, %v1325
        %v1342 = vmul.f32 %v1326, %v1326
        %v1343 = vmul.f32 %v1327, %v1327
        %v1344 = vmul.f32 %v1328, %v1328
        %v1345 = vmul.f32 %v1329, %v1329
        %v1346 = vmul.f32 %v1330, %v1330
        %v1347 = vmul.f32 %v1331, %v1331
        %v1348 = vmul.f32 %v1332, %v1332
        %v1349 = vmul.f32 %v1333, %v1333
        %v1350 = vmul.f32 %v1334, %v1334
        %v1351 = vmul.f32 %v1335, %v1335
        %v1352 = vmul.f32 %v1336, %v1336
        %v1353 = vmul.f32 %v1337, %v1337
        %v1354 = vmul.f32 %v1338, %v1338
        %v1355 = vmul.f32 %v1339, %v1339
        %1356 = vadd.xlane.f32.xlu0 %v1340
        %v1357 = vpop.xlane.xlu0 %1356
        %1358 = vadd.xlane.f32.xlu0 %v1341
        %v1359 = vpop.xlane.xlu0 %1358
        %1360 = vadd.xlane.f32.xlu0 %v1342
        %v1361 = vpop.xlane.xlu0 %1360
        %1362 = vadd.xlane.f32.xlu0 %v1343
        %v1363 = vpop.xlane.xlu0 %1362
        %1364 = vadd.xlane.f32.xlu0 %v1344
        %v1365 = vpop.xlane.xlu0 %1364
        %1366 = vadd.xlane.f32.xlu0 %v1345
        %v1367 = vpop.xlane.xlu0 %1366
        %1368 = vadd.xlane.f32.xlu0 %v1346
        %v1369 = vpop.xlane.xlu0 %1368
        %1370 = vadd.xlane.f32.xlu0 %v1347
        %v1371 = vpop.xlane.xlu0 %1370
        %1372 = vadd.xlane.f32.xlu0 %v1348
        %v1373 = vpop.xlane.xlu0 %1372
        %1374 = vadd.xlane.f32.xlu0 %v1349
        %v1375 = vpop.xlane.xlu0 %1374
        %1376 = vadd.xlane.f32.xlu0 %v1350
        %v1377 = vpop.xlane.xlu0 %1376
        %1378 = vadd.xlane.f32.xlu0 %v1351
        %v1379 = vpop.xlane.xlu0 %1378
        %1380 = vadd.xlane.f32.xlu0 %v1352
        %v1381 = vpop.xlane.xlu0 %1380
        %1382 = vadd.xlane.f32.xlu0 %v1353
        %v1383 = vpop.xlane.xlu0 %1382
        %1384 = vadd.xlane.f32.xlu0 %v1354
        %v1385 = vpop.xlane.xlu0 %1384
        %1386 = vadd.xlane.f32.xlu0 %v1355
        %v1387 = vpop.xlane.xlu0 %1386
        %v1388 = vmul.f32 %v1357, %v1131
        %v1389 = vmul.f32 %v1359, %v1131
        %v1390 = vmul.f32 %v1361, %v1131
        %v1391 = vmul.f32 %v1363, %v1131
        %v1392 = vmul.f32 %v1365, %v1131
        %v1393 = vmul.f32 %v1367, %v1131
        %v1394 = vmul.f32 %v1369, %v1131
        %v1395 = vmul.f32 %v1371, %v1131
        %v1396 = vmul.f32 %v1373, %v1131
        %v1397 = vmul.f32 %v1375, %v1131
        %v1398 = vmul.f32 %v1377, %v1131
        %v1399 = vmul.f32 %v1379, %v1131
        %v1400 = vmul.f32 %v1381, %v1131
        %v1401 = vmul.f32 %v1383, %v1131
        %v1402 = vmul.f32 %v1385, %v1131
        %v1403 = vmul.f32 %v1387, %v1131
        %v1404 = vadd.f32 %v1388, 0.1
        %v1405 = vadd.f32 %v1389, 0.1
        %v1406 = vadd.f32 %v1390, 0.1
        %v1407 = vadd.f32 %v1391, 0.1
        %v1408 = vadd.f32 %v1392, 0.1
        %v1409 = vadd.f32 %v1393, 0.1
        %v1410 = vadd.f32 %v1394, 0.1
        %v1411 = vadd.f32 %v1395, 0.1
        %v1412 = vadd.f32 %v1396, 0.1
        %v1413 = vadd.f32 %v1397, 0.1
        %v1414 = vadd.f32 %v1398, 0.1
        %v1415 = vadd.f32 %v1399, 0.1
        %v1416 = vadd.f32 %v1400, 0.1
        %v1417 = vadd.f32 %v1401, 0.1
        %v1418 = vadd.f32 %v1402, 0.1
        %v1419 = vadd.f32 %v1403, 0.1
        %v1420 = vrsqrt.pop %v1404
        %v1421 = vrsqrt.pop %v1405
        %v1422 = vrsqrt.pop %v1406
        %v1423 = vrsqrt.pop %v1407
        %v1424 = vrsqrt.pop %v1408
        %v1425 = vrsqrt.pop %v1409
        %v1426 = vrsqrt.pop %v1410
        %v1427 = vrsqrt.pop %v1411
        %v1428 = vrsqrt.pop %v1412
        %v1429 = vrsqrt.pop %v1413
        %v1430 = vrsqrt.pop %v1414
        %v1431 = vrsqrt.pop %v1415
        %v1432 = vrsqrt.pop %v1416
        %v1433 = vrsqrt.pop %v1417
        %v1434 = vrsqrt.pop %v1418
        %v1435 = vrsqrt.pop %v1419
        %v1436 = vmul.f32 %v1324, %v1420
        %v1437 = vmul.f32 %v1325, %v1421
        %v1438 = vmul.f32 %v1326, %v1422
        %v1439 = vmul.f32 %v1327, %v1423
        %v1440 = vmul.f32 %v1328, %v1424
        %v1441 = vmul.f32 %v1329, %v1425
        %v1442 = vmul.f32 %v1330, %v1426
        %v1443 = vmul.f32 %v1331, %v1427
        %v1444 = vmul.f32 %v1332, %v1428
        %v1445 = vmul.f32 %v1333, %v1429
        %v1446 = vmul.f32 %v1334, %v1430
        %v1447 = vmul.f32 %v1335, %v1431
        %v1448 = vmul.f32 %v1336, %v1432
        %v1449 = vmul.f32 %v1337, %v1433
        %v1450 = vmul.f32 %v1338, %v1434
        %v1451 = vmul.f32 %v1339, %v1435
        %v1452 = vld [vmem:[%s3] sm:$0x3]
        %v1454 = vlaneseq
        %v1455 = vshrl.u32 %v1454, 7
        %v1456 = vsub.s32 0, %v1455
        %v1457 = vrot.slane %v1452, %v1456
        %v1458 = vlaneseq
        %v1459 = vshrl.u32 %v1458, 7
        %v1460 = vsub.s32 1, %v1459
        %v1461 = vrot.slane %v1452, %v1460
        %v1464 = vmul.f32 %v1260, %v1457
        %v1465 = vmul.f32 %v1436, %v1461
        %v1466 = vmul.f32 %v1261, %v1457
        %v1467 = vmul.f32 %v1437, %v1461
        %v1468 = vmul.f32 %v1262, %v1457
        %v1469 = vmul.f32 %v1438, %v1461
        %v1470 = vmul.f32 %v1263, %v1457
        %v1471 = vmul.f32 %v1439, %v1461
        %v1472 = vmul.f32 %v1264, %v1457
        %v1473 = vmul.f32 %v1440, %v1461
        %v1474 = vmul.f32 %v1265, %v1457
        %v1475 = vmul.f32 %v1441, %v1461
        %v1476 = vmul.f32 %v1266, %v1457
        %v1477 = vmul.f32 %v1442, %v1461
        %v1478 = vmul.f32 %v1267, %v1457
        %v1479 = vmul.f32 %v1443, %v1461
        %v1480 = vmul.f32 %v1268, %v1457
        %v1481 = vmul.f32 %v1444, %v1461
        %v1482 = vmul.f32 %v1269, %v1457
        %v1483 = vmul.f32 %v1445, %v1461
        %v1484 = vmul.f32 %v1270, %v1457
        %v1485 = vmul.f32 %v1446, %v1461
        %v1486 = vmul.f32 %v1271, %v1457
        %v1487 = vmul.f32 %v1447, %v1461
        %v1488 = vmul.f32 %v1272, %v1457
        %v1489 = vmul.f32 %v1448, %v1461
        %v1490 = vmul.f32 %v1273, %v1457
        %v1491 = vmul.f32 %v1449, %v1461
        %v1492 = vmul.f32 %v1274, %v1457
        %v1493 = vmul.f32 %v1450, %v1461
        %v1494 = vmul.f32 %v1275, %v1457
        %v1495 = vmul.f32 %v1451, %v1461
        %v1496 = vld [vmem:[#allocation7] sm:$0x3]
        %v1498 = vlaneseq
        %v1499 = vshrl.u32 %v1498, 7
        %v1500 = vsub.s32 0, %v1499
        %v1501 = vrot.slane %v1496, %v1500
        %v1502 = vlaneseq
        %v1503 = vshrl.u32 %v1502, 7
        %v1504 = vsub.s32 1, %v1503
        %v1505 = vrot.slane %v1496, %v1504
        %v1508 = vadd.f32 %v1464, %v1501
        %v1509 = vadd.f32 %v1465, %v1505
        %v1510 = vadd.f32 %v1466, %v1501
        %v1511 = vadd.f32 %v1467, %v1505
        %v1512 = vadd.f32 %v1468, %v1501
        %v1513 = vadd.f32 %v1469, %v1505
        %v1514 = vadd.f32 %v1470, %v1501
        %v1515 = vadd.f32 %v1471, %v1505
        %v1516 = vadd.f32 %v1472, %v1501
        %v1517 = vadd.f32 %v1473, %v1505
        %v1518 = vadd.f32 %v1474, %v1501
        %v1519 = vadd.f32 %v1475, %v1505
        %v1520 = vadd.f32 %v1476, %v1501
        %v1521 = vadd.f32 %v1477, %v1505
        %v1522 = vadd.f32 %v1478, %v1501
        %v1523 = vadd.f32 %v1479, %v1505
        %v1524 = vadd.f32 %v1480, %v1501
        %v1525 = vadd.f32 %v1481, %v1505
        %v1526 = vadd.f32 %v1482, %v1501
        %v1527 = vadd.f32 %v1483, %v1505
        %v1528 = vadd.f32 %v1484, %v1501
        %v1529 = vadd.f32 %v1485, %v1505
        %v1530 = vadd.f32 %v1486, %v1501
        %v1531 = vadd.f32 %v1487, %v1505
        %v1532 = vadd.f32 %v1488, %v1501
        %v1533 = vadd.f32 %v1489, %v1505
        %v1534 = vadd.f32 %v1490, %v1501
        %v1535 = vadd.f32 %v1491, %v1505
        %v1536 = vadd.f32 %v1492, %v1501
        %v1537 = vadd.f32 %v1493, %v1505
        %v1538 = vadd.f32 %v1494, %v1501
        %v1539 = vadd.f32 %v1495, %v1505
        %s1540 = scalar_lea.vmem [#allocation4], 256
        %v1541 = vld [vmem:[%s1540] sm:$0xff]
        %v1542 = vld [vmem:[%s1540 + $0x8] sm:$0xff]
        %v1543 = vld [vmem:[%s1540 + $0x10] sm:$0xff]
        %v1544 = vld [vmem:[%s1540 + $0x18] sm:$0xff]
        %v1545 = vld [vmem:[%s1540 + $0x20] sm:$0xff]
        %v1546 = vld [vmem:[%s1540 + $0x28] sm:$0xff]
        %v1547 = vld [vmem:[%s1540 + $0x30] sm:$0xff]
        %v1548 = vld [vmem:[%s1540 + $0x38] sm:$0xff]
        %v1549 = vld [vmem:[%s1540 + $0x40] sm:$0xff]
        %v1550 = vld [vmem:[%s1540 + $0x48] sm:$0xff]
        %v1551 = vld [vmem:[%s1540 + $0x50] sm:$0xff]
        %v1552 = vld [vmem:[%s1540 + $0x58] sm:$0xff]
        %v1553 = vld [vmem:[%s1540 + $0x60] sm:$0xff]
        %v1554 = vld [vmem:[%s1540 + $0x68] sm:$0xff]
        %v1555 = vld [vmem:[%s1540 + $0x70] sm:$0xff]
        %v1556 = vld [vmem:[%s1540 + $0x78] sm:$0xff]
        %v1557 = vld [vmem:[%s1540 + $0x80] sm:$0xff]
        %v1558 = vld [vmem:[%s1540 + $0x88] sm:$0xff]
        %v1559 = vld [vmem:[%s1540 + $0x90] sm:$0xff]
        %v1560 = vld [vmem:[%s1540 + $0x98] sm:$0xff]
        %v1561 = vld [vmem:[%s1540 + $0xa0] sm:$0xff]
        %v1562 = vld [vmem:[%s1540 + $0xa8] sm:$0xff]
        %v1563 = vld [vmem:[%s1540 + $0xb0] sm:$0xff]
        %v1564 = vld [vmem:[%s1540 + $0xb8] sm:$0xff]
        %v1565 = vld [vmem:[%s1540 + $0xc0] sm:$0xff]
        %v1566 = vld [vmem:[%s1540 + $0xc8] sm:$0xff]
        %v1567 = vld [vmem:[%s1540 + $0xd0] sm:$0xff]
        %v1568 = vld [vmem:[%s1540 + $0xd8] sm:$0xff]
        %v1569 = vld [vmem:[%s1540 + $0xe0] sm:$0xff]
        %v1570 = vld [vmem:[%s1540 + $0xe8] sm:$0xff]
        %v1571 = vld [vmem:[%s1540 + $0xf0] sm:$0xff]
        %v1572 = vld [vmem:[%s1540 + $0xf8] sm:$0xff]
        %s1573 = scalar_lea.vmem [#allocation6], 2
        %v1574 = vld [vmem:[%s1573] sm:$0x3]
        %v1575 = vpack.c.bf16 %v1510, %v1508
        %v1576 = vpack.c.bf16 %v1511, %v1509
        %v1577 = vpack.c.bf16 %v1514, %v1512
        %v1578 = vpack.c.bf16 %v1515, %v1513
        %v1579 = vpack.c.bf16 %v1518, %v1516
        %v1580 = vpack.c.bf16 %v1519, %v1517
        %v1581 = vpack.c.bf16 %v1522, %v1520
        %v1582 = vpack.c.bf16 %v1523, %v1521
        %v1583 = vpack.c.bf16 %v1526, %v1524
        %v1584 = vpack.c.bf16 %v1527, %v1525
        %v1585 = vpack.c.bf16 %v1530, %v1528
        %v1586 = vpack.c.bf16 %v1531, %v1529
        %v1587 = vpack.c.bf16 %v1534, %v1532
        %v1588 = vpack.c.bf16 %v1535, %v1533
        %v1589 = vpack.c.bf16 %v1538, %v1536
        %v1590 = vpack.c.bf16 %v1539, %v1537
        %v1592 = vlaneseq
        %v1593 = vshrl.u32 %v1592, 7
        %v1594 = vsub.s32 0, %v1593
        %v1595 = vrot.slane %v1574, %v1594
        %v1596 = vlaneseq
        %v1597 = vshrl.u32 %v1596, 7
        %v1598 = vsub.s32 1, %v1597
        %v1599 = vrot.slane %v1574, %v1598
        %v1634 = vunpack.c.l.b16 %v1541
        %v1635 = vunpack.c.h.b16 %v1541
        %v1636 = vunpack.c.l.b16 %v1542
        %v1637 = vunpack.c.h.b16 %v1542
        %v1638 = vunpack.c.l.b16 %v1543
        %v1639 = vunpack.c.h.b16 %v1543
        %v1640 = vunpack.c.l.b16 %v1544
        %v1641 = vunpack.c.h.b16 %v1544
        %v1642 = vunpack.c.l.b16 %v1545
        %v1643 = vunpack.c.h.b16 %v1545
        %v1644 = vunpack.c.l.b16 %v1546
        %v1645 = vunpack.c.h.b16 %v1546
        %v1646 = vunpack.c.l.b16 %v1547
        %v1647 = vunpack.c.h.b16 %v1547
        %v1648 = vunpack.c.l.b16 %v1548
        %v1649 = vunpack.c.h.b16 %v1548
        %v1650 = vunpack.c.l.b16 %v1549
        %v1651 = vunpack.c.h.b16 %v1549
        %v1652 = vunpack.c.l.b16 %v1550
        %v1653 = vunpack.c.h.b16 %v1550
        %v1654 = vunpack.c.l.b16 %v1551
        %v1655 = vunpack.c.h.b16 %v1551
        %v1656 = vunpack.c.l.b16 %v1552
        %v1657 = vunpack.c.h.b16 %v1552
        %v1658 = vunpack.c.l.b16 %v1553
        %v1659 = vunpack.c.h.b16 %v1553
        %v1660 = vunpack.c.l.b16 %v1554
        %v1661 = vunpack.c.h.b16 %v1554
        %v1662 = vunpack.c.l.b16 %v1555
        %v1663 = vunpack.c.h.b16 %v1555
        %v1664 = vunpack.c.l.b16 %v1556
        %v1665 = vunpack.c.h.b16 %v1556
        %v1666 = vunpack.c.l.b16 %v1557
        %v1667 = vunpack.c.h.b16 %v1557
        %v1668 = vunpack.c.l.b16 %v1558
        %v1669 = vunpack.c.h.b16 %v1558
        %v1670 = vunpack.c.l.b16 %v1559
        %v1671 = vunpack.c.h.b16 %v1559
        %v1672 = vunpack.c.l.b16 %v1560
        %v1673 = vunpack.c.h.b16 %v1560
        %v1674 = vunpack.c.l.b16 %v1561
        %v1675 = vunpack.c.h.b16 %v1561
        %v1676 = vunpack.c.l.b16 %v1562
        %v1677 = vunpack.c.h.b16 %v1562
        %v1678 = vunpack.c.l.b16 %v1563
        %v1679 = vunpack.c.h.b16 %v1563
        %v1680 = vunpack.c.l.b16 %v1564
        %v1681 = vunpack.c.h.b16 %v1564
        %v1682 = vunpack.c.l.b16 %v1565
        %v1683 = vunpack.c.h.b16 %v1565
        %v1684 = vunpack.c.l.b16 %v1566
        %v1685 = vunpack.c.h.b16 %v1566
        %v1686 = vunpack.c.l.b16 %v1567
        %v1687 = vunpack.c.h.b16 %v1567
        %v1688 = vunpack.c.l.b16 %v1568
        %v1689 = vunpack.c.h.b16 %v1568
        %v1690 = vunpack.c.l.b16 %v1569
        %v1691 = vunpack.c.h.b16 %v1569
        %v1692 = vunpack.c.l.b16 %v1570
        %v1693 = vunpack.c.h.b16 %v1570
        %v1694 = vunpack.c.l.b16 %v1571
        %v1695 = vunpack.c.h.b16 %v1571
        %v1696 = vunpack.c.l.b16 %v1572
        %v1697 = vunpack.c.h.b16 %v1572
        %v1698 = vpack.c.b16 %v1636, %v1634
        %v1699 = vpack.c.b16 %v1637, %v1635
        %v1700 = vpack.c.b16 %v1640, %v1638
        %v1701 = vpack.c.b16 %v1641, %v1639
        %v1702 = vpack.c.b16 %v1644, %v1642
        %v1703 = vpack.c.b16 %v1645, %v1643
        %v1704 = vpack.c.b16 %v1648, %v1646
        %v1705 = vpack.c.b16 %v1649, %v1647
        %v1706 = vpack.c.b16 %v1652, %v1650
        %v1707 = vpack.c.b16 %v1653, %v1651
        %v1708 = vpack.c.b16 %v1656, %v1654
        %v1709 = vpack.c.b16 %v1657, %v1655
        %v1710 = vpack.c.b16 %v1660, %v1658
        %v1711 = vpack.c.b16 %v1661, %v1659
        %v1712 = vpack.c.b16 %v1664, %v1662
        %v1713 = vpack.c.b16 %v1665, %v1663
        %v1714 = vpack.c.b16 %v1668, %v1666
        %v1715 = vpack.c.b16 %v1669, %v1667
        %v1716 = vpack.c.b16 %v1672, %v1670
        %v1717 = vpack.c.b16 %v1673, %v1671
        %v1718 = vpack.c.b16 %v1676, %v1674
        %v1719 = vpack.c.b16 %v1677, %v1675
        %v1720 = vpack.c.b16 %v1680, %v1678
        %v1721 = vpack.c.b16 %v1681, %v1679
        %v1722 = vpack.c.b16 %v1684, %v1682
        %v1723 = vpack.c.b16 %v1685, %v1683
        %v1724 = vpack.c.b16 %v1688, %v1686
        %v1725 = vpack.c.b16 %v1689, %v1687
        %v1726 = vpack.c.b16 %v1692, %v1690
        %v1727 = vpack.c.b16 %v1693, %v1691
        %v1728 = vpack.c.b16 %v1696, %v1694
        %v1729 = vpack.c.b16 %v1697, %v1695
        %1762 = vmatprep.subr.bf16.mxu0 %v1699
        %1763 = vmatpush1.bf16.msra.mxu0 %v1698
        %1764 = vmatprep.subr.bf16.mxu0 %v1701
        %1765 = vmatpush1.bf16.msra.mxu0 %v1700
        %1766 = vmatprep.subr.bf16.mxu0 %v1703
        %1767 = vmatpush1.bf16.msra.mxu0 %v1702
        %1768 = vmatprep.subr.bf16.mxu0 %v1705
        %1769 = vmatpush1.bf16.msra.mxu0 %v1704
        %1770 = vmatprep.subr.bf16.mxu0 %v1707
        %1771 = vmatpush1.bf16.msra.mxu0 %v1706
        %1772 = vmatprep.subr.bf16.mxu0 %v1709
        %1773 = vmatpush1.bf16.msra.mxu0 %v1708
        %1774 = vmatprep.subr.bf16.mxu0 %v1711
        %1775 = vmatpush1.bf16.msra.mxu0 %v1710
        %1776 = vmatprep.subr.bf16.mxu0 %v1713
        %1777 = vmatpush1.bf16.msra.mxu0 %v1712
        %1778 = vmatprep.subr.bf16.mxu0 %v1715
        %1779 = vmatpush1.bf16.msra.mxu0 %v1714
        %1780 = vmatprep.subr.bf16.mxu0 %v1717
        %1781 = vmatpush1.bf16.msra.mxu0 %v1716
        %1782 = vmatprep.subr.bf16.mxu0 %v1719
        %1783 = vmatpush1.bf16.msra.mxu0 %v1718
        %1784 = vmatprep.subr.bf16.mxu0 %v1721
        %1785 = vmatpush1.bf16.msra.mxu0 %v1720
        %1786 = vmatprep.subr.bf16.mxu0 %v1723
        %1787 = vmatpush1.bf16.msra.mxu0 %v1722
        %1788 = vmatprep.subr.bf16.mxu0 %v1725
        %1789 = vmatpush1.bf16.msra.mxu0 %v1724
        %1790 = vmatprep.subr.bf16.mxu0 %v1727
        %1791 = vmatpush1.bf16.msra.mxu0 %v1726
        %1792 = vmatprep.subr.bf16.mxu0 %v1729
        %1793 = vmatpush1.bf16.msra.mxu0 %v1728
        %1794 = vmatprep.mubr.bf16.mxu0 %v1576
        %1795 = vmatmul.mubr.bf16.gmra.mrb[0].mxu0 %v1575
        %v1796 = vpop.f32.mrb[0].mxu0
        %v1797 = vadd.f32 %v1595, %v1796
        %v1798 = vpop.f32.mrb[0].mxu0
        %v1799 = vadd.f32 %v1599, %v1798
        %v1800 = vpop.f32.mrb[0].mxu0
        %v1801 = vadd.f32 %v1595, %v1800
        %v1802 = vpop.f32.mrb[0].mxu0
        %v1803 = vadd.f32 %v1599, %v1802
        %1804 = vmatprep.mubr.bf16.mxu0 %v1578
        %1805 = vmatmul.mubr.bf16.gmra.mrb[0].mxu0 %v1577
        %v1806 = vpop.f32.mrb[0].mxu0
        %v1807 = vadd.f32 %v1595, %v1806
        %v1808 = vpop.f32.mrb[0].mxu0
        %v1809 = vadd.f32 %v1599, %v1808
        %v1810 = vpop.f32.mrb[0].mxu0
        %v1811 = vadd.f32 %v1595, %v1810
        %v1812 = vpop.f32.mrb[0].mxu0
        %v1813 = vadd.f32 %v1599, %v1812
        %1814 = vmatprep.mubr.bf16.mxu0 %v1580
        %1815 = vmatmul.mubr.bf16.gmra.mrb[0].mxu0 %v1579
        %v1816 = vpop.f32.mrb[0].mxu0
        %v1817 = vadd.f32 %v1595, %v1816
        %v1818 = vpop.f32.mrb[0].mxu0
        %v1819 = vadd.f32 %v1599, %v1818
        %v1820 = vpop.f32.mrb[0].mxu0
        %v1821 = vadd.f32 %v1595, %v1820
        %v1822 = vpop.f32.mrb[0].mxu0
        %v1823 = vadd.f32 %v1599, %v1822
        %1824 = vmatprep.mubr.bf16.mxu0 %v1582
        %1825 = vmatmul.mubr.bf16.gmra.mrb[0].mxu0 %v1581
        %v1826 = vpop.f32.mrb[0].mxu0
        %v1827 = vadd.f32 %v1595, %v1826
        %v1828 = vpop.f32.mrb[0].mxu0
        %v1829 = vadd.f32 %v1599, %v1828
        %v1830 = vpop.f32.mrb[0].mxu0
        %v1831 = vadd.f32 %v1595, %v1830
        %v1832 = vpop.f32.mrb[0].mxu0
        %v1833 = vadd.f32 %v1599, %v1832
        %1834 = vmatprep.mubr.bf16.mxu0 %v1584
        %1835 = vmatmul.mubr.bf16.gmra.mrb[0].mxu0 %v1583
        %v1836 = vpop.f32.mrb[0].mxu0
        %v1837 = vadd.f32 %v1595, %v1836
        %v1838 = vpop.f32.mrb[0].mxu0
        %v1839 = vadd.f32 %v1599, %v1838
        %v1840 = vpop.f32.mrb[0].mxu0
        %v1841 = vadd.f32 %v1595, %v1840
        %v1842 = vpop.f32.mrb[0].mxu0
        %v1843 = vadd.f32 %v1599, %v1842
        %1844 = vmatprep.mubr.bf16.mxu0 %v1586
        %1845 = vmatmul.mubr.bf16.gmra.mrb[0].mxu0 %v1585
        %v1846 = vpop.f32.mrb[0].mxu0
        %v1847 = vadd.f32 %v1595, %v1846
        %v1848 = vpop.f32.mrb[0].mxu0
        %v1849 = vadd.f32 %v1599, %v1848
        %v1850 = vpop.f32.mrb[0].mxu0
        %v1851 = vadd.f32 %v1595, %v1850
        %v1852 = vpop.f32.mrb[0].mxu0
        %v1853 = vadd.f32 %v1599, %v1852
        %1854 = vmatprep.mubr.bf16.mxu0 %v1588
        %1855 = vmatmul.mubr.bf16.gmra.mrb[0].mxu0 %v1587
        %v1856 = vpop.f32.mrb[0].mxu0
        %v1857 = vadd.f32 %v1595, %v1856
        %v1858 = vpop.f32.mrb[0].mxu0
        %v1859 = vadd.f32 %v1599, %v1858
        %v1860 = vpop.f32.mrb[0].mxu0
        %v1861 = vadd.f32 %v1595, %v1860
        %v1862 = vpop.f32.mrb[0].mxu0
        %v1863 = vadd.f32 %v1599, %v1862
        %1864 = vmatprep.mubr.bf16.mxu0 %v1590
        %1865 = vmatmul.mubr.bf16.gmra.mrb[0].mxu0 %v1589
        %v1866 = vpop.f32.mrb[0].mxu0
        %v1867 = vadd.f32 %v1595, %v1866
        %v1868 = vpop.f32.mrb[0].mxu0
        %v1869 = vadd.f32 %v1599, %v1868
        %v1870 = vpop.f32.mrb[0].mxu0
        %v1871 = vadd.f32 %v1595, %v1870
        %v1872 = vpop.f32.mrb[0].mxu0
        %v1873 = vadd.f32 %v1599, %v1872
        %1874 = vdwg.mxu0
        %v1875 = vadd.f32 %v1797, %v1508
        %v1876 = vadd.f32 %v1799, %v1509
        %v1877 = vadd.f32 %v1801, %v1510
        %v1878 = vadd.f32 %v1803, %v1511
        %v1879 = vadd.f32 %v1807, %v1512
        %v1880 = vadd.f32 %v1809, %v1513
        %v1881 = vadd.f32 %v1811, %v1514
        %v1882 = vadd.f32 %v1813, %v1515
        %v1883 = vadd.f32 %v1817, %v1516
        %v1884 = vadd.f32 %v1819, %v1517
        %v1885 = vadd.f32 %v1821, %v1518
        %v1886 = vadd.f32 %v1823, %v1519
        %v1887 = vadd.f32 %v1827, %v1520
        %v1888 = vadd.f32 %v1829, %v1521
        %v1889 = vadd.f32 %v1831, %v1522
        %v1890 = vadd.f32 %v1833, %v1523
        %v1891 = vadd.f32 %v1837, %v1524
        %v1892 = vadd.f32 %v1839, %v1525
        %v1893 = vadd.f32 %v1841, %v1526
        %v1894 = vadd.f32 %v1843, %v1527
        %v1895 = vadd.f32 %v1847, %v1528
        %v1896 = vadd.f32 %v1849, %v1529
        %v1897 = vadd.f32 %v1851, %v1530
        %v1898 = vadd.f32 %v1853, %v1531
        %v1899 = vadd.f32 %v1857, %v1532
        %v1900 = vadd.f32 %v1859, %v1533
        %v1901 = vadd.f32 %v1861, %v1534
        %v1902 = vadd.f32 %v1863, %v1535
        %v1903 = vadd.f32 %v1867, %v1536
        %v1904 = vadd.f32 %v1869, %v1537
        %v1905 = vadd.f32 %v1871, %v1538
        %v1906 = vadd.f32 %v1873, %v1539
        %v1907 = vmul.f32 %v1875, 0.5
        %v1908 = vmul.f32 %v1876, 0.5
        %v1909 = vmul.f32 %v1877, 0.5
        %v1910 = vmul.f32 %v1878, 0.5
        %v1911 = vmul.f32 %v1879, 0.5
        %v1912 = vmul.f32 %v1880, 0.5
        %v1913 = vmul.f32 %v1881, 0.5
        %v1914 = vmul.f32 %v1882, 0.5
        %v1915 = vmul.f32 %v1883, 0.5
        %v1916 = vmul.f32 %v1884, 0.5
        %v1917 = vmul.f32 %v1885, 0.5
        %v1918 = vmul.f32 %v1886, 0.5
        %v1919 = vmul.f32 %v1887, 0.5
        %v1920 = vmul.f32 %v1888, 0.5
        %v1921 = vmul.f32 %v1889, 0.5
        %v1922 = vmul.f32 %v1890, 0.5
        %v1923 = vmul.f32 %v1891, 0.5
        %v1924 = vmul.f32 %v1892, 0.5
        %v1925 = vmul.f32 %v1893, 0.5
        %v1926 = vmul.f32 %v1894, 0.5
        %v1927 = vmul.f32 %v1895, 0.5
        %v1928 = vmul.f32 %v1896, 0.5
        %v1929 = vmul.f32 %v1897, 0.5
        %v1930 = vmul.f32 %v1898, 0.5
        %v1931 = vmul.f32 %v1899, 0.5
        %v1932 = vmul.f32 %v1900, 0.5
        %v1933 = vmul.f32 %v1901, 0.5
        %v1934 = vmul.f32 %v1902, 0.5
        %v1935 = vmul.f32 %v1903, 0.5
        %v1936 = vmul.f32 %v1904, 0.5
        %v1937 = vmul.f32 %v1905, 0.5
        %v1938 = vmul.f32 %v1906, 0.5
        %v1939 = vtanh.pop %v1907
        %v1940 = vtanh.pop %v1908
        %v1941 = vtanh.pop %v1909
        %v1942 = vtanh.pop %v1910
        %v1943 = vtanh.pop %v1911
        %v1944 = vtanh.pop %v1912
        %v1945 = vtanh.pop %v1913
        %v1946 = vtanh.pop %v1914
        %v1947 = vtanh.pop %v1915
        %v1948 = vtanh.pop %v1916
        %v1949 = vtanh.pop %v1917
        %v1950 = vtanh.pop %v1918
        %v1951 = vtanh.pop %v1919
        %v1952 = vtanh.pop %v1920
        %v1953 = vtanh.pop %v1921
        %v1954 = vtanh.pop %v1922
        %v1955 = vtanh.pop %v1923
        %v1956 = vtanh.pop %v1924
        %v1957 = vtanh.pop %v1925
        %v1958 = vtanh.pop %v1926
        %v1959 = vtanh.pop %v1927
        %v1960 = vtanh.pop %v1928
        %v1961 = vtanh.pop %v1929
        %v1962 = vtanh.pop %v1930
        %v1963 = vtanh.pop %v1931
        %v1964 = vtanh.pop %v1932
        %v1965 = vtanh.pop %v1933
        %v1966 = vtanh.pop %v1934
        %v1967 = vtanh.pop %v1935
        %v1968 = vtanh.pop %v1936
        %v1969 = vtanh.pop %v1937
        %v1970 = vtanh.pop %v1938
        %v1971 = vmul.f32 %v1939, 0.5
        %v1972 = vmul.f32 %v1940, 0.5
        %v1973 = vmul.f32 %v1941, 0.5
        %v1974 = vmul.f32 %v1942, 0.5
        %v1975 = vmul.f32 %v1943, 0.5
        %v1976 = vmul.f32 %v1944, 0.5
        %v1977 = vmul.f32 %v1945, 0.5
        %v1978 = vmul.f32 %v1946, 0.5
        %v1979 = vmul.f32 %v1947, 0.5
        %v1980 = vmul.f32 %v1948, 0.5
        %v1981 = vmul.f32 %v1949, 0.5
        %v1982 = vmul.f32 %v1950, 0.5
        %v1983 = vmul.f32 %v1951, 0.5
        %v1984 = vmul.f32 %v1952, 0.5
        %v1985 = vmul.f32 %v1953, 0.5
        %v1986 = vmul.f32 %v1954, 0.5
        %v1987 = vmul.f32 %v1955, 0.5
        %v1988 = vmul.f32 %v1956, 0.5
        %v1989 = vmul.f32 %v1957, 0.5
        %v1990 = vmul.f32 %v1958, 0.5
        %v1991 = vmul.f32 %v1959, 0.5
        %v1992 = vmul.f32 %v1960, 0.5
        %v1993 = vmul.f32 %v1961, 0.5
        %v1994 = vmul.f32 %v1962, 0.5
        %v1995 = vmul.f32 %v1963, 0.5
        %v1996 = vmul.f32 %v1964, 0.5
        %v1997 = vmul.f32 %v1965, 0.5
        %v1998 = vmul.f32 %v1966, 0.5
        %v1999 = vmul.f32 %v1967, 0.5
        %v2000 = vmul.f32 %v1968, 0.5
        %v2001 = vmul.f32 %v1969, 0.5
        %v2002 = vmul.f32 %v1970, 0.5
        %v2003 = vadd.f32 %v1971, 0.5
        %v2004 = vadd.f32 %v1972, 0.5
        %v2005 = vadd.f32 %v1973, 0.5
        %v2006 = vadd.f32 %v1974, 0.5
        %v2007 = vadd.f32 %v1975, 0.5
        %v2008 = vadd.f32 %v1976, 0.5
        %v2009 = vadd.f32 %v1977, 0.5
        %v2010 = vadd.f32 %v1978, 0.5
        %v2011 = vadd.f32 %v1979, 0.5
        %v2012 = vadd.f32 %v1980, 0.5
        %v2013 = vadd.f32 %v1981, 0.5
        %v2014 = vadd.f32 %v1982, 0.5
        %v2015 = vadd.f32 %v1983, 0.5
        %v2016 = vadd.f32 %v1984, 0.5
        %v2017 = vadd.f32 %v1985, 0.5
        %v2018 = vadd.f32 %v1986, 0.5
        %v2019 = vadd.f32 %v1987, 0.5
        %v2020 = vadd.f32 %v1988, 0.5
        %v2021 = vadd.f32 %v1989, 0.5
        %v2022 = vadd.f32 %v1990, 0.5
        %v2023 = vadd.f32 %v1991, 0.5
        %v2024 = vadd.f32 %v1992, 0.5
        %v2025 = vadd.f32 %v1993, 0.5
        %v2026 = vadd.f32 %v1994, 0.5
        %v2027 = vadd.f32 %v1995, 0.5
        %v2028 = vadd.f32 %v1996, 0.5
        %v2029 = vadd.f32 %v1997, 0.5
        %v2030 = vadd.f32 %v1998, 0.5
        %v2031 = vadd.f32 %v1999, 0.5
        %v2032 = vadd.f32 %v2000, 0.5
        %v2033 = vadd.f32 %v2001, 0.5
        %v2034 = vadd.f32 %v2002, 0.5
        %v2035 = vmul.f32 %v1875, %v2003
        %v2036 = vmul.f32 %v1876, %v2004
        %v2037 = vmul.f32 %v1877, %v2005
        %v2038 = vmul.f32 %v1878, %v2006
        %v2039 = vmul.f32 %v1879, %v2007
        %v2040 = vmul.f32 %v1880, %v2008
        %v2041 = vmul.f32 %v1881, %v2009
        %v2042 = vmul.f32 %v1882, %v2010
        %v2043 = vmul.f32 %v1883, %v2011
        %v2044 = vmul.f32 %v1884, %v2012
        %v2045 = vmul.f32 %v1885, %v2013
        %v2046 = vmul.f32 %v1886, %v2014
        %v2047 = vmul.f32 %v1887, %v2015
        %v2048 = vmul.f32 %v1888, %v2016
        %v2049 = vmul.f32 %v1889, %v2017
        %v2050 = vmul.f32 %v1890, %v2018
        %v2051 = vmul.f32 %v1891, %v2019
        %v2052 = vmul.f32 %v1892, %v2020
        %v2053 = vmul.f32 %v1893, %v2021
        %v2054 = vmul.f32 %v1894, %v2022
        %v2055 = vmul.f32 %v1895, %v2023
        %v2056 = vmul.f32 %v1896, %v2024
        %v2057 = vmul.f32 %v1897, %v2025
        %v2058 = vmul.f32 %v1898, %v2026
        %v2059 = vmul.f32 %v1899, %v2027
        %v2060 = vmul.f32 %v1900, %v2028
        %v2061 = vmul.f32 %v1901, %v2029
        %v2062 = vmul.f32 %v1902, %v2030
        %v2063 = vmul.f32 %v1903, %v2031
        %v2064 = vmul.f32 %v1904, %v2032
        %v2065 = vmul.f32 %v1905, %v2033
        %v2066 = vmul.f32 %v1906, %v2034
        %2067 = vadd.xlane.f32.xlu0 %v2035
        %v2068 = vpop.xlane.xlu0 %2067
        %2069 = vadd.xlane.f32.xlu0 %v2037
        %v2070 = vpop.xlane.xlu0 %2069
        %2071 = vadd.xlane.f32.xlu0 %v2039
        %v2072 = vpop.xlane.xlu0 %2071
        %2073 = vadd.xlane.f32.xlu0 %v2041
        %v2074 = vpop.xlane.xlu0 %2073
        %2075 = vadd.xlane.f32.xlu0 %v2043
        %v2076 = vpop.xlane.xlu0 %2075
        %2077 = vadd.xlane.f32.xlu0 %v2045
        %v2078 = vpop.xlane.xlu0 %2077
        %2079 = vadd.xlane.f32.xlu0 %v2047
        %v2080 = vpop.xlane.xlu0 %2079
        %2081 = vadd.xlane.f32.xlu0 %v2049
        %v2082 = vpop.xlane.xlu0 %2081
        %2083 = vadd.xlane.f32.xlu0 %v2051
        %v2084 = vpop.xlane.xlu0 %2083
        %2085 = vadd.xlane.f32.xlu0 %v2053
        %v2086 = vpop.xlane.xlu0 %2085
        %2087 = vadd.xlane.f32.xlu0 %v2055
        %v2088 = vpop.xlane.xlu0 %2087
        %2089 = vadd.xlane.f32.xlu0 %v2057
        %v2090 = vpop.xlane.xlu0 %2089
        %2091 = vadd.xlane.f32.xlu0 %v2059
        %v2092 = vpop.xlane.xlu0 %2091
        %2093 = vadd.xlane.f32.xlu0 %v2061
        %v2094 = vpop.xlane.xlu0 %2093
        %2095 = vadd.xlane.f32.xlu0 %v2063
        %v2096 = vpop.xlane.xlu0 %2095
        %2097 = vadd.xlane.f32.xlu0 %v2065
        %v2098 = vpop.xlane.xlu0 %2097
        %v2099 = vmul.f32 %v2068, %v1131
        %v2100 = vmul.f32 %v2070, %v1131
        %v2101 = vmul.f32 %v2072, %v1131
        %v2102 = vmul.f32 %v2074, %v1131
        %v2103 = vmul.f32 %v2076, %v1131
        %v2104 = vmul.f32 %v2078, %v1131
        %v2105 = vmul.f32 %v2080, %v1131
        %v2106 = vmul.f32 %v2082, %v1131
        %v2107 = vmul.f32 %v2084, %v1131
        %v2108 = vmul.f32 %v2086, %v1131
        %v2109 = vmul.f32 %v2088, %v1131
        %v2110 = vmul.f32 %v2090, %v1131
        %v2111 = vmul.f32 %v2092, %v1131
        %v2112 = vmul.f32 %v2094, %v1131
        %v2113 = vmul.f32 %v2096, %v1131
        %v2114 = vmul.f32 %v2098, %v1131
        %v2115 = vsub.f32 %v2035, %v2099
        %v2116 = vsub.f32 %v2037, %v2100
        %v2117 = vsub.f32 %v2039, %v2101
        %v2118 = vsub.f32 %v2041, %v2102
        %v2119 = vsub.f32 %v2043, %v2103
        %v2120 = vsub.f32 %v2045, %v2104
        %v2121 = vsub.f32 %v2047, %v2105
        %v2122 = vsub.f32 %v2049, %v2106
        %v2123 = vsub.f32 %v2051, %v2107
        %v2124 = vsub.f32 %v2053, %v2108
        %v2125 = vsub.f32 %v2055, %v2109
        %v2126 = vsub.f32 %v2057, %v2110
        %v2127 = vsub.f32 %v2059, %v2111
        %v2128 = vsub.f32 %v2061, %v2112
        %v2129 = vsub.f32 %v2063, %v2113
        %v2130 = vsub.f32 %v2065, %v2114
        %v2131 = vmul.f32 %v2115, %v2115
        %v2132 = vmul.f32 %v2116, %v2116
        %v2133 = vmul.f32 %v2117, %v2117
        %v2134 = vmul.f32 %v2118, %v2118
        %v2135 = vmul.f32 %v2119, %v2119
        %v2136 = vmul.f32 %v2120, %v2120
        %v2137 = vmul.f32 %v2121, %v2121
        %v2138 = vmul.f32 %v2122, %v2122
        %v2139 = vmul.f32 %v2123, %v2123
        %v2140 = vmul.f32 %v2124, %v2124
        %v2141 = vmul.f32 %v2125, %v2125
        %v2142 = vmul.f32 %v2126, %v2126
        %v2143 = vmul.f32 %v2127, %v2127
        %v2144 = vmul.f32 %v2128, %v2128
        %v2145 = vmul.f32 %v2129, %v2129
        %v2146 = vmul.f32 %v2130, %v2130
        %2147 = vadd.xlane.f32.xlu0 %v2131
        %v2148 = vpop.xlane.xlu0 %2147
        %2149 = vadd.xlane.f32.xlu0 %v2132
        %v2150 = vpop.xlane.xlu0 %2149
        %2151 = vadd.xlane.f32.xlu0 %v2133
        %v2152 = vpop.xlane.xlu0 %2151
        %2153 = vadd.xlane.f32.xlu0 %v2134
        %v2154 = vpop.xlane.xlu0 %2153
        %2155 = vadd.xlane.f32.xlu0 %v2135
        %v2156 = vpop.xlane.xlu0 %2155
        %2157 = vadd.xlane.f32.xlu0 %v2136
        %v2158 = vpop.xlane.xlu0 %2157
        %2159 = vadd.xlane.f32.xlu0 %v2137
        %v2160 = vpop.xlane.xlu0 %2159
        %2161 = vadd.xlane.f32.xlu0 %v2138
        %v2162 = vpop.xlane.xlu0 %2161
        %2163 = vadd.xlane.f32.xlu0 %v2139
        %v2164 = vpop.xlane.xlu0 %2163
        %2165 = vadd.xlane.f32.xlu0 %v2140
        %v2166 = vpop.xlane.xlu0 %2165
        %2167 = vadd.xlane.f32.xlu0 %v2141
        %v2168 = vpop.xlane.xlu0 %2167
        %2169 = vadd.xlane.f32.xlu0 %v2142
        %v2170 = vpop.xlane.xlu0 %2169
        %2171 = vadd.xlane.f32.xlu0 %v2143
        %v2172 = vpop.xlane.xlu0 %2171
        %2173 = vadd.xlane.f32.xlu0 %v2144
        %v2174 = vpop.xlane.xlu0 %2173
        %2175 = vadd.xlane.f32.xlu0 %v2145
        %v2176 = vpop.xlane.xlu0 %2175
        %2177 = vadd.xlane.f32.xlu0 %v2146
        %v2178 = vpop.xlane.xlu0 %2177
        %v2179 = vmul.f32 %v2148, %v1131
        %v2180 = vmul.f32 %v2150, %v1131
        %v2181 = vmul.f32 %v2152, %v1131
        %v2182 = vmul.f32 %v2154, %v1131
        %v2183 = vmul.f32 %v2156, %v1131
        %v2184 = vmul.f32 %v2158, %v1131
        %v2185 = vmul.f32 %v2160, %v1131
        %v2186 = vmul.f32 %v2162, %v1131
        %v2187 = vmul.f32 %v2164, %v1131
        %v2188 = vmul.f32 %v2166, %v1131
        %v2189 = vmul.f32 %v2168, %v1131
        %v2190 = vmul.f32 %v2170, %v1131
        %v2191 = vmul.f32 %v2172, %v1131
        %v2192 = vmul.f32 %v2174, %v1131
        %v2193 = vmul.f32 %v2176, %v1131
        %v2194 = vmul.f32 %v2178, %v1131
        %v2195 = vadd.f32 %v2179, 0.1
        %v2196 = vadd.f32 %v2180, 0.1
        %v2197 = vadd.f32 %v2181, 0.1
        %v2198 = vadd.f32 %v2182, 0.1
        %v2199 = vadd.f32 %v2183, 0.1
        %v2200 = vadd.f32 %v2184, 0.1
        %v2201 = vadd.f32 %v2185, 0.1
        %v2202 = vadd.f32 %v2186, 0.1
        %v2203 = vadd.f32 %v2187, 0.1
        %v2204 = vadd.f32 %v2188, 0.1
        %v2205 = vadd.f32 %v2189, 0.1
        %v2206 = vadd.f32 %v2190, 0.1
        %v2207 = vadd.f32 %v2191, 0.1
        %v2208 = vadd.f32 %v2192, 0.1
        %v2209 = vadd.f32 %v2193, 0.1
        %v2210 = vadd.f32 %v2194, 0.1
        %v2211 = vrsqrt.pop %v2195
        %v2212 = vrsqrt.pop %v2196
        %v2213 = vrsqrt.pop %v2197
        %v2214 = vrsqrt.pop %v2198
        %v2215 = vrsqrt.pop %v2199
        %v2216 = vrsqrt.pop %v2200
        %v2217 = vrsqrt.pop %v2201
        %v2218 = vrsqrt.pop %v2202
        %v2219 = vrsqrt.pop %v2203
        %v2220 = vrsqrt.pop %v2204
        %v2221 = vrsqrt.pop %v2205
        %v2222 = vrsqrt.pop %v2206
        %v2223 = vrsqrt.pop %v2207
        %v2224 = vrsqrt.pop %v2208
        %v2225 = vrsqrt.pop %v2209
        %v2226 = vrsqrt.pop %v2210
        %v2227 = vmul.f32 %v2115, %v2211
        %v2228 = vmul.f32 %v2116, %v2212
        %v2229 = vmul.f32 %v2117, %v2213
        %v2230 = vmul.f32 %v2118, %v2214
        %v2231 = vmul.f32 %v2119, %v2215
        %v2232 = vmul.f32 %v2120, %v2216
        %v2233 = vmul.f32 %v2121, %v2217
        %v2234 = vmul.f32 %v2122, %v2218
        %v2235 = vmul.f32 %v2123, %v2219
        %v2236 = vmul.f32 %v2124, %v2220
        %v2237 = vmul.f32 %v2125, %v2221
        %v2238 = vmul.f32 %v2126, %v2222
        %v2239 = vmul.f32 %v2127, %v2223
        %v2240 = vmul.f32 %v2128, %v2224
        %v2241 = vmul.f32 %v2129, %v2225
        %v2242 = vmul.f32 %v2130, %v2226
        %2243 = vadd.xlane.f32.xlu0 %v2036
        %v2244 = vpop.xlane.xlu0 %2243
        %2245 = vadd.xlane.f32.xlu0 %v2038
        %v2246 = vpop.xlane.xlu0 %2245
        %2247 = vadd.xlane.f32.xlu0 %v2040
        %v2248 = vpop.xlane.xlu0 %2247
        %2249 = vadd.xlane.f32.xlu0 %v2042
        %v2250 = vpop.xlane.xlu0 %2249
        %2251 = vadd.xlane.f32.xlu0 %v2044
        %v2252 = vpop.xlane.xlu0 %2251
        %2253 = vadd.xlane.f32.xlu0 %v2046
        %v2254 = vpop.xlane.xlu0 %2253
        %2255 = vadd.xlane.f32.xlu0 %v2048
        %v2256 = vpop.xlane.xlu0 %2255
        %2257 = vadd.xlane.f32.xlu0 %v2050
        %v2258 = vpop.xlane.xlu0 %2257
        %2259 = vadd.xlane.f32.xlu0 %v2052
        %v2260 = vpop.xlane.xlu0 %2259
        %2261 = vadd.xlane.f32.xlu0 %v2054
        %v2262 = vpop.xlane.xlu0 %2261
        %2263 = vadd.xlane.f32.xlu0 %v2056
        %v2264 = vpop.xlane.xlu0 %2263
        %2265 = vadd.xlane.f32.xlu0 %v2058
        %v2266 = vpop.xlane.xlu0 %2265
        %2267 = vadd.xlane.f32.xlu0 %v2060
        %v2268 = vpop.xlane.xlu0 %2267
        %2269 = vadd.xlane.f32.xlu0 %v2062
        %v2270 = vpop.xlane.xlu0 %2269
        %2271 = vadd.xlane.f32.xlu0 %v2064
        %v2272 = vpop.xlane.xlu0 %2271
        %2273 = vadd.xlane.f32.xlu0 %v2066
        %v2274 = vpop.xlane.xlu0 %2273
        %v2275 = vmul.f32 %v2244, %v1131
        %v2276 = vmul.f32 %v2246, %v1131
        %v2277 = vmul.f32 %v2248, %v1131
        %v2278 = vmul.f32 %v2250, %v1131
        %v2279 = vmul.f32 %v2252, %v1131
        %v2280 = vmul.f32 %v2254, %v1131
        %v2281 = vmul.f32 %v2256, %v1131
        %v2282 = vmul.f32 %v2258, %v1131
        %v2283 = vmul.f32 %v2260, %v1131
        %v2284 = vmul.f32 %v2262, %v1131
        %v2285 = vmul.f32 %v2264, %v1131
        %v2286 = vmul.f32 %v2266, %v1131
        %v2287 = vmul.f32 %v2268, %v1131
        %v2288 = vmul.f32 %v2270, %v1131
        %v2289 = vmul.f32 %v2272, %v1131
        %v2290 = vmul.f32 %v2274, %v1131
        %v2291 = vsub.f32 %v2036, %v2275
        %v2292 = vsub.f32 %v2038, %v2276
        %v2293 = vsub.f32 %v2040, %v2277
        %v2294 = vsub.f32 %v2042, %v2278
        %v2295 = vsub.f32 %v2044, %v2279
        %v2296 = vsub.f32 %v2046, %v2280
        %v2297 = vsub.f32 %v2048, %v2281
        %v2298 = vsub.f32 %v2050, %v2282
        %v2299 = vsub.f32 %v2052, %v2283
        %v2300 = vsub.f32 %v2054, %v2284
        %v2301 = vsub.f32 %v2056, %v2285
        %v2302 = vsub.f32 %v2058, %v2286
        %v2303 = vsub.f32 %v2060, %v2287
        %v2304 = vsub.f32 %v2062, %v2288
        %v2305 = vsub.f32 %v2064, %v2289
        %v2306 = vsub.f32 %v2066, %v2290
        %v2307 = vmul.f32 %v2291, %v2291
        %v2308 = vmul.f32 %v2292, %v2292
        %v2309 = vmul.f32 %v2293, %v2293
        %v2310 = vmul.f32 %v2294, %v2294
        %v2311 = vmul.f32 %v2295, %v2295
        %v2312 = vmul.f32 %v2296, %v2296
        %v2313 = vmul.f32 %v2297, %v2297
        %v2314 = vmul.f32 %v2298, %v2298
        %v2315 = vmul.f32 %v2299, %v2299
        %v2316 = vmul.f32 %v2300, %v2300
        %v2317 = vmul.f32 %v2301, %v2301
        %v2318 = vmul.f32 %v2302, %v2302
        %v2319 = vmul.f32 %v2303, %v2303
        %v2320 = vmul.f32 %v2304, %v2304
        %v2321 = vmul.f32 %v2305, %v2305
        %v2322 = vmul.f32 %v2306, %v2306
        %2323 = vadd.xlane.f32.xlu0 %v2307
        %v2324 = vpop.xlane.xlu0 %2323
        %2325 = vadd.xlane.f32.xlu0 %v2308
        %v2326 = vpop.xlane.xlu0 %2325
        %2327 = vadd.xlane.f32.xlu0 %v2309
        %v2328 = vpop.xlane.xlu0 %2327
        %2329 = vadd.xlane.f32.xlu0 %v2310
        %v2330 = vpop.xlane.xlu0 %2329
        %2331 = vadd.xlane.f32.xlu0 %v2311
        %v2332 = vpop.xlane.xlu0 %2331
        %2333 = vadd.xlane.f32.xlu0 %v2312
        %v2334 = vpop.xlane.xlu0 %2333
        %2335 = vadd.xlane.f32.xlu0 %v2313
        %v2336 = vpop.xlane.xlu0 %2335
        %2337 = vadd.xlane.f32.xlu0 %v2314
        %v2338 = vpop.xlane.xlu0 %2337
        %2339 = vadd.xlane.f32.xlu0 %v2315
        %v2340 = vpop.xlane.xlu0 %2339
        %2341 = vadd.xlane.f32.xlu0 %v2316
        %v2342 = vpop.xlane.xlu0 %2341
        %2343 = vadd.xlane.f32.xlu0 %v2317
        %v2344 = vpop.xlane.xlu0 %2343
        %2345 = vadd.xlane.f32.xlu0 %v2318
        %v2346 = vpop.xlane.xlu0 %2345
        %2347 = vadd.xlane.f32.xlu0 %v2319
        %v2348 = vpop.xlane.xlu0 %2347
        %2349 = vadd.xlane.f32.xlu0 %v2320
        %v2350 = vpop.xlane.xlu0 %2349
        %2351 = vadd.xlane.f32.xlu0 %v2321
        %v2352 = vpop.xlane.xlu0 %2351
        %2353 = vadd.xlane.f32.xlu0 %v2322
        %v2354 = vpop.xlane.xlu0 %2353
        %v2355 = vmul.f32 %v2324, %v1131
        %v2356 = vmul.f32 %v2326, %v1131
        %v2357 = vmul.f32 %v2328, %v1131
        %v2358 = vmul.f32 %v2330, %v1131
        %v2359 = vmul.f32 %v2332, %v1131
        %v2360 = vmul.f32 %v2334, %v1131
        %v2361 = vmul.f32 %v2336, %v1131
        %v2362 = vmul.f32 %v2338, %v1131
        %v2363 = vmul.f32 %v2340, %v1131
        %v2364 = vmul.f32 %v2342, %v1131
        %v2365 = vmul.f32 %v2344, %v1131
        %v2366 = vmul.f32 %v2346, %v1131
        %v2367 = vmul.f32 %v2348, %v1131
        %v2368 = vmul.f32 %v2350, %v1131
        %v2369 = vmul.f32 %v2352, %v1131
        %v2370 = vmul.f32 %v2354, %v1131
        %v2371 = vadd.f32 %v2355, 0.1
        %v2372 = vadd.f32 %v2356, 0.1
        %v2373 = vadd.f32 %v2357, 0.1
        %v2374 = vadd.f32 %v2358, 0.1
        %v2375 = vadd.f32 %v2359, 0.1
        %v2376 = vadd.f32 %v2360, 0.1
        %v2377 = vadd.f32 %v2361, 0.1
        %v2378 = vadd.f32 %v2362, 0.1
        %v2379 = vadd.f32 %v2363, 0.1
        %v2380 = vadd.f32 %v2364, 0.1
        %v2381 = vadd.f32 %v2365, 0.1
        %v2382 = vadd.f32 %v2366, 0.1
        %v2383 = vadd.f32 %v2367, 0.1
        %v2384 = vadd.f32 %v2368, 0.1
        %v2385 = vadd.f32 %v2369, 0.1
        %v2386 = vadd.f32 %v2370, 0.1
        %v2387 = vrsqrt.pop %v2371
        %v2388 = vrsqrt.pop %v2372
        %v2389 = vrsqrt.pop %v2373
        %v2390 = vrsqrt.pop %v2374
        %v2391 = vrsqrt.pop %v2375
        %v2392 = vrsqrt.pop %v2376
        %v2393 = vrsqrt.pop %v2377
        %v2394 = vrsqrt.pop %v2378
        %v2395 = vrsqrt.pop %v2379
        %v2396 = vrsqrt.pop %v2380
        %v2397 = vrsqrt.pop %v2381
        %v2398 = vrsqrt.pop %v2382
        %v2399 = vrsqrt.pop %v2383
        %v2400 = vrsqrt.pop %v2384
        %v2401 = vrsqrt.pop %v2385
        %v2402 = vrsqrt.pop %v2386
        %v2403 = vmul.f32 %v2291, %v2387
        %v2404 = vmul.f32 %v2292, %v2388
        %v2405 = vmul.f32 %v2293, %v2389
        %v2406 = vmul.f32 %v2294, %v2390
        %v2407 = vmul.f32 %v2295, %v2391
        %v2408 = vmul.f32 %v2296, %v2392
        %v2409 = vmul.f32 %v2297, %v2393
        %v2410 = vmul.f32 %v2298, %v2394
        %v2411 = vmul.f32 %v2299, %v2395
        %v2412 = vmul.f32 %v2300, %v2396
        %v2413 = vmul.f32 %v2301, %v2397
        %v2414 = vmul.f32 %v2302, %v2398
        %v2415 = vmul.f32 %v2303, %v2399
        %v2416 = vmul.f32 %v2304, %v2400
        %v2417 = vmul.f32 %v2305, %v2401
        %v2418 = vmul.f32 %v2306, %v2402
        %s2419 = scalar_lea.vmem %s3, 2
        %v2420 = vld [vmem:[%s2419] sm:$0x3]
        %v2422 = vlaneseq
        %v2423 = vshrl.u32 %v2422, 7
        %v2424 = vsub.s32 0, %v2423
        %v2425 = vrot.slane %v2420, %v2424
        %v2426 = vlaneseq
        %v2427 = vshrl.u32 %v2426, 7
        %v2428 = vsub.s32 1, %v2427
        %v2429 = vrot.slane %v2420, %v2428
        %v2432 = vmul.f32 %v2227, %v2425
        %v2433 = vmul.f32 %v2403, %v2429
        %v2434 = vmul.f32 %v2228, %v2425
        %v2435 = vmul.f32 %v2404, %v2429
        %v2436 = vmul.f32 %v2229, %v2425
        %v2437 = vmul.f32 %v2405, %v2429
        %v2438 = vmul.f32 %v2230, %v2425
        %v2439 = vmul.f32 %v2406, %v2429
        %v2440 = vmul.f32 %v2231, %v2425
        %v2441 = vmul.f32 %v2407, %v2429
        %v2442 = vmul.f32 %v2232, %v2425
        %v2443 = vmul.f32 %v2408, %v2429
        %v2444 = vmul.f32 %v2233, %v2425
        %v2445 = vmul.f32 %v2409, %v2429
        %v2446 = vmul.f32 %v2234, %v2425
        %v2447 = vmul.f32 %v2410, %v2429
        %v2448 = vmul.f32 %v2235, %v2425
        %v2449 = vmul.f32 %v2411, %v2429
        %v2450 = vmul.f32 %v2236, %v2425
        %v2451 = vmul.f32 %v2412, %v2429
        %v2452 = vmul.f32 %v2237, %v2425
        %v2453 = vmul.f32 %v2413, %v2429
        %v2454 = vmul.f32 %v2238, %v2425
        %v2455 = vmul.f32 %v2414, %v2429
        %v2456 = vmul.f32 %v2239, %v2425
        %v2457 = vmul.f32 %v2415, %v2429
        %v2458 = vmul.f32 %v2240, %v2425
        %v2459 = vmul.f32 %v2416, %v2429
        %v2460 = vmul.f32 %v2241, %v2425
        %v2461 = vmul.f32 %v2417, %v2429
        %v2462 = vmul.f32 %v2242, %v2425
        %v2463 = vmul.f32 %v2418, %v2429
        %s2464 = scalar_lea.vmem [#allocation7], 2
        %v2465 = vld [vmem:[%s2464] sm:$0x3]
        %v2467 = vlaneseq
        %v2468 = vshrl.u32 %v2467, 7
        %v2469 = vsub.s32 0, %v2468
        %v2470 = vrot.slane %v2465, %v2469
        %v2471 = vlaneseq
        %v2472 = vshrl.u32 %v2471, 7
        %v2473 = vsub.s32 1, %v2472
        %v2474 = vrot.slane %v2465, %v2473
        %v2477 = vadd.f32 %v2432, %v2470
        %v2478 = vadd.f32 %v2433, %v2474
        %v2479 = vadd.f32 %v2434, %v2470
        %v2480 = vadd.f32 %v2435, %v2474
        %v2481 = vadd.f32 %v2436, %v2470
        %v2482 = vadd.f32 %v2437, %v2474
        %v2483 = vadd.f32 %v2438, %v2470
        %v2484 = vadd.f32 %v2439, %v2474
        %v2485 = vadd.f32 %v2440, %v2470
        %v2486 = vadd.f32 %v2441, %v2474
        %v2487 = vadd.f32 %v2442, %v2470
        %v2488 = vadd.f32 %v2443, %v2474
        %v2489 = vadd.f32 %v2444, %v2470
        %v2490 = vadd.f32 %v2445, %v2474
        %v2491 = vadd.f32 %v2446, %v2470
        %v2492 = vadd.f32 %v2447, %v2474
        %v2493 = vadd.f32 %v2448, %v2470
        %v2494 = vadd.f32 %v2449, %v2474
        %v2495 = vadd.f32 %v2450, %v2470
        %v2496 = vadd.f32 %v2451, %v2474
        %v2497 = vadd.f32 %v2452, %v2470
        %v2498 = vadd.f32 %v2453, %v2474
        %v2499 = vadd.f32 %v2454, %v2470
        %v2500 = vadd.f32 %v2455, %v2474
        %v2501 = vadd.f32 %v2456, %v2470
        %v2502 = vadd.f32 %v2457, %v2474
        %v2503 = vadd.f32 %v2458, %v2470
        %v2504 = vadd.f32 %v2459, %v2474
        %v2505 = vadd.f32 %v2460, %v2470
        %v2506 = vadd.f32 %v2461, %v2474
        %v2507 = vadd.f32 %v2462, %v2470
        %v2508 = vadd.f32 %v2463, %v2474
        %v2509 = vadd.f32 %v1508, %v2477
        %v2510 = vadd.f32 %v1509, %v2478
        %v2511 = vadd.f32 %v1510, %v2479
        %v2512 = vadd.f32 %v1511, %v2480
        %v2513 = vadd.f32 %v1512, %v2481
        %v2514 = vadd.f32 %v1513, %v2482
        %v2515 = vadd.f32 %v1514, %v2483
        %v2516 = vadd.f32 %v1515, %v2484
        %v2517 = vadd.f32 %v1516, %v2485
        %v2518 = vadd.f32 %v1517, %v2486
        %v2519 = vadd.f32 %v1518, %v2487
        %v2520 = vadd.f32 %v1519, %v2488
        %v2521 = vadd.f32 %v1520, %v2489
        %v2522 = vadd.f32 %v1521, %v2490
        %v2523 = vadd.f32 %v1522, %v2491
        %v2524 = vadd.f32 %v1523, %v2492
        %v2525 = vadd.f32 %v1524, %v2493
        %v2526 = vadd.f32 %v1525, %v2494
        %v2527 = vadd.f32 %v1526, %v2495
        %v2528 = vadd.f32 %v1527, %v2496
        %v2529 = vadd.f32 %v1528, %v2497
        %v2530 = vadd.f32 %v1529, %v2498
        %v2531 = vadd.f32 %v1530, %v2499
        %v2532 = vadd.f32 %v1531, %v2500
        %v2533 = vadd.f32 %v1532, %v2501
        %v2534 = vadd.f32 %v1533, %v2502
        %v2535 = vadd.f32 %v1534, %v2503
        %v2536 = vadd.f32 %v1535, %v2504
        %v2537 = vadd.f32 %v1536, %v2505
        %v2538 = vadd.f32 %v1537, %v2506
        %v2539 = vadd.f32 %v1538, %v2507
        %v2540 = vadd.f32 %v1539, %v2508
        %s2541 = scalar_lea.vmem [#allocation4], 512
        %v2542 = vld [vmem:[%s2541] sm:$0xff]
        %v2543 = vld [vmem:[%s2541 + $0x8] sm:$0xff]
        %v2544 = vld [vmem:[%s2541 + $0x10] sm:$0xff]
        %v2545 = vld [vmem:[%s2541 + $0x18] sm:$0xff]
        %v2546 = vld [vmem:[%s2541 + $0x20] sm:$0xff]
        %v2547 = vld [vmem:[%s2541 + $0x28] sm:$0xff]
        %v2548 = vld [vmem:[%s2541 + $0x30] sm:$0xff]
        %v2549 = vld [vmem:[%s2541 + $0x38] sm:$0xff]
        %v2550 = vld [vmem:[%s2541 + $0x40] sm:$0xff]
        %v2551 = vld [vmem:[%s2541 + $0x48] sm:$0xff]
        %v2552 = vld [vmem:[%s2541 + $0x50] sm:$0xff]
        %v2553 = vld [vmem:[%s2541 + $0x58] sm:$0xff]
        %v2554 = vld [vmem:[%s2541 + $0x60] sm:$0xff]
        %v2555 = vld [vmem:[%s2541 + $0x68] sm:$0xff]
        %v2556 = vld [vmem:[%s2541 + $0x70] sm:$0xff]
        %v2557 = vld [vmem:[%s2541 + $0x78] sm:$0xff]
        %v2558 = vld [vmem:[%s2541 + $0x80] sm:$0xff]
        %v2559 = vld [vmem:[%s2541 + $0x88] sm:$0xff]
        %v2560 = vld [vmem:[%s2541 + $0x90] sm:$0xff]
        %v2561 = vld [vmem:[%s2541 + $0x98] sm:$0xff]
        %v2562 = vld [vmem:[%s2541 + $0xa0] sm:$0xff]
        %v2563 = vld [vmem:[%s2541 + $0xa8] sm:$0xff]
        %v2564 = vld [vmem:[%s2541 + $0xb0] sm:$0xff]
        %v2565 = vld [vmem:[%s2541 + $0xb8] sm:$0xff]
        %v2566 = vld [vmem:[%s2541 + $0xc0] sm:$0xff]
        %v2567 = vld [vmem:[%s2541 + $0xc8] sm:$0xff]
        %v2568 = vld [vmem:[%s2541 + $0xd0] sm:$0xff]
        %v2569 = vld [vmem:[%s2541 + $0xd8] sm:$0xff]
        %v2570 = vld [vmem:[%s2541 + $0xe0] sm:$0xff]
        %v2571 = vld [vmem:[%s2541 + $0xe8] sm:$0xff]
        %v2572 = vld [vmem:[%s2541 + $0xf0] sm:$0xff]
        %v2573 = vld [vmem:[%s2541 + $0xf8] sm:$0xff]
        %s2574 = scalar_lea.vmem [#allocation6], 4
        %v2575 = vld [vmem:[%s2574] sm:$0x3]
        %v2576 = vpack.c.bf16 %v2479, %v2477
        %v2577 = vpack.c.bf16 %v2480, %v2478
        %v2578 = vpack.c.bf16 %v2483, %v2481
        %v2579 = vpack.c.bf16 %v2484, %v2482
        %v2580 = vpack.c.bf16 %v2487, %v2485
        %v2581 = vpack.c.bf16 %v2488, %v2486
        %v2582 = vpack.c.bf16 %v2491, %v2489
        %v2583 = vpack.c.bf16 %v2492, %v2490
        %v2584 = vpack.c.bf16 %v2495, %v2493
        %v2585 = vpack.c.bf16 %v2496, %v2494
        %v2586 = vpack.c.bf16 %v2499, %v2497
        %v2587 = vpack.c.bf16 %v2500, %v2498
        %v2588 = vpack.c.bf16 %v2503, %v2501
        %v2589 = vpack.c.bf16 %v2504, %v2502
        %v2590 = vpack.c.bf16 %v2507, %v2505
        %v2591 = vpack.c.bf16 %v2508, %v2506
        %v2593 = vlaneseq
        %v2594 = vshrl.u32 %v2593, 7
        %v2595 = vsub.s32 0, %v2594
        %v2596 = vrot.slane %v2575, %v2595
        %v2597 = vlaneseq
        %v2598 = vshrl.u32 %v2597, 7
        %v2599 = vsub.s32 1, %v2598
        %v2600 = vrot.slane %v2575, %v2599
        %v2635 = vunpack.c.l.b16 %v2542
        %v2636 = vunpack.c.h.b16 %v2542
        %v2637 = vunpack.c.l.b16 %v2543
        %v2638 = vunpack.c.h.b16 %v2543
        %v2639 = vunpack.c.l.b16 %v2544
        %v2640 = vunpack.c.h.b16 %v2544
        %v2641 = vunpack.c.l.b16 %v2545
        %v2642 = vunpack.c.h.b16 %v2545
        %v2643 = vunpack.c.l.b16 %v2546
        %v2644 = vunpack.c.h.b16 %v2546
        %v2645 = vunpack.c.l.b16 %v2547
        %v2646 = vunpack.c.h.b16 %v2547
        %v2647 = vunpack.c.l.b16 %v2548
        %v2648 = vunpack.c.h.b16 %v2548
        %v2649 = vunpack.c.l.b16 %v2549
        %v2650 = vunpack.c.h.b16 %v2549
        %v2651 = vunpack.c.l.b16 %v2550
        %v2652 = vunpack.c.h.b16 %v2550
        %v2653 = vunpack.c.l.b16 %v2551
        %v2654 = vunpack.c.h.b16 %v2551
        %v2655 = vunpack.c.l.b16 %v2552
        %v2656 = vunpack.c.h.b16 %v2552
        %v2657 = vunpack.c.l.b16 %v2553
        %v2658 = vunpack.c.h.b16 %v2553
        %v2659 = vunpack.c.l.b16 %v2554
        %v2660 = vunpack.c.h.b16 %v2554
        %v2661 = vunpack.c.l.b16 %v2555
        %v2662 = vunpack.c.h.b16 %v2555
        %v2663 = vunpack.c.l.b16 %v2556
        %v2664 = vunpack.c.h.b16 %v2556
        %v2665 = vunpack.c.l.b16 %v2557
        %v2666 = vunpack.c.h.b16 %v2557
        %v2667 = vunpack.c.l.b16 %v2558
        %v2668 = vunpack.c.h.b16 %v2558
        %v2669 = vunpack.c.l.b16 %v2559
        %v2670 = vunpack.c.h.b16 %v2559
        %v2671 = vunpack.c.l.b16 %v2560
        %v2672 = vunpack.c.h.b16 %v2560
        %v2673 = vunpack.c.l.b16 %v2561
        %v2674 = vunpack.c.h.b16 %v2561
        %v2675 = vunpack.c.l.b16 %v2562
        %v2676 = vunpack.c.h.b16 %v2562
        %v2677 = vunpack.c.l.b16 %v2563
        %v2678 = vunpack.c.h.b16 %v2563
        %v2679 = vunpack.c.l.b16 %v2564
        %v2680 = vunpack.c.h.b16 %v2564
        %v2681 = vunpack.c.l.b16 %v2565
        %v2682 = vunpack.c.h.b16 %v2565
        %v2683 = vunpack.c.l.b16 %v2566
        %v2684 = vunpack.c.h.b16 %v2566
        %v2685 = vunpack.c.l.b16 %v2567
        %v2686 = vunpack.c.h.b16 %v2567
        %v2687 = vunpack.c.l.b16 %v2568
        %v2688 = vunpack.c.h.b16 %v2568
        %v2689 = vunpack.c.l.b16 %v2569
        %v2690 = vunpack.c.h.b16 %v2569
        %v2691 = vunpack.c.l.b16 %v2570
        %v2692 = vunpack.c.h.b16 %v2570
        %v2693 = vunpack.c.l.b16 %v2571
        %v2694 = vunpack.c.h.b16 %v2571
        %v2695 = vunpack.c.l.b16 %v2572
        %v2696 = vunpack.c.h.b16 %v2572
        %v2697 = vunpack.c.l.b16 %v2573
        %v2698 = vunpack.c.h.b16 %v2573
        %v2699 = vpack.c.b16 %v2637, %v2635
        %v2700 = vpack.c.b16 %v2638, %v2636
        %v2701 = vpack.c.b16 %v2641, %v2639
        %v2702 = vpack.c.b16 %v2642, %v2640
        %v2703 = vpack.c.b16 %v2645, %v2643
        %v2704 = vpack.c.b16 %v2646, %v2644
        %v2705 = vpack.c.b16 %v2649, %v2647
        %v2706 = vpack.c.b16 %v2650, %v2648
        %v2707 = vpack.c.b16 %v2653, %v2651
        %v2708 = vpack.c.b16 %v2654, %v2652
        %v2709 = vpack.c.b16 %v2657, %v2655
        %v2710 = vpack.c.b16 %v2658, %v2656
        %v2711 = vpack.c.b16 %v2661, %v2659
        %v2712 = vpack.c.b16 %v2662, %v2660
        %v2713 = vpack.c.b16 %v2665, %v2663
        %v2714 = vpack.c.b16 %v2666, %v2664
        %v2715 = vpack.c.b16 %v2669, %v2667
        %v2716 = vpack.c.b16 %v2670, %v2668
        %v2717 = vpack.c.b16 %v2673, %v2671
        %v2718 = vpack.c.b16 %v2674, %v2672
        %v2719 = vpack.c.b16 %v2677, %v2675
        %v2720 = vpack.c.b16 %v2678, %v2676
        %v2721 = vpack.c.b16 %v2681, %v2679
        %v2722 = vpack.c.b16 %v2682, %v2680
        %v2723 = vpack.c.b16 %v2685, %v2683
        %v2724 = vpack.c.b16 %v2686, %v2684
        %v2725 = vpack.c.b16 %v2689, %v2687
        %v2726 = vpack.c.b16 %v2690, %v2688
        %v2727 = vpack.c.b16 %v2693, %v2691
        %v2728 = vpack.c.b16 %v2694, %v2692
        %v2729 = vpack.c.b16 %v2697, %v2695
        %v2730 = vpack.c.b16 %v2698, %v2696
        %2763 = vmatprep.subr.bf16.mxu0 %v2700
        %2764 = vmatpush1.bf16.msra.mxu0 %v2699
        %2765 = vmatprep.subr.bf16.mxu0 %v2702
        %2766 = vmatpush1.bf16.msra.mxu0 %v2701
        %2767 = vmatprep.subr.bf16.mxu0 %v2704
        %2768 = vmatpush1.bf16.msra.mxu0 %v2703
        %2769 = vmatprep.subr.bf16.mxu0 %v2706
        %2770 = vmatpush1.bf16.msra.mxu0 %v2705
        %2771 = vmatprep.subr.bf16.mxu0 %v2708
        %2772 = vmatpush1.bf16.msra.mxu0 %v2707
        %2773 = vmatprep.subr.bf16.mxu0 %v2710
        %2774 = vmatpush1.bf16.msra.mxu0 %v2709
        %2775 = vmatprep.subr.bf16.mxu0 %v2712
        %2776 = vmatpush1.bf16.msra.mxu0 %v2711
        %2777 = vmatprep.subr.bf16.mxu0 %v2714
        %2778 = vmatpush1.bf16.msra.mxu0 %v2713
        %2779 = vmatprep.subr.bf16.mxu0 %v2716
        %2780 = vmatpush1.bf16.msra.mxu0 %v2715
        %2781 = vmatprep.subr.bf16.mxu0 %v2718
        %2782 = vmatpush1.bf16.msra.mxu0 %v2717
        %2783 = vmatprep.subr.bf16.mxu0 %v2720
        %2784 = vmatpush1.bf16.msra.mxu0 %v2719
        %2785 = vmatprep.subr.bf16.mxu0 %v2722
        %2786 = vmatpush1.bf16.msra.mxu0 %v2721
        %2787 = vmatprep.subr.bf16.mxu0 %v2724
        %2788 = vmatpush1.bf16.msra.mxu0 %v2723
        %2789 = vmatprep.subr.bf16.mxu0 %v2726
        %2790 = vmatpush1.bf16.msra.mxu0 %v2725
        %2791 = vmatprep.subr.bf16.mxu0 %v2728
        %2792 = vmatpush1.bf16.msra.mxu0 %v2727
        %2793 = vmatprep.subr.bf16.mxu0 %v2730
        %2794 = vmatpush1.bf16.msra.mxu0 %v2729
        %2795 = vmatprep.mubr.bf16.mxu0 %v2577
        %2796 = vmatmul.mubr.bf16.gmra.mrb[0].mxu0 %v2576
        %v2797 = vpop.f32.mrb[0].mxu0
        %v2798 = vadd.f32 %v2596, %v2797
        %v2799 = vpop.f32.mrb[0].mxu0
        %v2800 = vadd.f32 %v2600, %v2799
        %v2801 = vpop.f32.mrb[0].mxu0
        %v2802 = vadd.f32 %v2596, %v2801
        %v2803 = vpop.f32.mrb[0].mxu0
        %v2804 = vadd.f32 %v2600, %v2803
        %2805 = vmatprep.mubr.bf16.mxu0 %v2579
        %2806 = vmatmul.mubr.bf16.gmra.mrb[0].mxu0 %v2578
        %v2807 = vpop.f32.mrb[0].mxu0
        %v2808 = vadd.f32 %v2596, %v2807
        %v2809 = vpop.f32.mrb[0].mxu0
        %v2810 = vadd.f32 %v2600, %v2809
        %v2811 = vpop.f32.mrb[0].mxu0
        %v2812 = vadd.f32 %v2596, %v2811
        %v2813 = vpop.f32.mrb[0].mxu0
        %v2814 = vadd.f32 %v2600, %v2813
        %2815 = vmatprep.mubr.bf16.mxu0 %v2581
        %2816 = vmatmul.mubr.bf16.gmra.mrb[0].mxu0 %v2580
        %v2817 = vpop.f32.mrb[0].mxu0
        %v2818 = vadd.f32 %v2596, %v2817
        %v2819 = vpop.f32.mrb[0].mxu0
        %v2820 = vadd.f32 %v2600, %v2819
        %v2821 = vpop.f32.mrb[0].mxu0
        %v2822 = vadd.f32 %v2596, %v2821
        %v2823 = vpop.f32.mrb[0].mxu0
        %v2824 = vadd.f32 %v2600, %v2823
        %2825 = vmatprep.mubr.bf16.mxu0 %v2583
        %2826 = vmatmul.mubr.bf16.gmra.mrb[0].mxu0 %v2582
        %v2827 = vpop.f32.mrb[0].mxu0
        %v2828 = vadd.f32 %v2596, %v2827
        %v2829 = vpop.f32.mrb[0].mxu0
        %v2830 = vadd.f32 %v2600, %v2829
        %v2831 = vpop.f32.mrb[0].mxu0
        %v2832 = vadd.f32 %v2596, %v2831
        %v2833 = vpop.f32.mrb[0].mxu0
        %v2834 = vadd.f32 %v2600, %v2833
        %2835 = vmatprep.mubr.bf16.mxu0 %v2585
        %2836 = vmatmul.mubr.bf16.gmra.mrb[0].mxu0 %v2584
        %v2837 = vpop.f32.mrb[0].mxu0
        %v2838 = vadd.f32 %v2596, %v2837
        %v2839 = vpop.f32.mrb[0].mxu0
        %v2840 = vadd.f32 %v2600, %v2839
        %v2841 = vpop.f32.mrb[0].mxu0
        %v2842 = vadd.f32 %v2596, %v2841
        %v2843 = vpop.f32.mrb[0].mxu0
        %v2844 = vadd.f32 %v2600, %v2843
        %2845 = vmatprep.mubr.bf16.mxu0 %v2587
        %2846 = vmatmul.mubr.bf16.gmra.mrb[0].mxu0 %v2586
        %v2847 = vpop.f32.mrb[0].mxu0
        %v2848 = vadd.f32 %v2596, %v2847
        %v2849 = vpop.f32.mrb[0].mxu0
        %v2850 = vadd.f32 %v2600, %v2849
        %v2851 = vpop.f32.mrb[0].mxu0
        %v2852 = vadd.f32 %v2596, %v2851
        %v2853 = vpop.f32.mrb[0].mxu0
        %v2854 = vadd.f32 %v2600, %v2853
        %2855 = vmatprep.mubr.bf16.mxu0 %v2589
        %2856 = vmatmul.mubr.bf16.gmra.mrb[0].mxu0 %v2588
        %v2857 = vpop.f32.mrb[0].mxu0
        %v2858 = vadd.f32 %v2596, %v2857
        %v2859 = vpop.f32.mrb[0].mxu0
        %v2860 = vadd.f32 %v2600, %v2859
        %v2861 = vpop.f32.mrb[0].mxu0
        %v2862 = vadd.f32 %v2596, %v2861
        %v2863 = vpop.f32.mrb[0].mxu0
        %v2864 = vadd.f32 %v2600, %v2863
        %2865 = vmatprep.mubr.bf16.mxu0 %v2591
        %2866 = vmatmul.mubr.bf16.gmra.mrb[0].mxu0 %v2590
        %v2867 = vpop.f32.mrb[0].mxu0
        %v2868 = vadd.f32 %v2596, %v2867
        %v2869 = vpop.f32.mrb[0].mxu0
        %v2870 = vadd.f32 %v2600, %v2869
        %v2871 = vpop.f32.mrb[0].mxu0
        %v2872 = vadd.f32 %v2596, %v2871
        %v2873 = vpop.f32.mrb[0].mxu0
        %v2874 = vadd.f32 %v2600, %v2873
        %2875 = vdwg.mxu0
        %v2876 = vadd.f32 %v2798, %v2509
        %v2877 = vadd.f32 %v2800, %v2510
        %v2878 = vadd.f32 %v2802, %v2511
        %v2879 = vadd.f32 %v2804, %v2512
        %v2880 = vadd.f32 %v2808, %v2513
        %v2881 = vadd.f32 %v2810, %v2514
        %v2882 = vadd.f32 %v2812, %v2515
        %v2883 = vadd.f32 %v2814, %v2516
        %v2884 = vadd.f32 %v2818, %v2517
        %v2885 = vadd.f32 %v2820, %v2518
        %v2886 = vadd.f32 %v2822, %v2519
        %v2887 = vadd.f32 %v2824, %v2520
        %v2888 = vadd.f32 %v2828, %v2521
        %v2889 = vadd.f32 %v2830, %v2522
        %v2890 = vadd.f32 %v2832, %v2523
        %v2891 = vadd.f32 %v2834, %v2524
        %v2892 = vadd.f32 %v2838, %v2525
        %v2893 = vadd.f32 %v2840, %v2526
        %v2894 = vadd.f32 %v2842, %v2527
        %v2895 = vadd.f32 %v2844, %v2528
        %v2896 = vadd.f32 %v2848, %v2529
        %v2897 = vadd.f32 %v2850, %v2530
        %v2898 = vadd.f32 %v2852, %v2531
        %v2899 = vadd.f32 %v2854, %v2532
        %v2900 = vadd.f32 %v2858, %v2533
        %v2901 = vadd.f32 %v2860, %v2534
        %v2902 = vadd.f32 %v2862, %v2535
        %v2903 = vadd.f32 %v2864, %v2536
        %v2904 = vadd.f32 %v2868, %v2537
        %v2905 = vadd.f32 %v2870, %v2538
        %v2906 = vadd.f32 %v2872, %v2539
        %v2907 = vadd.f32 %v2874, %v2540
        %v2908 = vmul.f32 %v2876, 0.5
        %v2909 = vmul.f32 %v2877, 0.5
        %v2910 = vmul.f32 %v2878, 0.5
        %v2911 = vmul.f32 %v2879, 0.5
        %v2912 = vmul.f32 %v2880, 0.5
        %v2913 = vmul.f32 %v2881, 0.5
        %v2914 = vmul.f32 %v2882, 0.5
        %v2915 = vmul.f32 %v2883, 0.5
        %v2916 = vmul.f32 %v2884, 0.5
        %v2917 = vmul.f32 %v2885, 0.5
        %v2918 = vmul.f32 %v2886, 0.5
        %v2919 = vmul.f32 %v2887, 0.5
        %v2920 = vmul.f32 %v2888, 0.5
        %v2921 = vmul.f32 %v2889, 0.5
        %v2922 = vmul.f32 %v2890, 0.5
        %v2923 = vmul.f32 %v2891, 0.5
        %v2924 = vmul.f32 %v2892, 0.5
        %v2925 = vmul.f32 %v2893, 0.5
        %v2926 = vmul.f32 %v2894, 0.5
        %v2927 = vmul.f32 %v2895, 0.5
        %v2928 = vmul.f32 %v2896, 0.5
        %v2929 = vmul.f32 %v2897, 0.5
        %v2930 = vmul.f32 %v2898, 0.5
        %v2931 = vmul.f32 %v2899, 0.5
        %v2932 = vmul.f32 %v2900, 0.5
        %v2933 = vmul.f32 %v2901, 0.5
        %v2934 = vmul.f32 %v2902, 0.5
        %v2935 = vmul.f32 %v2903, 0.5
        %v2936 = vmul.f32 %v2904, 0.5
        %v2937 = vmul.f32 %v2905, 0.5
        %v2938 = vmul.f32 %v2906, 0.5
        %v2939 = vmul.f32 %v2907, 0.5
        %v2940 = vtanh.pop %v2908
        %v2941 = vtanh.pop %v2909
        %v2942 = vtanh.pop %v2910
        %v2943 = vtanh.pop %v2911
        %v2944 = vtanh.pop %v2912
        %v2945 = vtanh.pop %v2913
        %v2946 = vtanh.pop %v2914
        %v2947 = vtanh.pop %v2915
        %v2948 = vtanh.pop %v2916
        %v2949 = vtanh.pop %v2917
        %v2950 = vtanh.pop %v2918
        %v2951 = vtanh.pop %v2919
        %v2952 = vtanh.pop %v2920
        %v2953 = vtanh.pop %v2921
        %v2954 = vtanh.pop %v2922
        %v2955 = vtanh.pop %v2923
        %v2956 = vtanh.pop %v2924
        %v2957 = vtanh.pop %v2925
        %v2958 = vtanh.pop %v2926
        %v2959 = vtanh.pop %v2927
        %v2960 = vtanh.pop %v2928
        %v2961 = vtanh.pop %v2929
        %v2962 = vtanh.pop %v2930
        %v2963 = vtanh.pop %v2931
        %v2964 = vtanh.pop %v2932
        %v2965 = vtanh.pop %v2933
        %v2966 = vtanh.pop %v2934
        %v2967 = vtanh.pop %v2935
        %v2968 = vtanh.pop %v2936
        %v2969 = vtanh.pop %v2937
        %v2970 = vtanh.pop %v2938
        %v2971 = vtanh.pop %v2939
        %v2972 = vmul.f32 %v2940, 0.5
        %v2973 = vmul.f32 %v2941, 0.5
        %v2974 = vmul.f32 %v2942, 0.5
        %v2975 = vmul.f32 %v2943, 0.5
        %v2976 = vmul.f32 %v2944, 0.5
        %v2977 = vmul.f32 %v2945, 0.5
        %v2978 = vmul.f32 %v2946, 0.5
        %v2979 = vmul.f32 %v2947, 0.5
        %v2980 = vmul.f32 %v2948, 0.5
        %v2981 = vmul.f32 %v2949, 0.5
        %v2982 = vmul.f32 %v2950, 0.5
        %v2983 = vmul.f32 %v2951, 0.5
        %v2984 = vmul.f32 %v2952, 0.5
        %v2985 = vmul.f32 %v2953, 0.5
        %v2986 = vmul.f32 %v2954, 0.5
        %v2987 = vmul.f32 %v2955, 0.5
        %v2988 = vmul.f32 %v2956, 0.5
        %v2989 = vmul.f32 %v2957, 0.5
        %v2990 = vmul.f32 %v2958, 0.5
        %v2991 = vmul.f32 %v2959, 0.5
        %v2992 = vmul.f32 %v2960, 0.5
        %v2993 = vmul.f32 %v2961, 0.5
        %v2994 = vmul.f32 %v2962, 0.5
        %v2995 = vmul.f32 %v2963, 0.5
        %v2996 = vmul.f32 %v2964, 0.5
        %v2997 = vmul.f32 %v2965, 0.5
        %v2998 = vmul.f32 %v2966, 0.5
        %v2999 = vmul.f32 %v2967, 0.5
        %v3000 = vmul.f32 %v2968, 0.5
        %v3001 = vmul.f32 %v2969, 0.5
        %v3002 = vmul.f32 %v2970, 0.5
        %v3003 = vmul.f32 %v2971, 0.5
        %v3004 = vadd.f32 %v2972, 0.5
        %v3005 = vadd.f32 %v2973, 0.5
        %v3006 = vadd.f32 %v2974, 0.5
        %v3007 = vadd.f32 %v2975, 0.5
        %v3008 = vadd.f32 %v2976, 0.5
        %v3009 = vadd.f32 %v2977, 0.5
        %v3010 = vadd.f32 %v2978, 0.5
        %v3011 = vadd.f32 %v2979, 0.5
        %v3012 = vadd.f32 %v2980, 0.5
        %v3013 = vadd.f32 %v2981, 0.5
        %v3014 = vadd.f32 %v2982, 0.5
        %v3015 = vadd.f32 %v2983, 0.5
        %v3016 = vadd.f32 %v2984, 0.5
        %v3017 = vadd.f32 %v2985, 0.5
        %v3018 = vadd.f32 %v2986, 0.5
        %v3019 = vadd.f32 %v2987, 0.5
        %v3020 = vadd.f32 %v2988, 0.5
        %v3021 = vadd.f32 %v2989, 0.5
        %v3022 = vadd.f32 %v2990, 0.5
        %v3023 = vadd.f32 %v2991, 0.5
        %v3024 = vadd.f32 %v2992, 0.5
        %v3025 = vadd.f32 %v2993, 0.5
        %v3026 = vadd.f32 %v2994, 0.5
        %v3027 = vadd.f32 %v2995, 0.5
        %v3028 = vadd.f32 %v2996, 0.5
        %v3029 = vadd.f32 %v2997, 0.5
        %v3030 = vadd.f32 %v2998, 0.5
        %v3031 = vadd.f32 %v2999, 0.5
        %v3032 = vadd.f32 %v3000, 0.5
        %v3033 = vadd.f32 %v3001, 0.5
        %v3034 = vadd.f32 %v3002, 0.5
        %v3035 = vadd.f32 %v3003, 0.5
        %v3036 = vmul.f32 %v2876, %v3004
        %v3037 = vmul.f32 %v2877, %v3005
        %v3038 = vmul.f32 %v2878, %v3006
        %v3039 = vmul.f32 %v2879, %v3007
        %v3040 = vmul.f32 %v2880, %v3008
        %v3041 = vmul.f32 %v2881, %v3009
        %v3042 = vmul.f32 %v2882, %v3010
        %v3043 = vmul.f32 %v2883, %v3011
        %v3044 = vmul.f32 %v2884, %v3012
        %v3045 = vmul.f32 %v2885, %v3013
        %v3046 = vmul.f32 %v2886, %v3014
        %v3047 = vmul.f32 %v2887, %v3015
        %v3048 = vmul.f32 %v2888, %v3016
        %v3049 = vmul.f32 %v2889, %v3017
        %v3050 = vmul.f32 %v2890, %v3018
        %v3051 = vmul.f32 %v2891, %v3019
        %v3052 = vmul.f32 %v2892, %v3020
        %v3053 = vmul.f32 %v2893, %v3021
        %v3054 = vmul.f32 %v2894, %v3022
        %v3055 = vmul.f32 %v2895, %v3023
        %v3056 = vmul.f32 %v2896, %v3024
        %v3057 = vmul.f32 %v2897, %v3025
        %v3058 = vmul.f32 %v2898, %v3026
        %v3059 = vmul.f32 %v2899, %v3027
        %v3060 = vmul.f32 %v2900, %v3028
        %v3061 = vmul.f32 %v2901, %v3029
        %v3062 = vmul.f32 %v2902, %v3030
        %v3063 = vmul.f32 %v2903, %v3031
        %v3064 = vmul.f32 %v2904, %v3032
        %v3065 = vmul.f32 %v2905, %v3033
        %v3066 = vmul.f32 %v2906, %v3034
        %v3067 = vmul.f32 %v2907, %v3035
        %3068 = vadd.xlane.f32.xlu0 %v3036
        %v3069 = vpop.xlane.xlu0 %3068
        %3070 = vadd.xlane.f32.xlu0 %v3038
        %v3071 = vpop.xlane.xlu0 %3070
        %3072 = vadd.xlane.f32.xlu0 %v3040
        %v3073 = vpop.xlane.xlu0 %3072
        %3074 = vadd.xlane.f32.xlu0 %v3042
        %v3075 = vpop.xlane.xlu0 %3074
        %3076 = vadd.xlane.f32.xlu0 %v3044
        %v3077 = vpop.xlane.xlu0 %3076
        %3078 = vadd.xlane.f32.xlu0 %v3046
        %v3079 = vpop.xlane.xlu0 %3078
        %3080 = vadd.xlane.f32.xlu0 %v3048
        %v3081 = vpop.xlane.xlu0 %3080
        %3082 = vadd.xlane.f32.xlu0 %v3050
        %v3083 = vpop.xlane.xlu0 %3082
        %3084 = vadd.xlane.f32.xlu0 %v3052
        %v3085 = vpop.xlane.xlu0 %3084
        %3086 = vadd.xlane.f32.xlu0 %v3054
        %v3087 = vpop.xlane.xlu0 %3086
        %3088 = vadd.xlane.f32.xlu0 %v3056
        %v3089 = vpop.xlane.xlu0 %3088
        %3090 = vadd.xlane.f32.xlu0 %v3058
        %v3091 = vpop.xlane.xlu0 %3090
        %3092 = vadd.xlane.f32.xlu0 %v3060
        %v3093 = vpop.xlane.xlu0 %3092
        %3094 = vadd.xlane.f32.xlu0 %v3062
        %v3095 = vpop.xlane.xlu0 %3094
        %3096 = vadd.xlane.f32.xlu0 %v3064
        %v3097 = vpop.xlane.xlu0 %3096
        %3098 = vadd.xlane.f32.xlu0 %v3066
        %v3099 = vpop.xlane.xlu0 %3098
        %v3100 = vmul.f32 %v3069, %v1131
        %v3101 = vmul.f32 %v3071, %v1131
        %v3102 = vmul.f32 %v3073, %v1131
        %v3103 = vmul.f32 %v3075, %v1131
        %v3104 = vmul.f32 %v3077, %v1131
        %v3105 = vmul.f32 %v3079, %v1131
        %v3106 = vmul.f32 %v3081, %v1131
        %v3107 = vmul.f32 %v3083, %v1131
        %v3108 = vmul.f32 %v3085, %v1131
        %v3109 = vmul.f32 %v3087, %v1131
        %v3110 = vmul.f32 %v3089, %v1131
        %v3111 = vmul.f32 %v3091, %v1131
        %v3112 = vmul.f32 %v3093, %v1131
        %v3113 = vmul.f32 %v3095, %v1131
        %v3114 = vmul.f32 %v3097, %v1131
        %v3115 = vmul.f32 %v3099, %v1131
        %v3116 = vsub.f32 %v3036, %v3100
        %v3117 = vsub.f32 %v3038, %v3101
        %v3118 = vsub.f32 %v3040, %v3102
        %v3119 = vsub.f32 %v3042, %v3103
        %v3120 = vsub.f32 %v3044, %v3104
        %v3121 = vsub.f32 %v3046, %v3105
        %v3122 = vsub.f32 %v3048, %v3106
        %v3123 = vsub.f32 %v3050, %v3107
        %v3124 = vsub.f32 %v3052, %v3108
        %v3125 = vsub.f32 %v3054, %v3109
        %v3126 = vsub.f32 %v3056, %v3110
        %v3127 = vsub.f32 %v3058, %v3111
        %v3128 = vsub.f32 %v3060, %v3112
        %v3129 = vsub.f32 %v3062, %v3113
        %v3130 = vsub.f32 %v3064, %v3114
        %v3131 = vsub.f32 %v3066, %v3115
        %v3132 = vmul.f32 %v3116, %v3116
        %v3133 = vmul.f32 %v3117, %v3117
        %v3134 = vmul.f32 %v3118, %v3118
        %v3135 = vmul.f32 %v3119, %v3119
        %v3136 = vmul.f32 %v3120, %v3120
        %v3137 = vmul.f32 %v3121, %v3121
        %v3138 = vmul.f32 %v3122, %v3122
        %v3139 = vmul.f32 %v3123, %v3123
        %v3140 = vmul.f32 %v3124, %v3124
        %v3141 = vmul.f32 %v3125, %v3125
        %v3142 = vmul.f32 %v3126, %v3126
        %v3143 = vmul.f32 %v3127, %v3127
        %v3144 = vmul.f32 %v3128, %v3128
        %v3145 = vmul.f32 %v3129, %v3129
        %v3146 = vmul.f32 %v3130, %v3130
        %v3147 = vmul.f32 %v3131, %v3131
        %3148 = vadd.xlane.f32.xlu0 %v3132
        %v3149 = vpop.xlane.xlu0 %3148
        %3150 = vadd.xlane.f32.xlu0 %v3133
        %v3151 = vpop.xlane.xlu0 %3150
        %3152 = vadd.xlane.f32.xlu0 %v3134
        %v3153 = vpop.xlane.xlu0 %3152
        %3154 = vadd.xlane.f32.xlu0 %v3135
        %v3155 = vpop.xlane.xlu0 %3154
        %3156 = vadd.xlane.f32.xlu0 %v3136
        %v3157 = vpop.xlane.xlu0 %3156
        %3158 = vadd.xlane.f32.xlu0 %v3137
        %v3159 = vpop.xlane.xlu0 %3158
        %3160 = vadd.xlane.f32.xlu0 %v3138
        %v3161 = vpop.xlane.xlu0 %3160
        %3162 = vadd.xlane.f32.xlu0 %v3139
        %v3163 = vpop.xlane.xlu0 %3162
        %3164 = vadd.xlane.f32.xlu0 %v3140
        %v3165 = vpop.xlane.xlu0 %3164
        %3166 = vadd.xlane.f32.xlu0 %v3141
        %v3167 = vpop.xlane.xlu0 %3166
        %3168 = vadd.xlane.f32.xlu0 %v3142
        %v3169 = vpop.xlane.xlu0 %3168
        %3170 = vadd.xlane.f32.xlu0 %v3143
        %v3171 = vpop.xlane.xlu0 %3170
        %3172 = vadd.xlane.f32.xlu0 %v3144
        %v3173 = vpop.xlane.xlu0 %3172
        %3174 = vadd.xlane.f32.xlu0 %v3145
        %v3175 = vpop.xlane.xlu0 %3174
        %3176 = vadd.xlane.f32.xlu0 %v3146
        %v3177 = vpop.xlane.xlu0 %3176
        %3178 = vadd.xlane.f32.xlu0 %v3147
        %v3179 = vpop.xlane.xlu0 %3178
        %v3180 = vmul.f32 %v3149, %v1131
        %v3181 = vmul.f32 %v3151, %v1131
        %v3182 = vmul.f32 %v3153, %v1131
        %v3183 = vmul.f32 %v3155, %v1131
        %v3184 = vmul.f32 %v3157, %v1131
        %v3185 = vmul.f32 %v3159, %v1131
        %v3186 = vmul.f32 %v3161, %v1131
        %v3187 = vmul.f32 %v3163, %v1131
        %v3188 = vmul.f32 %v3165, %v1131
        %v3189 = vmul.f32 %v3167, %v1131
        %v3190 = vmul.f32 %v3169, %v1131
        %v3191 = vmul.f32 %v3171, %v1131
        %v3192 = vmul.f32 %v3173, %v1131
        %v3193 = vmul.f32 %v3175, %v1131
        %v3194 = vmul.f32 %v3177, %v1131
        %v3195 = vmul.f32 %v3179, %v1131
        %v3196 = vadd.f32 %v3180, 0.1
        %v3197 = vadd.f32 %v3181, 0.1
        %v3198 = vadd.f32 %v3182, 0.1
        %v3199 = vadd.f32 %v3183, 0.1
        %v3200 = vadd.f32 %v3184, 0.1
        %v3201 = vadd.f32 %v3185, 0.1
        %v3202 = vadd.f32 %v3186, 0.1
        %v3203 = vadd.f32 %v3187, 0.1
        %v3204 = vadd.f32 %v3188, 0.1
        %v3205 = vadd.f32 %v3189, 0.1
        %v3206 = vadd.f32 %v3190, 0.1
        %v3207 = vadd.f32 %v3191, 0.1
        %v3208 = vadd.f32 %v3192, 0.1
        %v3209 = vadd.f32 %v3193, 0.1
        %v3210 = vadd.f32 %v3194, 0.1
        %v3211 = vadd.f32 %v3195, 0.1
        %v3212 = vrsqrt.pop %v3196
        %v3213 = vrsqrt.pop %v3197
        %v3214 = vrsqrt.pop %v3198
        %v3215 = vrsqrt.pop %v3199
        %v3216 = vrsqrt.pop %v3200
        %v3217 = vrsqrt.pop %v3201
        %v3218 = vrsqrt.pop %v3202
        %v3219 = vrsqrt.pop %v3203
        %v3220 = vrsqrt.pop %v3204
        %v3221 = vrsqrt.pop %v3205
        %v3222 = vrsqrt.pop %v3206
        %v3223 = vrsqrt.pop %v3207
        %v3224 = vrsqrt.pop %v3208
        %v3225 = vrsqrt.pop %v3209
        %v3226 = vrsqrt.pop %v3210
        %v3227 = vrsqrt.pop %v3211
        %v3228 = vmul.f32 %v3116, %v3212
        %v3229 = vmul.f32 %v3117, %v3213
        %v3230 = vmul.f32 %v3118, %v3214
        %v3231 = vmul.f32 %v3119, %v3215
        %v3232 = vmul.f32 %v3120, %v3216
        %v3233 = vmul.f32 %v3121, %v3217
        %v3234 = vmul.f32 %v3122, %v3218
        %v3235 = vmul.f32 %v3123, %v3219
        %v3236 = vmul.f32 %v3124, %v3220
        %v3237 = vmul.f32 %v3125, %v3221
        %v3238 = vmul.f32 %v3126, %v3222
        %v3239 = vmul.f32 %v3127, %v3223
        %v3240 = vmul.f32 %v3128, %v3224
        %v3241 = vmul.f32 %v3129, %v3225
        %v3242 = vmul.f32 %v3130, %v3226
        %v3243 = vmul.f32 %v3131, %v3227
        %3244 = vadd.xlane.f32.xlu0 %v3037
        %v3245 = vpop.xlane.xlu0 %3244
        %3246 = vadd.xlane.f32.xlu0 %v3039
        %v3247 = vpop.xlane.xlu0 %3246
        %3248 = vadd.xlane.f32.xlu0 %v3041
        %v3249 = vpop.xlane.xlu0 %3248
        %3250 = vadd.xlane.f32.xlu0 %v3043
        %v3251 = vpop.xlane.xlu0 %3250
        %3252 = vadd.xlane.f32.xlu0 %v3045
        %v3253 = vpop.xlane.xlu0 %3252
        %3254 = vadd.xlane.f32.xlu0 %v3047
        %v3255 = vpop.xlane.xlu0 %3254
        %3256 = vadd.xlane.f32.xlu0 %v3049
        %v3257 = vpop.xlane.xlu0 %3256
        %3258 = vadd.xlane.f32.xlu0 %v3051
        %v3259 = vpop.xlane.xlu0 %3258
        %3260 = vadd.xlane.f32.xlu0 %v3053
        %v3261 = vpop.xlane.xlu0 %3260
        %3262 = vadd.xlane.f32.xlu0 %v3055
        %v3263 = vpop.xlane.xlu0 %3262
        %3264 = vadd.xlane.f32.xlu0 %v3057
        %v3265 = vpop.xlane.xlu0 %3264
        %3266 = vadd.xlane.f32.xlu0 %v3059
        %v3267 = vpop.xlane.xlu0 %3266
        %3268 = vadd.xlane.f32.xlu0 %v3061
        %v3269 = vpop.xlane.xlu0 %3268
        %3270 = vadd.xlane.f32.xlu0 %v3063
        %v3271 = vpop.xlane.xlu0 %3270
        %3272 = vadd.xlane.f32.xlu0 %v3065
        %v3273 = vpop.xlane.xlu0 %3272
        %3274 = vadd.xlane.f32.xlu0 %v3067
        %v3275 = vpop.xlane.xlu0 %3274
        %v3276 = vmul.f32 %v3245, %v1131
        %v3277 = vmul.f32 %v3247, %v1131
        %v3278 = vmul.f32 %v3249, %v1131
        %v3279 = vmul.f32 %v3251, %v1131
        %v3280 = vmul.f32 %v3253, %v1131
        %v3281 = vmul.f32 %v3255, %v1131
        %v3282 = vmul.f32 %v3257, %v1131
        %v3283 = vmul.f32 %v3259, %v1131
        %v3284 = vmul.f32 %v3261, %v1131
        %v3285 = vmul.f32 %v3263, %v1131
        %v3286 = vmul.f32 %v3265, %v1131
        %v3287 = vmul.f32 %v3267, %v1131
        %v3288 = vmul.f32 %v3269, %v1131
        %v3289 = vmul.f32 %v3271, %v1131
        %v3290 = vmul.f32 %v3273, %v1131
        %v3291 = vmul.f32 %v3275, %v1131
        %v3292 = vsub.f32 %v3037, %v3276
        %v3293 = vsub.f32 %v3039, %v3277
        %v3294 = vsub.f32 %v3041, %v3278
        %v3295 = vsub.f32 %v3043, %v3279
        %v3296 = vsub.f32 %v3045, %v3280
        %v3297 = vsub.f32 %v3047, %v3281
        %v3298 = vsub.f32 %v3049, %v3282
        %v3299 = vsub.f32 %v3051, %v3283
        %v3300 = vsub.f32 %v3053, %v3284
        %v3301 = vsub.f32 %v3055, %v3285
        %v3302 = vsub.f32 %v3057, %v3286
        %v3303 = vsub.f32 %v3059, %v3287
        %v3304 = vsub.f32 %v3061, %v3288
        %v3305 = vsub.f32 %v3063, %v3289
        %v3306 = vsub.f32 %v3065, %v3290
        %v3307 = vsub.f32 %v3067, %v3291
        %v3308 = vmul.f32 %v3292, %v3292
        %v3309 = vmul.f32 %v3293, %v3293
        %v3310 = vmul.f32 %v3294, %v3294
        %v3311 = vmul.f32 %v3295, %v3295
        %v3312 = vmul.f32 %v3296, %v3296
        %v3313 = vmul.f32 %v3297, %v3297
        %v3314 = vmul.f32 %v3298, %v3298
        %v3315 = vmul.f32 %v3299, %v3299
        %v3316 = vmul.f32 %v3300, %v3300
        %v3317 = vmul.f32 %v3301, %v3301
        %v3318 = vmul.f32 %v3302, %v3302
        %v3319 = vmul.f32 %v3303, %v3303
        %v3320 = vmul.f32 %v3304, %v3304
        %v3321 = vmul.f32 %v3305, %v3305
        %v3322 = vmul.f32 %v3306, %v3306
        %v3323 = vmul.f32 %v3307, %v3307
        %3324 = vadd.xlane.f32.xlu0 %v3308
        %v3325 = vpop.xlane.xlu0 %3324
        %3326 = vadd.xlane.f32.xlu0 %v3309
        %v3327 = vpop.xlane.xlu0 %3326
        %3328 = vadd.xlane.f32.xlu0 %v3310
        %v3329 = vpop.xlane.xlu0 %3328
        %3330 = vadd.xlane.f32.xlu0 %v3311
        %v3331 = vpop.xlane.xlu0 %3330
        %3332 = vadd.xlane.f32.xlu0 %v3312
        %v3333 = vpop.xlane.xlu0 %3332
        %3334 = vadd.xlane.f32.xlu0 %v3313
        %v3335 = vpop.xlane.xlu0 %3334
        %3336 = vadd.xlane.f32.xlu0 %v3314
        %v3337 = vpop.xlane.xlu0 %3336
        %3338 = vadd.xlane.f32.xlu0 %v3315
        %v3339 = vpop.xlane.xlu0 %3338
        %3340 = vadd.xlane.f32.xlu0 %v3316
        %v3341 = vpop.xlane.xlu0 %3340
        %3342 = vadd.xlane.f32.xlu0 %v3317
        %v3343 = vpop.xlane.xlu0 %3342
        %3344 = vadd.xlane.f32.xlu0 %v3318
        %v3345 = vpop.xlane.xlu0 %3344
        %3346 = vadd.xlane.f32.xlu0 %v3319
        %v3347 = vpop.xlane.xlu0 %3346
        %3348 = vadd.xlane.f32.xlu0 %v3320
        %v3349 = vpop.xlane.xlu0 %3348
        %3350 = vadd.xlane.f32.xlu0 %v3321
        %v3351 = vpop.xlane.xlu0 %3350
        %3352 = vadd.xlane.f32.xlu0 %v3322
        %v3353 = vpop.xlane.xlu0 %3352
        %3354 = vadd.xlane.f32.xlu0 %v3323
        %v3355 = vpop.xlane.xlu0 %3354
        %v3356 = vmul.f32 %v3325, %v1131
        %v3357 = vmul.f32 %v3327, %v1131
        %v3358 = vmul.f32 %v3329, %v1131
        %v3359 = vmul.f32 %v3331, %v1131
        %v3360 = vmul.f32 %v3333, %v1131
        %v3361 = vmul.f32 %v3335, %v1131
        %v3362 = vmul.f32 %v3337, %v1131
        %v3363 = vmul.f32 %v3339, %v1131
        %v3364 = vmul.f32 %v3341, %v1131
        %v3365 = vmul.f32 %v3343, %v1131
        %v3366 = vmul.f32 %v3345, %v1131
        %v3367 = vmul.f32 %v3347, %v1131
        %v3368 = vmul.f32 %v3349, %v1131
        %v3369 = vmul.f32 %v3351, %v1131
        %v3370 = vmul.f32 %v3353, %v1131
        %v3371 = vmul.f32 %v3355, %v1131
        %v3372 = vadd.f32 %v3356, 0.1
        %v3373 = vadd.f32 %v3357, 0.1
        %v3374 = vadd.f32 %v3358, 0.1
        %v3375 = vadd.f32 %v3359, 0.1
        %v3376 = vadd.f32 %v3360, 0.1
        %v3377 = vadd.f32 %v3361, 0.1
        %v3378 = vadd.f32 %v3362, 0.1
        %v3379 = vadd.f32 %v3363, 0.1
        %v3380 = vadd.f32 %v3364, 0.1
        %v3381 = vadd.f32 %v3365, 0.1
        %v3382 = vadd.f32 %v3366, 0.1
        %v3383 = vadd.f32 %v3367, 0.1
        %v3384 = vadd.f32 %v3368, 0.1
        %v3385 = vadd.f32 %v3369, 0.1
        %v3386 = vadd.f32 %v3370, 0.1
        %v3387 = vadd.f32 %v3371, 0.1
        %v3388 = vrsqrt.pop %v3372
        %v3389 = vrsqrt.pop %v3373
        %v3390 = vrsqrt.pop %v3374
        %v3391 = vrsqrt.pop %v3375
        %v3392 = vrsqrt.pop %v3376
        %v3393 = vrsqrt.pop %v3377
        %v3394 = vrsqrt.pop %v3378
        %v3395 = vrsqrt.pop %v3379
        %v3396 = vrsqrt.pop %v3380
        %v3397 = vrsqrt.pop %v3381
        %v3398 = vrsqrt.pop %v3382
        %v3399 = vrsqrt.pop %v3383
        %v3400 = vrsqrt.pop %v3384
        %v3401 = vrsqrt.pop %v3385
        %v3402 = vrsqrt.pop %v3386
        %v3403 = vrsqrt.pop %v3387
        %v3404 = vmul.f32 %v3292, %v3388
        %v3405 = vmul.f32 %v3293, %v3389
        %v3406 = vmul.f32 %v3294, %v3390
        %v3407 = vmul.f32 %v3295, %v3391
        %v3408 = vmul.f32 %v3296, %v3392
        %v3409 = vmul.f32 %v3297, %v3393
        %v3410 = vmul.f32 %v3298, %v3394
        %v3411 = vmul.f32 %v3299, %v3395
        %v3412 = vmul.f32 %v3300, %v3396
        %v3413 = vmul.f32 %v3301, %v3397
        %v3414 = vmul.f32 %v3302, %v3398
        %v3415 = vmul.f32 %v3303, %v3399
        %v3416 = vmul.f32 %v3304, %v3400
        %v3417 = vmul.f32 %v3305, %v3401
        %v3418 = vmul.f32 %v3306, %v3402
        %v3419 = vmul.f32 %v3307, %v3403
        %s3420 = scalar_lea.vmem %s3, 4
        %v3421 = vld [vmem:[%s3420] sm:$0x3]
        %v3423 = vlaneseq
        %v3424 = vshrl.u32 %v3423, 7
        %v3425 = vsub.s32 0, %v3424
        %v3426 = vrot.slane %v3421, %v3425
        %v3427 = vlaneseq
        %v3428 = vshrl.u32 %v3427, 7
        %v3429 = vsub.s32 1, %v3428
        %v3430 = vrot.slane %v3421, %v3429
        %v3433 = vmul.f32 %v3228, %v3426
        %v3434 = vmul.f32 %v3404, %v3430
        %v3435 = vmul.f32 %v3229, %v3426
        %v3436 = vmul.f32 %v3405, %v3430
        %v3437 = vmul.f32 %v3230, %v3426
        %v3438 = vmul.f32 %v3406, %v3430
        %v3439 = vmul.f32 %v3231, %v3426
        %v3440 = vmul.f32 %v3407, %v3430
        %v3441 = vmul.f32 %v3232, %v3426
        %v3442 = vmul.f32 %v3408, %v3430
        %v3443 = vmul.f32 %v3233, %v3426
        %v3444 = vmul.f32 %v3409, %v3430
        %v3445 = vmul.f32 %v3234, %v3426
        %v3446 = vmul.f32 %v3410, %v3430
        %v3447 = vmul.f32 %v3235, %v3426
        %v3448 = vmul.f32 %v3411, %v3430
        %v3449 = vmul.f32 %v3236, %v3426
        %v3450 = vmul.f32 %v3412, %v3430
        %v3451 = vmul.f32 %v3237, %v3426
        %v3452 = vmul.f32 %v3413, %v3430
        %v3453 = vmul.f32 %v3238, %v3426
        %v3454 = vmul.f32 %v3414, %v3430
        %v3455 = vmul.f32 %v3239, %v3426
        %v3456 = vmul.f32 %v3415, %v3430
        %v3457 = vmul.f32 %v3240, %v3426
        %v3458 = vmul.f32 %v3416, %v3430
        %v3459 = vmul.f32 %v3241, %v3426
        %v3460 = vmul.f32 %v3417, %v3430
        %v3461 = vmul.f32 %v3242, %v3426
        %v3462 = vmul.f32 %v3418, %v3430
        %v3463 = vmul.f32 %v3243, %v3426
        %v3464 = vmul.f32 %v3419, %v3430
        %s3465 = scalar_lea.vmem [#allocation7], 4
        %v3466 = vld [vmem:[%s3465] sm:$0x3]
        %v3468 = vlaneseq
        %v3469 = vshrl.u32 %v3468, 7
        %v3470 = vsub.s32 0, %v3469
        %v3471 = vrot.slane %v3466, %v3470
        %v3472 = vlaneseq
        %v3473 = vshrl.u32 %v3472, 7
        %v3474 = vsub.s32 1, %v3473
        %v3475 = vrot.slane %v3466, %v3474
        %v3478 = vadd.f32 %v3433, %v3471
        %v3479 = vadd.f32 %v3434, %v3475
        %v3480 = vadd.f32 %v3435, %v3471
        %v3481 = vadd.f32 %v3436, %v3475
        %v3482 = vadd.f32 %v3437, %v3471
        %v3483 = vadd.f32 %v3438, %v3475
        %v3484 = vadd.f32 %v3439, %v3471
        %v3485 = vadd.f32 %v3440, %v3475
        %v3486 = vadd.f32 %v3441, %v3471
        %v3487 = vadd.f32 %v3442, %v3475
        %v3488 = vadd.f32 %v3443, %v3471
        %v3489 = vadd.f32 %v3444, %v3475
        %v3490 = vadd.f32 %v3445, %v3471
        %v3491 = vadd.f32 %v3446, %v3475
        %v3492 = vadd.f32 %v3447, %v3471
        %v3493 = vadd.f32 %v3448, %v3475
        %v3494 = vadd.f32 %v3449, %v3471
        %v3495 = vadd.f32 %v3450, %v3475
        %v3496 = vadd.f32 %v3451, %v3471
        %v3497 = vadd.f32 %v3452, %v3475
        %v3498 = vadd.f32 %v3453, %v3471
        %v3499 = vadd.f32 %v3454, %v3475
        %v3500 = vadd.f32 %v3455, %v3471
        %v3501 = vadd.f32 %v3456, %v3475
        %v3502 = vadd.f32 %v3457, %v3471
        %v3503 = vadd.f32 %v3458, %v3475
        %v3504 = vadd.f32 %v3459, %v3471
        %v3505 = vadd.f32 %v3460, %v3475
        %v3506 = vadd.f32 %v3461, %v3471
        %v3507 = vadd.f32 %v3462, %v3475
        %v3508 = vadd.f32 %v3463, %v3471
        %v3509 = vadd.f32 %v3464, %v3475
        %v3510 = vadd.f32 %v2509, %v3478
        %v3511 = vadd.f32 %v2510, %v3479
        %v3512 = vadd.f32 %v2511, %v3480
        %v3513 = vadd.f32 %v2512, %v3481
        %v3514 = vadd.f32 %v2513, %v3482
        %v3515 = vadd.f32 %v2514, %v3483
        %v3516 = vadd.f32 %v2515, %v3484
        %v3517 = vadd.f32 %v2516, %v3485
        %v3518 = vadd.f32 %v2517, %v3486
        %v3519 = vadd.f32 %v2518, %v3487
        %v3520 = vadd.f32 %v2519, %v3488
        %v3521 = vadd.f32 %v2520, %v3489
        %v3522 = vadd.f32 %v2521, %v3490
        %v3523 = vadd.f32 %v2522, %v3491
        %v3524 = vadd.f32 %v2523, %v3492
        %v3525 = vadd.f32 %v2524, %v3493
        %v3526 = vadd.f32 %v2525, %v3494
        %v3527 = vadd.f32 %v2526, %v3495
        %v3528 = vadd.f32 %v2527, %v3496
        %v3529 = vadd.f32 %v2528, %v3497
        %v3530 = vadd.f32 %v2529, %v3498
        %v3531 = vadd.f32 %v2530, %v3499
        %v3532 = vadd.f32 %v2531, %v3500
        %v3533 = vadd.f32 %v2532, %v3501
        %v3534 = vadd.f32 %v2533, %v3502
        %v3535 = vadd.f32 %v2534, %v3503
        %v3536 = vadd.f32 %v2535, %v3504
        %v3537 = vadd.f32 %v2536, %v3505
        %v3538 = vadd.f32 %v2537, %v3506
        %v3539 = vadd.f32 %v2538, %v3507
        %v3540 = vadd.f32 %v2539, %v3508
        %v3541 = vadd.f32 %v2540, %v3509
        %s3542 = scalar_lea.vmem [#allocation4], 768
        %v3543 = vld [vmem:[%s3542] sm:$0xff]
        %v3544 = vld [vmem:[%s3542 + $0x8] sm:$0xff]
        %v3545 = vld [vmem:[%s3542 + $0x10] sm:$0xff]
        %v3546 = vld [vmem:[%s3542 + $0x18] sm:$0xff]
        %v3547 = vld [vmem:[%s3542 + $0x20] sm:$0xff]
        %v3548 = vld [vmem:[%s3542 + $0x28] sm:$0xff]
        %v3549 = vld [vmem:[%s3542 + $0x30] sm:$0xff]
        %v3550 = vld [vmem:[%s3542 + $0x38] sm:$0xff]
        %v3551 = vld [vmem:[%s3542 + $0x40] sm:$0xff]
        %v3552 = vld [vmem:[%s3542 + $0x48] sm:$0xff]
        %v3553 = vld [vmem:[%s3542 + $0x50] sm:$0xff]
        %v3554 = vld [vmem:[%s3542 + $0x58] sm:$0xff]
        %v3555 = vld [vmem:[%s3542 + $0x60] sm:$0xff]
        %v3556 = vld [vmem:[%s3542 + $0x68] sm:$0xff]
        %v3557 = vld [vmem:[%s3542 + $0x70] sm:$0xff]
        %v3558 = vld [vmem:[%s3542 + $0x78] sm:$0xff]
        %v3559 = vld [vmem:[%s3542 + $0x80] sm:$0xff]
        %v3560 = vld [vmem:[%s3542 + $0x88] sm:$0xff]
        %v3561 = vld [vmem:[%s3542 + $0x90] sm:$0xff]
        %v3562 = vld [vmem:[%s3542 + $0x98] sm:$0xff]
        %v3563 = vld [vmem:[%s3542 + $0xa0] sm:$0xff]
        %v3564 = vld [vmem:[%s3542 + $0xa8] sm:$0xff]
        %v3565 = vld [vmem:[%s3542 + $0xb0] sm:$0xff]
        %v3566 = vld [vmem:[%s3542 + $0xb8] sm:$0xff]
        %v3567 = vld [vmem:[%s3542 + $0xc0] sm:$0xff]
        %v3568 = vld [vmem:[%s3542 + $0xc8] sm:$0xff]
        %v3569 = vld [vmem:[%s3542 + $0xd0] sm:$0xff]
        %v3570 = vld [vmem:[%s3542 + $0xd8] sm:$0xff]
        %v3571 = vld [vmem:[%s3542 + $0xe0] sm:$0xff]
        %v3572 = vld [vmem:[%s3542 + $0xe8] sm:$0xff]
        %v3573 = vld [vmem:[%s3542 + $0xf0] sm:$0xff]
        %v3574 = vld [vmem:[%s3542 + $0xf8] sm:$0xff]
        %s3575 = scalar_lea.vmem [#allocation6], 6
        %v3576 = vld [vmem:[%s3575] sm:$0x3]
        %v3577 = vpack.c.bf16 %v3480, %v3478
        %v3578 = vpack.c.bf16 %v3481, %v3479
        %v3579 = vpack.c.bf16 %v3484, %v3482
        %v3580 = vpack.c.bf16 %v3485, %v3483
        %v3581 = vpack.c.bf16 %v3488, %v3486
        %v3582 = vpack.c.bf16 %v3489, %v3487
        %v3583 = vpack.c.bf16 %v3492, %v3490
        %v3584 = vpack.c.bf16 %v3493, %v3491
        %v3585 = vpack.c.bf16 %v3496, %v3494
        %v3586 = vpack.c.bf16 %v3497, %v3495
        %v3587 = vpack.c.bf16 %v3500, %v3498
        %v3588 = vpack.c.bf16 %v3501, %v3499
        %v3589 = vpack.c.bf16 %v3504, %v3502
        %v3590 = vpack.c.bf16 %v3505, %v3503
        %v3591 = vpack.c.bf16 %v3508, %v3506
        %v3592 = vpack.c.bf16 %v3509, %v3507
        %v3594 = vlaneseq
        %v3595 = vshrl.u32 %v3594, 7
        %v3596 = vsub.s32 0, %v3595
        %v3597 = vrot.slane %v3576, %v3596
        %v3598 = vlaneseq
        %v3599 = vshrl.u32 %v3598, 7
        %v3600 = vsub.s32 1, %v3599
        %v3601 = vrot.slane %v3576, %v3600
        %v3636 = vunpack.c.l.b16 %v3543
        %v3637 = vunpack.c.h.b16 %v3543
        %v3638 = vunpack.c.l.b16 %v3544
        %v3639 = vunpack.c.h.b16 %v3544
        %v3640 = vunpack.c.l.b16 %v3545
        %v3641 = vunpack.c.h.b16 %v3545
        %v3642 = vunpack.c.l.b16 %v3546
        %v3643 = vunpack.c.h.b16 %v3546
        %v3644 = vunpack.c.l.b16 %v3547
        %v3645 = vunpack.c.h.b16 %v3547
        %v3646 = vunpack.c.l.b16 %v3548
        %v3647 = vunpack.c.h.b16 %v3548
        %v3648 = vunpack.c.l.b16 %v3549
        %v3649 = vunpack.c.h.b16 %v3549
        %v3650 = vunpack.c.l.b16 %v3550
        %v3651 = vunpack.c.h.b16 %v3550
        %v3652 = vunpack.c.l.b16 %v3551
        %v3653 = vunpack.c.h.b16 %v3551
        %v3654 = vunpack.c.l.b16 %v3552
        %v3655 = vunpack.c.h.b16 %v3552
        %v3656 = vunpack.c.l.b16 %v3553
        %v3657 = vunpack.c.h.b16 %v3553
        %v3658 = vunpack.c.l.b16 %v3554
        %v3659 = vunpack.c.h.b16 %v3554
        %v3660 = vunpack.c.l.b16 %v3555
        %v3661 = vunpack.c.h.b16 %v3555
        %v3662 = vunpack.c.l.b16 %v3556
        %v3663 = vunpack.c.h.b16 %v3556
        %v3664 = vunpack.c.l.b16 %v3557
        %v3665 = vunpack.c.h.b16 %v3557
        %v3666 = vunpack.c.l.b16 %v3558
        %v3667 = vunpack.c.h.b16 %v3558
        %v3668 = vunpack.c.l.b16 %v3559
        %v3669 = vunpack.c.h.b16 %v3559
        %v3670 = vunpack.c.l.b16 %v3560
        %v3671 = vunpack.c.h.b16 %v3560
        %v3672 = vunpack.c.l.b16 %v3561
        %v3673 = vunpack.c.h.b16 %v3561
        %v3674 = vunpack.c.l.b16 %v3562
        %v3675 = vunpack.c.h.b16 %v3562
        %v3676 = vunpack.c.l.b16 %v3563
        %v3677 = vunpack.c.h.b16 %v3563
        %v3678 = vunpack.c.l.b16 %v3564
        %v3679 = vunpack.c.h.b16 %v3564
        %v3680 = vunpack.c.l.b16 %v3565
        %v3681 = vunpack.c.h.b16 %v3565
        %v3682 = vunpack.c.l.b16 %v3566
        %v3683 = vunpack.c.h.b16 %v3566
        %v3684 = vunpack.c.l.b16 %v3567
        %v3685 = vunpack.c.h.b16 %v3567
        %v3686 = vunpack.c.l.b16 %v3568
        %v3687 = vunpack.c.h.b16 %v3568
        %v3688 = vunpack.c.l.b16 %v3569
        %v3689 = vunpack.c.h.b16 %v3569
        %v3690 = vunpack.c.l.b16 %v3570
        %v3691 = vunpack.c.h.b16 %v3570
        %v3692 = vunpack.c.l.b16 %v3571
        %v3693 = vunpack.c.h.b16 %v3571
        %v3694 = vunpack.c.l.b16 %v3572
        %v3695 = vunpack.c.h.b16 %v3572
        %v3696 = vunpack.c.l.b16 %v3573
        %v3697 = vunpack.c.h.b16 %v3573
        %v3698 = vunpack.c.l.b16 %v3574
        %v3699 = vunpack.c.h.b16 %v3574
        %v3700 = vpack.c.b16 %v3638, %v3636
        %v3701 = vpack.c.b16 %v3639, %v3637
        %v3702 = vpack.c.b16 %v3642, %v3640
        %v3703 = vpack.c.b16 %v3643, %v3641
        %v3704 = vpack.c.b16 %v3646, %v3644
        %v3705 = vpack.c.b16 %v3647, %v3645
        %v3706 = vpack.c.b16 %v3650, %v3648
        %v3707 = vpack.c.b16 %v3651, %v3649
        %v3708 = vpack.c.b16 %v3654, %v3652
        %v3709 = vpack.c.b16 %v3655, %v3653
        %v3710 = vpack.c.b16 %v3658, %v3656
        %v3711 = vpack.c.b16 %v3659, %v3657
        %v3712 = vpack.c.b16 %v3662, %v3660
        %v3713 = vpack.c.b16 %v3663, %v3661
        %v3714 = vpack.c.b16 %v3666, %v3664
        %v3715 = vpack.c.b16 %v3667, %v3665
        %v3716 = vpack.c.b16 %v3670, %v3668
        %v3717 = vpack.c.b16 %v3671, %v3669
        %v3718 = vpack.c.b16 %v3674, %v3672
        %v3719 = vpack.c.b16 %v3675, %v3673
        %v3720 = vpack.c.b16 %v3678, %v3676
        %v3721 = vpack.c.b16 %v3679, %v3677
        %v3722 = vpack.c.b16 %v3682, %v3680
        %v3723 = vpack.c.b16 %v3683, %v3681
        %v3724 = vpack.c.b16 %v3686, %v3684
        %v3725 = vpack.c.b16 %v3687, %v3685
        %v3726 = vpack.c.b16 %v3690, %v3688
        %v3727 = vpack.c.b16 %v3691, %v3689
        %v3728 = vpack.c.b16 %v3694, %v3692
        %v3729 = vpack.c.b16 %v3695, %v3693
        %v3730 = vpack.c.b16 %v3698, %v3696
        %v3731 = vpack.c.b16 %v3699, %v3697
        %3764 = vmatprep.subr.bf16.mxu0 %v3701
        %3765 = vmatpush1.bf16.msra.mxu0 %v3700
        %3766 = vmatprep.subr.bf16.mxu0 %v3703
        %3767 = vmatpush1.bf16.msra.mxu0 %v3702
        %3768 = vmatprep.subr.bf16.mxu0 %v3705
        %3769 = vmatpush1.bf16.msra.mxu0 %v3704
        %3770 = vmatprep.subr.bf16.mxu0 %v3707
        %3771 = vmatpush1.bf16.msra.mxu0 %v3706
        %3772 = vmatprep.subr.bf16.mxu0 %v3709
        %3773 = vmatpush1.bf16.msra.mxu0 %v3708
        %3774 = vmatprep.subr.bf16.mxu0 %v3711
        %3775 = vmatpush1.bf16.msra.mxu0 %v3710
        %3776 = vmatprep.subr.bf16.mxu0 %v3713
        %3777 = vmatpush1.bf16.msra.mxu0 %v3712
        %3778 = vmatprep.subr.bf16.mxu0 %v3715
        %3779 = vmatpush1.bf16.msra.mxu0 %v3714
        %3780 = vmatprep.subr.bf16.mxu0 %v3717
        %3781 = vmatpush1.bf16.msra.mxu0 %v3716
        %3782 = vmatprep.subr.bf16.mxu0 %v3719
        %3783 = vmatpush1.bf16.msra.mxu0 %v3718
        %3784 = vmatprep.subr.bf16.mxu0 %v3721
        %3785 = vmatpush1.bf16.msra.mxu0 %v3720
        %3786 = vmatprep.subr.bf16.mxu0 %v3723
        %3787 = vmatpush1.bf16.msra.mxu0 %v3722
        %3788 = vmatprep.subr.bf16.mxu0 %v3725
        %3789 = vmatpush1.bf16.msra.mxu0 %v3724
        %3790 = vmatprep.subr.bf16.mxu0 %v3727
        %3791 = vmatpush1.bf16.msra.mxu0 %v3726
        %3792 = vmatprep.subr.bf16.mxu0 %v3729
        %3793 = vmatpush1.bf16.msra.mxu0 %v3728
        %3794 = vmatprep.subr.bf16.mxu0 %v3731
        %3795 = vmatpush1.bf16.msra.mxu0 %v3730
        %3796 = vmatprep.mubr.bf16.mxu0 %v3578
        %3797 = vmatmul.mubr.bf16.gmra.mrb[0].mxu0 %v3577
        %v3798 = vpop.f32.mrb[0].mxu0
        %v3799 = vadd.f32 %v3597, %v3798
        %v3800 = vpop.f32.mrb[0].mxu0
        %v3801 = vadd.f32 %v3601, %v3800
        %v3802 = vpop.f32.mrb[0].mxu0
        %v3803 = vadd.f32 %v3597, %v3802
        %v3804 = vpop.f32.mrb[0].mxu0
        %v3805 = vadd.f32 %v3601, %v3804
        %3806 = vmatprep.mubr.bf16.mxu0 %v3580
        %3807 = vmatmul.mubr.bf16.gmra.mrb[0].mxu0 %v3579
        %v3808 = vpop.f32.mrb[0].mxu0
        %v3809 = vadd.f32 %v3597, %v3808
        %v3810 = vpop.f32.mrb[0].mxu0
        %v3811 = vadd.f32 %v3601, %v3810
        %v3812 = vpop.f32.mrb[0].mxu0
        %v3813 = vadd.f32 %v3597, %v3812
        %v3814 = vpop.f32.mrb[0].mxu0
        %v3815 = vadd.f32 %v3601, %v3814
        %3816 = vmatprep.mubr.bf16.mxu0 %v3582
        %3817 = vmatmul.mubr.bf16.gmra.mrb[0].mxu0 %v3581
        %v3818 = vpop.f32.mrb[0].mxu0
        %v3819 = vadd.f32 %v3597, %v3818
        %v3820 = vpop.f32.mrb[0].mxu0
        %v3821 = vadd.f32 %v3601, %v3820
        %v3822 = vpop.f32.mrb[0].mxu0
        %v3823 = vadd.f32 %v3597, %v3822
        %v3824 = vpop.f32.mrb[0].mxu0
        %v3825 = vadd.f32 %v3601, %v3824
        %3826 = vmatprep.mubr.bf16.mxu0 %v3584
        %3827 = vmatmul.mubr.bf16.gmra.mrb[0].mxu0 %v3583
        %v3828 = vpop.f32.mrb[0].mxu0
        %v3829 = vadd.f32 %v3597, %v3828
        %v3830 = vpop.f32.mrb[0].mxu0
        %v3831 = vadd.f32 %v3601, %v3830
        %v3832 = vpop.f32.mrb[0].mxu0
        %v3833 = vadd.f32 %v3597, %v3832
        %v3834 = vpop.f32.mrb[0].mxu0
        %v3835 = vadd.f32 %v3601, %v3834
        %3836 = vmatprep.mubr.bf16.mxu0 %v3586
        %3837 = vmatmul.mubr.bf16.gmra.mrb[0].mxu0 %v3585
        %v3838 = vpop.f32.mrb[0].mxu0
        %v3839 = vadd.f32 %v3597, %v3838
        %v3840 = vpop.f32.mrb[0].mxu0
        %v3841 = vadd.f32 %v3601, %v3840
        %v3842 = vpop.f32.mrb[0].mxu0
        %v3843 = vadd.f32 %v3597, %v3842
        %v3844 = vpop.f32.mrb[0].mxu0
        %v3845 = vadd.f32 %v3601, %v3844
        %3846 = vmatprep.mubr.bf16.mxu0 %v3588
        %3847 = vmatmul.mubr.bf16.gmra.mrb[0].mxu0 %v3587
        %v3848 = vpop.f32.mrb[0].mxu0
        %v3849 = vadd.f32 %v3597, %v3848
        %v3850 = vpop.f32.mrb[0].mxu0
        %v3851 = vadd.f32 %v3601, %v3850
        %v3852 = vpop.f32.mrb[0].mxu0
        %v3853 = vadd.f32 %v3597, %v3852
        %v3854 = vpop.f32.mrb[0].mxu0
        %v3855 = vadd.f32 %v3601, %v3854
        %3856 = vmatprep.mubr.bf16.mxu0 %v3590
        %3857 = vmatmul.mubr.bf16.gmra.mrb[0].mxu0 %v3589
        %v3858 = vpop.f32.mrb[0].mxu0
        %v3859 = vadd.f32 %v3597, %v3858
        %v3860 = vpop.f32.mrb[0].mxu0
        %v3861 = vadd.f32 %v3601, %v3860
        %v3862 = vpop.f32.mrb[0].mxu0
        %v3863 = vadd.f32 %v3597, %v3862
        %v3864 = vpop.f32.mrb[0].mxu0
        %v3865 = vadd.f32 %v3601, %v3864
        %3866 = vmatprep.mubr.bf16.mxu0 %v3592
        %3867 = vmatmul.mubr.bf16.gmra.mrb[0].mxu0 %v3591
        %v3868 = vpop.f32.mrb[0].mxu0
        %v3869 = vadd.f32 %v3597, %v3868
        %v3870 = vpop.f32.mrb[0].mxu0
        %v3871 = vadd.f32 %v3601, %v3870
        %v3872 = vpop.f32.mrb[0].mxu0
        %v3873 = vadd.f32 %v3597, %v3872
        %v3874 = vpop.f32.mrb[0].mxu0
        %v3875 = vadd.f32 %v3601, %v3874
        %3876 = vdwg.mxu0
        %v3877 = vadd.f32 %v3799, %v3510
        %v3878 = vadd.f32 %v3801, %v3511
        %v3879 = vadd.f32 %v3803, %v3512
        %v3880 = vadd.f32 %v3805, %v3513
        %v3881 = vadd.f32 %v3809, %v3514
        %v3882 = vadd.f32 %v3811, %v3515
        %v3883 = vadd.f32 %v3813, %v3516
        %v3884 = vadd.f32 %v3815, %v3517
        %v3885 = vadd.f32 %v3819, %v3518
        %v3886 = vadd.f32 %v3821, %v3519
        %v3887 = vadd.f32 %v3823, %v3520
        %v3888 = vadd.f32 %v3825, %v3521
        %v3889 = vadd.f32 %v3829, %v3522
        %v3890 = vadd.f32 %v3831, %v3523
        %v3891 = vadd.f32 %v3833, %v3524
        %v3892 = vadd.f32 %v3835, %v3525
        %v3893 = vadd.f32 %v3839, %v3526
        %v3894 = vadd.f32 %v3841, %v3527
        %v3895 = vadd.f32 %v3843, %v3528
        %v3896 = vadd.f32 %v3845, %v3529
        %v3897 = vadd.f32 %v3849, %v3530
        %v3898 = vadd.f32 %v3851, %v3531
        %v3899 = vadd.f32 %v3853, %v3532
        %v3900 = vadd.f32 %v3855, %v3533
        %v3901 = vadd.f32 %v3859, %v3534
        %v3902 = vadd.f32 %v3861, %v3535
        %v3903 = vadd.f32 %v3863, %v3536
        %v3904 = vadd.f32 %v3865, %v3537
        %v3905 = vadd.f32 %v3869, %v3538
        %v3906 = vadd.f32 %v3871, %v3539
        %v3907 = vadd.f32 %v3873, %v3540
        %v3908 = vadd.f32 %v3875, %v3541
        %v3909 = vmul.f32 %v3877, 0.5
        %v3910 = vmul.f32 %v3878, 0.5
        %v3911 = vmul.f32 %v3879, 0.5
        %v3912 = vmul.f32 %v3880, 0.5
        %v3913 = vmul.f32 %v3881, 0.5
        %v3914 = vmul.f32 %v3882, 0.5
        %v3915 = vmul.f32 %v3883, 0.5
        %v3916 = vmul.f32 %v3884, 0.5
        %v3917 = vmul.f32 %v3885, 0.5
        %v3918 = vmul.f32 %v3886, 0.5
        %v3919 = vmul.f32 %v3887, 0.5
        %v3920 = vmul.f32 %v3888, 0.5
        %v3921 = vmul.f32 %v3889, 0.5
        %v3922 = vmul.f32 %v3890, 0.5
        %v3923 = vmul.f32 %v3891, 0.5
        %v3924 = vmul.f32 %v3892, 0.5
        %v3925 = vmul.f32 %v3893, 0.5
        %v3926 = vmul.f32 %v3894, 0.5
        %v3927 = vmul.f32 %v3895, 0.5
        %v3928 = vmul.f32 %v3896, 0.5
        %v3929 = vmul.f32 %v3897, 0.5
        %v3930 = vmul.f32 %v3898, 0.5
        %v3931 = vmul.f32 %v3899, 0.5
        %v3932 = vmul.f32 %v3900, 0.5
        %v3933 = vmul.f32 %v3901, 0.5
        %v3934 = vmul.f32 %v3902, 0.5
        %v3935 = vmul.f32 %v3903, 0.5
        %v3936 = vmul.f32 %v3904, 0.5
        %v3937 = vmul.f32 %v3905, 0.5
        %v3938 = vmul.f32 %v3906, 0.5
        %v3939 = vmul.f32 %v3907, 0.5
        %v3940 = vmul.f32 %v3908, 0.5
        %v3941 = vtanh.pop %v3909
        %v3942 = vtanh.pop %v3910
        %v3943 = vtanh.pop %v3911
        %v3944 = vtanh.pop %v3912
        %v3945 = vtanh.pop %v3913
        %v3946 = vtanh.pop %v3914
        %v3947 = vtanh.pop %v3915
        %v3948 = vtanh.pop %v3916
        %v3949 = vtanh.pop %v3917
        %v3950 = vtanh.pop %v3918
        %v3951 = vtanh.pop %v3919
        %v3952 = vtanh.pop %v3920
        %v3953 = vtanh.pop %v3921
        %v3954 = vtanh.pop %v3922
        %v3955 = vtanh.pop %v3923
        %v3956 = vtanh.pop %v3924
        %v3957 = vtanh.pop %v3925
        %v3958 = vtanh.pop %v3926
        %v3959 = vtanh.pop %v3927
        %v3960 = vtanh.pop %v3928
        %v3961 = vtanh.pop %v3929
        %v3962 = vtanh.pop %v3930
        %v3963 = vtanh.pop %v3931
        %v3964 = vtanh.pop %v3932
        %v3965 = vtanh.pop %v3933
        %v3966 = vtanh.pop %v3934
        %v3967 = vtanh.pop %v3935
        %v3968 = vtanh.pop %v3936
        %v3969 = vtanh.pop %v3937
        %v3970 = vtanh.pop %v3938
        %v3971 = vtanh.pop %v3939
        %v3972 = vtanh.pop %v3940
        %v3973 = vmul.f32 %v3941, 0.5
        %v3974 = vmul.f32 %v3942, 0.5
        %v3975 = vmul.f32 %v3943, 0.5
        %v3976 = vmul.f32 %v3944, 0.5
        %v3977 = vmul.f32 %v3945, 0.5
        %v3978 = vmul.f32 %v3946, 0.5
        %v3979 = vmul.f32 %v3947, 0.5
        %v3980 = vmul.f32 %v3948, 0.5
        %v3981 = vmul.f32 %v3949, 0.5
        %v3982 = vmul.f32 %v3950, 0.5
        %v3983 = vmul.f32 %v3951, 0.5
        %v3984 = vmul.f32 %v3952, 0.5
        %v3985 = vmul.f32 %v3953, 0.5
        %v3986 = vmul.f32 %v3954, 0.5
        %v3987 = vmul.f32 %v3955, 0.5
        %v3988 = vmul.f32 %v3956, 0.5
        %v3989 = vmul.f32 %v3957, 0.5
        %v3990 = vmul.f32 %v3958, 0.5
        %v3991 = vmul.f32 %v3959, 0.5
        %v3992 = vmul.f32 %v3960, 0.5
        %v3993 = vmul.f32 %v3961, 0.5
        %v3994 = vmul.f32 %v3962, 0.5
        %v3995 = vmul.f32 %v3963, 0.5
        %v3996 = vmul.f32 %v3964, 0.5
        %v3997 = vmul.f32 %v3965, 0.5
        %v3998 = vmul.f32 %v3966, 0.5
        %v3999 = vmul.f32 %v3967, 0.5
        %v4000 = vmul.f32 %v3968, 0.5
        %v4001 = vmul.f32 %v3969, 0.5
        %v4002 = vmul.f32 %v3970, 0.5
        %v4003 = vmul.f32 %v3971, 0.5
        %v4004 = vmul.f32 %v3972, 0.5
        %v4005 = vadd.f32 %v3973, 0.5
        %v4006 = vadd.f32 %v3974, 0.5
        %v4007 = vadd.f32 %v3975, 0.5
        %v4008 = vadd.f32 %v3976, 0.5
        %v4009 = vadd.f32 %v3977, 0.5
        %v4010 = vadd.f32 %v3978, 0.5
        %v4011 = vadd.f32 %v3979, 0.5
        %v4012 = vadd.f32 %v3980, 0.5
        %v4013 = vadd.f32 %v3981, 0.5
        %v4014 = vadd.f32 %v3982, 0.5
        %v4015 = vadd.f32 %v3983, 0.5
        %v4016 = vadd.f32 %v3984, 0.5
        %v4017 = vadd.f32 %v3985, 0.5
        %v4018 = vadd.f32 %v3986, 0.5
        %v4019 = vadd.f32 %v3987, 0.5
        %v4020 = vadd.f32 %v3988, 0.5
        %v4021 = vadd.f32 %v3989, 0.5
        %v4022 = vadd.f32 %v3990, 0.5
        %v4023 = vadd.f32 %v3991, 0.5
        %v4024 = vadd.f32 %v3992, 0.5
        %v4025 = vadd.f32 %v3993, 0.5
        %v4026 = vadd.f32 %v3994, 0.5
        %v4027 = vadd.f32 %v3995, 0.5
        %v4028 = vadd.f32 %v3996, 0.5
        %v4029 = vadd.f32 %v3997, 0.5
        %v4030 = vadd.f32 %v3998, 0.5
        %v4031 = vadd.f32 %v3999, 0.5
        %v4032 = vadd.f32 %v4000, 0.5
        %v4033 = vadd.f32 %v4001, 0.5
        %v4034 = vadd.f32 %v4002, 0.5
        %v4035 = vadd.f32 %v4003, 0.5
        %v4036 = vadd.f32 %v4004, 0.5
        %v4037 = vmul.f32 %v3877, %v4005
        %v4038 = vmul.f32 %v3878, %v4006
        %v4039 = vmul.f32 %v3879, %v4007
        %v4040 = vmul.f32 %v3880, %v4008
        %v4041 = vmul.f32 %v3881, %v4009
        %v4042 = vmul.f32 %v3882, %v4010
        %v4043 = vmul.f32 %v3883, %v4011
        %v4044 = vmul.f32 %v3884, %v4012
        %v4045 = vmul.f32 %v3885, %v4013
        %v4046 = vmul.f32 %v3886, %v4014
        %v4047 = vmul.f32 %v3887, %v4015
        %v4048 = vmul.f32 %v3888, %v4016
        %v4049 = vmul.f32 %v3889, %v4017
        %v4050 = vmul.f32 %v3890, %v4018
        %v4051 = vmul.f32 %v3891, %v4019
        %v4052 = vmul.f32 %v3892, %v4020
        %v4053 = vmul.f32 %v3893, %v4021
        %v4054 = vmul.f32 %v3894, %v4022
        %v4055 = vmul.f32 %v3895, %v4023
        %v4056 = vmul.f32 %v3896, %v4024
        %v4057 = vmul.f32 %v3897, %v4025
        %v4058 = vmul.f32 %v3898, %v4026
        %v4059 = vmul.f32 %v3899, %v4027
        %v4060 = vmul.f32 %v3900, %v4028
        %v4061 = vmul.f32 %v3901, %v4029
        %v4062 = vmul.f32 %v3902, %v4030
        %v4063 = vmul.f32 %v3903, %v4031
        %v4064 = vmul.f32 %v3904, %v4032
        %v4065 = vmul.f32 %v3905, %v4033
        %v4066 = vmul.f32 %v3906, %v4034
        %v4067 = vmul.f32 %v3907, %v4035
        %v4068 = vmul.f32 %v3908, %v4036
        %4069 = vadd.xlane.f32.xlu0 %v4037
        %v4070 = vpop.xlane.xlu0 %4069
        %4071 = vadd.xlane.f32.xlu0 %v4039
        %v4072 = vpop.xlane.xlu0 %4071
        %4073 = vadd.xlane.f32.xlu0 %v4041
        %v4074 = vpop.xlane.xlu0 %4073
        %4075 = vadd.xlane.f32.xlu0 %v4043
        %v4076 = vpop.xlane.xlu0 %4075
        %4077 = vadd.xlane.f32.xlu0 %v4045
        %v4078 = vpop.xlane.xlu0 %4077
        %4079 = vadd.xlane.f32.xlu0 %v4047
        %v4080 = vpop.xlane.xlu0 %4079
        %4081 = vadd.xlane.f32.xlu0 %v4049
        %v4082 = vpop.xlane.xlu0 %4081
        %4083 = vadd.xlane.f32.xlu0 %v4051
        %v4084 = vpop.xlane.xlu0 %4083
        %4085 = vadd.xlane.f32.xlu0 %v4053
        %v4086 = vpop.xlane.xlu0 %4085
        %4087 = vadd.xlane.f32.xlu0 %v4055
        %v4088 = vpop.xlane.xlu0 %4087
        %4089 = vadd.xlane.f32.xlu0 %v4057
        %v4090 = vpop.xlane.xlu0 %4089
        %4091 = vadd.xlane.f32.xlu0 %v4059
        %v4092 = vpop.xlane.xlu0 %4091
        %4093 = vadd.xlane.f32.xlu0 %v4061
        %v4094 = vpop.xlane.xlu0 %4093
        %4095 = vadd.xlane.f32.xlu0 %v4063
        %v4096 = vpop.xlane.xlu0 %4095
        %4097 = vadd.xlane.f32.xlu0 %v4065
        %v4098 = vpop.xlane.xlu0 %4097
        %4099 = vadd.xlane.f32.xlu0 %v4067
        %v4100 = vpop.xlane.xlu0 %4099
        %v4101 = vmul.f32 %v4070, %v1131
        %v4102 = vmul.f32 %v4072, %v1131
        %v4103 = vmul.f32 %v4074, %v1131
        %v4104 = vmul.f32 %v4076, %v1131
        %v4105 = vmul.f32 %v4078, %v1131
        %v4106 = vmul.f32 %v4080, %v1131
        %v4107 = vmul.f32 %v4082, %v1131
        %v4108 = vmul.f32 %v4084, %v1131
        %v4109 = vmul.f32 %v4086, %v1131
        %v4110 = vmul.f32 %v4088, %v1131
        %v4111 = vmul.f32 %v4090, %v1131
        %v4112 = vmul.f32 %v4092, %v1131
        %v4113 = vmul.f32 %v4094, %v1131
        %v4114 = vmul.f32 %v4096, %v1131
        %v4115 = vmul.f32 %v4098, %v1131
        %v4116 = vmul.f32 %v4100, %v1131
        %v4117 = vsub.f32 %v4037, %v4101
        %v4118 = vsub.f32 %v4039, %v4102
        %v4119 = vsub.f32 %v4041, %v4103
        %v4120 = vsub.f32 %v4043, %v4104
        %v4121 = vsub.f32 %v4045, %v4105
        %v4122 = vsub.f32 %v4047, %v4106
        %v4123 = vsub.f32 %v4049, %v4107
        %v4124 = vsub.f32 %v4051, %v4108
        %v4125 = vsub.f32 %v4053, %v4109
        %v4126 = vsub.f32 %v4055, %v4110
        %v4127 = vsub.f32 %v4057, %v4111
        %v4128 = vsub.f32 %v4059, %v4112
        %v4129 = vsub.f32 %v4061, %v4113
        %v4130 = vsub.f32 %v4063, %v4114
        %v4131 = vsub.f32 %v4065, %v4115
        %v4132 = vsub.f32 %v4067, %v4116
        %v4133 = vmul.f32 %v4117, %v4117
        %v4134 = vmul.f32 %v4118, %v4118
        %v4135 = vmul.f32 %v4119, %v4119
        %v4136 = vmul.f32 %v4120, %v4120
        %v4137 = vmul.f32 %v4121, %v4121
        %v4138 = vmul.f32 %v4122, %v4122
        %v4139 = vmul.f32 %v4123, %v4123
        %v4140 = vmul.f32 %v4124, %v4124
        %v4141 = vmul.f32 %v4125, %v4125
        %v4142 = vmul.f32 %v4126, %v4126
        %v4143 = vmul.f32 %v4127, %v4127
        %v4144 = vmul.f32 %v4128, %v4128
        %v4145 = vmul.f32 %v4129, %v4129
        %v4146 = vmul.f32 %v4130, %v4130
        %v4147 = vmul.f32 %v4131, %v4131
        %v4148 = vmul.f32 %v4132, %v4132
        %4149 = vadd.xlane.f32.xlu0 %v4133
        %v4150 = vpop.xlane.xlu0 %4149
        %4151 = vadd.xlane.f32.xlu0 %v4134
        %v4152 = vpop.xlane.xlu0 %4151
        %4153 = vadd.xlane.f32.xlu0 %v4135
        %v4154 = vpop.xlane.xlu0 %4153
        %4155 = vadd.xlane.f32.xlu0 %v4136
        %v4156 = vpop.xlane.xlu0 %4155
        %4157 = vadd.xlane.f32.xlu0 %v4137
        %v4158 = vpop.xlane.xlu0 %4157
        %4159 = vadd.xlane.f32.xlu0 %v4138
        %v4160 = vpop.xlane.xlu0 %4159
        %4161 = vadd.xlane.f32.xlu0 %v4139
        %v4162 = vpop.xlane.xlu0 %4161
        %4163 = vadd.xlane.f32.xlu0 %v4140
        %v4164 = vpop.xlane.xlu0 %4163
        %4165 = vadd.xlane.f32.xlu0 %v4141
        %v4166 = vpop.xlane.xlu0 %4165
        %4167 = vadd.xlane.f32.xlu0 %v4142
        %v4168 = vpop.xlane.xlu0 %4167
        %4169 = vadd.xlane.f32.xlu0 %v4143
        %v4170 = vpop.xlane.xlu0 %4169
        %4171 = vadd.xlane.f32.xlu0 %v4144
        %v4172 = vpop.xlane.xlu0 %4171
        %4173 = vadd.xlane.f32.xlu0 %v4145
        %v4174 = vpop.xlane.xlu0 %4173
        %4175 = vadd.xlane.f32.xlu0 %v4146
        %v4176 = vpop.xlane.xlu0 %4175
        %4177 = vadd.xlane.f32.xlu0 %v4147
        %v4178 = vpop.xlane.xlu0 %4177
        %4179 = vadd.xlane.f32.xlu0 %v4148
        %v4180 = vpop.xlane.xlu0 %4179
        %v4181 = vmul.f32 %v4150, %v1131
        %v4182 = vmul.f32 %v4152, %v1131
        %v4183 = vmul.f32 %v4154, %v1131
        %v4184 = vmul.f32 %v4156, %v1131
        %v4185 = vmul.f32 %v4158, %v1131
        %v4186 = vmul.f32 %v4160, %v1131
        %v4187 = vmul.f32 %v4162, %v1131
        %v4188 = vmul.f32 %v4164, %v1131
        %v4189 = vmul.f32 %v4166, %v1131
        %v4190 = vmul.f32 %v4168, %v1131
        %v4191 = vmul.f32 %v4170, %v1131
        %v4192 = vmul.f32 %v4172, %v1131
        %v4193 = vmul.f32 %v4174, %v1131
        %v4194 = vmul.f32 %v4176, %v1131
        %v4195 = vmul.f32 %v4178, %v1131
        %v4196 = vmul.f32 %v4180, %v1131
        %v4197 = vadd.f32 %v4181, 0.1
        %v4198 = vadd.f32 %v4182, 0.1
        %v4199 = vadd.f32 %v4183, 0.1
        %v4200 = vadd.f32 %v4184, 0.1
        %v4201 = vadd.f32 %v4185, 0.1
        %v4202 = vadd.f32 %v4186, 0.1
        %v4203 = vadd.f32 %v4187, 0.1
        %v4204 = vadd.f32 %v4188, 0.1
        %v4205 = vadd.f32 %v4189, 0.1
        %v4206 = vadd.f32 %v4190, 0.1
        %v4207 = vadd.f32 %v4191, 0.1
        %v4208 = vadd.f32 %v4192, 0.1
        %v4209 = vadd.f32 %v4193, 0.1
        %v4210 = vadd.f32 %v4194, 0.1
        %v4211 = vadd.f32 %v4195, 0.1
        %v4212 = vadd.f32 %v4196, 0.1
        %v4213 = vrsqrt.pop %v4197
        %v4214 = vrsqrt.pop %v4198
        %v4215 = vrsqrt.pop %v4199
        %v4216 = vrsqrt.pop %v4200
        %v4217 = vrsqrt.pop %v4201
        %v4218 = vrsqrt.pop %v4202
        %v4219 = vrsqrt.pop %v4203
        %v4220 = vrsqrt.pop %v4204
        %v4221 = vrsqrt.pop %v4205
        %v4222 = vrsqrt.pop %v4206
        %v4223 = vrsqrt.pop %v4207
        %v4224 = vrsqrt.pop %v4208
        %v4225 = vrsqrt.pop %v4209
        %v4226 = vrsqrt.pop %v4210
        %v4227 = vrsqrt.pop %v4211
        %v4228 = vrsqrt.pop %v4212
        %v4229 = vmul.f32 %v4117, %v4213
        %v4230 = vmul.f32 %v4118, %v4214
        %v4231 = vmul.f32 %v4119, %v4215
        %v4232 = vmul.f32 %v4120, %v4216
        %v4233 = vmul.f32 %v4121, %v4217
        %v4234 = vmul.f32 %v4122, %v4218
        %v4235 = vmul.f32 %v4123, %v4219
        %v4236 = vmul.f32 %v4124, %v4220
        %v4237 = vmul.f32 %v4125, %v4221
        %v4238 = vmul.f32 %v4126, %v4222
        %v4239 = vmul.f32 %v4127, %v4223
        %v4240 = vmul.f32 %v4128, %v4224
        %v4241 = vmul.f32 %v4129, %v4225
        %v4242 = vmul.f32 %v4130, %v4226
        %v4243 = vmul.f32 %v4131, %v4227
        %v4244 = vmul.f32 %v4132, %v4228
        %4245 = vadd.xlane.f32.xlu0 %v4038
        %v4246 = vpop.xlane.xlu0 %4245
        %4247 = vadd.xlane.f32.xlu0 %v4040
        %v4248 = vpop.xlane.xlu0 %4247
        %4249 = vadd.xlane.f32.xlu0 %v4042
        %v4250 = vpop.xlane.xlu0 %4249
        %4251 = vadd.xlane.f32.xlu0 %v4044
        %v4252 = vpop.xlane.xlu0 %4251
        %4253 = vadd.xlane.f32.xlu0 %v4046
        %v4254 = vpop.xlane.xlu0 %4253
        %4255 = vadd.xlane.f32.xlu0 %v4048
        %v4256 = vpop.xlane.xlu0 %4255
        %4257 = vadd.xlane.f32.xlu0 %v4050
        %v4258 = vpop.xlane.xlu0 %4257
        %4259 = vadd.xlane.f32.xlu0 %v4052
        %v4260 = vpop.xlane.xlu0 %4259
        %4261 = vadd.xlane.f32.xlu0 %v4054
        %v4262 = vpop.xlane.xlu0 %4261
        %4263 = vadd.xlane.f32.xlu0 %v4056
        %v4264 = vpop.xlane.xlu0 %4263
        %4265 = vadd.xlane.f32.xlu0 %v4058
        %v4266 = vpop.xlane.xlu0 %4265
        %4267 = vadd.xlane.f32.xlu0 %v4060
        %v4268 = vpop.xlane.xlu0 %4267
        %4269 = vadd.xlane.f32.xlu0 %v4062
        %v4270 = vpop.xlane.xlu0 %4269
        %4271 = vadd.xlane.f32.xlu0 %v4064
        %v4272 = vpop.xlane.xlu0 %4271
        %4273 = vadd.xlane.f32.xlu0 %v4066
        %v4274 = vpop.xlane.xlu0 %4273
        %4275 = vadd.xlane.f32.xlu0 %v4068
        %v4276 = vpop.xlane.xlu0 %4275
        %v4277 = vmul.f32 %v4246, %v1131
        %v4278 = vmul.f32 %v4248, %v1131
        %v4279 = vmul.f32 %v4250, %v1131
        %v4280 = vmul.f32 %v4252, %v1131
        %v4281 = vmul.f32 %v4254, %v1131
        %v4282 = vmul.f32 %v4256, %v1131
        %v4283 = vmul.f32 %v4258, %v1131
        %v4284 = vmul.f32 %v4260, %v1131
        %v4285 = vmul.f32 %v4262, %v1131
        %v4286 = vmul.f32 %v4264, %v1131
        %v4287 = vmul.f32 %v4266, %v1131
        %v4288 = vmul.f32 %v4268, %v1131
        %v4289 = vmul.f32 %v4270, %v1131
        %v4290 = vmul.f32 %v4272, %v1131
        %v4291 = vmul.f32 %v4274, %v1131
        %v4292 = vmul.f32 %v4276, %v1131
        %v4293 = vsub.f32 %v4038, %v4277
        %v4294 = vsub.f32 %v4040, %v4278
        %v4295 = vsub.f32 %v4042, %v4279
        %v4296 = vsub.f32 %v4044, %v4280
        %v4297 = vsub.f32 %v4046, %v4281
        %v4298 = vsub.f32 %v4048, %v4282
        %v4299 = vsub.f32 %v4050, %v4283
        %v4300 = vsub.f32 %v4052, %v4284
        %v4301 = vsub.f32 %v4054, %v4285
        %v4302 = vsub.f32 %v4056, %v4286
        %v4303 = vsub.f32 %v4058, %v4287
        %v4304 = vsub.f32 %v4060, %v4288
        %v4305 = vsub.f32 %v4062, %v4289
        %v4306 = vsub.f32 %v4064, %v4290
        %v4307 = vsub.f32 %v4066, %v4291
        %v4308 = vsub.f32 %v4068, %v4292
        %v4309 = vmul.f32 %v4293, %v4293
        %v4310 = vmul.f32 %v4294, %v4294
        %v4311 = vmul.f32 %v4295, %v4295
        %v4312 = vmul.f32 %v4296, %v4296
        %v4313 = vmul.f32 %v4297, %v4297
        %v4314 = vmul.f32 %v4298, %v4298
        %v4315 = vmul.f32 %v4299, %v4299
        %v4316 = vmul.f32 %v4300, %v4300
        %v4317 = vmul.f32 %v4301, %v4301
        %v4318 = vmul.f32 %v4302, %v4302
        %v4319 = vmul.f32 %v4303, %v4303
        %v4320 = vmul.f32 %v4304, %v4304
        %v4321 = vmul.f32 %v4305, %v4305
        %v4322 = vmul.f32 %v4306, %v4306
        %v4323 = vmul.f32 %v4307, %v4307
        %v4324 = vmul.f32 %v4308, %v4308
        %4325 = vadd.xlane.f32.xlu0 %v4309
        %v4326 = vpop.xlane.xlu0 %4325
        %4327 = vadd.xlane.f32.xlu0 %v4310
        %v4328 = vpop.xlane.xlu0 %4327
        %4329 = vadd.xlane.f32.xlu0 %v4311
        %v4330 = vpop.xlane.xlu0 %4329
        %4331 = vadd.xlane.f32.xlu0 %v4312
        %v4332 = vpop.xlane.xlu0 %4331
        %4333 = vadd.xlane.f32.xlu0 %v4313
        %v4334 = vpop.xlane.xlu0 %4333
        %4335 = vadd.xlane.f32.xlu0 %v4314
        %v4336 = vpop.xlane.xlu0 %4335
        %4337 = vadd.xlane.f32.xlu0 %v4315
        %v4338 = vpop.xlane.xlu0 %4337
        %4339 = vadd.xlane.f32.xlu0 %v4316
        %v4340 = vpop.xlane.xlu0 %4339
        %4341 = vadd.xlane.f32.xlu0 %v4317
        %v4342 = vpop.xlane.xlu0 %4341
        %4343 = vadd.xlane.f32.xlu0 %v4318
        %v4344 = vpop.xlane.xlu0 %4343
        %4345 = vadd.xlane.f32.xlu0 %v4319
        %v4346 = vpop.xlane.xlu0 %4345
        %4347 = vadd.xlane.f32.xlu0 %v4320
        %v4348 = vpop.xlane.xlu0 %4347
        %4349 = vadd.xlane.f32.xlu0 %v4321
        %v4350 = vpop.xlane.xlu0 %4349
        %4351 = vadd.xlane.f32.xlu0 %v4322
        %v4352 = vpop.xlane.xlu0 %4351
        %4353 = vadd.xlane.f32.xlu0 %v4323
        %v4354 = vpop.xlane.xlu0 %4353
        %4355 = vadd.xlane.f32.xlu0 %v4324
        %v4356 = vpop.xlane.xlu0 %4355
        %v4357 = vmul.f32 %v4326, %v1131
        %v4358 = vmul.f32 %v4328, %v1131
        %v4359 = vmul.f32 %v4330, %v1131
        %v4360 = vmul.f32 %v4332, %v1131
        %v4361 = vmul.f32 %v4334, %v1131
        %v4362 = vmul.f32 %v4336, %v1131
        %v4363 = vmul.f32 %v4338, %v1131
        %v4364 = vmul.f32 %v4340, %v1131
        %v4365 = vmul.f32 %v4342, %v1131
        %v4366 = vmul.f32 %v4344, %v1131
        %v4367 = vmul.f32 %v4346, %v1131
        %v4368 = vmul.f32 %v4348, %v1131
        %v4369 = vmul.f32 %v4350, %v1131
        %v4370 = vmul.f32 %v4352, %v1131
        %v4371 = vmul.f32 %v4354, %v1131
        %v4372 = vmul.f32 %v4356, %v1131
        %v4373 = vadd.f32 %v4357, 0.1
        %v4374 = vadd.f32 %v4358, 0.1
        %v4375 = vadd.f32 %v4359, 0.1
        %v4376 = vadd.f32 %v4360, 0.1
        %v4377 = vadd.f32 %v4361, 0.1
        %v4378 = vadd.f32 %v4362, 0.1
        %v4379 = vadd.f32 %v4363, 0.1
        %v4380 = vadd.f32 %v4364, 0.1
        %v4381 = vadd.f32 %v4365, 0.1
        %v4382 = vadd.f32 %v4366, 0.1
        %v4383 = vadd.f32 %v4367, 0.1
        %v4384 = vadd.f32 %v4368, 0.1
        %v4385 = vadd.f32 %v4369, 0.1
        %v4386 = vadd.f32 %v4370, 0.1
        %v4387 = vadd.f32 %v4371, 0.1
        %v4388 = vadd.f32 %v4372, 0.1
        %v4389 = vrsqrt.pop %v4373
        %v4390 = vrsqrt.pop %v4374
        %v4391 = vrsqrt.pop %v4375
        %v4392 = vrsqrt.pop %v4376
        %v4393 = vrsqrt.pop %v4377
        %v4394 = vrsqrt.pop %v4378
        %v4395 = vrsqrt.pop %v4379
        %v4396 = vrsqrt.pop %v4380
        %v4397 = vrsqrt.pop %v4381
        %v4398 = vrsqrt.pop %v4382
        %v4399 = vrsqrt.pop %v4383
        %v4400 = vrsqrt.pop %v4384
        %v4401 = vrsqrt.pop %v4385
        %v4402 = vrsqrt.pop %v4386
        %v4403 = vrsqrt.pop %v4387
        %v4404 = vrsqrt.pop %v4388
        %v4405 = vmul.f32 %v4293, %v4389
        %v4406 = vmul.f32 %v4294, %v4390
        %v4407 = vmul.f32 %v4295, %v4391
        %v4408 = vmul.f32 %v4296, %v4392
        %v4409 = vmul.f32 %v4297, %v4393
        %v4410 = vmul.f32 %v4298, %v4394
        %v4411 = vmul.f32 %v4299, %v4395
        %v4412 = vmul.f32 %v4300, %v4396
        %v4413 = vmul.f32 %v4301, %v4397
        %v4414 = vmul.f32 %v4302, %v4398
        %v4415 = vmul.f32 %v4303, %v4399
        %v4416 = vmul.f32 %v4304, %v4400
        %v4417 = vmul.f32 %v4305, %v4401
        %v4418 = vmul.f32 %v4306, %v4402
        %v4419 = vmul.f32 %v4307, %v4403
        %v4420 = vmul.f32 %v4308, %v4404
        %s4421 = scalar_lea.vmem %s3, 6
        %v4422 = vld [vmem:[%s4421] sm:$0x3]
        %v4424 = vlaneseq
        %v4425 = vshrl.u32 %v4424, 7
        %v4426 = vsub.s32 0, %v4425
        %v4427 = vrot.slane %v4422, %v4426
        %v4428 = vlaneseq
        %v4429 = vshrl.u32 %v4428, 7
        %v4430 = vsub.s32 1, %v4429
        %v4431 = vrot.slane %v4422, %v4430
        %v4434 = vmul.f32 %v4229, %v4427
        %v4435 = vmul.f32 %v4405, %v4431
        %v4436 = vmul.f32 %v4230, %v4427
        %v4437 = vmul.f32 %v4406, %v4431
        %v4438 = vmul.f32 %v4231, %v4427
        %v4439 = vmul.f32 %v4407, %v4431
        %v4440 = vmul.f32 %v4232, %v4427
        %v4441 = vmul.f32 %v4408, %v4431
        %v4442 = vmul.f32 %v4233, %v4427
        %v4443 = vmul.f32 %v4409, %v4431
        %v4444 = vmul.f32 %v4234, %v4427
        %v4445 = vmul.f32 %v4410, %v4431
        %v4446 = vmul.f32 %v4235, %v4427
        %v4447 = vmul.f32 %v4411, %v4431
        %v4448 = vmul.f32 %v4236, %v4427
        %v4449 = vmul.f32 %v4412, %v4431
        %v4450 = vmul.f32 %v4237, %v4427
        %v4451 = vmul.f32 %v4413, %v4431
        %v4452 = vmul.f32 %v4238, %v4427
        %v4453 = vmul.f32 %v4414, %v4431
        %v4454 = vmul.f32 %v4239, %v4427
        %v4455 = vmul.f32 %v4415, %v4431
        %v4456 = vmul.f32 %v4240, %v4427
        %v4457 = vmul.f32 %v4416, %v4431
        %v4458 = vmul.f32 %v4241, %v4427
        %v4459 = vmul.f32 %v4417, %v4431
        %v4460 = vmul.f32 %v4242, %v4427
        %v4461 = vmul.f32 %v4418, %v4431
        %v4462 = vmul.f32 %v4243, %v4427
        %v4463 = vmul.f32 %v4419, %v4431
        %v4464 = vmul.f32 %v4244, %v4427
        %v4465 = vmul.f32 %v4420, %v4431
        %s4466 = scalar_lea.vmem [#allocation7], 6
        %v4467 = vld [vmem:[%s4466] sm:$0x3]
        %v4469 = vlaneseq
        %v4470 = vshrl.u32 %v4469, 7
        %v4471 = vsub.s32 0, %v4470
        %v4472 = vrot.slane %v4467, %v4471
        %v4473 = vlaneseq
        %v4474 = vshrl.u32 %v4473, 7
        %v4475 = vsub.s32 1, %v4474
        %v4476 = vrot.slane %v4467, %v4475
        %v4479 = vadd.f32 %v4434, %v4472
        %v4480 = vadd.f32 %v4435, %v4476
        %v4481 = vadd.f32 %v4436, %v4472
        %v4482 = vadd.f32 %v4437, %v4476
        %v4483 = vadd.f32 %v4438, %v4472
        %v4484 = vadd.f32 %v4439, %v4476
        %v4485 = vadd.f32 %v4440, %v4472
        %v4486 = vadd.f32 %v4441, %v4476
        %v4487 = vadd.f32 %v4442, %v4472
        %v4488 = vadd.f32 %v4443, %v4476
        %v4489 = vadd.f32 %v4444, %v4472
        %v4490 = vadd.f32 %v4445, %v4476
        %v4491 = vadd.f32 %v4446, %v4472
        %v4492 = vadd.f32 %v4447, %v4476
        %v4493 = vadd.f32 %v4448, %v4472
        %v4494 = vadd.f32 %v4449, %v4476
        %v4495 = vadd.f32 %v4450, %v4472
        %v4496 = vadd.f32 %v4451, %v4476
        %v4497 = vadd.f32 %v4452, %v4472
        %v4498 = vadd.f32 %v4453, %v4476
        %v4499 = vadd.f32 %v4454, %v4472
        %v4500 = vadd.f32 %v4455, %v4476
        %v4501 = vadd.f32 %v4456, %v4472
        %v4502 = vadd.f32 %v4457, %v4476
        %v4503 = vadd.f32 %v4458, %v4472
        %v4504 = vadd.f32 %v4459, %v4476
        %v4505 = vadd.f32 %v4460, %v4472
        %v4506 = vadd.f32 %v4461, %v4476
        %v4507 = vadd.f32 %v4462, %v4472
        %v4508 = vadd.f32 %v4463, %v4476
        %v4509 = vadd.f32 %v4464, %v4472
        %v4510 = vadd.f32 %v4465, %v4476
        %v4511 = vadd.f32 %v3510, %v4479
        %v4512 = vadd.f32 %v3511, %v4480
        %v4513 = vadd.f32 %v3512, %v4481
        %v4514 = vadd.f32 %v3513, %v4482
        %v4515 = vadd.f32 %v3514, %v4483
        %v4516 = vadd.f32 %v3515, %v4484
        %v4517 = vadd.f32 %v3516, %v4485
        %v4518 = vadd.f32 %v3517, %v4486
        %v4519 = vadd.f32 %v3518, %v4487
        %v4520 = vadd.f32 %v3519, %v4488
        %v4521 = vadd.f32 %v3520, %v4489
        %v4522 = vadd.f32 %v3521, %v4490
        %v4523 = vadd.f32 %v3522, %v4491
        %v4524 = vadd.f32 %v3523, %v4492
        %v4525 = vadd.f32 %v3524, %v4493
        %v4526 = vadd.f32 %v3525, %v4494
        %v4527 = vadd.f32 %v3526, %v4495
        %v4528 = vadd.f32 %v3527, %v4496
        %v4529 = vadd.f32 %v3528, %v4497
        %v4530 = vadd.f32 %v3529, %v4498
        %v4531 = vadd.f32 %v3530, %v4499
        %v4532 = vadd.f32 %v3531, %v4500
        %v4533 = vadd.f32 %v3532, %v4501
        %v4534 = vadd.f32 %v3533, %v4502
        %v4535 = vadd.f32 %v3534, %v4503
        %v4536 = vadd.f32 %v3535, %v4504
        %v4537 = vadd.f32 %v3536, %v4505
        %v4538 = vadd.f32 %v3537, %v4506
        %v4539 = vadd.f32 %v3538, %v4507
        %v4540 = vadd.f32 %v3539, %v4508
        %v4541 = vadd.f32 %v3540, %v4509
        %v4542 = vadd.f32 %v3541, %v4510
        %s4543 = scalar_lea.vmem [#allocation4], 1024
        %v4544 = vld [vmem:[%s4543] sm:$0xff]
        %v4545 = vld [vmem:[%s4543 + $0x8] sm:$0xff]
        %v4546 = vld [vmem:[%s4543 + $0x10] sm:$0xff]
        %v4547 = vld [vmem:[%s4543 + $0x18] sm:$0xff]
        %v4548 = vld [vmem:[%s4543 + $0x20] sm:$0xff]
        %v4549 = vld [vmem:[%s4543 + $0x28] sm:$0xff]
        %v4550 = vld [vmem:[%s4543 + $0x30] sm:$0xff]
        %v4551 = vld [vmem:[%s4543 + $0x38] sm:$0xff]
        %v4552 = vld [vmem:[%s4543 + $0x40] sm:$0xff]
        %v4553 = vld [vmem:[%s4543 + $0x48] sm:$0xff]
        %v4554 = vld [vmem:[%s4543 + $0x50] sm:$0xff]
        %v4555 = vld [vmem:[%s4543 + $0x58] sm:$0xff]
        %v4556 = vld [vmem:[%s4543 + $0x60] sm:$0xff]
        %v4557 = vld [vmem:[%s4543 + $0x68] sm:$0xff]
        %v4558 = vld [vmem:[%s4543 + $0x70] sm:$0xff]
        %v4559 = vld [vmem:[%s4543 + $0x78] sm:$0xff]
        %v4560 = vld [vmem:[%s4543 + $0x80] sm:$0xff]
        %v4561 = vld [vmem:[%s4543 + $0x88] sm:$0xff]
        %v4562 = vld [vmem:[%s4543 + $0x90] sm:$0xff]
        %v4563 = vld [vmem:[%s4543 + $0x98] sm:$0xff]
        %v4564 = vld [vmem:[%s4543 + $0xa0] sm:$0xff]
        %v4565 = vld [vmem:[%s4543 + $0xa8] sm:$0xff]
        %v4566 = vld [vmem:[%s4543 + $0xb0] sm:$0xff]
        %v4567 = vld [vmem:[%s4543 + $0xb8] sm:$0xff]
        %v4568 = vld [vmem:[%s4543 + $0xc0] sm:$0xff]
        %v4569 = vld [vmem:[%s4543 + $0xc8] sm:$0xff]
        %v4570 = vld [vmem:[%s4543 + $0xd0] sm:$0xff]
        %v4571 = vld [vmem:[%s4543 + $0xd8] sm:$0xff]
        %v4572 = vld [vmem:[%s4543 + $0xe0] sm:$0xff]
        %v4573 = vld [vmem:[%s4543 + $0xe8] sm:$0xff]
        %v4574 = vld [vmem:[%s4543 + $0xf0] sm:$0xff]
        %v4575 = vld [vmem:[%s4543 + $0xf8] sm:$0xff]
        %s4576 = scalar_lea.vmem [#allocation6], 8
        %v4577 = vld [vmem:[%s4576] sm:$0x3]
        %v4578 = vpack.c.bf16 %v4481, %v4479
        %v4579 = vpack.c.bf16 %v4482, %v4480
        %v4580 = vpack.c.bf16 %v4485, %v4483
        %v4581 = vpack.c.bf16 %v4486, %v4484
        %v4582 = vpack.c.bf16 %v4489, %v4487
        %v4583 = vpack.c.bf16 %v4490, %v4488
        %v4584 = vpack.c.bf16 %v4493, %v4491
        %v4585 = vpack.c.bf16 %v4494, %v4492
        %v4586 = vpack.c.bf16 %v4497, %v4495
        %v4587 = vpack.c.bf16 %v4498, %v4496
        %v4588 = vpack.c.bf16 %v4501, %v4499
        %v4589 = vpack.c.bf16 %v4502, %v4500
        %v4590 = vpack.c.bf16 %v4505, %v4503
        %v4591 = vpack.c.bf16 %v4506, %v4504
        %v4592 = vpack.c.bf16 %v4509, %v4507
        %v4593 = vpack.c.bf16 %v4510, %v4508
        %v4595 = vlaneseq
        %v4596 = vshrl.u32 %v4595, 7
        %v4597 = vsub.s32 0, %v4596
        %v4598 = vrot.slane %v4577, %v4597
        %v4599 = vlaneseq
        %v4600 = vshrl.u32 %v4599, 7
        %v4601 = vsub.s32 1, %v4600
        %v4602 = vrot.slane %v4577, %v4601
        %v4637 = vunpack.c.l.b16 %v4544
        %v4638 = vunpack.c.h.b16 %v4544
        %v4639 = vunpack.c.l.b16 %v4545
        %v4640 = vunpack.c.h.b16 %v4545
        %v4641 = vunpack.c.l.b16 %v4546
        %v4642 = vunpack.c.h.b16 %v4546
        %v4643 = vunpack.c.l.b16 %v4547
        %v4644 = vunpack.c.h.b16 %v4547
        %v4645 = vunpack.c.l.b16 %v4548
        %v4646 = vunpack.c.h.b16 %v4548
        %v4647 = vunpack.c.l.b16 %v4549
        %v4648 = vunpack.c.h.b16 %v4549
        %v4649 = vunpack.c.l.b16 %v4550
        %v4650 = vunpack.c.h.b16 %v4550
        %v4651 = vunpack.c.l.b16 %v4551
        %v4652 = vunpack.c.h.b16 %v4551
        %v4653 = vunpack.c.l.b16 %v4552
        %v4654 = vunpack.c.h.b16 %v4552
        %v4655 = vunpack.c.l.b16 %v4553
        %v4656 = vunpack.c.h.b16 %v4553
        %v4657 = vunpack.c.l.b16 %v4554
        %v4658 = vunpack.c.h.b16 %v4554
        %v4659 = vunpack.c.l.b16 %v4555
        %v4660 = vunpack.c.h.b16 %v4555
        %v4661 = vunpack.c.l.b16 %v4556
        %v4662 = vunpack.c.h.b16 %v4556
        %v4663 = vunpack.c.l.b16 %v4557
        %v4664 = vunpack.c.h.b16 %v4557
        %v4665 = vunpack.c.l.b16 %v4558
        %v4666 = vunpack.c.h.b16 %v4558
        %v4667 = vunpack.c.l.b16 %v4559
        %v4668 = vunpack.c.h.b16 %v4559
        %v4669 = vunpack.c.l.b16 %v4560
        %v4670 = vunpack.c.h.b16 %v4560
        %v4671 = vunpack.c.l.b16 %v4561
        %v4672 = vunpack.c.h.b16 %v4561
        %v4673 = vunpack.c.l.b16 %v4562
        %v4674 = vunpack.c.h.b16 %v4562
        %v4675 = vunpack.c.l.b16 %v4563
        %v4676 = vunpack.c.h.b16 %v4563
        %v4677 = vunpack.c.l.b16 %v4564
        %v4678 = vunpack.c.h.b16 %v4564
        %v4679 = vunpack.c.l.b16 %v4565
        %v4680 = vunpack.c.h.b16 %v4565
        %v4681 = vunpack.c.l.b16 %v4566
        %v4682 = vunpack.c.h.b16 %v4566
        %v4683 = vunpack.c.l.b16 %v4567
        %v4684 = vunpack.c.h.b16 %v4567
        %v4685 = vunpack.c.l.b16 %v4568
        %v4686 = vunpack.c.h.b16 %v4568
        %v4687 = vunpack.c.l.b16 %v4569
        %v4688 = vunpack.c.h.b16 %v4569
        %v4689 = vunpack.c.l.b16 %v4570
        %v4690 = vunpack.c.h.b16 %v4570
        %v4691 = vunpack.c.l.b16 %v4571
        %v4692 = vunpack.c.h.b16 %v4571
        %v4693 = vunpack.c.l.b16 %v4572
        %v4694 = vunpack.c.h.b16 %v4572
        %v4695 = vunpack.c.l.b16 %v4573
        %v4696 = vunpack.c.h.b16 %v4573
        %v4697 = vunpack.c.l.b16 %v4574
        %v4698 = vunpack.c.h.b16 %v4574
        %v4699 = vunpack.c.l.b16 %v4575
        %v4700 = vunpack.c.h.b16 %v4575
        %v4701 = vpack.c.b16 %v4639, %v4637
        %v4702 = vpack.c.b16 %v4640, %v4638
        %v4703 = vpack.c.b16 %v4643, %v4641
        %v4704 = vpack.c.b16 %v4644, %v4642
        %v4705 = vpack.c.b16 %v4647, %v4645
        %v4706 = vpack.c.b16 %v4648, %v4646
        %v4707 = vpack.c.b16 %v4651, %v4649
        %v4708 = vpack.c.b16 %v4652, %v4650
        %v4709 = vpack.c.b16 %v4655, %v4653
        %v4710 = vpack.c.b16 %v4656, %v4654
        %v4711 = vpack.c.b16 %v4659, %v4657
        %v4712 = vpack.c.b16 %v4660, %v4658
        %v4713 = vpack.c.b16 %v4663, %v4661
        %v4714 = vpack.c.b16 %v4664, %v4662
        %v4715 = vpack.c.b16 %v4667, %v4665
        %v4716 = vpack.c.b16 %v4668, %v4666
        %v4717 = vpack.c.b16 %v4671, %v4669
        %v4718 = vpack.c.b16 %v4672, %v4670
        %v4719 = vpack.c.b16 %v4675, %v4673
        %v4720 = vpack.c.b16 %v4676, %v4674
        %v4721 = vpack.c.b16 %v4679, %v4677
        %v4722 = vpack.c.b16 %v4680, %v4678
        %v4723 = vpack.c.b16 %v4683, %v4681
        %v4724 = vpack.c.b16 %v4684, %v4682
        %v4725 = vpack.c.b16 %v4687, %v4685
        %v4726 = vpack.c.b16 %v4688, %v4686
        %v4727 = vpack.c.b16 %v4691, %v4689
        %v4728 = vpack.c.b16 %v4692, %v4690
        %v4729 = vpack.c.b16 %v4695, %v4693
        %v4730 = vpack.c.b16 %v4696, %v4694
        %v4731 = vpack.c.b16 %v4699, %v4697
        %v4732 = vpack.c.b16 %v4700, %v4698
        %4765 = vmatprep.subr.bf16.mxu0 %v4702
        %4766 = vmatpush1.bf16.msra.mxu0 %v4701
        %4767 = vmatprep.subr.bf16.mxu0 %v4704
        %4768 = vmatpush1.bf16.msra.mxu0 %v4703
        %4769 = vmatprep.subr.bf16.mxu0 %v4706
        %4770 = vmatpush1.bf16.msra.mxu0 %v4705
        %4771 = vmatprep.subr.bf16.mxu0 %v4708
        %4772 = vmatpush1.bf16.msra.mxu0 %v4707
        %4773 = vmatprep.subr.bf16.mxu0 %v4710
        %4774 = vmatpush1.bf16.msra.mxu0 %v4709
        %4775 = vmatprep.subr.bf16.mxu0 %v4712
        %4776 = vmatpush1.bf16.msra.mxu0 %v4711
        %4777 = vmatprep.subr.bf16.mxu0 %v4714
        %4778 = vmatpush1.bf16.msra.mxu0 %v4713
        %4779 = vmatprep.subr.bf16.mxu0 %v4716
        %4780 = vmatpush1.bf16.msra.mxu0 %v4715
        %4781 = vmatprep.subr.bf16.mxu0 %v4718
        %4782 = vmatpush1.bf16.msra.mxu0 %v4717
        %4783 = vmatprep.subr.bf16.mxu0 %v4720
        %4784 = vmatpush1.bf16.msra.mxu0 %v4719
        %4785 = vmatprep.subr.bf16.mxu0 %v4722
        %4786 = vmatpush1.bf16.msra.mxu0 %v4721
        %4787 = vmatprep.subr.bf16.mxu0 %v4724
        %4788 = vmatpush1.bf16.msra.mxu0 %v4723
        %4789 = vmatprep.subr.bf16.mxu0 %v4726
        %4790 = vmatpush1.bf16.msra.mxu0 %v4725
        %4791 = vmatprep.subr.bf16.mxu0 %v4728
        %4792 = vmatpush1.bf16.msra.mxu0 %v4727
        %4793 = vmatprep.subr.bf16.mxu0 %v4730
        %4794 = vmatpush1.bf16.msra.mxu0 %v4729
        %4795 = vmatprep.subr.bf16.mxu0 %v4732
        %4796 = vmatpush1.bf16.msra.mxu0 %v4731
        %4797 = vmatprep.mubr.bf16.mxu0 %v4579
        %4798 = vmatmul.mubr.bf16.gmra.mrb[0].mxu0 %v4578
        %v4799 = vpop.f32.mrb[0].mxu0
        %v4800 = vadd.f32 %v4598, %v4799
        %v4801 = vpop.f32.mrb[0].mxu0
        %v4802 = vadd.f32 %v4602, %v4801
        %v4803 = vpop.f32.mrb[0].mxu0
        %v4804 = vadd.f32 %v4598, %v4803
        %v4805 = vpop.f32.mrb[0].mxu0
        %v4806 = vadd.f32 %v4602, %v4805
        %4807 = vmatprep.mubr.bf16.mxu0 %v4581
        %4808 = vmatmul.mubr.bf16.gmra.mrb[0].mxu0 %v4580
        %v4809 = vpop.f32.mrb[0].mxu0
        %v4810 = vadd.f32 %v4598, %v4809
        %v4811 = vpop.f32.mrb[0].mxu0
        %v4812 = vadd.f32 %v4602, %v4811
        %v4813 = vpop.f32.mrb[0].mxu0
        %v4814 = vadd.f32 %v4598, %v4813
        %v4815 = vpop.f32.mrb[0].mxu0
        %v4816 = vadd.f32 %v4602, %v4815
        %4817 = vmatprep.mubr.bf16.mxu0 %v4583
        %4818 = vmatmul.mubr.bf16.gmra.mrb[0].mxu0 %v4582
        %v4819 = vpop.f32.mrb[0].mxu0
        %v4820 = vadd.f32 %v4598, %v4819
        %v4821 = vpop.f32.mrb[0].mxu0
        %v4822 = vadd.f32 %v4602, %v4821
        %v4823 = vpop.f32.mrb[0].mxu0
        %v4824 = vadd.f32 %v4598, %v4823
        %v4825 = vpop.f32.mrb[0].mxu0
        %v4826 = vadd.f32 %v4602, %v4825
        %4827 = vmatprep.mubr.bf16.mxu0 %v4585
        %4828 = vmatmul.mubr.bf16.gmra.mrb[0].mxu0 %v4584
        %v4829 = vpop.f32.mrb[0].mxu0
        %v4830 = vadd.f32 %v4598, %v4829
        %v4831 = vpop.f32.mrb[0].mxu0
        %v4832 = vadd.f32 %v4602, %v4831
        %v4833 = vpop.f32.mrb[0].mxu0
        %v4834 = vadd.f32 %v4598, %v4833
        %v4835 = vpop.f32.mrb[0].mxu0
        %v4836 = vadd.f32 %v4602, %v4835
        %4837 = vmatprep.mubr.bf16.mxu0 %v4587
        %4838 = vmatmul.mubr.bf16.gmra.mrb[0].mxu0 %v4586
        %v4839 = vpop.f32.mrb[0].mxu0
        %v4840 = vadd.f32 %v4598, %v4839
        %v4841 = vpop.f32.mrb[0].mxu0
        %v4842 = vadd.f32 %v4602, %v4841
        %v4843 = vpop.f32.mrb[0].mxu0
        %v4844 = vadd.f32 %v4598, %v4843
        %v4845 = vpop.f32.mrb[0].mxu0
        %v4846 = vadd.f32 %v4602, %v4845
        %4847 = vmatprep.mubr.bf16.mxu0 %v4589
        %4848 = vmatmul.mubr.bf16.gmra.mrb[0].mxu0 %v4588
        %v4849 = vpop.f32.mrb[0].mxu0
        %v4850 = vadd.f32 %v4598, %v4849
        %v4851 = vpop.f32.mrb[0].mxu0
        %v4852 = vadd.f32 %v4602, %v4851
        %v4853 = vpop.f32.mrb[0].mxu0
        %v4854 = vadd.f32 %v4598, %v4853
        %v4855 = vpop.f32.mrb[0].mxu0
        %v4856 = vadd.f32 %v4602, %v4855
        %4857 = vmatprep.mubr.bf16.mxu0 %v4591
        %4858 = vmatmul.mubr.bf16.gmra.mrb[0].mxu0 %v4590
        %v4859 = vpop.f32.mrb[0].mxu0
        %v4860 = vadd.f32 %v4598, %v4859
        %v4861 = vpop.f32.mrb[0].mxu0
        %v4862 = vadd.f32 %v4602, %v4861
        %v4863 = vpop.f32.mrb[0].mxu0
        %v4864 = vadd.f32 %v4598, %v4863
        %v4865 = vpop.f32.mrb[0].mxu0
        %v4866 = vadd.f32 %v4602, %v4865
        %4867 = vmatprep.mubr.bf16.mxu0 %v4593
        %4868 = vmatmul.mubr.bf16.gmra.mrb[0].mxu0 %v4592
        %v4869 = vpop.f32.mrb[0].mxu0
        %v4870 = vadd.f32 %v4598, %v4869
        %v4871 = vpop.f32.mrb[0].mxu0
        %v4872 = vadd.f32 %v4602, %v4871
        %v4873 = vpop.f32.mrb[0].mxu0
        %v4874 = vadd.f32 %v4598, %v4873
        %v4875 = vpop.f32.mrb[0].mxu0
        %v4876 = vadd.f32 %v4602, %v4875
        %4877 = vdwg.mxu0
        %v4878 = vadd.f32 %v4800, %v4511
        %v4879 = vadd.f32 %v4802, %v4512
        %v4880 = vadd.f32 %v4804, %v4513
        %v4881 = vadd.f32 %v4806, %v4514
        %v4882 = vadd.f32 %v4810, %v4515
        %v4883 = vadd.f32 %v4812, %v4516
        %v4884 = vadd.f32 %v4814, %v4517
        %v4885 = vadd.f32 %v4816, %v4518
        %v4886 = vadd.f32 %v4820, %v4519
        %v4887 = vadd.f32 %v4822, %v4520
        %v4888 = vadd.f32 %v4824, %v4521
        %v4889 = vadd.f32 %v4826, %v4522
        %v4890 = vadd.f32 %v4830, %v4523
        %v4891 = vadd.f32 %v4832, %v4524
        %v4892 = vadd.f32 %v4834, %v4525
        %v4893 = vadd.f32 %v4836, %v4526
        %v4894 = vadd.f32 %v4840, %v4527
        %v4895 = vadd.f32 %v4842, %v4528
        %v4896 = vadd.f32 %v4844, %v4529
        %v4897 = vadd.f32 %v4846, %v4530
        %v4898 = vadd.f32 %v4850, %v4531
        %v4899 = vadd.f32 %v4852, %v4532
        %v4900 = vadd.f32 %v4854, %v4533
        %v4901 = vadd.f32 %v4856, %v4534
        %v4902 = vadd.f32 %v4860, %v4535
        %v4903 = vadd.f32 %v4862, %v4536
        %v4904 = vadd.f32 %v4864, %v4537
        %v4905 = vadd.f32 %v4866, %v4538
        %v4906 = vadd.f32 %v4870, %v4539
        %v4907 = vadd.f32 %v4872, %v4540
        %v4908 = vadd.f32 %v4874, %v4541
        %v4909 = vadd.f32 %v4876, %v4542
        %v4910 = vmul.f32 %v4878, 0.5
        %v4911 = vmul.f32 %v4879, 0.5
        %v4912 = vmul.f32 %v4880, 0.5
        %v4913 = vmul.f32 %v4881, 0.5
        %v4914 = vmul.f32 %v4882, 0.5
        %v4915 = vmul.f32 %v4883, 0.5
        %v4916 = vmul.f32 %v4884, 0.5
        %v4917 = vmul.f32 %v4885, 0.5
        %v4918 = vmul.f32 %v4886, 0.5
        %v4919 = vmul.f32 %v4887, 0.5
        %v4920 = vmul.f32 %v4888, 0.5
        %v4921 = vmul.f32 %v4889, 0.5
        %v4922 = vmul.f32 %v4890, 0.5
        %v4923 = vmul.f32 %v4891, 0.5
        %v4924 = vmul.f32 %v4892, 0.5
        %v4925 = vmul.f32 %v4893, 0.5
        %v4926 = vmul.f32 %v4894, 0.5
        %v4927 = vmul.f32 %v4895, 0.5
        %v4928 = vmul.f32 %v4896, 0.5
        %v4929 = vmul.f32 %v4897, 0.5
        %v4930 = vmul.f32 %v4898, 0.5
        %v4931 = vmul.f32 %v4899, 0.5
        %v4932 = vmul.f32 %v4900, 0.5
        %v4933 = vmul.f32 %v4901, 0.5
        %v4934 = vmul.f32 %v4902, 0.5
        %v4935 = vmul.f32 %v4903, 0.5
        %v4936 = vmul.f32 %v4904, 0.5
        %v4937 = vmul.f32 %v4905, 0.5
        %v4938 = vmul.f32 %v4906, 0.5
        %v4939 = vmul.f32 %v4907, 0.5
        %v4940 = vmul.f32 %v4908, 0.5
        %v4941 = vmul.f32 %v4909, 0.5
        %v4942 = vtanh.pop %v4910
        %v4943 = vtanh.pop %v4911
        %v4944 = vtanh.pop %v4912
        %v4945 = vtanh.pop %v4913
        %v4946 = vtanh.pop %v4914
        %v4947 = vtanh.pop %v4915
        %v4948 = vtanh.pop %v4916
        %v4949 = vtanh.pop %v4917
        %v4950 = vtanh.pop %v4918
        %v4951 = vtanh.pop %v4919
        %v4952 = vtanh.pop %v4920
        %v4953 = vtanh.pop %v4921
        %v4954 = vtanh.pop %v4922
        %v4955 = vtanh.pop %v4923
        %v4956 = vtanh.pop %v4924
        %v4957 = vtanh.pop %v4925
        %v4958 = vtanh.pop %v4926
        %v4959 = vtanh.pop %v4927
        %v4960 = vtanh.pop %v4928
        %v4961 = vtanh.pop %v4929
        %v4962 = vtanh.pop %v4930
        %v4963 = vtanh.pop %v4931
        %v4964 = vtanh.pop %v4932
        %v4965 = vtanh.pop %v4933
        %v4966 = vtanh.pop %v4934
        %v4967 = vtanh.pop %v4935
        %v4968 = vtanh.pop %v4936
        %v4969 = vtanh.pop %v4937
        %v4970 = vtanh.pop %v4938
        %v4971 = vtanh.pop %v4939
        %v4972 = vtanh.pop %v4940
        %v4973 = vtanh.pop %v4941
        %v4974 = vmul.f32 %v4942, 0.5
        %v4975 = vmul.f32 %v4943, 0.5
        %v4976 = vmul.f32 %v4944, 0.5
        %v4977 = vmul.f32 %v4945, 0.5
        %v4978 = vmul.f32 %v4946, 0.5
        %v4979 = vmul.f32 %v4947, 0.5
        %v4980 = vmul.f32 %v4948, 0.5
        %v4981 = vmul.f32 %v4949, 0.5
        %v4982 = vmul.f32 %v4950, 0.5
        %v4983 = vmul.f32 %v4951, 0.5
        %v4984 = vmul.f32 %v4952, 0.5
        %v4985 = vmul.f32 %v4953, 0.5
        %v4986 = vmul.f32 %v4954, 0.5
        %v4987 = vmul.f32 %v4955, 0.5
        %v4988 = vmul.f32 %v4956, 0.5
        %v4989 = vmul.f32 %v4957, 0.5
        %v4990 = vmul.f32 %v4958, 0.5
        %v4991 = vmul.f32 %v4959, 0.5
        %v4992 = vmul.f32 %v4960, 0.5
        %v4993 = vmul.f32 %v4961, 0.5
        %v4994 = vmul.f32 %v4962, 0.5
        %v4995 = vmul.f32 %v4963, 0.5
        %v4996 = vmul.f32 %v4964, 0.5
        %v4997 = vmul.f32 %v4965, 0.5
        %v4998 = vmul.f32 %v4966, 0.5
        %v4999 = vmul.f32 %v4967, 0.5
        %v5000 = vmul.f32 %v4968, 0.5
        %v5001 = vmul.f32 %v4969, 0.5
        %v5002 = vmul.f32 %v4970, 0.5
        %v5003 = vmul.f32 %v4971, 0.5
        %v5004 = vmul.f32 %v4972, 0.5
        %v5005 = vmul.f32 %v4973, 0.5
        %v5006 = vadd.f32 %v4974, 0.5
        %v5007 = vadd.f32 %v4975, 0.5
        %v5008 = vadd.f32 %v4976, 0.5
        %v5009 = vadd.f32 %v4977, 0.5
        %v5010 = vadd.f32 %v4978, 0.5
        %v5011 = vadd.f32 %v4979, 0.5
        %v5012 = vadd.f32 %v4980, 0.5
        %v5013 = vadd.f32 %v4981, 0.5
        %v5014 = vadd.f32 %v4982, 0.5
        %v5015 = vadd.f32 %v4983, 0.5
        %v5016 = vadd.f32 %v4984, 0.5
        %v5017 = vadd.f32 %v4985, 0.5
        %v5018 = vadd.f32 %v4986, 0.5
        %v5019 = vadd.f32 %v4987, 0.5
        %v5020 = vadd.f32 %v4988, 0.5
        %v5021 = vadd.f32 %v4989, 0.5
        %v5022 = vadd.f32 %v4990, 0.5
        %v5023 = vadd.f32 %v4991, 0.5
        %v5024 = vadd.f32 %v4992, 0.5
        %v5025 = vadd.f32 %v4993, 0.5
        %v5026 = vadd.f32 %v4994, 0.5
        %v5027 = vadd.f32 %v4995, 0.5
        %v5028 = vadd.f32 %v4996, 0.5
        %v5029 = vadd.f32 %v4997, 0.5
        %v5030 = vadd.f32 %v4998, 0.5
        %v5031 = vadd.f32 %v4999, 0.5
        %v5032 = vadd.f32 %v5000, 0.5
        %v5033 = vadd.f32 %v5001, 0.5
        %v5034 = vadd.f32 %v5002, 0.5
        %v5035 = vadd.f32 %v5003, 0.5
        %v5036 = vadd.f32 %v5004, 0.5
        %v5037 = vadd.f32 %v5005, 0.5
        %v5038 = vmul.f32 %v4878, %v5006
        %v5039 = vmul.f32 %v4879, %v5007
        %v5040 = vmul.f32 %v4880, %v5008
        %v5041 = vmul.f32 %v4881, %v5009
        %v5042 = vmul.f32 %v4882, %v5010
        %v5043 = vmul.f32 %v4883, %v5011
        %v5044 = vmul.f32 %v4884, %v5012
        %v5045 = vmul.f32 %v4885, %v5013
        %v5046 = vmul.f32 %v4886, %v5014
        %v5047 = vmul.f32 %v4887, %v5015
        %v5048 = vmul.f32 %v4888, %v5016
        %v5049 = vmul.f32 %v4889, %v5017
        %v5050 = vmul.f32 %v4890, %v5018
        %v5051 = vmul.f32 %v4891, %v5019
        %v5052 = vmul.f32 %v4892, %v5020
        %v5053 = vmul.f32 %v4893, %v5021
        %v5054 = vmul.f32 %v4894, %v5022
        %v5055 = vmul.f32 %v4895, %v5023
        %v5056 = vmul.f32 %v4896, %v5024
        %v5057 = vmul.f32 %v4897, %v5025
        %v5058 = vmul.f32 %v4898, %v5026
        %v5059 = vmul.f32 %v4899, %v5027
        %v5060 = vmul.f32 %v4900, %v5028
        %v5061 = vmul.f32 %v4901, %v5029
        %v5062 = vmul.f32 %v4902, %v5030
        %v5063 = vmul.f32 %v4903, %v5031
        %v5064 = vmul.f32 %v4904, %v5032
        %v5065 = vmul.f32 %v4905, %v5033
        %v5066 = vmul.f32 %v4906, %v5034
        %v5067 = vmul.f32 %v4907, %v5035
        %v5068 = vmul.f32 %v4908, %v5036
        %v5069 = vmul.f32 %v4909, %v5037
        %5070 = vadd.xlane.f32.xlu0 %v5038
        %v5071 = vpop.xlane.xlu0 %5070
        %5072 = vadd.xlane.f32.xlu0 %v5040
        %v5073 = vpop.xlane.xlu0 %5072
        %5074 = vadd.xlane.f32.xlu0 %v5042
        %v5075 = vpop.xlane.xlu0 %5074
        %5076 = vadd.xlane.f32.xlu0 %v5044
        %v5077 = vpop.xlane.xlu0 %5076
        %5078 = vadd.xlane.f32.xlu0 %v5046
        %v5079 = vpop.xlane.xlu0 %5078
        %5080 = vadd.xlane.f32.xlu0 %v5048
        %v5081 = vpop.xlane.xlu0 %5080
        %5082 = vadd.xlane.f32.xlu0 %v5050
        %v5083 = vpop.xlane.xlu0 %5082
        %5084 = vadd.xlane.f32.xlu0 %v5052
        %v5085 = vpop.xlane.xlu0 %5084
        %5086 = vadd.xlane.f32.xlu0 %v5054
        %v5087 = vpop.xlane.xlu0 %5086
        %5088 = vadd.xlane.f32.xlu0 %v5056
        %v5089 = vpop.xlane.xlu0 %5088
        %5090 = vadd.xlane.f32.xlu0 %v5058
        %v5091 = vpop.xlane.xlu0 %5090
        %5092 = vadd.xlane.f32.xlu0 %v5060
        %v5093 = vpop.xlane.xlu0 %5092
        %5094 = vadd.xlane.f32.xlu0 %v5062
        %v5095 = vpop.xlane.xlu0 %5094
        %5096 = vadd.xlane.f32.xlu0 %v5064
        %v5097 = vpop.xlane.xlu0 %5096
        %5098 = vadd.xlane.f32.xlu0 %v5066
        %v5099 = vpop.xlane.xlu0 %5098
        %5100 = vadd.xlane.f32.xlu0 %v5068
        %v5101 = vpop.xlane.xlu0 %5100
        %v5102 = vmul.f32 %v5071, %v1131
        %v5103 = vmul.f32 %v5073, %v1131
        %v5104 = vmul.f32 %v5075, %v1131
        %v5105 = vmul.f32 %v5077, %v1131
        %v5106 = vmul.f32 %v5079, %v1131
        %v5107 = vmul.f32 %v5081, %v1131
        %v5108 = vmul.f32 %v5083, %v1131
        %v5109 = vmul.f32 %v5085, %v1131
        %v5110 = vmul.f32 %v5087, %v1131
        %v5111 = vmul.f32 %v5089, %v1131
        %v5112 = vmul.f32 %v5091, %v1131
        %v5113 = vmul.f32 %v5093, %v1131
        %v5114 = vmul.f32 %v5095, %v1131
        %v5115 = vmul.f32 %v5097, %v1131
        %v5116 = vmul.f32 %v5099, %v1131
        %v5117 = vmul.f32 %v5101, %v1131
        %v5118 = vsub.f32 %v5038, %v5102
        %v5119 = vsub.f32 %v5040, %v5103
        %v5120 = vsub.f32 %v5042, %v5104
        %v5121 = vsub.f32 %v5044, %v5105
        %v5122 = vsub.f32 %v5046, %v5106
        %v5123 = vsub.f32 %v5048, %v5107
        %v5124 = vsub.f32 %v5050, %v5108
        %v5125 = vsub.f32 %v5052, %v5109
        %v5126 = vsub.f32 %v5054, %v5110
        %v5127 = vsub.f32 %v5056, %v5111
        %v5128 = vsub.f32 %v5058, %v5112
        %v5129 = vsub.f32 %v5060, %v5113
        %v5130 = vsub.f32 %v5062, %v5114
        %v5131 = vsub.f32 %v5064, %v5115
        %v5132 = vsub.f32 %v5066, %v5116
        %v5133 = vsub.f32 %v5068, %v5117
        %v5134 = vmul.f32 %v5118, %v5118
        %v5135 = vmul.f32 %v5119, %v5119
        %v5136 = vmul.f32 %v5120, %v5120
        %v5137 = vmul.f32 %v5121, %v5121
        %v5138 = vmul.f32 %v5122, %v5122
        %v5139 = vmul.f32 %v5123, %v5123
        %v5140 = vmul.f32 %v5124, %v5124
        %v5141 = vmul.f32 %v5125, %v5125
        %v5142 = vmul.f32 %v5126, %v5126
        %v5143 = vmul.f32 %v5127, %v5127
        %v5144 = vmul.f32 %v5128, %v5128
        %v5145 = vmul.f32 %v5129, %v5129
        %v5146 = vmul.f32 %v5130, %v5130
        %v5147 = vmul.f32 %v5131, %v5131
        %v5148 = vmul.f32 %v5132, %v5132
        %v5149 = vmul.f32 %v5133, %v5133
        %5150 = vadd.xlane.f32.xlu0 %v5134
        %v5151 = vpop.xlane.xlu0 %5150
        %5152 = vadd.xlane.f32.xlu0 %v5135
        %v5153 = vpop.xlane.xlu0 %5152
        %5154 = vadd.xlane.f32.xlu0 %v5136
        %v5155 = vpop.xlane.xlu0 %5154
        %5156 = vadd.xlane.f32.xlu0 %v5137
        %v5157 = vpop.xlane.xlu0 %5156
        %5158 = vadd.xlane.f32.xlu0 %v5138
        %v5159 = vpop.xlane.xlu0 %5158
        %5160 = vadd.xlane.f32.xlu0 %v5139
        %v5161 = vpop.xlane.xlu0 %5160
        %5162 = vadd.xlane.f32.xlu0 %v5140
        %v5163 = vpop.xlane.xlu0 %5162
        %5164 = vadd.xlane.f32.xlu0 %v5141
        %v5165 = vpop.xlane.xlu0 %5164
        %5166 = vadd.xlane.f32.xlu0 %v5142
        %v5167 = vpop.xlane.xlu0 %5166
        %5168 = vadd.xlane.f32.xlu0 %v5143
        %v5169 = vpop.xlane.xlu0 %5168
        %5170 = vadd.xlane.f32.xlu0 %v5144
        %v5171 = vpop.xlane.xlu0 %5170
        %5172 = vadd.xlane.f32.xlu0 %v5145
        %v5173 = vpop.xlane.xlu0 %5172
        %5174 = vadd.xlane.f32.xlu0 %v5146
        %v5175 = vpop.xlane.xlu0 %5174
        %5176 = vadd.xlane.f32.xlu0 %v5147
        %v5177 = vpop.xlane.xlu0 %5176
        %5178 = vadd.xlane.f32.xlu0 %v5148
        %v5179 = vpop.xlane.xlu0 %5178
        %5180 = vadd.xlane.f32.xlu0 %v5149
        %v5181 = vpop.xlane.xlu0 %5180
        %v5182 = vmul.f32 %v5151, %v1131
        %v5183 = vmul.f32 %v5153, %v1131
        %v5184 = vmul.f32 %v5155, %v1131
        %v5185 = vmul.f32 %v5157, %v1131
        %v5186 = vmul.f32 %v5159, %v1131
        %v5187 = vmul.f32 %v5161, %v1131
        %v5188 = vmul.f32 %v5163, %v1131
        %v5189 = vmul.f32 %v5165, %v1131
        %v5190 = vmul.f32 %v5167, %v1131
        %v5191 = vmul.f32 %v5169, %v1131
        %v5192 = vmul.f32 %v5171, %v1131
        %v5193 = vmul.f32 %v5173, %v1131
        %v5194 = vmul.f32 %v5175, %v1131
        %v5195 = vmul.f32 %v5177, %v1131
        %v5196 = vmul.f32 %v5179, %v1131
        %v5197 = vmul.f32 %v5181, %v1131
        %v5198 = vadd.f32 %v5182, 0.1
        %v5199 = vadd.f32 %v5183, 0.1
        %v5200 = vadd.f32 %v5184, 0.1
        %v5201 = vadd.f32 %v5185, 0.1
        %v5202 = vadd.f32 %v5186, 0.1
        %v5203 = vadd.f32 %v5187, 0.1
        %v5204 = vadd.f32 %v5188, 0.1
        %v5205 = vadd.f32 %v5189, 0.1
        %v5206 = vadd.f32 %v5190, 0.1
        %v5207 = vadd.f32 %v5191, 0.1
        %v5208 = vadd.f32 %v5192, 0.1
        %v5209 = vadd.f32 %v5193, 0.1
        %v5210 = vadd.f32 %v5194, 0.1
        %v5211 = vadd.f32 %v5195, 0.1
        %v5212 = vadd.f32 %v5196, 0.1
        %v5213 = vadd.f32 %v5197, 0.1
        %v5214 = vrsqrt.pop %v5198
        %v5215 = vrsqrt.pop %v5199
        %v5216 = vrsqrt.pop %v5200
        %v5217 = vrsqrt.pop %v5201
        %v5218 = vrsqrt.pop %v5202
        %v5219 = vrsqrt.pop %v5203
        %v5220 = vrsqrt.pop %v5204
        %v5221 = vrsqrt.pop %v5205
        %v5222 = vrsqrt.pop %v5206
        %v5223 = vrsqrt.pop %v5207
        %v5224 = vrsqrt.pop %v5208
        %v5225 = vrsqrt.pop %v5209
        %v5226 = vrsqrt.pop %v5210
        %v5227 = vrsqrt.pop %v5211
        %v5228 = vrsqrt.pop %v5212
        %v5229 = vrsqrt.pop %v5213
        %v5230 = vmul.f32 %v5118, %v5214
        %v5231 = vmul.f32 %v5119, %v5215
        %v5232 = vmul.f32 %v5120, %v5216
        %v5233 = vmul.f32 %v5121, %v5217
        %v5234 = vmul.f32 %v5122, %v5218
        %v5235 = vmul.f32 %v5123, %v5219
        %v5236 = vmul.f32 %v5124, %v5220
        %v5237 = vmul.f32 %v5125, %v5221
        %v5238 = vmul.f32 %v5126, %v5222
        %v5239 = vmul.f32 %v5127, %v5223
        %v5240 = vmul.f32 %v5128, %v5224
        %v5241 = vmul.f32 %v5129, %v5225
        %v5242 = vmul.f32 %v5130, %v5226
        %v5243 = vmul.f32 %v5131, %v5227
        %v5244 = vmul.f32 %v5132, %v5228
        %v5245 = vmul.f32 %v5133, %v5229
        %5246 = vadd.xlane.f32.xlu0 %v5039
        %v5247 = vpop.xlane.xlu0 %5246
        %5248 = vadd.xlane.f32.xlu0 %v5041
        %v5249 = vpop.xlane.xlu0 %5248
        %5250 = vadd.xlane.f32.xlu0 %v5043
        %v5251 = vpop.xlane.xlu0 %5250
        %5252 = vadd.xlane.f32.xlu0 %v5045
        %v5253 = vpop.xlane.xlu0 %5252
        %5254 = vadd.xlane.f32.xlu0 %v5047
        %v5255 = vpop.xlane.xlu0 %5254
        %5256 = vadd.xlane.f32.xlu0 %v5049
        %v5257 = vpop.xlane.xlu0 %5256
        %5258 = vadd.xlane.f32.xlu0 %v5051
        %v5259 = vpop.xlane.xlu0 %5258
        %5260 = vadd.xlane.f32.xlu0 %v5053
        %v5261 = vpop.xlane.xlu0 %5260
        %5262 = vadd.xlane.f32.xlu0 %v5055
        %v5263 = vpop.xlane.xlu0 %5262
        %5264 = vadd.xlane.f32.xlu0 %v5057
        %v5265 = vpop.xlane.xlu0 %5264
        %5266 = vadd.xlane.f32.xlu0 %v5059
        %v5267 = vpop.xlane.xlu0 %5266
        %5268 = vadd.xlane.f32.xlu0 %v5061
        %v5269 = vpop.xlane.xlu0 %5268
        %5270 = vadd.xlane.f32.xlu0 %v5063
        %v5271 = vpop.xlane.xlu0 %5270
        %5272 = vadd.xlane.f32.xlu0 %v5065
        %v5273 = vpop.xlane.xlu0 %5272
        %5274 = vadd.xlane.f32.xlu0 %v5067
        %v5275 = vpop.xlane.xlu0 %5274
        %5276 = vadd.xlane.f32.xlu0 %v5069
        %v5277 = vpop.xlane.xlu0 %5276
        %v5278 = vmul.f32 %v5247, %v1131
        %v5279 = vmul.f32 %v5249, %v1131
        %v5280 = vmul.f32 %v5251, %v1131
        %v5281 = vmul.f32 %v5253, %v1131
        %v5282 = vmul.f32 %v5255, %v1131
        %v5283 = vmul.f32 %v5257, %v1131
        %v5284 = vmul.f32 %v5259, %v1131
        %v5285 = vmul.f32 %v5261, %v1131
        %v5286 = vmul.f32 %v5263, %v1131
        %v5287 = vmul.f32 %v5265, %v1131
        %v5288 = vmul.f32 %v5267, %v1131
        %v5289 = vmul.f32 %v5269, %v1131
        %v5290 = vmul.f32 %v5271, %v1131
        %v5291 = vmul.f32 %v5273, %v1131
        %v5292 = vmul.f32 %v5275, %v1131
        %v5293 = vmul.f32 %v5277, %v1131
        %v5294 = vsub.f32 %v5039, %v5278
        %v5295 = vsub.f32 %v5041, %v5279
        %v5296 = vsub.f32 %v5043, %v5280
        %v5297 = vsub.f32 %v5045, %v5281
        %v5298 = vsub.f32 %v5047, %v5282
        %v5299 = vsub.f32 %v5049, %v5283
        %v5300 = vsub.f32 %v5051, %v5284
        %v5301 = vsub.f32 %v5053, %v5285
        %v5302 = vsub.f32 %v5055, %v5286
        %v5303 = vsub.f32 %v5057, %v5287
        %v5304 = vsub.f32 %v5059, %v5288
        %v5305 = vsub.f32 %v5061, %v5289
        %v5306 = vsub.f32 %v5063, %v5290
        %v5307 = vsub.f32 %v5065, %v5291
        %v5308 = vsub.f32 %v5067, %v5292
        %v5309 = vsub.f32 %v5069, %v5293
        %v5310 = vmul.f32 %v5294, %v5294
        %v5311 = vmul.f32 %v5295, %v5295
        %v5312 = vmul.f32 %v5296, %v5296
        %v5313 = vmul.f32 %v5297, %v5297
        %v5314 = vmul.f32 %v5298, %v5298
        %v5315 = vmul.f32 %v5299, %v5299
        %v5316 = vmul.f32 %v5300, %v5300
        %v5317 = vmul.f32 %v5301, %v5301
        %v5318 = vmul.f32 %v5302, %v5302
        %v5319 = vmul.f32 %v5303, %v5303
        %v5320 = vmul.f32 %v5304, %v5304
        %v5321 = vmul.f32 %v5305, %v5305
        %v5322 = vmul.f32 %v5306, %v5306
        %v5323 = vmul.f32 %v5307, %v5307
        %v5324 = vmul.f32 %v5308, %v5308
        %v5325 = vmul.f32 %v5309, %v5309
        %5326 = vadd.xlane.f32.xlu0 %v5310
        %v5327 = vpop.xlane.xlu0 %5326
        %5328 = vadd.xlane.f32.xlu0 %v5311
        %v5329 = vpop.xlane.xlu0 %5328
        %5330 = vadd.xlane.f32.xlu0 %v5312
        %v5331 = vpop.xlane.xlu0 %5330
        %5332 = vadd.xlane.f32.xlu0 %v5313
        %v5333 = vpop.xlane.xlu0 %5332
        %5334 = vadd.xlane.f32.xlu0 %v5314
        %v5335 = vpop.xlane.xlu0 %5334
        %5336 = vadd.xlane.f32.xlu0 %v5315
        %v5337 = vpop.xlane.xlu0 %5336
        %5338 = vadd.xlane.f32.xlu0 %v5316
        %v5339 = vpop.xlane.xlu0 %5338
        %5340 = vadd.xlane.f32.xlu0 %v5317
        %v5341 = vpop.xlane.xlu0 %5340
        %5342 = vadd.xlane.f32.xlu0 %v5318
        %v5343 = vpop.xlane.xlu0 %5342
        %5344 = vadd.xlane.f32.xlu0 %v5319
        %v5345 = vpop.xlane.xlu0 %5344
        %5346 = vadd.xlane.f32.xlu0 %v5320
        %v5347 = vpop.xlane.xlu0 %5346
        %5348 = vadd.xlane.f32.xlu0 %v5321
        %v5349 = vpop.xlane.xlu0 %5348
        %5350 = vadd.xlane.f32.xlu0 %v5322
        %v5351 = vpop.xlane.xlu0 %5350
        %5352 = vadd.xlane.f32.xlu0 %v5323
        %v5353 = vpop.xlane.xlu0 %5352
        %5354 = vadd.xlane.f32.xlu0 %v5324
        %v5355 = vpop.xlane.xlu0 %5354
        %5356 = vadd.xlane.f32.xlu0 %v5325
        %v5357 = vpop.xlane.xlu0 %5356
        %v5358 = vmul.f32 %v5327, %v1131
        %v5359 = vmul.f32 %v5329, %v1131
        %v5360 = vmul.f32 %v5331, %v1131
        %v5361 = vmul.f32 %v5333, %v1131
        %v5362 = vmul.f32 %v5335, %v1131
        %v5363 = vmul.f32 %v5337, %v1131
        %v5364 = vmul.f32 %v5339, %v1131
        %v5365 = vmul.f32 %v5341, %v1131
        %v5366 = vmul.f32 %v5343, %v1131
        %v5367 = vmul.f32 %v5345, %v1131
        %v5368 = vmul.f32 %v5347, %v1131
        %v5369 = vmul.f32 %v5349, %v1131
        %v5370 = vmul.f32 %v5351, %v1131
        %v5371 = vmul.f32 %v5353, %v1131
        %v5372 = vmul.f32 %v5355, %v1131
        %v5373 = vmul.f32 %v5357, %v1131
        %v5374 = vadd.f32 %v5358, 0.1
        %v5375 = vadd.f32 %v5359, 0.1
        %v5376 = vadd.f32 %v5360, 0.1
        %v5377 = vadd.f32 %v5361, 0.1
        %v5378 = vadd.f32 %v5362, 0.1
        %v5379 = vadd.f32 %v5363, 0.1
        %v5380 = vadd.f32 %v5364, 0.1
        %v5381 = vadd.f32 %v5365, 0.1
        %v5382 = vadd.f32 %v5366, 0.1
        %v5383 = vadd.f32 %v5367, 0.1
        %v5384 = vadd.f32 %v5368, 0.1
        %v5385 = vadd.f32 %v5369, 0.1
        %v5386 = vadd.f32 %v5370, 0.1
        %v5387 = vadd.f32 %v5371, 0.1
        %v5388 = vadd.f32 %v5372, 0.1
        %v5389 = vadd.f32 %v5373, 0.1
        %v5390 = vrsqrt.pop %v5374
        %v5391 = vrsqrt.pop %v5375
        %v5392 = vrsqrt.pop %v5376
        %v5393 = vrsqrt.pop %v5377
        %v5394 = vrsqrt.pop %v5378
        %v5395 = vrsqrt.pop %v5379
        %v5396 = vrsqrt.pop %v5380
        %v5397 = vrsqrt.pop %v5381
        %v5398 = vrsqrt.pop %v5382
        %v5399 = vrsqrt.pop %v5383
        %v5400 = vrsqrt.pop %v5384
        %v5401 = vrsqrt.pop %v5385
        %v5402 = vrsqrt.pop %v5386
        %v5403 = vrsqrt.pop %v5387
        %v5404 = vrsqrt.pop %v5388
        %v5405 = vrsqrt.pop %v5389
        %v5406 = vmul.f32 %v5294, %v5390
        %v5407 = vmul.f32 %v5295, %v5391
        %v5408 = vmul.f32 %v5296, %v5392
        %v5409 = vmul.f32 %v5297, %v5393
        %v5410 = vmul.f32 %v5298, %v5394
        %v5411 = vmul.f32 %v5299, %v5395
        %v5412 = vmul.f32 %v5300, %v5396
        %v5413 = vmul.f32 %v5301, %v5397
        %v5414 = vmul.f32 %v5302, %v5398
        %v5415 = vmul.f32 %v5303, %v5399
        %v5416 = vmul.f32 %v5304, %v5400
        %v5417 = vmul.f32 %v5305, %v5401
        %v5418 = vmul.f32 %v5306, %v5402
        %v5419 = vmul.f32 %v5307, %v5403
        %v5420 = vmul.f32 %v5308, %v5404
        %v5421 = vmul.f32 %v5309, %v5405
        %s5422 = scalar_lea.vmem %s3, 8
        %v5423 = vld [vmem:[%s5422] sm:$0x3]
        %v5425 = vlaneseq
        %v5426 = vshrl.u32 %v5425, 7
        %v5427 = vsub.s32 0, %v5426
        %v5428 = vrot.slane %v5423, %v5427
        %v5429 = vlaneseq
        %v5430 = vshrl.u32 %v5429, 7
        %v5431 = vsub.s32 1, %v5430
        %v5432 = vrot.slane %v5423, %v5431
        %v5435 = vmul.f32 %v5230, %v5428
        %v5436 = vmul.f32 %v5406, %v5432
        %v5437 = vmul.f32 %v5231, %v5428
        %v5438 = vmul.f32 %v5407, %v5432
        %v5439 = vmul.f32 %v5232, %v5428
        %v5440 = vmul.f32 %v5408, %v5432
        %v5441 = vmul.f32 %v5233, %v5428
        %v5442 = vmul.f32 %v5409, %v5432
        %v5443 = vmul.f32 %v5234, %v5428
        %v5444 = vmul.f32 %v5410, %v5432
        %v5445 = vmul.f32 %v5235, %v5428
        %v5446 = vmul.f32 %v5411, %v5432
        %v5447 = vmul.f32 %v5236, %v5428
        %v5448 = vmul.f32 %v5412, %v5432
        %v5449 = vmul.f32 %v5237, %v5428
        %v5450 = vmul.f32 %v5413, %v5432
        %v5451 = vmul.f32 %v5238, %v5428
        %v5452 = vmul.f32 %v5414, %v5432
        %v5453 = vmul.f32 %v5239, %v5428
        %v5454 = vmul.f32 %v5415, %v5432
        %v5455 = vmul.f32 %v5240, %v5428
        %v5456 = vmul.f32 %v5416, %v5432
        %v5457 = vmul.f32 %v5241, %v5428
        %v5458 = vmul.f32 %v5417, %v5432
        %v5459 = vmul.f32 %v5242, %v5428
        %v5460 = vmul.f32 %v5418, %v5432
        %v5461 = vmul.f32 %v5243, %v5428
        %v5462 = vmul.f32 %v5419, %v5432
        %v5463 = vmul.f32 %v5244, %v5428
        %v5464 = vmul.f32 %v5420, %v5432
        %v5465 = vmul.f32 %v5245, %v5428
        %v5466 = vmul.f32 %v5421, %v5432
        %s5467 = scalar_lea.vmem [#allocation7], 8
        %v5468 = vld [vmem:[%s5467] sm:$0x3]
        %v5470 = vlaneseq
        %v5471 = vshrl.u32 %v5470, 7
        %v5472 = vsub.s32 0, %v5471
        %v5473 = vrot.slane %v5468, %v5472
        %v5474 = vlaneseq
        %v5475 = vshrl.u32 %v5474, 7
        %v5476 = vsub.s32 1, %v5475
        %v5477 = vrot.slane %v5468, %v5476
        %v5480 = vadd.f32 %v5435, %v5473
        %v5481 = vadd.f32 %v5436, %v5477
        %v5482 = vadd.f32 %v5437, %v5473
        %v5483 = vadd.f32 %v5438, %v5477
        %v5484 = vadd.f32 %v5439, %v5473
        %v5485 = vadd.f32 %v5440, %v5477
        %v5486 = vadd.f32 %v5441, %v5473
        %v5487 = vadd.f32 %v5442, %v5477
        %v5488 = vadd.f32 %v5443, %v5473
        %v5489 = vadd.f32 %v5444, %v5477
        %v5490 = vadd.f32 %v5445, %v5473
        %v5491 = vadd.f32 %v5446, %v5477
        %v5492 = vadd.f32 %v5447, %v5473
        %v5493 = vadd.f32 %v5448, %v5477
        %v5494 = vadd.f32 %v5449, %v5473
        %v5495 = vadd.f32 %v5450, %v5477
        %v5496 = vadd.f32 %v5451, %v5473
        %v5497 = vadd.f32 %v5452, %v5477
        %v5498 = vadd.f32 %v5453, %v5473
        %v5499 = vadd.f32 %v5454, %v5477
        %v5500 = vadd.f32 %v5455, %v5473
        %v5501 = vadd.f32 %v5456, %v5477
        %v5502 = vadd.f32 %v5457, %v5473
        %v5503 = vadd.f32 %v5458, %v5477
        %v5504 = vadd.f32 %v5459, %v5473
        %v5505 = vadd.f32 %v5460, %v5477
        %v5506 = vadd.f32 %v5461, %v5473
        %v5507 = vadd.f32 %v5462, %v5477
        %v5508 = vadd.f32 %v5463, %v5473
        %v5509 = vadd.f32 %v5464, %v5477
        %v5510 = vadd.f32 %v5465, %v5473
        %v5511 = vadd.f32 %v5466, %v5477
        %v5512 = vld [vmem:[#allocation9] sm:$0xff]
        %v5513 = vld [vmem:[#allocation9 + $0x8] sm:$0xff]
        %v5514 = vld [vmem:[#allocation9 + $0x10] sm:$0xff]
        %v5515 = vld [vmem:[#allocation9 + $0x18] sm:$0xff]
        %v5516 = vld [vmem:[#allocation9 + $0x20] sm:$0xff]
        %v5517 = vld [vmem:[#allocation9 + $0x28] sm:$0xff]
        %v5518 = vld [vmem:[#allocation9 + $0x30] sm:$0xff]
        %v5519 = vld [vmem:[#allocation9 + $0x38] sm:$0xff]
        %v5520 = vld [vmem:[#allocation9 + $0x40] sm:$0xff]
        %v5521 = vld [vmem:[#allocation9 + $0x48] sm:$0xff]
        %v5522 = vld [vmem:[#allocation9 + $0x50] sm:$0xff]
        %v5523 = vld [vmem:[#allocation9 + $0x58] sm:$0xff]
        %v5524 = vld [vmem:[#allocation9 + $0x60] sm:$0xff]
        %v5525 = vld [vmem:[#allocation9 + $0x68] sm:$0xff]
        %v5526 = vld [vmem:[#allocation9 + $0x70] sm:$0xff]
        %v5527 = vld [vmem:[#allocation9 + $0x78] sm:$0xff]
        %v5528 = vld [vmem:[#allocation9 + $0x80] sm:$0xff]
        %v5529 = vld [vmem:[#allocation9 + $0x88] sm:$0xff]
        %v5530 = vld [vmem:[#allocation9 + $0x90] sm:$0xff]
        %v5531 = vld [vmem:[#allocation9 + $0x98] sm:$0xff]
        %v5532 = vld [vmem:[#allocation9 + $0xa0] sm:$0xff]
        %v5533 = vld [vmem:[#allocation9 + $0xa8] sm:$0xff]
        %v5534 = vld [vmem:[#allocation9 + $0xb0] sm:$0xff]
        %v5535 = vld [vmem:[#allocation9 + $0xb8] sm:$0xff]
        %v5536 = vld [vmem:[#allocation9 + $0xc0] sm:$0xff]
        %v5537 = vld [vmem:[#allocation9 + $0xc8] sm:$0xff]
        %v5538 = vld [vmem:[#allocation9 + $0xd0] sm:$0xff]
        %v5539 = vld [vmem:[#allocation9 + $0xd8] sm:$0xff]
        %v5540 = vld [vmem:[#allocation9 + $0xe0] sm:$0xff]
        %v5541 = vld [vmem:[#allocation9 + $0xe8] sm:$0xff]
        %v5542 = vld [vmem:[#allocation9 + $0xf0] sm:$0xff]
        %v5543 = vld [vmem:[#allocation9 + $0xf8] sm:$0xff]
        %v5544 = vld [vmem:[%s6] sm:$0x3]
        %v5545 = vpack.c.bf16 %v5482, %v5480
        %v5546 = vpack.c.bf16 %v5483, %v5481
        %v5547 = vpack.c.bf16 %v5486, %v5484
        %v5548 = vpack.c.bf16 %v5487, %v5485
        %v5549 = vpack.c.bf16 %v5490, %v5488
        %v5550 = vpack.c.bf16 %v5491, %v5489
        %v5551 = vpack.c.bf16 %v5494, %v5492
        %v5552 = vpack.c.bf16 %v5495, %v5493
        %v5553 = vpack.c.bf16 %v5498, %v5496
        %v5554 = vpack.c.bf16 %v5499, %v5497
        %v5555 = vpack.c.bf16 %v5502, %v5500
        %v5556 = vpack.c.bf16 %v5503, %v5501
        %v5557 = vpack.c.bf16 %v5506, %v5504
        %v5558 = vpack.c.bf16 %v5507, %v5505
        %v5559 = vpack.c.bf16 %v5510, %v5508
        %v5560 = vpack.c.bf16 %v5511, %v5509
        %v5562 = vlaneseq
        %v5563 = vshrl.u32 %v5562, 7
        %v5564 = vsub.s32 0, %v5563
        %v5565 = vrot.slane %v5544, %v5564
        %v5566 = vlaneseq
        %v5567 = vshrl.u32 %v5566, 7
        %v5568 = vsub.s32 1, %v5567
        %v5569 = vrot.slane %v5544, %v5568
        %v5604 = vunpack.c.l.b16 %v5512
        %v5605 = vunpack.c.h.b16 %v5512
        %v5606 = vunpack.c.l.b16 %v5513
        %v5607 = vunpack.c.h.b16 %v5513
        %v5608 = vunpack.c.l.b16 %v5514
        %v5609 = vunpack.c.h.b16 %v5514
        %v5610 = vunpack.c.l.b16 %v5515
        %v5611 = vunpack.c.h.b16 %v5515
        %v5612 = vunpack.c.l.b16 %v5516
        %v5613 = vunpack.c.h.b16 %v5516
        %v5614 = vunpack.c.l.b16 %v5517
        %v5615 = vunpack.c.h.b16 %v5517
        %v5616 = vunpack.c.l.b16 %v5518
        %v5617 = vunpack.c.h.b16 %v5518
        %v5618 = vunpack.c.l.b16 %v5519
        %v5619 = vunpack.c.h.b16 %v5519
        %v5620 = vunpack.c.l.b16 %v5520
        %v5621 = vunpack.c.h.b16 %v5520
        %v5622 = vunpack.c.l.b16 %v5521
        %v5623 = vunpack.c.h.b16 %v5521
        %v5624 = vunpack.c.l.b16 %v5522
        %v5625 = vunpack.c.h.b16 %v5522
        %v5626 = vunpack.c.l.b16 %v5523
        %v5627 = vunpack.c.h.b16 %v5523
        %v5628 = vunpack.c.l.b16 %v5524
        %v5629 = vunpack.c.h.b16 %v5524
        %v5630 = vunpack.c.l.b16 %v5525
        %v5631 = vunpack.c.h.b16 %v5525
        %v5632 = vunpack.c.l.b16 %v5526
        %v5633 = vunpack.c.h.b16 %v5526
        %v5634 = vunpack.c.l.b16 %v5527
        %v5635 = vunpack.c.h.b16 %v5527
        %v5636 = vunpack.c.l.b16 %v5528
        %v5637 = vunpack.c.h.b16 %v5528
        %v5638 = vunpack.c.l.b16 %v5529
        %v5639 = vunpack.c.h.b16 %v5529
        %v5640 = vunpack.c.l.b16 %v5530
        %v5641 = vunpack.c.h.b16 %v5530
        %v5642 = vunpack.c.l.b16 %v5531
        %v5643 = vunpack.c.h.b16 %v5531
        %v5644 = vunpack.c.l.b16 %v5532
        %v5645 = vunpack.c.h.b16 %v5532
        %v5646 = vunpack.c.l.b16 %v5533
        %v5647 = vunpack.c.h.b16 %v5533
        %v5648 = vunpack.c.l.b16 %v5534
        %v5649 = vunpack.c.h.b16 %v5534
        %v5650 = vunpack.c.l.b16 %v5535
        %v5651 = vunpack.c.h.b16 %v5535
        %v5652 = vunpack.c.l.b16 %v5536
        %v5653 = vunpack.c.h.b16 %v5536
        %v5654 = vunpack.c.l.b16 %v5537
        %v5655 = vunpack.c.h.b16 %v5537
        %v5656 = vunpack.c.l.b16 %v5538
        %v5657 = vunpack.c.h.b16 %v5538
        %v5658 = vunpack.c.l.b16 %v5539
        %v5659 = vunpack.c.h.b16 %v5539
        %v5660 = vunpack.c.l.b16 %v5540
        %v5661 = vunpack.c.h.b16 %v5540
        %v5662 = vunpack.c.l.b16 %v5541
        %v5663 = vunpack.c.h.b16 %v5541
        %v5664 = vunpack.c.l.b16 %v5542
        %v5665 = vunpack.c.h.b16 %v5542
        %v5666 = vunpack.c.l.b16 %v5543
        %v5667 = vunpack.c.h.b16 %v5543
        %v5668 = vpack.c.b16 %v5606, %v5604
        %v5669 = vpack.c.b16 %v5607, %v5605
        %v5670 = vpack.c.b16 %v5610, %v5608
        %v5671 = vpack.c.b16 %v5611, %v5609
        %v5672 = vpack.c.b16 %v5614, %v5612
        %v5673 = vpack.c.b16 %v5615, %v5613
        %v5674 = vpack.c.b16 %v5618, %v5616
        %v5675 = vpack.c.b16 %v5619, %v5617
        %v5676 = vpack.c.b16 %v5622, %v5620
        %v5677 = vpack.c.b16 %v5623, %v5621
        %v5678 = vpack.c.b16 %v5626, %v5624
        %v5679 = vpack.c.b16 %v5627, %v5625
        %v5680 = vpack.c.b16 %v5630, %v5628
        %v5681 = vpack.c.b16 %v5631, %v5629
        %v5682 = vpack.c.b16 %v5634, %v5632
        %v5683 = vpack.c.b16 %v5635, %v5633
        %v5684 = vpack.c.b16 %v5638, %v5636
        %v5685 = vpack.c.b16 %v5639, %v5637
        %v5686 = vpack.c.b16 %v5642, %v5640
        %v5687 = vpack.c.b16 %v5643, %v5641
        %v5688 = vpack.c.b16 %v5646, %v5644
        %v5689 = vpack.c.b16 %v5647, %v5645
        %v5690 = vpack.c.b16 %v5650, %v5648
        %v5691 = vpack.c.b16 %v5651, %v5649
        %v5692 = vpack.c.b16 %v5654, %v5652
        %v5693 = vpack.c.b16 %v5655, %v5653
        %v5694 = vpack.c.b16 %v5658, %v5656
        %v5695 = vpack.c.b16 %v5659, %v5657
        %v5696 = vpack.c.b16 %v5662, %v5660
        %v5697 = vpack.c.b16 %v5663, %v5661
        %v5698 = vpack.c.b16 %v5666, %v5664
        %v5699 = vpack.c.b16 %v5667, %v5665
        %5732 = vmatprep.subr.bf16.mxu0 %v5669
        %5733 = vmatpush1.bf16.msra.mxu0 %v5668
        %5734 = vmatprep.subr.bf16.mxu0 %v5671
        %5735 = vmatpush1.bf16.msra.mxu0 %v5670
        %5736 = vmatprep.subr.bf16.mxu0 %v5673
        %5737 = vmatpush1.bf16.msra.mxu0 %v5672
        %5738 = vmatprep.subr.bf16.mxu0 %v5675
        %5739 = vmatpush1.bf16.msra.mxu0 %v5674
        %5740 = vmatprep.subr.bf16.mxu0 %v5677
        %5741 = vmatpush1.bf16.msra.mxu0 %v5676
        %5742 = vmatprep.subr.bf16.mxu0 %v5679
        %5743 = vmatpush1.bf16.msra.mxu0 %v5678
        %5744 = vmatprep.subr.bf16.mxu0 %v5681
        %5745 = vmatpush1.bf16.msra.mxu0 %v5680
        %5746 = vmatprep.subr.bf16.mxu0 %v5683
        %5747 = vmatpush1.bf16.msra.mxu0 %v5682
        %5748 = vmatprep.subr.bf16.mxu0 %v5685
        %5749 = vmatpush1.bf16.msra.mxu0 %v5684
        %5750 = vmatprep.subr.bf16.mxu0 %v5687
        %5751 = vmatpush1.bf16.msra.mxu0 %v5686
        %5752 = vmatprep.subr.bf16.mxu0 %v5689
        %5753 = vmatpush1.bf16.msra.mxu0 %v5688
        %5754 = vmatprep.subr.bf16.mxu0 %v5691
        %5755 = vmatpush1.bf16.msra.mxu0 %v5690
        %5756 = vmatprep.subr.bf16.mxu0 %v5693
        %5757 = vmatpush1.bf16.msra.mxu0 %v5692
        %5758 = vmatprep.subr.bf16.mxu0 %v5695
        %5759 = vmatpush1.bf16.msra.mxu0 %v5694
        %5760 = vmatprep.subr.bf16.mxu0 %v5697
        %5761 = vmatpush1.bf16.msra.mxu0 %v5696
        %5762 = vmatprep.subr.bf16.mxu0 %v5699
        %5763 = vmatpush1.bf16.msra.mxu0 %v5698
        %5764 = vmatprep.mubr.bf16.mxu0 %v5546
        %5765 = vmatmul.mubr.bf16.gmra.mrb[0].mxu0 %v5545
        %v5766 = vpop.f32.mrb[0].mxu0
        %v5767 = vadd.f32 %v5565, %v5766
        %v5768 = vpop.f32.mrb[0].mxu0
        %v5769 = vadd.f32 %v5569, %v5768
        %v5770 = vpop.f32.mrb[0].mxu0
        %v5771 = vadd.f32 %v5565, %v5770
        %v5772 = vpop.f32.mrb[0].mxu0
        %v5773 = vadd.f32 %v5569, %v5772
        %5774 = vmatprep.mubr.bf16.mxu0 %v5548
        %5775 = vmatmul.mubr.bf16.gmra.mrb[0].mxu0 %v5547
        %v5776 = vpop.f32.mrb[0].mxu0
        %v5777 = vadd.f32 %v5565, %v5776
        %v5778 = vpop.f32.mrb[0].mxu0
        %v5779 = vadd.f32 %v5569, %v5778
        %v5780 = vpop.f32.mrb[0].mxu0
        %v5781 = vadd.f32 %v5565, %v5780
        %v5782 = vpop.f32.mrb[0].mxu0
        %v5783 = vadd.f32 %v5569, %v5782
        %5784 = vmatprep.mubr.bf16.mxu0 %v5550
        %5785 = vmatmul.mubr.bf16.gmra.mrb[0].mxu0 %v5549
        %v5786 = vpop.f32.mrb[0].mxu0
        %v5787 = vadd.f32 %v5565, %v5786
        %v5788 = vpop.f32.mrb[0].mxu0
        %v5789 = vadd.f32 %v5569, %v5788
        %v5790 = vpop.f32.mrb[0].mxu0
        %v5791 = vadd.f32 %v5565, %v5790
        %v5792 = vpop.f32.mrb[0].mxu0
        %v5793 = vadd.f32 %v5569, %v5792
        %5794 = vmatprep.mubr.bf16.mxu0 %v5552
        %5795 = vmatmul.mubr.bf16.gmra.mrb[0].mxu0 %v5551
        %v5796 = vpop.f32.mrb[0].mxu0
        %v5797 = vadd.f32 %v5565, %v5796
        %v5798 = vpop.f32.mrb[0].mxu0
        %v5799 = vadd.f32 %v5569, %v5798
        %v5800 = vpop.f32.mrb[0].mxu0
        %v5801 = vadd.f32 %v5565, %v5800
        %v5802 = vpop.f32.mrb[0].mxu0
        %v5803 = vadd.f32 %v5569, %v5802
        %5804 = vmatprep.mubr.bf16.mxu0 %v5554
        %5805 = vmatmul.mubr.bf16.gmra.mrb[0].mxu0 %v5553
        %v5806 = vpop.f32.mrb[0].mxu0
        %v5807 = vadd.f32 %v5565, %v5806
        %v5808 = vpop.f32.mrb[0].mxu0
        %v5809 = vadd.f32 %v5569, %v5808
        %v5810 = vpop.f32.mrb[0].mxu0
        %v5811 = vadd.f32 %v5565, %v5810
        %v5812 = vpop.f32.mrb[0].mxu0
        %v5813 = vadd.f32 %v5569, %v5812
        %5814 = vmatprep.mubr.bf16.mxu0 %v5556
        %5815 = vmatmul.mubr.bf16.gmra.mrb[0].mxu0 %v5555
        %v5816 = vpop.f32.mrb[0].mxu0
        %v5817 = vadd.f32 %v5565, %v5816
        %v5818 = vpop.f32.mrb[0].mxu0
        %v5819 = vadd.f32 %v5569, %v5818
        %v5820 = vpop.f32.mrb[0].mxu0
        %v5821 = vadd.f32 %v5565, %v5820
        %v5822 = vpop.f32.mrb[0].mxu0
        %v5823 = vadd.f32 %v5569, %v5822
        %5824 = vmatprep.mubr.bf16.mxu0 %v5558
        %5825 = vmatmul.mubr.bf16.gmra.mrb[0].mxu0 %v5557
        %v5826 = vpop.f32.mrb[0].mxu0
        %v5827 = vadd.f32 %v5565, %v5826
        %v5828 = vpop.f32.mrb[0].mxu0
        %v5829 = vadd.f32 %v5569, %v5828
        %v5830 = vpop.f32.mrb[0].mxu0
        %v5831 = vadd.f32 %v5565, %v5830
        %v5832 = vpop.f32.mrb[0].mxu0
        %v5833 = vadd.f32 %v5569, %v5832
        %5834 = vmatprep.mubr.bf16.mxu0 %v5560
        %5835 = vmatmul.mubr.bf16.gmra.mrb[0].mxu0 %v5559
        %v5836 = vpop.f32.mrb[0].mxu0
        %v5837 = vadd.f32 %v5565, %v5836
        %v5838 = vpop.f32.mrb[0].mxu0
        %v5839 = vadd.f32 %v5569, %v5838
        %v5840 = vpop.f32.mrb[0].mxu0
        %v5841 = vadd.f32 %v5565, %v5840
        %v5842 = vpop.f32.mrb[0].mxu0
        %v5843 = vadd.f32 %v5569, %v5842
        %5844 = vdwg.mxu0
        %v5845 = vld [vmem:[#allocation10] sm:$0xff]
        %v5846 = vld [vmem:[#allocation10 + $0x8] sm:$0xff]
        %v5847 = vld [vmem:[#allocation10 + $0x10] sm:$0xff]
        %v5848 = vld [vmem:[#allocation10 + $0x18] sm:$0xff]
        %v5849 = vld [vmem:[#allocation10 + $0x20] sm:$0xff]
        %v5850 = vld [vmem:[#allocation10 + $0x28] sm:$0xff]
        %v5851 = vld [vmem:[#allocation10 + $0x30] sm:$0xff]
        %v5852 = vld [vmem:[#allocation10 + $0x38] sm:$0xff]
        %v5853 = vld [vmem:[%s8] sm:$0x3]
        %v5854 = vpack.c.bf16 %v5771, %v5767
        %v5855 = vpack.c.bf16 %v5781, %v5777
        %v5856 = vpack.c.bf16 %v5791, %v5787
        %v5857 = vpack.c.bf16 %v5801, %v5797
        %v5858 = vpack.c.bf16 %v5811, %v5807
        %v5859 = vpack.c.bf16 %v5821, %v5817
        %v5860 = vpack.c.bf16 %v5831, %v5827
        %v5861 = vpack.c.bf16 %v5841, %v5837
        %v5863 = vlaneseq
        %v5864 = vshrl.u32 %v5863, 7
        %v5865 = vsub.s32 0, %v5864
        %v5866 = vrot.slane %v5853, %v5865
        %v5867 = vlaneseq
        %v5868 = vshrl.u32 %v5867, 7
        %v5869 = vsub.s32 1, %v5868
        %v5870 = vrot.slane %v5853, %v5869
        %v5881 = vunpack.c.l.b16 %v5845
        %v5882 = vunpack.c.h.b16 %v5845
        %v5883 = vunpack.c.l.b16 %v5846
        %v5884 = vunpack.c.h.b16 %v5846
        %v5885 = vunpack.c.l.b16 %v5847
        %v5886 = vunpack.c.h.b16 %v5847
        %v5887 = vunpack.c.l.b16 %v5848
        %v5888 = vunpack.c.h.b16 %v5848
        %v5889 = vunpack.c.l.b16 %v5849
        %v5890 = vunpack.c.h.b16 %v5849
        %v5891 = vunpack.c.l.b16 %v5850
        %v5892 = vunpack.c.h.b16 %v5850
        %v5893 = vunpack.c.l.b16 %v5851
        %v5894 = vunpack.c.h.b16 %v5851
        %v5895 = vunpack.c.l.b16 %v5852
        %v5896 = vunpack.c.h.b16 %v5852
        %v5897 = vpack.c.b16 %v5883, %v5881
        %v5898 = vpack.c.b16 %v5884, %v5882
        %v5899 = vpack.c.b16 %v5887, %v5885
        %v5900 = vpack.c.b16 %v5888, %v5886
        %v5901 = vpack.c.b16 %v5891, %v5889
        %v5902 = vpack.c.b16 %v5892, %v5890
        %v5903 = vpack.c.b16 %v5895, %v5893
        %v5904 = vpack.c.b16 %v5896, %v5894
        %vm5913 = vcmask 523264
        %v5915 = vsel %vm5913, %v5854, 0
        %v5918 = vsel %vm5913, %v5855, 0
        %v5921 = vsel %vm5913, %v5856, 0
        %v5924 = vsel %vm5913, %v5857, 0
        %v5927 = vsel %vm5913, %v5858, 0
        %v5930 = vsel %vm5913, %v5859, 0
        %v5933 = vsel %vm5913, %v5860, 0
        %v5936 = vsel %vm5913, %v5861, 0
        %5938 = vmatprep.subr.bf16.mxu0 %v5898
        %5939 = vmatpush1.bf16.msra.mxu0 %v5897
        %5940 = vmatprep.subr.bf16.mxu0 %v5900
        %5941 = vmatpush1.bf16.msra.mxu0 %v5899
        %5942 = vmatprep.subr.bf16.mxu0 %v5902
        %5943 = vmatpush1.bf16.msra.mxu0 %v5901
        %5944 = vmatprep.subr.bf16.mxu0 %v5904
        %5945 = vmatpush1.bf16.msra.mxu0 %v5903
        %5946 = vmatprep.subr.bf16.mxu0 0
        %5947 = vmatpush1.bf16.msra.mxu0 0
        %5948 = vmatprep.subr.bf16.mxu0 0
        %5949 = vmatpush1.bf16.msra.mxu0 0
        %5950 = vmatprep.subr.bf16.mxu0 0
        %5951 = vmatpush1.bf16.msra.mxu0 0
        %5952 = vmatprep.subr.bf16.mxu0 0
        %5953 = vmatpush1.bf16.msra.mxu0 0
        %5954 = vmatprep.subr.bf16.mxu0 0
        %5955 = vmatpush1.bf16.msra.mxu0 0
        %5956 = vmatprep.subr.bf16.mxu0 0
        %5957 = vmatpush1.bf16.msra.mxu0 0
        %5958 = vmatprep.subr.bf16.mxu0 0
        %5959 = vmatpush1.bf16.msra.mxu0 0
        %5960 = vmatprep.subr.bf16.mxu0 0
        %5961 = vmatpush1.bf16.msra.mxu0 0
        %5962 = vmatprep.subr.bf16.mxu0 0
        %5963 = vmatpush1.bf16.msra.mxu0 0
        %5964 = vmatprep.subr.bf16.mxu0 0
        %5965 = vmatpush1.bf16.msra.mxu0 0
        %5966 = vmatprep.subr.bf16.mxu0 0
        %5967 = vmatpush1.bf16.msra.mxu0 0
        %5968 = vmatprep.subr.bf16.mxu0 0
        %5969 = vmatpush1.bf16.msra.mxu0 0
        %5970 = vmatprep.mubr.bf16.mxu0 0
        %5971 = vmatmul.mubr.bf16.gmra.mrb[0].mxu0 %v5915
        %v5972 = vpop.f32.mrb[0].mxu0
        %v5973 = vadd.f32 %v5866, %v5972
        %v5974 = vpop.f32.mrb[0].mxu0
        %v5975 = vadd.f32 %v5870, %v5974
        %v5976 = vpop.f32.mrb[0].mxu0
        %v5977 = vadd.f32 %v5866, %v5976
        %v5978 = vpop.f32.mrb[0].mxu0
        %v5979 = vadd.f32 %v5870, %v5978
        %5980 = vmatprep.mubr.bf16.mxu0 0
        %5981 = vmatmul.mubr.bf16.gmra.mrb[0].mxu0 %v5918
        %v5982 = vpop.f32.mrb[0].mxu0
        %v5983 = vadd.f32 %v5866, %v5982
        %v5984 = vpop.f32.mrb[0].mxu0
        %v5985 = vadd.f32 %v5870, %v5984
        %v5986 = vpop.f32.mrb[0].mxu0
        %v5987 = vadd.f32 %v5866, %v5986
        %v5988 = vpop.f32.mrb[0].mxu0
        %v5989 = vadd.f32 %v5870, %v5988
        %5990 = vmatprep.mubr.bf16.mxu0 0
        %5991 = vmatmul.mubr.bf16.gmra.mrb[0].mxu0 %v5921
        %v5992 = vpop.f32.mrb[0].mxu0
        %v5993 = vadd.f32 %v5866, %v5992
        %v5994 = vpop.f32.mrb[0].mxu0
        %v5995 = vadd.f32 %v5870, %v5994
        %v5996 = vpop.f32.mrb[0].mxu0
        %v5997 = vadd.f32 %v5866, %v5996
        %v5998 = vpop.f32.mrb[0].mxu0
        %v5999 = vadd.f32 %v5870, %v5998
        %6000 = vmatprep.mubr.bf16.mxu0 0
        %6001 = vmatmul.mubr.bf16.gmra.mrb[0].mxu0 %v5924
        %v6002 = vpop.f32.mrb[0].mxu0
        %v6003 = vadd.f32 %v5866, %v6002
        %v6004 = vpop.f32.mrb[0].mxu0
        %v6005 = vadd.f32 %v5870, %v6004
        %v6006 = vpop.f32.mrb[0].mxu0
        %v6007 = vadd.f32 %v5866, %v6006
        %v6008 = vpop.f32.mrb[0].mxu0
        %v6009 = vadd.f32 %v5870, %v6008
        %6010 = vmatprep.mubr.bf16.mxu0 0
        %6011 = vmatmul.mubr.bf16.gmra.mrb[0].mxu0 %v5927
        %v6012 = vpop.f32.mrb[0].mxu0
        %v6013 = vadd.f32 %v5866, %v6012
        %v6014 = vpop.f32.mrb[0].mxu0
        %v6015 = vadd.f32 %v5870, %v6014
        %v6016 = vpop.f32.mrb[0].mxu0
        %v6017 = vadd.f32 %v5866, %v6016
        %v6018 = vpop.f32.mrb[0].mxu0
        %v6019 = vadd.f32 %v5870, %v6018
        %6020 = vmatprep.mubr.bf16.mxu0 0
        %6021 = vmatmul.mubr.bf16.gmra.mrb[0].mxu0 %v5930
        %v6022 = vpop.f32.mrb[0].mxu0
        %v6023 = vadd.f32 %v5866, %v6022
        %v6024 = vpop.f32.mrb[0].mxu0
        %v6025 = vadd.f32 %v5870, %v6024
        %v6026 = vpop.f32.mrb[0].mxu0
        %v6027 = vadd.f32 %v5866, %v6026
        %v6028 = vpop.f32.mrb[0].mxu0
        %v6029 = vadd.f32 %v5870, %v6028
        %6030 = vmatprep.mubr.bf16.mxu0 0
        %6031 = vmatmul.mubr.bf16.gmra.mrb[0].mxu0 %v5933
        %v6032 = vpop.f32.mrb[0].mxu0
        %v6033 = vadd.f32 %v5866, %v6032
        %v6034 = vpop.f32.mrb[0].mxu0
        %v6035 = vadd.f32 %v5870, %v6034
        %v6036 = vpop.f32.mrb[0].mxu0
        %v6037 = vadd.f32 %v5866, %v6036
        %v6038 = vpop.f32.mrb[0].mxu0
        %v6039 = vadd.f32 %v5870, %v6038
        %6040 = vmatprep.mubr.bf16.mxu0 0
        %6041 = vmatmul.mubr.bf16.gmra.mrb[0].mxu0 %v5936
        %v6042 = vpop.f32.mrb[0].mxu0
        %v6043 = vadd.f32 %v5866, %v6042
        %v6044 = vpop.f32.mrb[0].mxu0
        %v6045 = vadd.f32 %v5870, %v6044
        %v6046 = vpop.f32.mrb[0].mxu0
        %v6047 = vadd.f32 %v5866, %v6046
        %v6048 = vpop.f32.mrb[0].mxu0
        %v6049 = vadd.f32 %v5870, %v6048
        %6050 = vdwg.mxu0
        %v6051 = vmax.f32 %v5973, %v5975
        %6052 = vmax.xlane.f32.xlu0 %v6051
        %v6053 = vpop.xlane.xlu0 %6052
        %v6054 = vmax.f32 %v5977, %v5979
        %6055 = vmax.xlane.f32.xlu0 %v6054
        %v6056 = vpop.xlane.xlu0 %6055
        %v6057 = vmax.f32 %v5983, %v5985
        %6058 = vmax.xlane.f32.xlu0 %v6057
        %v6059 = vpop.xlane.xlu0 %6058
        %v6060 = vmax.f32 %v5987, %v5989
        %6061 = vmax.xlane.f32.xlu0 %v6060
        %v6062 = vpop.xlane.xlu0 %6061
        %v6063 = vmax.f32 %v5993, %v5995
        %6064 = vmax.xlane.f32.xlu0 %v6063
        %v6065 = vpop.xlane.xlu0 %6064
        %v6066 = vmax.f32 %v5997, %v5999
        %6067 = vmax.xlane.f32.xlu0 %v6066
        %v6068 = vpop.xlane.xlu0 %6067
        %v6069 = vmax.f32 %v6003, %v6005
        %6070 = vmax.xlane.f32.xlu0 %v6069
        %v6071 = vpop.xlane.xlu0 %6070
        %v6072 = vmax.f32 %v6007, %v6009
        %6073 = vmax.xlane.f32.xlu0 %v6072
        %v6074 = vpop.xlane.xlu0 %6073
        %v6075 = vmax.f32 %v6013, %v6015
        %6076 = vmax.xlane.f32.xlu0 %v6075
        %v6077 = vpop.xlane.xlu0 %6076
        %v6078 = vmax.f32 %v6017, %v6019
        %6079 = vmax.xlane.f32.xlu0 %v6078
        %v6080 = vpop.xlane.xlu0 %6079
        %v6081 = vmax.f32 %v6023, %v6025
        %6082 = vmax.xlane.f32.xlu0 %v6081
        %v6083 = vpop.xlane.xlu0 %6082
        %v6084 = vmax.f32 %v6027, %v6029
        %6085 = vmax.xlane.f32.xlu0 %v6084
        %v6086 = vpop.xlane.xlu0 %6085
        %v6087 = vmax.f32 %v6033, %v6035
        %6088 = vmax.xlane.f32.xlu0 %v6087
        %v6089 = vpop.xlane.xlu0 %6088
        %v6090 = vmax.f32 %v6037, %v6039
        %6091 = vmax.xlane.f32.xlu0 %v6090
        %v6092 = vpop.xlane.xlu0 %6091
        %v6093 = vmax.f32 %v6043, %v6045
        %6094 = vmax.xlane.f32.xlu0 %v6093
        %v6095 = vpop.xlane.xlu0 %6094
        %v6096 = vmax.f32 %v6047, %v6049
        %6097 = vmax.xlane.f32.xlu0 %v6096
        %v6098 = vpop.xlane.xlu0 %6097
        %v6099 = vsub.f32 %v5973, %v6053
        %v6100 = vsub.f32 %v5975, %v6053
        %v6101 = vsub.f32 %v5977, %v6056
        %v6102 = vsub.f32 %v5979, %v6056
        %v6103 = vsub.f32 %v5983, %v6059
        %v6104 = vsub.f32 %v5985, %v6059
        %v6105 = vsub.f32 %v5987, %v6062
        %v6106 = vsub.f32 %v5989, %v6062
        %v6107 = vsub.f32 %v5993, %v6065
        %v6108 = vsub.f32 %v5995, %v6065
        %v6109 = vsub.f32 %v5997, %v6068
        %v6110 = vsub.f32 %v5999, %v6068
        %v6111 = vsub.f32 %v6003, %v6071
        %v6112 = vsub.f32 %v6005, %v6071
        %v6113 = vsub.f32 %v6007, %v6074
        %v6114 = vsub.f32 %v6009, %v6074
        %v6115 = vsub.f32 %v6013, %v6077
        %v6116 = vsub.f32 %v6015, %v6077
        %v6117 = vsub.f32 %v6017, %v6080
        %v6118 = vsub.f32 %v6019, %v6080
        %v6119 = vsub.f32 %v6023, %v6083
        %v6120 = vsub.f32 %v6025, %v6083
        %v6121 = vsub.f32 %v6027, %v6086
        %v6122 = vsub.f32 %v6029, %v6086
        %v6123 = vsub.f32 %v6033, %v6089
        %v6124 = vsub.f32 %v6035, %v6089
        %v6125 = vsub.f32 %v6037, %v6092
        %v6126 = vsub.f32 %v6039, %v6092
        %v6127 = vsub.f32 %v6043, %v6095
        %v6128 = vsub.f32 %v6045, %v6095
        %v6129 = vsub.f32 %v6047, %v6098
        %v6130 = vsub.f32 %v6049, %v6098
        %v6131 = vmul.f32 %v6099, 1.442695
        %v6132 = vpow.pop %v6131
        %v6133 = vmul.f32 %v6100, 1.442695
        %v6134 = vpow.pop %v6133
        %v6135 = vmul.f32 %v6101, 1.442695
        %v6136 = vpow.pop %v6135
        %v6137 = vmul.f32 %v6102, 1.442695
        %v6138 = vpow.pop %v6137
        %v6139 = vmul.f32 %v6103, 1.442695
        %v6140 = vpow.pop %v6139
        %v6141 = vmul.f32 %v6104, 1.442695
        %v6142 = vpow.pop %v6141
        %v6143 = vmul.f32 %v6105, 1.442695
        %v6144 = vpow.pop %v6143
        %v6145 = vmul.f32 %v6106, 1.442695
        %v6146 = vpow.pop %v6145
        %v6147 = vmul.f32 %v6107, 1.442695
        %v6148 = vpow.pop %v6147
        %v6149 = vmul.f32 %v6108, 1.442695
        %v6150 = vpow.pop %v6149
        %v6151 = vmul.f32 %v6109, 1.442695
        %v6152 = vpow.pop %v6151
        %v6153 = vmul.f32 %v6110, 1.442695
        %v6154 = vpow.pop %v6153
        %v6155 = vmul.f32 %v6111, 1.442695
        %v6156 = vpow.pop %v6155
        %v6157 = vmul.f32 %v6112, 1.442695
        %v6158 = vpow.pop %v6157
        %v6159 = vmul.f32 %v6113, 1.442695
        %v6160 = vpow.pop %v6159
        %v6161 = vmul.f32 %v6114, 1.442695
        %v6162 = vpow.pop %v6161
        %v6163 = vmul.f32 %v6115, 1.442695
        %v6164 = vpow.pop %v6163
        %v6165 = vmul.f32 %v6116, 1.442695
        %v6166 = vpow.pop %v6165
        %v6167 = vmul.f32 %v6117, 1.442695
        %v6168 = vpow.pop %v6167
        %v6169 = vmul.f32 %v6118, 1.442695
        %v6170 = vpow.pop %v6169
        %v6171 = vmul.f32 %v6119, 1.442695
        %v6172 = vpow.pop %v6171
        %v6173 = vmul.f32 %v6120, 1.442695
        %v6174 = vpow.pop %v6173
        %v6175 = vmul.f32 %v6121, 1.442695
        %v6176 = vpow.pop %v6175
        %v6177 = vmul.f32 %v6122, 1.442695
        %v6178 = vpow.pop %v6177
        %v6179 = vmul.f32 %v6123, 1.442695
        %v6180 = vpow.pop %v6179
        %v6181 = vmul.f32 %v6124, 1.442695
        %v6182 = vpow.pop %v6181
        %v6183 = vmul.f32 %v6125, 1.442695
        %v6184 = vpow.pop %v6183
        %v6185 = vmul.f32 %v6126, 1.442695
        %v6186 = vpow.pop %v6185
        %v6187 = vmul.f32 %v6127, 1.442695
        %v6188 = vpow.pop %v6187
        %v6189 = vmul.f32 %v6128, 1.442695
        %v6190 = vpow.pop %v6189
        %v6191 = vmul.f32 %v6129, 1.442695
        %v6192 = vpow.pop %v6191
        %v6193 = vmul.f32 %v6130, 1.442695
        %v6194 = vpow.pop %v6193
        %v6195 = vadd.f32 %v6132, %v6134
        %6196 = vadd.xlane.f32.xlu0 %v6195
        %v6197 = vpop.xlane.xlu0 %6196
        %v6198 = vadd.f32 %v6136, %v6138
        %6199 = vadd.xlane.f32.xlu0 %v6198
        %v6200 = vpop.xlane.xlu0 %6199
        %v6201 = vadd.f32 %v6140, %v6142
        %6202 = vadd.xlane.f32.xlu0 %v6201
        %v6203 = vpop.xlane.xlu0 %6202
        %v6204 = vadd.f32 %v6144, %v6146
        %6205 = vadd.xlane.f32.xlu0 %v6204
        %v6206 = vpop.xlane.xlu0 %6205
        %v6207 = vadd.f32 %v6148, %v6150
        %6208 = vadd.xlane.f32.xlu0 %v6207
        %v6209 = vpop.xlane.xlu0 %6208
        %v6210 = vadd.f32 %v6152, %v6154
        %6211 = vadd.xlane.f32.xlu0 %v6210
        %v6212 = vpop.xlane.xlu0 %6211
        %v6213 = vadd.f32 %v6156, %v6158
        %6214 = vadd.xlane.f32.xlu0 %v6213
        %v6215 = vpop.xlane.xlu0 %6214
        %v6216 = vadd.f32 %v6160, %v6162
        %6217 = vadd.xlane.f32.xlu0 %v6216
        %v6218 = vpop.xlane.xlu0 %6217
        %v6219 = vadd.f32 %v6164, %v6166
        %6220 = vadd.xlane.f32.xlu0 %v6219
        %v6221 = vpop.xlane.xlu0 %6220
        %v6222 = vadd.f32 %v6168, %v6170
        %6223 = vadd.xlane.f32.xlu0 %v6222
        %v6224 = vpop.xlane.xlu0 %6223
        %v6225 = vadd.f32 %v6172, %v6174
        %6226 = vadd.xlane.f32.xlu0 %v6225
        %v6227 = vpop.xlane.xlu0 %6226
        %v6228 = vadd.f32 %v6176, %v6178
        %6229 = vadd.xlane.f32.xlu0 %v6228
        %v6230 = vpop.xlane.xlu0 %6229
        %v6231 = vadd.f32 %v6180, %v6182
        %6232 = vadd.xlane.f32.xlu0 %v6231
        %v6233 = vpop.xlane.xlu0 %6232
        %v6234 = vadd.f32 %v6184, %v6186
        %6235 = vadd.xlane.f32.xlu0 %v6234
        %v6236 = vpop.xlane.xlu0 %6235
        %v6237 = vadd.f32 %v6188, %v6190
        %6238 = vadd.xlane.f32.xlu0 %v6237
        %v6239 = vpop.xlane.xlu0 %6238
        %v6240 = vadd.f32 %v6192, %v6194
        %6241 = vadd.xlane.f32.xlu0 %v6240
        %v6242 = vpop.xlane.xlu0 %6241
        %v6243 = vlog2.pop %v6197
        %v6244 = vmul.f32 %v6243, 0.6931472
        %v6245 = vlog2.pop %v6200
        %v6246 = vmul.f32 %v6245, 0.6931472
        %v6247 = vlog2.pop %v6203
        %v6248 = vmul.f32 %v6247, 0.6931472
        %v6249 = vlog2.pop %v6206
        %v6250 = vmul.f32 %v6249, 0.6931472
        %v6251 = vlog2.pop %v6209
        %v6252 = vmul.f32 %v6251, 0.6931472
        %v6253 = vlog2.pop %v6212
        %v6254 = vmul.f32 %v6253, 0.6931472
        %v6255 = vlog2.pop %v6215
        %v6256 = vmul.f32 %v6255, 0.6931472
        %v6257 = vlog2.pop %v6218
        %v6258 = vmul.f32 %v6257, 0.6931472
        %v6259 = vlog2.pop %v6221
        %v6260 = vmul.f32 %v6259, 0.6931472
        %v6261 = vlog2.pop %v6224
        %v6262 = vmul.f32 %v6261, 0.6931472
        %v6263 = vlog2.pop %v6227
        %v6264 = vmul.f32 %v6263, 0.6931472
        %v6265 = vlog2.pop %v6230
        %v6266 = vmul.f32 %v6265, 0.6931472
        %v6267 = vlog2.pop %v6233
        %v6268 = vmul.f32 %v6267, 0.6931472
        %v6269 = vlog2.pop %v6236
        %v6270 = vmul.f32 %v6269, 0.6931472
        %v6271 = vlog2.pop %v6239
        %v6272 = vmul.f32 %v6271, 0.6931472
        %v6273 = vlog2.pop %v6242
        %v6274 = vmul.f32 %v6273, 0.6931472
        %v6275 = vadd.f32 %v6053, %v6244
        %v6276 = vadd.f32 %v6056, %v6246
        %v6277 = vadd.f32 %v6059, %v6248
        %v6278 = vadd.f32 %v6062, %v6250
        %v6279 = vadd.f32 %v6065, %v6252
        %v6280 = vadd.f32 %v6068, %v6254
        %v6281 = vadd.f32 %v6071, %v6256
        %v6282 = vadd.f32 %v6074, %v6258
        %v6283 = vadd.f32 %v6077, %v6260
        %v6284 = vadd.f32 %v6080, %v6262
        %v6285 = vadd.f32 %v6083, %v6264
        %v6286 = vadd.f32 %v6086, %v6266
        %v6287 = vadd.f32 %v6089, %v6268
        %v6288 = vadd.f32 %v6092, %v6270
        %v6289 = vadd.f32 %v6095, %v6272
        %v6290 = vadd.f32 %v6098, %v6274
        %v6291 = vsub.f32 %v5973, %v6275
        %v6292 = vsub.f32 %v5975, %v6275
        %v6293 = vsub.f32 %v5977, %v6276
        %v6294 = vsub.f32 %v5979, %v6276
        %v6295 = vsub.f32 %v5983, %v6277
        %v6296 = vsub.f32 %v5985, %v6277
        %v6297 = vsub.f32 %v5987, %v6278
        %v6298 = vsub.f32 %v5989, %v6278
        %v6299 = vsub.f32 %v5993, %v6279
        %v6300 = vsub.f32 %v5995, %v6279
        %v6301 = vsub.f32 %v5997, %v6280
        %v6302 = vsub.f32 %v5999, %v6280
        %v6303 = vsub.f32 %v6003, %v6281
        %v6304 = vsub.f32 %v6005, %v6281
        %v6305 = vsub.f32 %v6007, %v6282
        %v6306 = vsub.f32 %v6009, %v6282
        %v6307 = vsub.f32 %v6013, %v6283
        %v6308 = vsub.f32 %v6015, %v6283
        %v6309 = vsub.f32 %v6017, %v6284
        %v6310 = vsub.f32 %v6019, %v6284
        %v6311 = vsub.f32 %v6023, %v6285
        %v6312 = vsub.f32 %v6025, %v6285
        %v6313 = vsub.f32 %v6027, %v6286
        %v6314 = vsub.f32 %v6029, %v6286
        %v6315 = vsub.f32 %v6033, %v6287
        %v6316 = vsub.f32 %v6035, %v6287
        %v6317 = vsub.f32 %v6037, %v6288
        %v6318 = vsub.f32 %v6039, %v6288
        %v6319 = vsub.f32 %v6043, %v6289
        %v6320 = vsub.f32 %v6045, %v6289
        %v6321 = vsub.f32 %v6047, %v6290
        %v6322 = vsub.f32 %v6049, %v6290
        %v6323 = vmul.f32 %v6291, %v430
        %v6324 = vmul.f32 %v6292, %v431
        %v6325 = vmul.f32 %v6293, %v432
        %v6326 = vmul.f32 %v6294, %v433
        %v6327 = vmul.f32 %v6295, %v434
        %v6328 = vmul.f32 %v6296, %v435
        %v6329 = vmul.f32 %v6297, %v436
        %v6330 = vmul.f32 %v6298, %v437
        %v6331 = vmul.f32 %v6299, %v438
        %v6332 = vmul.f32 %v6300, %v439
        %v6333 = vmul.f32 %v6301, %v440
        %v6334 = vmul.f32 %v6302, %v441
        %v6335 = vmul.f32 %v6303, %v442
        %v6336 = vmul.f32 %v6304, %v443
        %v6337 = vmul.f32 %v6305, %v444
        %v6338 = vmul.f32 %v6306, %v445
        %v6339 = vmul.f32 %v6307, %v446
        %v6340 = vmul.f32 %v6308, %v447
        %v6341 = vmul.f32 %v6309, %v448
        %v6342 = vmul.f32 %v6310, %v449
        %v6343 = vmul.f32 %v6311, %v450
        %v6344 = vmul.f32 %v6312, %v451
        %v6345 = vmul.f32 %v6313, %v452
        %v6346 = vmul.f32 %v6314, %v453
        %v6347 = vmul.f32 %v6315, %v454
        %v6348 = vmul.f32 %v6316, %v455
        %v6349 = vmul.f32 %v6317, %v456
        %v6350 = vmul.f32 %v6318, %v457
        %v6351 = vmul.f32 %v6319, %v458
        %v6352 = vmul.f32 %v6320, %v459
        %v6353 = vmul.f32 %v6321, %v460
        %v6354 = vmul.f32 %v6322, %v461
        %v6355 = vadd.f32 %v6323, %v6324
        %6356 = vadd.xlane.f32.xlu0 %v6355
        %v6357 = vpop.xlane.xlu0 %6356
        %v6358 = vadd.f32 %v6325, %v6326
        %6359 = vadd.xlane.f32.xlu0 %v6358
        %v6360 = vpop.xlane.xlu0 %6359
        %v6361 = vadd.f32 %v6327, %v6328
        %6362 = vadd.xlane.f32.xlu0 %v6361
        %v6363 = vpop.xlane.xlu0 %6362
        %v6364 = vadd.f32 %v6329, %v6330
        %6365 = vadd.xlane.f32.xlu0 %v6364
        %v6366 = vpop.xlane.xlu0 %6365
        %v6367 = vadd.f32 %v6331, %v6332
        %6368 = vadd.xlane.f32.xlu0 %v6367
        %v6369 = vpop.xlane.xlu0 %6368
        %v6370 = vadd.f32 %v6333, %v6334
        %6371 = vadd.xlane.f32.xlu0 %v6370
        %v6372 = vpop.xlane.xlu0 %6371
        %v6373 = vadd.f32 %v6335, %v6336
        %6374 = vadd.xlane.f32.xlu0 %v6373
        %v6375 = vpop.xlane.xlu0 %6374
        %v6376 = vadd.f32 %v6337, %v6338
        %6377 = vadd.xlane.f32.xlu0 %v6376
        %v6378 = vpop.xlane.xlu0 %6377
        %v6379 = vadd.f32 %v6339, %v6340
        %6380 = vadd.xlane.f32.xlu0 %v6379
        %v6381 = vpop.xlane.xlu0 %6380
        %v6382 = vadd.f32 %v6341, %v6342
        %6383 = vadd.xlane.f32.xlu0 %v6382
        %v6384 = vpop.xlane.xlu0 %6383
        %v6385 = vadd.f32 %v6343, %v6344
        %6386 = vadd.xlane.f32.xlu0 %v6385
        %v6387 = vpop.xlane.xlu0 %6386
        %v6388 = vadd.f32 %v6345, %v6346
        %6389 = vadd.xlane.f32.xlu0 %v6388
        %v6390 = vpop.xlane.xlu0 %6389
        %v6391 = vadd.f32 %v6347, %v6348
        %6392 = vadd.xlane.f32.xlu0 %v6391
        %v6393 = vpop.xlane.xlu0 %6392
        %v6394 = vadd.f32 %v6349, %v6350
        %6395 = vadd.xlane.f32.xlu0 %v6394
        %v6396 = vpop.xlane.xlu0 %6395
        %v6397 = vadd.f32 %v6351, %v6352
        %6398 = vadd.xlane.f32.xlu0 %v6397
        %v6399 = vpop.xlane.xlu0 %6398
        %v6400 = vadd.f32 %v6353, %v6354
        %6401 = vadd.xlane.f32.xlu0 %v6400
        %v6402 = vpop.xlane.xlu0 %6401
        %v6403 = vmul.f32 %v5767, %v5767
        %v6404 = vmul.f32 %v5771, %v5771
        %v6405 = vmul.f32 %v5777, %v5777
        %v6406 = vmul.f32 %v5781, %v5781
        %v6407 = vmul.f32 %v5787, %v5787
        %v6408 = vmul.f32 %v5791, %v5791
        %v6409 = vmul.f32 %v5797, %v5797
        %v6410 = vmul.f32 %v5801, %v5801
        %v6411 = vmul.f32 %v5807, %v5807
        %v6412 = vmul.f32 %v5811, %v5811
        %v6413 = vmul.f32 %v5817, %v5817
        %v6414 = vmul.f32 %v5821, %v5821
        %v6415 = vmul.f32 %v5827, %v5827
        %v6416 = vmul.f32 %v5831, %v5831
        %v6417 = vmul.f32 %v5837, %v5837
        %v6418 = vmul.f32 %v5841, %v5841
        %v6419 = vadd.f32 %v6403, 1.837877
        %v6420 = vadd.f32 %v6404, 1.837877
        %v6421 = vadd.f32 %v6405, 1.837877
        %v6422 = vadd.f32 %v6406, 1.837877
        %v6423 = vadd.f32 %v6407, 1.837877
        %v6424 = vadd.f32 %v6408, 1.837877
        %v6425 = vadd.f32 %v6409, 1.837877
        %v6426 = vadd.f32 %v6410, 1.837877
        %v6427 = vadd.f32 %v6411, 1.837877
        %v6428 = vadd.f32 %v6412, 1.837877
        %v6429 = vadd.f32 %v6413, 1.837877
        %v6430 = vadd.f32 %v6414, 1.837877
        %v6431 = vadd.f32 %v6415, 1.837877
        %v6432 = vadd.f32 %v6416, 1.837877
        %v6433 = vadd.f32 %v6417, 1.837877
        %v6434 = vadd.f32 %v6418, 1.837877
        %v6435 = vmul.f32 %v6419, -0.5
        %v6436 = vmul.f32 %v6420, -0.5
        %v6437 = vmul.f32 %v6421, -0.5
        %v6438 = vmul.f32 %v6422, -0.5
        %v6439 = vmul.f32 %v6423, -0.5
        %v6440 = vmul.f32 %v6424, -0.5
        %v6441 = vmul.f32 %v6425, -0.5
        %v6442 = vmul.f32 %v6426, -0.5
        %v6443 = vmul.f32 %v6427, -0.5
        %v6444 = vmul.f32 %v6428, -0.5
        %v6445 = vmul.f32 %v6429, -0.5
        %v6446 = vmul.f32 %v6430, -0.5
        %v6447 = vmul.f32 %v6431, -0.5
        %v6448 = vmul.f32 %v6432, -0.5
        %v6449 = vmul.f32 %v6433, -0.5
        %v6450 = vmul.f32 %v6434, -0.5
        %v6451 = vadd.f32 %v6435, -1.89712
        %v6452 = vadd.f32 %v6436, -1.89712
        %v6453 = vadd.f32 %v6437, -1.89712
        %v6454 = vadd.f32 %v6438, -1.89712
        %v6455 = vadd.f32 %v6439, -1.89712
        %v6456 = vadd.f32 %v6440, -1.89712
        %v6457 = vadd.f32 %v6441, -1.89712
        %v6458 = vadd.f32 %v6442, -1.89712
        %v6459 = vadd.f32 %v6443, -1.89712
        %v6460 = vadd.f32 %v6444, -1.89712
        %v6461 = vadd.f32 %v6445, -1.89712
        %v6462 = vadd.f32 %v6446, -1.89712
        %v6463 = vadd.f32 %v6447, -1.89712
        %v6464 = vadd.f32 %v6448, -1.89712
        %v6465 = vadd.f32 %v6449, -1.89712
        %v6466 = vadd.f32 %v6450, -1.89712
        %v6467 = vsub.f32 %v5767, %v5769
        %v6468 = vsub.f32 %v5771, %v5773
        %v6469 = vsub.f32 %v5777, %v5779
        %v6470 = vsub.f32 %v5781, %v5783
        %v6471 = vsub.f32 %v5787, %v5789
        %v6472 = vsub.f32 %v5791, %v5793
        %v6473 = vsub.f32 %v5797, %v5799
        %v6474 = vsub.f32 %v5801, %v5803
        %v6475 = vsub.f32 %v5807, %v5809
        %v6476 = vsub.f32 %v5811, %v5813
        %v6477 = vsub.f32 %v5817, %v5819
        %v6478 = vsub.f32 %v5821, %v5823
        %v6479 = vsub.f32 %v5827, %v5829
        %v6480 = vsub.f32 %v5831, %v5833
        %v6481 = vsub.f32 %v5837, %v5839
        %v6482 = vsub.f32 %v5841, %v5843
        %v6483 = vadd.f32 %v5769, 1.837877
        %v6484 = vadd.f32 %v5773, 1.837877
        %v6485 = vadd.f32 %v5779, 1.837877
        %v6486 = vadd.f32 %v5783, 1.837877
        %v6487 = vadd.f32 %v5789, 1.837877
        %v6488 = vadd.f32 %v5793, 1.837877
        %v6489 = vadd.f32 %v5799, 1.837877
        %v6490 = vadd.f32 %v5803, 1.837877
        %v6491 = vadd.f32 %v5809, 1.837877
        %v6492 = vadd.f32 %v5813, 1.837877
        %v6493 = vadd.f32 %v5819, 1.837877
        %v6494 = vadd.f32 %v5823, 1.837877
        %v6495 = vadd.f32 %v5829, 1.837877
        %v6496 = vadd.f32 %v5833, 1.837877
        %v6497 = vadd.f32 %v5839, 1.837877
        %v6498 = vadd.f32 %v5843, 1.837877
        %v6499 = vmul.f32 %v6467, %v6467
        %v6500 = vmul.f32 %v6468, %v6468
        %v6501 = vmul.f32 %v6469, %v6469
        %v6502 = vmul.f32 %v6470, %v6470
        %v6503 = vmul.f32 %v6471, %v6471
        %v6504 = vmul.f32 %v6472, %v6472
        %v6505 = vmul.f32 %v6473, %v6473
        %v6506 = vmul.f32 %v6474, %v6474
        %v6507 = vmul.f32 %v6475, %v6475
        %v6508 = vmul.f32 %v6476, %v6476
        %v6509 = vmul.f32 %v6477, %v6477
        %v6510 = vmul.f32 %v6478, %v6478
        %v6511 = vmul.f32 %v6479, %v6479
        %v6512 = vmul.f32 %v6480, %v6480
        %v6513 = vmul.f32 %v6481, %v6481
        %v6514 = vmul.f32 %v6482, %v6482
        %v6515 = vsub.f32 0.0, %v5769
        %v6516 = vsub.f32 0.0, %v5773
        %v6517 = vsub.f32 0.0, %v5779
        %v6518 = vsub.f32 0.0, %v5783
        %v6519 = vsub.f32 0.0, %v5789
        %v6520 = vsub.f32 0.0, %v5793
        %v6521 = vsub.f32 0.0, %v5799
        %v6522 = vsub.f32 0.0, %v5803
        %v6523 = vsub.f32 0.0, %v5809
        %v6524 = vsub.f32 0.0, %v5813
        %v6525 = vsub.f32 0.0, %v5819
        %v6526 = vsub.f32 0.0, %v5823
        %v6527 = vsub.f32 0.0, %v5829
        %v6528 = vsub.f32 0.0, %v5833
        %v6529 = vsub.f32 0.0, %v5839
        %v6530 = vsub.f32 0.0, %v5843
        %v6531 = vmul.f32 %v6515, 1.442695
        %v6532 = vpow.pop %v6531
        %v6533 = vmul.f32 %v6516, 1.442695
        %v6534 = vpow.pop %v6533
        %v6535 = vmul.f32 %v6517, 1.442695
        %v6536 = vpow.pop %v6535
        %v6537 = vmul.f32 %v6518, 1.442695
        %v6538 = vpow.pop %v6537
        %v6539 = vmul.f32 %v6519, 1.442695
        %v6540 = vpow.pop %v6539
        %v6541 = vmul.f32 %v6520, 1.442695
        %v6542 = vpow.pop %v6541
        %v6543 = vmul.f32 %v6521, 1.442695
        %v6544 = vpow.pop %v6543
        %v6545 = vmul.f32 %v6522, 1.442695
        %v6546 = vpow.pop %v6545
        %v6547 = vmul.f32 %v6523, 1.442695
        %v6548 = vpow.pop %v6547
        %v6549 = vmul.f32 %v6524, 1.442695
        %v6550 = vpow.pop %v6549
        %v6551 = vmul.f32 %v6525, 1.442695
        %v6552 = vpow.pop %v6551
        %v6553 = vmul.f32 %v6526, 1.442695
        %v6554 = vpow.pop %v6553
        %v6555 = vmul.f32 %v6527, 1.442695
        %v6556 = vpow.pop %v6555
        %v6557 = vmul.f32 %v6528, 1.442695
        %v6558 = vpow.pop %v6557
        %v6559 = vmul.f32 %v6529, 1.442695
        %v6560 = vpow.pop %v6559
        %v6561 = vmul.f32 %v6530, 1.442695
        %v6562 = vpow.pop %v6561
        %6579 = vrot.lane.b32.xlu0 %v6532, 64
        %v6580 = vpop.permute.xlu0 %6579
        %6581 = vrot.lane.b32.xlu0 %v6534, 64
        %v6582 = vpop.permute.xlu0 %6581
        %6583 = vrot.lane.b32.xlu0 %v6536, 64
        %v6584 = vpop.permute.xlu0 %6583
        %6585 = vrot.lane.b32.xlu0 %v6538, 64
        %v6586 = vpop.permute.xlu0 %6585
        %6587 = vrot.lane.b32.xlu0 %v6540, 64
        %v6588 = vpop.permute.xlu0 %6587
        %6589 = vrot.lane.b32.xlu0 %v6542, 64
        %v6590 = vpop.permute.xlu0 %6589
        %6591 = vrot.lane.b32.xlu0 %v6544, 64
        %v6592 = vpop.permute.xlu0 %6591
        %6593 = vrot.lane.b32.xlu0 %v6546, 64
        %v6594 = vpop.permute.xlu0 %6593
        %6595 = vrot.lane.b32.xlu0 %v6548, 64
        %v6596 = vpop.permute.xlu0 %6595
        %6597 = vrot.lane.b32.xlu0 %v6550, 64
        %v6598 = vpop.permute.xlu0 %6597
        %6599 = vrot.lane.b32.xlu0 %v6552, 64
        %v6600 = vpop.permute.xlu0 %6599
        %6601 = vrot.lane.b32.xlu0 %v6554, 64
        %v6602 = vpop.permute.xlu0 %6601
        %6603 = vrot.lane.b32.xlu0 %v6556, 64
        %v6604 = vpop.permute.xlu0 %6603
        %6605 = vrot.lane.b32.xlu0 %v6558, 64
        %v6606 = vpop.permute.xlu0 %6605
        %6607 = vrot.lane.b32.xlu0 %v6560, 64
        %v6608 = vpop.permute.xlu0 %6607
        %6609 = vrot.lane.b32.xlu0 %v6562, 64
        %v6610 = vpop.permute.xlu0 %6609
        %v6627 = vmul.f32 %v6499, %v6580
        %v6628 = vmul.f32 %v6500, %v6582
        %v6629 = vmul.f32 %v6501, %v6584
        %v6630 = vmul.f32 %v6502, %v6586
        %v6631 = vmul.f32 %v6503, %v6588
        %v6632 = vmul.f32 %v6504, %v6590
        %v6633 = vmul.f32 %v6505, %v6592
        %v6634 = vmul.f32 %v6506, %v6594
        %v6635 = vmul.f32 %v6507, %v6596
        %v6636 = vmul.f32 %v6508, %v6598
        %v6637 = vmul.f32 %v6509, %v6600
        %v6638 = vmul.f32 %v6510, %v6602
        %v6639 = vmul.f32 %v6511, %v6604
        %v6640 = vmul.f32 %v6512, %v6606
        %v6641 = vmul.f32 %v6513, %v6608
        %v6642 = vmul.f32 %v6514, %v6610
        %6659 = vrot.lane.b32.xlu0 %v6627, 64
        %v6660 = vpop.permute.xlu0 %6659
        %6661 = vrot.lane.b32.xlu0 %v6628, 64
        %v6662 = vpop.permute.xlu0 %6661
        %6663 = vrot.lane.b32.xlu0 %v6629, 64
        %v6664 = vpop.permute.xlu0 %6663
        %6665 = vrot.lane.b32.xlu0 %v6630, 64
        %v6666 = vpop.permute.xlu0 %6665
        %6667 = vrot.lane.b32.xlu0 %v6631, 64
        %v6668 = vpop.permute.xlu0 %6667
        %6669 = vrot.lane.b32.xlu0 %v6632, 64
        %v6670 = vpop.permute.xlu0 %6669
        %6671 = vrot.lane.b32.xlu0 %v6633, 64
        %v6672 = vpop.permute.xlu0 %6671
        %6673 = vrot.lane.b32.xlu0 %v6634, 64
        %v6674 = vpop.permute.xlu0 %6673
        %6675 = vrot.lane.b32.xlu0 %v6635, 64
        %v6676 = vpop.permute.xlu0 %6675
        %6677 = vrot.lane.b32.xlu0 %v6636, 64
        %v6678 = vpop.permute.xlu0 %6677
        %6679 = vrot.lane.b32.xlu0 %v6637, 64
        %v6680 = vpop.permute.xlu0 %6679
        %6681 = vrot.lane.b32.xlu0 %v6638, 64
        %v6682 = vpop.permute.xlu0 %6681
        %6683 = vrot.lane.b32.xlu0 %v6639, 64
        %v6684 = vpop.permute.xlu0 %6683
        %6685 = vrot.lane.b32.xlu0 %v6640, 64
        %v6686 = vpop.permute.xlu0 %6685
        %6687 = vrot.lane.b32.xlu0 %v6641, 64
        %v6688 = vpop.permute.xlu0 %6687
        %6689 = vrot.lane.b32.xlu0 %v6642, 64
        %v6690 = vpop.permute.xlu0 %6689
        %v6707 = vadd.f32 %v6483, %v6660
        %v6708 = vadd.f32 %v6484, %v6662
        %v6709 = vadd.f32 %v6485, %v6664
        %v6710 = vadd.f32 %v6486, %v6666
        %v6711 = vadd.f32 %v6487, %v6668
        %v6712 = vadd.f32 %v6488, %v6670
        %v6713 = vadd.f32 %v6489, %v6672
        %v6714 = vadd.f32 %v6490, %v6674
        %v6715 = vadd.f32 %v6491, %v6676
        %v6716 = vadd.f32 %v6492, %v6678
        %v6717 = vadd.f32 %v6493, %v6680
        %v6718 = vadd.f32 %v6494, %v6682
        %v6719 = vadd.f32 %v6495, %v6684
        %v6720 = vadd.f32 %v6496, %v6686
        %v6721 = vadd.f32 %v6497, %v6688
        %v6722 = vadd.f32 %v6498, %v6690
        %v6723 = vmul.f32 %v6707, -0.5
        %v6724 = vmul.f32 %v6708, -0.5
        %v6725 = vmul.f32 %v6709, -0.5
        %v6726 = vmul.f32 %v6710, -0.5
        %v6727 = vmul.f32 %v6711, -0.5
        %v6728 = vmul.f32 %v6712, -0.5
        %v6729 = vmul.f32 %v6713, -0.5
        %v6730 = vmul.f32 %v6714, -0.5
        %v6731 = vmul.f32 %v6715, -0.5
        %v6732 = vmul.f32 %v6716, -0.5
        %v6733 = vmul.f32 %v6717, -0.5
        %v6734 = vmul.f32 %v6718, -0.5
        %v6735 = vmul.f32 %v6719, -0.5
        %v6736 = vmul.f32 %v6720, -0.5
        %v6737 = vmul.f32 %v6721, -0.5
        %v6738 = vmul.f32 %v6722, -0.5
        %v6739 = vadd.f32 %v6723, -0.2876821
        %v6740 = vadd.f32 %v6724, -0.2876821
        %v6741 = vadd.f32 %v6725, -0.2876821
        %v6742 = vadd.f32 %v6726, -0.2876821
        %v6743 = vadd.f32 %v6727, -0.2876821
        %v6744 = vadd.f32 %v6728, -0.2876821
        %v6745 = vadd.f32 %v6729, -0.2876821
        %v6746 = vadd.f32 %v6730, -0.2876821
        %v6747 = vadd.f32 %v6731, -0.2876821
        %v6748 = vadd.f32 %v6732, -0.2876821
        %v6749 = vadd.f32 %v6733, -0.2876821
        %v6750 = vadd.f32 %v6734, -0.2876821
        %v6751 = vadd.f32 %v6735, -0.2876821
        %v6752 = vadd.f32 %v6736, -0.2876821
        %v6753 = vadd.f32 %v6737, -0.2876821
        %v6754 = vadd.f32 %v6738, -0.2876821
        %v6755 = vmul.f32 %v6403, 4.539993e-05
        %v6756 = vmul.f32 %v6404, 4.539993e-05
        %v6757 = vmul.f32 %v6405, 4.539993e-05
        %v6758 = vmul.f32 %v6406, 4.539993e-05
        %v6759 = vmul.f32 %v6407, 4.539993e-05
        %v6760 = vmul.f32 %v6408, 4.539993e-05
        %v6761 = vmul.f32 %v6409, 4.539993e-05
        %v6762 = vmul.f32 %v6410, 4.539993e-05
        %v6763 = vmul.f32 %v6411, 4.539993e-05
        %v6764 = vmul.f32 %v6412, 4.539993e-05
        %v6765 = vmul.f32 %v6413, 4.539993e-05
        %v6766 = vmul.f32 %v6414, 4.539993e-05
        %v6767 = vmul.f32 %v6415, 4.539993e-05
        %v6768 = vmul.f32 %v6416, 4.539993e-05
        %v6769 = vmul.f32 %v6417, 4.539993e-05
        %v6770 = vmul.f32 %v6418, 4.539993e-05
        %v6771 = vadd.f32 %v6755, 11.837877
        %v6772 = vadd.f32 %v6756, 11.837877
        %v6773 = vadd.f32 %v6757, 11.837877
        %v6774 = vadd.f32 %v6758, 11.837877
        %v6775 = vadd.f32 %v6759, 11.837877
        %v6776 = vadd.f32 %v6760, 11.837877
        %v6777 = vadd.f32 %v6761, 11.837877
        %v6778 = vadd.f32 %v6762, 11.837877
        %v6779 = vadd.f32 %v6763, 11.837877
        %v6780 = vadd.f32 %v6764, 11.837877
        %v6781 = vadd.f32 %v6765, 11.837877
        %v6782 = vadd.f32 %v6766, 11.837877
        %v6783 = vadd.f32 %v6767, 11.837877
        %v6784 = vadd.f32 %v6768, 11.837877
        %v6785 = vadd.f32 %v6769, 11.837877
        %v6786 = vadd.f32 %v6770, 11.837877
        %v6787 = vmul.f32 %v6771, -0.5
        %v6788 = vmul.f32 %v6772, -0.5
        %v6789 = vmul.f32 %v6773, -0.5
        %v6790 = vmul.f32 %v6774, -0.5
        %v6791 = vmul.f32 %v6775, -0.5
        %v6792 = vmul.f32 %v6776, -0.5
        %v6793 = vmul.f32 %v6777, -0.5
        %v6794 = vmul.f32 %v6778, -0.5
        %v6795 = vmul.f32 %v6779, -0.5
        %v6796 = vmul.f32 %v6780, -0.5
        %v6797 = vmul.f32 %v6781, -0.5
        %v6798 = vmul.f32 %v6782, -0.5
        %v6799 = vmul.f32 %v6783, -0.5
        %v6800 = vmul.f32 %v6784, -0.5
        %v6801 = vmul.f32 %v6785, -0.5
        %v6802 = vmul.f32 %v6786, -0.5
        %v6803 = vadd.f32 %v6787, -2.3025851
        %v6804 = vadd.f32 %v6788, -2.3025851
        %v6805 = vadd.f32 %v6789, -2.3025851
        %v6806 = vadd.f32 %v6790, -2.3025851
        %v6807 = vadd.f32 %v6791, -2.3025851
        %v6808 = vadd.f32 %v6792, -2.3025851
        %v6809 = vadd.f32 %v6793, -2.3025851
        %v6810 = vadd.f32 %v6794, -2.3025851
        %v6811 = vadd.f32 %v6795, -2.3025851
        %v6812 = vadd.f32 %v6796, -2.3025851
        %v6813 = vadd.f32 %v6797, -2.3025851
        %v6814 = vadd.f32 %v6798, -2.3025851
        %v6815 = vadd.f32 %v6799, -2.3025851
        %v6816 = vadd.f32 %v6800, -2.3025851
        %v6817 = vadd.f32 %v6801, -2.3025851
        %v6818 = vadd.f32 %v6802, -2.3025851
        %6835 = vrot.lane.b32.xlu0 %v6739, 64
        %v6836 = vpop.permute.xlu0 %6835
        %6837 = vrot.lane.b32.xlu0 %v6740, 64
        %v6838 = vpop.permute.xlu0 %6837
        %6839 = vrot.lane.b32.xlu0 %v6741, 64
        %v6840 = vpop.permute.xlu0 %6839
        %6841 = vrot.lane.b32.xlu0 %v6742, 64
        %v6842 = vpop.permute.xlu0 %6841
        %6843 = vrot.lane.b32.xlu0 %v6743, 64
        %v6844 = vpop.permute.xlu0 %6843
        %6845 = vrot.lane.b32.xlu0 %v6744, 64
        %v6846 = vpop.permute.xlu0 %6845
        %6847 = vrot.lane.b32.xlu0 %v6745, 64
        %v6848 = vpop.permute.xlu0 %6847
        %6849 = vrot.lane.b32.xlu0 %v6746, 64
        %v6850 = vpop.permute.xlu0 %6849
        %6851 = vrot.lane.b32.xlu0 %v6747, 64
        %v6852 = vpop.permute.xlu0 %6851
        %6853 = vrot.lane.b32.xlu0 %v6748, 64
        %v6854 = vpop.permute.xlu0 %6853
        %6855 = vrot.lane.b32.xlu0 %v6749, 64
        %v6856 = vpop.permute.xlu0 %6855
        %6857 = vrot.lane.b32.xlu0 %v6750, 64
        %v6858 = vpop.permute.xlu0 %6857
        %6859 = vrot.lane.b32.xlu0 %v6751, 64
        %v6860 = vpop.permute.xlu0 %6859
        %6861 = vrot.lane.b32.xlu0 %v6752, 64
        %v6862 = vpop.permute.xlu0 %6861
        %6863 = vrot.lane.b32.xlu0 %v6753, 64
        %v6864 = vpop.permute.xlu0 %6863
        %6865 = vrot.lane.b32.xlu0 %v6754, 64
        %v6866 = vpop.permute.xlu0 %6865
        %v6883 = vmax.f32 %v6451, %v6836
        %v6884 = vmax.f32 %v6452, %v6838
        %v6885 = vmax.f32 %v6453, %v6840
        %v6886 = vmax.f32 %v6454, %v6842
        %v6887 = vmax.f32 %v6455, %v6844
        %v6888 = vmax.f32 %v6456, %v6846
        %v6889 = vmax.f32 %v6457, %v6848
        %v6890 = vmax.f32 %v6458, %v6850
        %v6891 = vmax.f32 %v6459, %v6852
        %v6892 = vmax.f32 %v6460, %v6854
        %v6893 = vmax.f32 %v6461, %v6856
        %v6894 = vmax.f32 %v6462, %v6858
        %v6895 = vmax.f32 %v6463, %v6860
        %v6896 = vmax.f32 %v6464, %v6862
        %v6897 = vmax.f32 %v6465, %v6864
        %v6898 = vmax.f32 %v6466, %v6866
        %v6899 = vmax.f32 %v6883, %v6803
        %v6900 = vmax.f32 %v6884, %v6804
        %v6901 = vmax.f32 %v6885, %v6805
        %v6902 = vmax.f32 %v6886, %v6806
        %v6903 = vmax.f32 %v6887, %v6807
        %v6904 = vmax.f32 %v6888, %v6808
        %v6905 = vmax.f32 %v6889, %v6809
        %v6906 = vmax.f32 %v6890, %v6810
        %v6907 = vmax.f32 %v6891, %v6811
        %v6908 = vmax.f32 %v6892, %v6812
        %v6909 = vmax.f32 %v6893, %v6813
        %v6910 = vmax.f32 %v6894, %v6814
        %v6911 = vmax.f32 %v6895, %v6815
        %v6912 = vmax.f32 %v6896, %v6816
        %v6913 = vmax.f32 %v6897, %v6817
        %v6914 = vmax.f32 %v6898, %v6818
        %v6915 = vsub.f32 %v6451, %v6899
        %v6916 = vsub.f32 %v6452, %v6900
        %v6917 = vsub.f32 %v6453, %v6901
        %v6918 = vsub.f32 %v6454, %v6902
        %v6919 = vsub.f32 %v6455, %v6903
        %v6920 = vsub.f32 %v6456, %v6904
        %v6921 = vsub.f32 %v6457, %v6905
        %v6922 = vsub.f32 %v6458, %v6906
        %v6923 = vsub.f32 %v6459, %v6907
        %v6924 = vsub.f32 %v6460, %v6908
        %v6925 = vsub.f32 %v6461, %v6909
        %v6926 = vsub.f32 %v6462, %v6910
        %v6927 = vsub.f32 %v6463, %v6911
        %v6928 = vsub.f32 %v6464, %v6912
        %v6929 = vsub.f32 %v6465, %v6913
        %v6930 = vsub.f32 %v6466, %v6914
        %v6931 = vmul.f32 %v6915, 1.442695
        %v6932 = vpow.pop %v6931
        %v6933 = vmul.f32 %v6916, 1.442695
        %v6934 = vpow.pop %v6933
        %v6935 = vmul.f32 %v6917, 1.442695
        %v6936 = vpow.pop %v6935
        %v6937 = vmul.f32 %v6918, 1.442695
        %v6938 = vpow.pop %v6937
        %v6939 = vmul.f32 %v6919, 1.442695
        %v6940 = vpow.pop %v6939
        %v6941 = vmul.f32 %v6920, 1.442695
        %v6942 = vpow.pop %v6941
        %v6943 = vmul.f32 %v6921, 1.442695
        %v6944 = vpow.pop %v6943
        %v6945 = vmul.f32 %v6922, 1.442695
        %v6946 = vpow.pop %v6945
        %v6947 = vmul.f32 %v6923, 1.442695
        %v6948 = vpow.pop %v6947
        %v6949 = vmul.f32 %v6924, 1.442695
        %v6950 = vpow.pop %v6949
        %v6951 = vmul.f32 %v6925, 1.442695
        %v6952 = vpow.pop %v6951
        %v6953 = vmul.f32 %v6926, 1.442695
        %v6954 = vpow.pop %v6953
        %v6955 = vmul.f32 %v6927, 1.442695
        %v6956 = vpow.pop %v6955
        %v6957 = vmul.f32 %v6928, 1.442695
        %v6958 = vpow.pop %v6957
        %v6959 = vmul.f32 %v6929, 1.442695
        %v6960 = vpow.pop %v6959
        %v6961 = vmul.f32 %v6930, 1.442695
        %v6962 = vpow.pop %v6961
        %6979 = vrot.lane.b32.xlu0 %v6899, 64
        %v6980 = vpop.permute.xlu0 %6979
        %6981 = vrot.lane.b32.xlu0 %v6900, 64
        %v6982 = vpop.permute.xlu0 %6981
        %6983 = vrot.lane.b32.xlu0 %v6901, 64
        %v6984 = vpop.permute.xlu0 %6983
        %6985 = vrot.lane.b32.xlu0 %v6902, 64
        %v6986 = vpop.permute.xlu0 %6985
        %6987 = vrot.lane.b32.xlu0 %v6903, 64
        %v6988 = vpop.permute.xlu0 %6987
        %6989 = vrot.lane.b32.xlu0 %v6904, 64
        %v6990 = vpop.permute.xlu0 %6989
        %6991 = vrot.lane.b32.xlu0 %v6905, 64
        %v6992 = vpop.permute.xlu0 %6991
        %6993 = vrot.lane.b32.xlu0 %v6906, 64
        %v6994 = vpop.permute.xlu0 %6993
        %6995 = vrot.lane.b32.xlu0 %v6907, 64
        %v6996 = vpop.permute.xlu0 %6995
        %6997 = vrot.lane.b32.xlu0 %v6908, 64
        %v6998 = vpop.permute.xlu0 %6997
        %6999 = vrot.lane.b32.xlu0 %v6909, 64
        %v7000 = vpop.permute.xlu0 %6999
        %7001 = vrot.lane.b32.xlu0 %v6910, 64
        %v7002 = vpop.permute.xlu0 %7001
        %7003 = vrot.lane.b32.xlu0 %v6911, 64
        %v7004 = vpop.permute.xlu0 %7003
        %7005 = vrot.lane.b32.xlu0 %v6912, 64
        %v7006 = vpop.permute.xlu0 %7005
        %7007 = vrot.lane.b32.xlu0 %v6913, 64
        %v7008 = vpop.permute.xlu0 %7007
        %7009 = vrot.lane.b32.xlu0 %v6914, 64
        %v7010 = vpop.permute.xlu0 %7009
        %v7027 = vsub.f32 %v6739, %v6980
        %v7028 = vsub.f32 %v6740, %v6982
        %v7029 = vsub.f32 %v6741, %v6984
        %v7030 = vsub.f32 %v6742, %v6986
        %v7031 = vsub.f32 %v6743, %v6988
        %v7032 = vsub.f32 %v6744, %v6990
        %v7033 = vsub.f32 %v6745, %v6992
        %v7034 = vsub.f32 %v6746, %v6994
        %v7035 = vsub.f32 %v6747, %v6996
        %v7036 = vsub.f32 %v6748, %v6998
        %v7037 = vsub.f32 %v6749, %v7000
        %v7038 = vsub.f32 %v6750, %v7002
        %v7039 = vsub.f32 %v6751, %v7004
        %v7040 = vsub.f32 %v6752, %v7006
        %v7041 = vsub.f32 %v6753, %v7008
        %v7042 = vsub.f32 %v6754, %v7010
        %v7043 = vmul.f32 %v7027, 1.442695
        %v7044 = vpow.pop %v7043
        %v7045 = vmul.f32 %v7028, 1.442695
        %v7046 = vpow.pop %v7045
        %v7047 = vmul.f32 %v7029, 1.442695
        %v7048 = vpow.pop %v7047
        %v7049 = vmul.f32 %v7030, 1.442695
        %v7050 = vpow.pop %v7049
        %v7051 = vmul.f32 %v7031, 1.442695
        %v7052 = vpow.pop %v7051
        %v7053 = vmul.f32 %v7032, 1.442695
        %v7054 = vpow.pop %v7053
        %v7055 = vmul.f32 %v7033, 1.442695
        %v7056 = vpow.pop %v7055
        %v7057 = vmul.f32 %v7034, 1.442695
        %v7058 = vpow.pop %v7057
        %v7059 = vmul.f32 %v7035, 1.442695
        %v7060 = vpow.pop %v7059
        %v7061 = vmul.f32 %v7036, 1.442695
        %v7062 = vpow.pop %v7061
        %v7063 = vmul.f32 %v7037, 1.442695
        %v7064 = vpow.pop %v7063
        %v7065 = vmul.f32 %v7038, 1.442695
        %v7066 = vpow.pop %v7065
        %v7067 = vmul.f32 %v7039, 1.442695
        %v7068 = vpow.pop %v7067
        %v7069 = vmul.f32 %v7040, 1.442695
        %v7070 = vpow.pop %v7069
        %v7071 = vmul.f32 %v7041, 1.442695
        %v7072 = vpow.pop %v7071
        %v7073 = vmul.f32 %v7042, 1.442695
        %v7074 = vpow.pop %v7073
        %7091 = vrot.lane.b32.xlu0 %v7044, 64
        %v7092 = vpop.permute.xlu0 %7091
        %7093 = vrot.lane.b32.xlu0 %v7046, 64
        %v7094 = vpop.permute.xlu0 %7093
        %7095 = vrot.lane.b32.xlu0 %v7048, 64
        %v7096 = vpop.permute.xlu0 %7095
        %7097 = vrot.lane.b32.xlu0 %v7050, 64
        %v7098 = vpop.permute.xlu0 %7097
        %7099 = vrot.lane.b32.xlu0 %v7052, 64
        %v7100 = vpop.permute.xlu0 %7099
        %7101 = vrot.lane.b32.xlu0 %v7054, 64
        %v7102 = vpop.permute.xlu0 %7101
        %7103 = vrot.lane.b32.xlu0 %v7056, 64
        %v7104 = vpop.permute.xlu0 %7103
        %7105 = vrot.lane.b32.xlu0 %v7058, 64
        %v7106 = vpop.permute.xlu0 %7105
        %7107 = vrot.lane.b32.xlu0 %v7060, 64
        %v7108 = vpop.permute.xlu0 %7107
        %7109 = vrot.lane.b32.xlu0 %v7062, 64
        %v7110 = vpop.permute.xlu0 %7109
        %7111 = vrot.lane.b32.xlu0 %v7064, 64
        %v7112 = vpop.permute.xlu0 %7111
        %7113 = vrot.lane.b32.xlu0 %v7066, 64
        %v7114 = vpop.permute.xlu0 %7113
        %7115 = vrot.lane.b32.xlu0 %v7068, 64
        %v7116 = vpop.permute.xlu0 %7115
        %7117 = vrot.lane.b32.xlu0 %v7070, 64
        %v7118 = vpop.permute.xlu0 %7117
        %7119 = vrot.lane.b32.xlu0 %v7072, 64
        %v7120 = vpop.permute.xlu0 %7119
        %7121 = vrot.lane.b32.xlu0 %v7074, 64
        %v7122 = vpop.permute.xlu0 %7121
        %v7139 = vadd.f32 %v6932, %v7092
        %v7140 = vadd.f32 %v6934, %v7094
        %v7141 = vadd.f32 %v6936, %v7096
        %v7142 = vadd.f32 %v6938, %v7098
        %v7143 = vadd.f32 %v6940, %v7100
        %v7144 = vadd.f32 %v6942, %v7102
        %v7145 = vadd.f32 %v6944, %v7104
        %v7146 = vadd.f32 %v6946, %v7106
        %v7147 = vadd.f32 %v6948, %v7108
        %v7148 = vadd.f32 %v6950, %v7110
        %v7149 = vadd.f32 %v6952, %v7112
        %v7150 = vadd.f32 %v6954, %v7114
        %v7151 = vadd.f32 %v6956, %v7116
        %v7152 = vadd.f32 %v6958, %v7118
        %v7153 = vadd.f32 %v6960, %v7120
        %v7154 = vadd.f32 %v6962, %v7122
        %v7155 = vsub.f32 %v6803, %v6899
        %v7156 = vsub.f32 %v6804, %v6900
        %v7157 = vsub.f32 %v6805, %v6901
        %v7158 = vsub.f32 %v6806, %v6902
        %v7159 = vsub.f32 %v6807, %v6903
        %v7160 = vsub.f32 %v6808, %v6904
        %v7161 = vsub.f32 %v6809, %v6905
        %v7162 = vsub.f32 %v6810, %v6906
        %v7163 = vsub.f32 %v6811, %v6907
        %v7164 = vsub.f32 %v6812, %v6908
        %v7165 = vsub.f32 %v6813, %v6909
        %v7166 = vsub.f32 %v6814, %v6910
        %v7167 = vsub.f32 %v6815, %v6911
        %v7168 = vsub.f32 %v6816, %v6912
        %v7169 = vsub.f32 %v6817, %v6913
        %v7170 = vsub.f32 %v6818, %v6914
        %v7171 = vmul.f32 %v7155, 1.442695
        %v7172 = vpow.pop %v7171
        %v7173 = vmul.f32 %v7156, 1.442695
        %v7174 = vpow.pop %v7173
        %v7175 = vmul.f32 %v7157, 1.442695
        %v7176 = vpow.pop %v7175
        %v7177 = vmul.f32 %v7158, 1.442695
        %v7178 = vpow.pop %v7177
        %v7179 = vmul.f32 %v7159, 1.442695
        %v7180 = vpow.pop %v7179
        %v7181 = vmul.f32 %v7160, 1.442695
        %v7182 = vpow.pop %v7181
        %v7183 = vmul.f32 %v7161, 1.442695
        %v7184 = vpow.pop %v7183
        %v7185 = vmul.f32 %v7162, 1.442695
        %v7186 = vpow.pop %v7185
        %v7187 = vmul.f32 %v7163, 1.442695
        %v7188 = vpow.pop %v7187
        %v7189 = vmul.f32 %v7164, 1.442695
        %v7190 = vpow.pop %v7189
        %v7191 = vmul.f32 %v7165, 1.442695
        %v7192 = vpow.pop %v7191
        %v7193 = vmul.f32 %v7166, 1.442695
        %v7194 = vpow.pop %v7193
        %v7195 = vmul.f32 %v7167, 1.442695
        %v7196 = vpow.pop %v7195
        %v7197 = vmul.f32 %v7168, 1.442695
        %v7198 = vpow.pop %v7197
        %v7199 = vmul.f32 %v7169, 1.442695
        %v7200 = vpow.pop %v7199
        %v7201 = vmul.f32 %v7170, 1.442695
        %v7202 = vpow.pop %v7201
        %v7203 = vadd.f32 %v7139, %v7172
        %v7204 = vadd.f32 %v7140, %v7174
        %v7205 = vadd.f32 %v7141, %v7176
        %v7206 = vadd.f32 %v7142, %v7178
        %v7207 = vadd.f32 %v7143, %v7180
        %v7208 = vadd.f32 %v7144, %v7182
        %v7209 = vadd.f32 %v7145, %v7184
        %v7210 = vadd.f32 %v7146, %v7186
        %v7211 = vadd.f32 %v7147, %v7188
        %v7212 = vadd.f32 %v7148, %v7190
        %v7213 = vadd.f32 %v7149, %v7192
        %v7214 = vadd.f32 %v7150, %v7194
        %v7215 = vadd.f32 %v7151, %v7196
        %v7216 = vadd.f32 %v7152, %v7198
        %v7217 = vadd.f32 %v7153, %v7200
        %v7218 = vadd.f32 %v7154, %v7202
        %v7219 = vlog2.pop %v7203
        %v7220 = vmul.f32 %v7219, 0.6931472
        %v7221 = vlog2.pop %v7204
        %v7222 = vmul.f32 %v7221, 0.6931472
        %v7223 = vlog2.pop %v7205
        %v7224 = vmul.f32 %v7223, 0.6931472
        %v7225 = vlog2.pop %v7206
        %v7226 = vmul.f32 %v7225, 0.6931472
        %v7227 = vlog2.pop %v7207
        %v7228 = vmul.f32 %v7227, 0.6931472
        %v7229 = vlog2.pop %v7208
        %v7230 = vmul.f32 %v7229, 0.6931472
        %v7231 = vlog2.pop %v7209
        %v7232 = vmul.f32 %v7231, 0.6931472
        %v7233 = vlog2.pop %v7210
        %v7234 = vmul.f32 %v7233, 0.6931472
        %v7235 = vlog2.pop %v7211
        %v7236 = vmul.f32 %v7235, 0.6931472
        %v7237 = vlog2.pop %v7212
        %v7238 = vmul.f32 %v7237, 0.6931472
        %v7239 = vlog2.pop %v7213
        %v7240 = vmul.f32 %v7239, 0.6931472
        %v7241 = vlog2.pop %v7214
        %v7242 = vmul.f32 %v7241, 0.6931472
        %v7243 = vlog2.pop %v7215
        %v7244 = vmul.f32 %v7243, 0.6931472
        %v7245 = vlog2.pop %v7216
        %v7246 = vmul.f32 %v7245, 0.6931472
        %v7247 = vlog2.pop %v7217
        %v7248 = vmul.f32 %v7247, 0.6931472
        %v7249 = vlog2.pop %v7218
        %v7250 = vmul.f32 %v7249, 0.6931472
        %v7251 = vadd.f32 %v6899, %v7220
        %v7252 = vadd.f32 %v6900, %v7222
        %v7253 = vadd.f32 %v6901, %v7224
        %v7254 = vadd.f32 %v6902, %v7226
        %v7255 = vadd.f32 %v6903, %v7228
        %v7256 = vadd.f32 %v6904, %v7230
        %v7257 = vadd.f32 %v6905, %v7232
        %v7258 = vadd.f32 %v6906, %v7234
        %v7259 = vadd.f32 %v6907, %v7236
        %v7260 = vadd.f32 %v6908, %v7238
        %v7261 = vadd.f32 %v6909, %v7240
        %v7262 = vadd.f32 %v6910, %v7242
        %v7263 = vadd.f32 %v6911, %v7244
        %v7264 = vadd.f32 %v6912, %v7246
        %v7265 = vadd.f32 %v6913, %v7248
        %v7266 = vadd.f32 %v6914, %v7250
        %v7267 = vadd.f32 %v5767, 1.837877
        %v7268 = vadd.f32 %v5771, 1.837877
        %v7269 = vadd.f32 %v5777, 1.837877
        %v7270 = vadd.f32 %v5781, 1.837877
        %v7271 = vadd.f32 %v5787, 1.837877
        %v7272 = vadd.f32 %v5791, 1.837877
        %v7273 = vadd.f32 %v5797, 1.837877
        %v7274 = vadd.f32 %v5801, 1.837877
        %v7275 = vadd.f32 %v5807, 1.837877
        %v7276 = vadd.f32 %v5811, 1.837877
        %v7277 = vadd.f32 %v5817, 1.837877
        %v7278 = vadd.f32 %v5821, 1.837877
        %v7279 = vadd.f32 %v5827, 1.837877
        %v7280 = vadd.f32 %v5831, 1.837877
        %v7281 = vadd.f32 %v5837, 1.837877
        %v7282 = vadd.f32 %v5841, 1.837877
        %v7283 = vmul.f32 %v7267, -0.5
        %v7284 = vmul.f32 %v7268, -0.5
        %v7285 = vmul.f32 %v7269, -0.5
        %v7286 = vmul.f32 %v7270, -0.5
        %v7287 = vmul.f32 %v7271, -0.5
        %v7288 = vmul.f32 %v7272, -0.5
        %v7289 = vmul.f32 %v7273, -0.5
        %v7290 = vmul.f32 %v7274, -0.5
        %v7291 = vmul.f32 %v7275, -0.5
        %v7292 = vmul.f32 %v7276, -0.5
        %v7293 = vmul.f32 %v7277, -0.5
        %v7294 = vmul.f32 %v7278, -0.5
        %v7295 = vmul.f32 %v7279, -0.5
        %v7296 = vmul.f32 %v7280, -0.5
        %v7297 = vmul.f32 %v7281, -0.5
        %v7298 = vmul.f32 %v7282, -0.5
        %v7299 = vadd.f32 %v430, %v431
        %7300 = vadd.xlane.f32.xlu0 %v7299
        %v7301 = vpop.xlane.xlu0 %7300
        %v7302 = vadd.f32 %v432, %v433
        %7303 = vadd.xlane.f32.xlu0 %v7302
        %v7304 = vpop.xlane.xlu0 %7303
        %v7305 = vadd.f32 %v434, %v435
        %7306 = vadd.xlane.f32.xlu0 %v7305
        %v7307 = vpop.xlane.xlu0 %7306
        %v7308 = vadd.f32 %v436, %v437
        %7309 = vadd.xlane.f32.xlu0 %v7308
        %v7310 = vpop.xlane.xlu0 %7309
        %v7311 = vadd.f32 %v438, %v439
        %7312 = vadd.xlane.f32.xlu0 %v7311
        %v7313 = vpop.xlane.xlu0 %7312
        %v7314 = vadd.f32 %v440, %v441
        %7315 = vadd.xlane.f32.xlu0 %v7314
        %v7316 = vpop.xlane.xlu0 %7315
        %v7317 = vadd.f32 %v442, %v443
        %7318 = vadd.xlane.f32.xlu0 %v7317
        %v7319 = vpop.xlane.xlu0 %7318
        %v7320 = vadd.f32 %v444, %v445
        %7321 = vadd.xlane.f32.xlu0 %v7320
        %v7322 = vpop.xlane.xlu0 %7321
        %v7323 = vadd.f32 %v446, %v447
        %7324 = vadd.xlane.f32.xlu0 %v7323
        %v7325 = vpop.xlane.xlu0 %7324
        %v7326 = vadd.f32 %v448, %v449
        %7327 = vadd.xlane.f32.xlu0 %v7326
        %v7328 = vpop.xlane.xlu0 %7327
        %v7329 = vadd.f32 %v450, %v451
        %7330 = vadd.xlane.f32.xlu0 %v7329
        %v7331 = vpop.xlane.xlu0 %7330
        %v7332 = vadd.f32 %v452, %v453
        %7333 = vadd.xlane.f32.xlu0 %v7332
        %v7334 = vpop.xlane.xlu0 %7333
        %v7335 = vadd.f32 %v454, %v455
        %7336 = vadd.xlane.f32.xlu0 %v7335
        %v7337 = vpop.xlane.xlu0 %7336
        %v7338 = vadd.f32 %v456, %v457
        %7339 = vadd.xlane.f32.xlu0 %v7338
        %v7340 = vpop.xlane.xlu0 %7339
        %v7341 = vadd.f32 %v458, %v459
        %7342 = vadd.xlane.f32.xlu0 %v7341
        %v7343 = vpop.xlane.xlu0 %7342
        %v7344 = vadd.f32 %v460, %v461
        %7345 = vadd.xlane.f32.xlu0 %v7344
        %v7346 = vpop.xlane.xlu0 %7345
        %7363 = vrot.lane.b32.xlu0 %v7251, 64
        %v7364 = vpop.permute.xlu0 %7363
        %7365 = vrot.lane.b32.xlu0 %v7252, 64
        %v7366 = vpop.permute.xlu0 %7365
        %7367 = vrot.lane.b32.xlu0 %v7253, 64
        %v7368 = vpop.permute.xlu0 %7367
        %7369 = vrot.lane.b32.xlu0 %v7254, 64
        %v7370 = vpop.permute.xlu0 %7369
        %7371 = vrot.lane.b32.xlu0 %v7255, 64
        %v7372 = vpop.permute.xlu0 %7371
        %7373 = vrot.lane.b32.xlu0 %v7256, 64
        %v7374 = vpop.permute.xlu0 %7373
        %7375 = vrot.lane.b32.xlu0 %v7257, 64
        %v7376 = vpop.permute.xlu0 %7375
        %7377 = vrot.lane.b32.xlu0 %v7258, 64
        %v7378 = vpop.permute.xlu0 %7377
        %7379 = vrot.lane.b32.xlu0 %v7259, 64
        %v7380 = vpop.permute.xlu0 %7379
        %7381 = vrot.lane.b32.xlu0 %v7260, 64
        %v7382 = vpop.permute.xlu0 %7381
        %7383 = vrot.lane.b32.xlu0 %v7261, 64
        %v7384 = vpop.permute.xlu0 %7383
        %7385 = vrot.lane.b32.xlu0 %v7262, 64
        %v7386 = vpop.permute.xlu0 %7385
        %7387 = vrot.lane.b32.xlu0 %v7263, 64
        %v7388 = vpop.permute.xlu0 %7387
        %7389 = vrot.lane.b32.xlu0 %v7264, 64
        %v7390 = vpop.permute.xlu0 %7389
        %7391 = vrot.lane.b32.xlu0 %v7265, 64
        %v7392 = vpop.permute.xlu0 %7391
        %7393 = vrot.lane.b32.xlu0 %v7266, 64
        %v7394 = vpop.permute.xlu0 %7393
        %v7411 = vsub.f32 %v7283, %v7364
        %v7412 = vsub.f32 %v7284, %v7366
        %v7413 = vsub.f32 %v7285, %v7368
        %v7414 = vsub.f32 %v7286, %v7370
        %v7415 = vsub.f32 %v7287, %v7372
        %v7416 = vsub.f32 %v7288, %v7374
        %v7417 = vsub.f32 %v7289, %v7376
        %v7418 = vsub.f32 %v7290, %v7378
        %v7419 = vsub.f32 %v7291, %v7380
        %v7420 = vsub.f32 %v7292, %v7382
        %v7421 = vsub.f32 %v7293, %v7384
        %v7422 = vsub.f32 %v7294, %v7386
        %v7423 = vsub.f32 %v7295, %v7388
        %v7424 = vsub.f32 %v7296, %v7390
        %v7425 = vsub.f32 %v7297, %v7392
        %v7426 = vsub.f32 %v7298, %v7394
        %7443 = vrot.lane.b32.xlu0 %v7411, 64
        %v7444 = vpop.permute.xlu0 %7443
        %7445 = vrot.lane.b32.xlu0 %v7412, 64
        %v7446 = vpop.permute.xlu0 %7445
        %7447 = vrot.lane.b32.xlu0 %v7413, 64
        %v7448 = vpop.permute.xlu0 %7447
        %7449 = vrot.lane.b32.xlu0 %v7414, 64
        %v7450 = vpop.permute.xlu0 %7449
        %7451 = vrot.lane.b32.xlu0 %v7415, 64
        %v7452 = vpop.permute.xlu0 %7451
        %7453 = vrot.lane.b32.xlu0 %v7416, 64
        %v7454 = vpop.permute.xlu0 %7453
        %7455 = vrot.lane.b32.xlu0 %v7417, 64
        %v7456 = vpop.permute.xlu0 %7455
        %7457 = vrot.lane.b32.xlu0 %v7418, 64
        %v7458 = vpop.permute.xlu0 %7457
        %7459 = vrot.lane.b32.xlu0 %v7419, 64
        %v7460 = vpop.permute.xlu0 %7459
        %7461 = vrot.lane.b32.xlu0 %v7420, 64
        %v7462 = vpop.permute.xlu0 %7461
        %7463 = vrot.lane.b32.xlu0 %v7421, 64
        %v7464 = vpop.permute.xlu0 %7463
        %7465 = vrot.lane.b32.xlu0 %v7422, 64
        %v7466 = vpop.permute.xlu0 %7465
        %7467 = vrot.lane.b32.xlu0 %v7423, 64
        %v7468 = vpop.permute.xlu0 %7467
        %7469 = vrot.lane.b32.xlu0 %v7424, 64
        %v7470 = vpop.permute.xlu0 %7469
        %7471 = vrot.lane.b32.xlu0 %v7425, 64
        %v7472 = vpop.permute.xlu0 %7471
        %7473 = vrot.lane.b32.xlu0 %v7426, 64
        %v7474 = vpop.permute.xlu0 %7473
        %v7491 = vsel %vm5913, %v7444, 0.0
        %7492 = vadd.xlane.f32.xlu0 %v7491
        %v7493 = vpop.xlane.xlu0 %7492
        %v7494 = vsel %vm5913, %v7446, 0.0
        %7495 = vadd.xlane.f32.xlu0 %v7494
        %v7496 = vpop.xlane.xlu0 %7495
        %v7497 = vsel %vm5913, %v7448, 0.0
        %7498 = vadd.xlane.f32.xlu0 %v7497
        %v7499 = vpop.xlane.xlu0 %7498
        %v7500 = vsel %vm5913, %v7450, 0.0
        %7501 = vadd.xlane.f32.xlu0 %v7500
        %v7502 = vpop.xlane.xlu0 %7501
        %v7503 = vsel %vm5913, %v7452, 0.0
        %7504 = vadd.xlane.f32.xlu0 %v7503
        %v7505 = vpop.xlane.xlu0 %7504
        %v7506 = vsel %vm5913, %v7454, 0.0
        %7507 = vadd.xlane.f32.xlu0 %v7506
        %v7508 = vpop.xlane.xlu0 %7507
        %v7509 = vsel %vm5913, %v7456, 0.0
        %7510 = vadd.xlane.f32.xlu0 %v7509
        %v7511 = vpop.xlane.xlu0 %7510
        %v7512 = vsel %vm5913, %v7458, 0.0
        %7513 = vadd.xlane.f32.xlu0 %v7512
        %v7514 = vpop.xlane.xlu0 %7513
        %v7515 = vsel %vm5913, %v7460, 0.0
        %7516 = vadd.xlane.f32.xlu0 %v7515
        %v7517 = vpop.xlane.xlu0 %7516
        %v7518 = vsel %vm5913, %v7462, 0.0
        %7519 = vadd.xlane.f32.xlu0 %v7518
        %v7520 = vpop.xlane.xlu0 %7519
        %v7521 = vsel %vm5913, %v7464, 0.0
        %7522 = vadd.xlane.f32.xlu0 %v7521
        %v7523 = vpop.xlane.xlu0 %7522
        %v7524 = vsel %vm5913, %v7466, 0.0
        %7525 = vadd.xlane.f32.xlu0 %v7524
        %v7526 = vpop.xlane.xlu0 %7525
        %v7527 = vsel %vm5913, %v7468, 0.0
        %7528 = vadd.xlane.f32.xlu0 %v7527
        %v7529 = vpop.xlane.xlu0 %7528
        %v7530 = vsel %vm5913, %v7470, 0.0
        %7531 = vadd.xlane.f32.xlu0 %v7530
        %v7532 = vpop.xlane.xlu0 %7531
        %v7533 = vsel %vm5913, %v7472, 0.0
        %7534 = vadd.xlane.f32.xlu0 %v7533
        %v7535 = vpop.xlane.xlu0 %7534
        %v7536 = vsel %vm5913, %v7474, 0.0
        %7537 = vadd.xlane.f32.xlu0 %v7536
        %v7538 = vpop.xlane.xlu0 %7537
        %v7539 = vmul.f32 %v7493, %v7301
        %v7540 = vmul.f32 %v7496, %v7304
        %v7541 = vmul.f32 %v7499, %v7307
        %v7542 = vmul.f32 %v7502, %v7310
        %v7543 = vmul.f32 %v7505, %v7313
        %v7544 = vmul.f32 %v7508, %v7316
        %v7545 = vmul.f32 %v7511, %v7319
        %v7546 = vmul.f32 %v7514, %v7322
        %v7547 = vmul.f32 %v7517, %v7325
        %v7548 = vmul.f32 %v7520, %v7328
        %v7549 = vmul.f32 %v7523, %v7331
        %v7550 = vmul.f32 %v7526, %v7334
        %v7551 = vmul.f32 %v7529, %v7337
        %v7552 = vmul.f32 %v7532, %v7340
        %v7553 = vmul.f32 %v7535, %v7343
        %v7554 = vmul.f32 %v7538, %v7346
        %vm7555 = vcmask 7168
        %v7556 = vsel %vm7555, %v6357, %v7539
        %v7557 = vsel %vm7555, %v6360, %v7540
        %v7558 = vsel %vm7555, %v6363, %v7541
        %v7559 = vsel %vm7555, %v6366, %v7542
        %v7560 = vsel %vm7555, %v6369, %v7543
        %v7561 = vsel %vm7555, %v6372, %v7544
        %v7562 = vsel %vm7555, %v6375, %v7545
        %v7563 = vsel %vm7555, %v6378, %v7546
        %v7564 = vsel %vm7555, %v6381, %v7547
        %v7565 = vsel %vm7555, %v6384, %v7548
        %v7566 = vsel %vm7555, %v6387, %v7549
        %v7567 = vsel %vm7555, %v6390, %v7550
        %v7568 = vsel %vm7555, %v6393, %v7551
        %v7569 = vsel %vm7555, %v6396, %v7552
        %v7570 = vsel %vm7555, %v6399, %v7553
        %v7571 = vsel %vm7555, %v6402, %v7554
        %vm7572 = vcmask 15360
        %7573 = vst.msk [vmem:[%s427] sm:$0xff] %vm7572, %v7556
        %7574 = vst.msk [vmem:[%s427 + $0x8] sm:$0xff] %vm7572, %v7557
        %7575 = vst.msk [vmem:[%s427 + $0x10] sm:$0xff] %vm7572, %v7558
        %7576 = vst.msk [vmem:[%s427 + $0x18] sm:$0xff] %vm7572, %v7559
        %7577 = vst.msk [vmem:[%s427 + $0x20] sm:$0xff] %vm7572, %v7560
        %7578 = vst.msk [vmem:[%s427 + $0x28] sm:$0xff] %vm7572, %v7561
        %7579 = vst.msk [vmem:[%s427 + $0x30] sm:$0xff] %vm7572, %v7562
        %7580 = vst.msk [vmem:[%s427 + $0x38] sm:$0xff] %vm7572, %v7563
        %7581 = vst.msk [vmem:[%s427 + $0x40] sm:$0xff] %vm7572, %v7564
        %7582 = vst.msk [vmem:[%s427 + $0x48] sm:$0xff] %vm7572, %v7565
        %7583 = vst.msk [vmem:[%s427 + $0x50] sm:$0xff] %vm7572, %v7566
        %7584 = vst.msk [vmem:[%s427 + $0x58] sm:$0xff] %vm7572, %v7567
        %7585 = vst.msk [vmem:[%s427 + $0x60] sm:$0xff] %vm7572, %v7568
        %7586 = vst.msk [vmem:[%s427 + $0x68] sm:$0xff] %vm7572, %v7569
        %7587 = vst.msk [vmem:[%s427 + $0x70] sm:$0xff] %vm7572, %v7570
        %7588 = vst.msk [vmem:[%s427 + $0x78] sm:$0xff] %vm7572, %v7571
        %s7589 = smul.u32 16, %s26
        %p7590 = scmp.lt.s32.totalorder %s7589, 31
        %s7591 = scalar_select %p7590, %s7589, 31
        %s7592 = smul.addr %s7591, 8
        %s7593 = scalar_lea.vmem %s9, %s7592
        // Predicated region
        $region81: #{tpu_custom_call.1} parent=55 // pred_check
          %p7594 = pneg %p238
        $region82: #{tpu_custom_call.1} parent=55 // pred_check_branch
          %7596 = sbr.rel (%p7594) target = $region84
        $region83: #{tpu_custom_call.1} parent=55 // pred_region
          %s7597 = smul.u32 16, %s26
        $region84: #{tpu_custom_call.1} parent=55 // pred_fallthru
          _
      $region56: #{tpu_custom_call.1} parent=5 // pred_fallthru
        _
      %p7598 = scmp.le.s32.totalorder 2, %s21
      // Predicated region
      $region85: #{tpu_custom_call.1} parent=5 // pred_check
        %p7599 = pneg %p7598
      $region86: #{tpu_custom_call.1} parent=5 // pred_check_branch
        %7601 = sbr.rel (%p7599) target = $region88
      $region87: #{tpu_custom_call.1} parent=5 // pred_region
        %s7602 = ssub.s32 %s21, 2
        // Predicated region
        $region89: #{tpu_custom_call.1} parent=87 // pred_check
          %p7603 = pneg %p244
        $region90: #{tpu_custom_call.1} parent=87 // pred_check_branch
          %7605 = sbr.rel (%p7603) target = $region92
        $region91: #{tpu_custom_call.1} parent=87 // pred_region
          %s7606 = smul.u32 16, %s27
          %p7607 = scmp.lt.s32.totalorder %s7606, 31
          %s7608 = scalar_select %p7607, %s7606, 31
          %s7609 = smul.addr %s7608, 8
          %s7610 = scalar_lea.vmem %s9, %s7609
        $region92: #{tpu_custom_call.1} parent=87 // pred_fallthru
          _
      $region88: #{tpu_custom_call.1} parent=5 // pred_fallthru
        _
    $region6: #{tpu_custom_call.1} parent=1 // loop_footer
      %s25 = sadd.s32 1, %s21
    $region7: #{tpu_custom_call.1} parent=1 // loop_footer_branch
      %20 = sbr.rel target = $region3
    $region8: #{tpu_custom_call.1} parent=1 // loop_exit
      _
    %7611 = vsyncpa [#allocation3], 1
    %s7612 = scalar_lea.sflag [#allocation3], 1
    %7613 = vsyncpa %s7612, 1
    %7614 = vsyncpa [#allocation5], 1
    %7615 = vsyncpa [#allocation8], 1
    %7616 = vsyncpa [#allocation11], 1

</llo_original>
